<compile_context>
chip_gen: v6e
topology: v6e:2x2x1
jax: 0.10.0
libtpu: 0.0.40
codegen_flags: <defaults>
</compile_context>

<pallas_src>
import functools

import jax
import jax.numpy as jnp
from jax import lax
from jax.experimental import pallas as pl
from jax.experimental.pallas import tpu as pltpu


# ----------------------------- Pallas kernel ----------------------------------

def _fused_conv_kernel(alpha_ref, p_ref, w_ref, *rest, act, has_res):
    """One im2col'ed convolution as a single MXU matmul + fused epilogue.

    alpha_ref: (1,) f32 SMEM        PReLU slope (ignored unless act uses prelu)
    p_ref:     (TM, K)   bf16 VMEM  im2col patches (rows = output positions)
    w_ref:     (K, Cout) bf16 VMEM  flattened conv weights
    res_ref:   (TM, Cout) f32 VMEM  residual (only when has_res)
    o_ref:     (TM, Cout) f32 VMEM  output
    """
    if has_res:
        res_ref, o_ref = rest
    else:
        (o_ref,) = rest

    # Single matmul; f32 accumulation stays in vregs until the final store.
    y = jnp.dot(p_ref[...], w_ref[...], preferred_element_type=jnp.float32)

    if act in ("bn_prelu", "bn_add"):
        # Training-mode BatchNorm2d(affine=False): per-channel stats over all
        # N*Ho*Wo rows (whole batch is in this single block), biased variance.
        mean = jnp.mean(y, axis=0, keepdims=True)
        var = jnp.mean(jnp.square(y - mean), axis=0, keepdims=True)
        y = (y - mean) * lax.rsqrt(var + 1e-5)

    if act in ("prelu", "bn_prelu"):
        a = alpha_ref[0]
        y = jnp.where(y >= 0.0, y, a * y)
    elif act == "tanh":
        y = jnp.tanh(y)

    if has_res:
        y = y + res_ref[...]

    o_ref[...] = y


# ------------------------------ JAX wrappers -----------------------------------

def _im2col(x, kh, kw, stride, pad):
    """x: [N,H,W,C] f32 -> (patches [N*Ho*Wo, kh*kw*C] bf16, Ho, Wo)."""
    N, H, W, C = x.shape
    xp = jnp.pad(x, ((0, 0), (pad, pad), (pad, pad), (0, 0)))
    Ho = (H + 2 * pad - kh) // stride + 1
    Wo = (W + 2 * pad - kw) // stride + 1
    cols = [xp[:, i:i + stride * Ho:stride, j:j + stride * Wo:stride, :]
            for i in range(kh) for j in range(kw)]
    p = jnp.concatenate(cols, axis=-1)                    # [N, Ho, Wo, kh*kw*C]
    return p.reshape(N * Ho * Wo, kh * kw * C).astype(jnp.bfloat16), Ho, Wo


def _fused_conv(patches, w_flat, *, act="none", alpha=None, res=None, m_tiles=1):
    """patches: [M,K] bf16; w_flat: [K,Cout] bf16; res: [M,Cout] f32 or None."""
    M, K = patches.shape
    Cout = w_flat.shape[1]
    has_res = res is not None
    if alpha is None:
        alpha = jnp.zeros((1,), jnp.float32)

    # BN epilogues need the full batch resident to compute batch statistics;
    # also fall back to a single block if the tiling would be irregular.
    if act in ("bn_prelu", "bn_add") or M % m_tiles != 0 or (M // m_tiles) % 8 != 0:
        m_tiles = 1
    TM = M // m_tiles

    kernel = functools.partial(_fused_conv_kernel, act=act, has_res=has_res)

    in_specs = [
        pl.BlockSpec(memory_space=pltpu.MemorySpace.SMEM),
        pl.BlockSpec((TM, K), lambda i: (i, 0)),
        pl.BlockSpec((K, Cout), lambda i: (0, 0)),
    ]
    args = [alpha, patches, w_flat]
    if has_res:
        in_specs.append(pl.BlockSpec((TM, Cout), lambda i: (i, 0)))
        args.append(res)

    flops = 2 * M * K * Cout
    transcendentals = M * Cout if act == "tanh" else 0
    bytes_accessed = (patches.size * 2 + w_flat.size * 2 + M * Cout * 4
                      + (M * Cout * 4 if has_res else 0))

    return pl.pallas_call(
        kernel,
        out_shape=jax.ShapeDtypeStruct((M, Cout), jnp.float32),
        grid=(m_tiles,),
        in_specs=in_specs,
        out_specs=pl.BlockSpec((TM, Cout), lambda i: (i, 0)),
        compiler_params=pltpu.CompilerParams(
            dimension_semantics=("parallel",) if m_tiles > 1 else ("arbitrary",)),
        cost_estimate=pl.CostEstimate(flops=flops,
                                      transcendentals=transcendentals,
                                      bytes_accessed=bytes_accessed),
    )(*args)


def conv_block(x, w, *, kh, kw, stride, pad, act="none", alpha=None, res=None,
               m_tiles=1):
    """x: [N,H,W,Cin] f32, w: [KH,KW,Cin,Cout] f32 -> [N,Ho,Wo,Cout] f32."""
    N = x.shape[0]
    Cout = w.shape[-1]
    patches, Ho, Wo = _im2col(x, kh, kw, stride, pad)
    w_flat = w.reshape(kh * kw * w.shape[2], Cout).astype(jnp.bfloat16)
    res_flat = None if res is None else res.reshape(-1, Cout)
    out = _fused_conv(patches, w_flat, act=act, alpha=alpha, res=res_flat,
                      m_tiles=m_tiles)
    return out.reshape(N, Ho, Wo, Cout)


def pixel_shuffle_nhwc(x, r):
    # PyTorch PixelShuffle channel order: c_in = c_out * r^2 + i * r + j
    N, H, W, Cr2 = x.shape
    C = Cr2 // (r * r)
    x = x.reshape(N, H, W, C, r, r)
    x = x.transpose(0, 1, 4, 2, 5, 3)
    return x.reshape(N, H * r, W * r, C)


# ------------------------------ NetG forward -----------------------------------

def init_params(key):
    def conv_w(k, kh, kw, cin, cout):
        fan_in = kh * kw * cin
        return (jax.random.normal(k, (kh, kw, cin, cout), jnp.float32)
                / jnp.sqrt(jnp.float32(fan_in)))

    keys = jax.random.split(key, 12)
    p = {
        "convInit":    conv_w(keys[0], 4, 4, 3, 64),
        "convRes1":    conv_w(keys[1], 3, 3, 64, 64),
        "convRes2":    conv_w(keys[2], 3, 3, 64, 64),
        "convRes3":    conv_w(keys[3], 3, 3, 64, 64),
        "convRes4":    conv_w(keys[4], 3, 3, 64, 64),
        "convRes5":    conv_w(keys[5], 3, 3, 64, 64),
        "convResInit": conv_w(keys[6], 3, 3, 64, 64),
        "conv1":       conv_w(keys[7], 3, 3, 64, 256),
        "conv2":       conv_w(keys[8], 3, 3, 64, 256),
        "conv3":       conv_w(keys[9], 3, 3, 64, 256),   # defined but unused, as in PyTorch
        "convOut":     conv_w(keys[10], 3, 3, 64, 3),
    }
    for i in range(1, 7):
        p[f"alpha{i}"] = jnp.full((1,), 0.25, jnp.float32)  # nn.PReLU() default
    return p


def netg_forward(params, x_nchw):
    x = jnp.transpose(x_nchw, (0, 2, 3, 1)).astype(jnp.float32)  # -> NHWC

    # convInit (k=4, s=2, p=1) + PReLU1 fused
    x = conv_block(x, params["convInit"], kh=4, kw=4, stride=2, pad=1,
                   act="prelu", alpha=params["alpha1"], m_tiles=2)
    x0 = x

    # residual block 1
    t = conv_block(x0, params["convRes1"], kh=3, kw=3, stride=1, pad=1,
                   act="bn_prelu", alpha=params["alpha2"])
    xres1 = conv_block(t, params["convRes2"], kh=3, kw=3, stride=1, pad=1,
                       act="bn_add", res=x0)

    # residual block 2 (convRes3 used twice, faithful to the PyTorch forward)
    t = conv_block(xres1, params["convRes3"], kh=3, kw=3, stride=1, pad=1,
                   act="bn_prelu", alpha=params["alpha3"])
    xres2 = conv_block(t, params["convRes3"], kh=3, kw=3, stride=1, pad=1,
                       act="bn_add", res=xres1)

    # residual block 3
    t = conv_block(xres2, params["convRes4"], kh=3, kw=3, stride=1, pad=1,
                   act="bn_prelu", alpha=params["alpha4"])
    xres3 = conv_block(t, params["convRes5"], kh=3, kw=3, stride=1, pad=1,
                       act="bn_add", res=xres2)

    # trunk close
    x = conv_block(xres3, params["convResInit"], kh=3, kw=3, stride=1, pad=1,
                   act="bn_add", res=x0)

    # upsample 1 (PReLU commutes with PixelShuffle -> fused into the conv)
    x = conv_block(x, params["conv1"], kh=3, kw=3, stride=1, pad=1,
                   act="prelu", alpha=params["alpha5"], m_tiles=2)
    x = pixel_shuffle_nhwc(x, 2)

    # upsample 2
    x = conv_block(x, params["conv2"], kh=3, kw=3, stride=1, pad=1,
                   act="prelu", alpha=params["alpha6"], m_tiles=2)
    x = pixel_shuffle_nhwc(x, 2)

    # output conv + tanh; pad Cout 3 -> 128 for lane-dense stores, slice back
    w_out = jnp.pad(params["convOut"], ((0, 0), (0, 0), (0, 0), (0, 125)))
    x = conv_block(x, w_out, kh=3, kw=3, stride=1, pad=1, act="tanh", m_tiles=2)
    x = x[..., :3]

    return jnp.transpose(x, (0, 3, 1, 2))  # back to NCHW


# ---------------------------------- main ----------------------------------------

if __name__ == "__main__":
    key = jax.random.PRNGKey(0)
    pkey, xkey = jax.random.split(key)
    params = init_params(pkey)

    # NCHW input, matching the PyTorch module's convention: [N, 3, H, W]
    x = jax.random.normal(xkey, (2, 3, 16, 16), jnp.float32)

    fwd = jax.jit(functools.partial(netg_forward, params))
    out = jax.block_until_ready(fwd(x))

    assert out.shape == (2, 3, 32, 32), out.shape
    assert bool(jnp.all(jnp.isfinite(out)))
    # TODO(synk): BatchNorm running-stat updates (a training-time side effect) are not
    # materialized; only the forward output is reproduced.
    print("KERNEL_OK")
</pallas_src>

<mosaic_0001>
module attributes {stable_mosaic.version = 11 : i64} {
  func.func @_fused_conv_kernel(%arg0: i32, %arg1: memref<1xf32, #tpu.memory_space<smem>>, %arg2: memref<64x48xbf16, #tpu.memory_space<vmem>>, %arg3: memref<48x64xbf16, #tpu.memory_space<vmem>>, %arg4: memref<64x64xf32, #tpu.memory_space<vmem>>) attributes {dimension_semantics = [#tpu.dimension_semantics<parallel>], iteration_bounds = array<i64: 2>, scalar_prefetch = 0 : i64, scratch_operands = 0 : i64, tpu.core_type = #tpu.core_type<tc>, window_params = [{transform_indices = @transform_0, window_bounds = array<i64: 1>}, {transform_indices = @transform_1, window_bounds = array<i64: 64, 48>}, {pipeline_mode = #tpu.pipeline_mode<synchronous>, transform_indices = @transform_2, window_bounds = array<i64: 48, 64>}, {transform_indices = @transform_3, window_bounds = array<i64: 64, 64>}]} {
    %c0 = arith.constant 0 : index
    %c0_0 = arith.constant 0 : index
    %0 = vector.load %arg2[%c0, %c0_0] : memref<64x48xbf16, #tpu.memory_space<vmem>>, vector<64x48xbf16>
    %c0_1 = arith.constant 0 : index
    %c0_2 = arith.constant 0 : index
    %1 = vector.load %arg3[%c0_1, %c0_2] : memref<48x64xbf16, #tpu.memory_space<vmem>>, vector<48x64xbf16>
    %cst = arith.constant dense<0.000000e+00> : vector<64x64xf32>
    %2 = tpu.matmul %0, %1, %cst {dimension_numbers = #tpu.dot_dimension_numbers<[1], [0], [0], [1], [0, 0, 1, 1], [], []>} : vector<64x48xbf16>, vector<48x64xbf16>, vector<64x64xf32> -> vector<64x64xf32>
    %c0_3 = arith.constant 0 : index
    %3 = memref.load %arg1[%c0_3] : memref<1xf32, #tpu.memory_space<smem>>
    %cst_4 = arith.constant 0.000000e+00 : f32
    %4 = vector.broadcast %cst_4 : f32 to vector<64x64xf32>
    %5 = arith.cmpf oge, %2, %4 : vector<64x64xf32>
    %6 = vector.broadcast %3 : f32 to vector<64x64xf32>
    %7 = arith.mulf %6, %2 : vector<64x64xf32>
    %8 = arith.select %5, %2, %7 : vector<64x64xi1>, vector<64x64xf32>
    %c0_5 = arith.constant 0 : index
    %c0_6 = arith.constant 0 : index
    %9 = vector.load %arg4[%c0_5, %c0_6] : memref<64x64xf32, #tpu.memory_space<vmem>>, vector<64x64xf32>
    tpu.vector_store %arg4[%c0_5, %c0_6], %8 {strides = array<i32>} : memref<64x64xf32, #tpu.memory_space<vmem>>, vector<64x64xf32>,
    return
  }
  func.func @transform_0(%arg0: i32) -> i32 {
    %c0_i32 = arith.constant 0 : i32
    %c0_i32_0 = arith.constant 0 : i32
    return %c0_i32 : i32
  }
  func.func @transform_1(%arg0: i32) -> (i32, i32) {
    %c0_i32 = arith.constant 0 : i32
    %c0_i32_0 = arith.constant 0 : i32
    return %arg0, %c0_i32 : i32, i32
  }
  func.func @transform_2(%arg0: i32) -> (i32, i32) {
    %c0_i32 = arith.constant 0 : i32
    %c0_i32_0 = arith.constant 0 : i32
    %c0_i32_1 = arith.constant 0 : i32
    return %c0_i32, %c0_i32_0 : i32, i32
  }
  func.func @transform_3(%arg0: i32) -> (i32, i32) {
    %c0_i32 = arith.constant 0 : i32
    %c0_i32_0 = arith.constant 0 : i32
    return %arg0, %c0_i32 : i32, i32
  }
}

module attributes {stable_mosaic.version = 11 : i64} {
  func.func @_fused_conv_kernel(%arg0: i32, %arg1: memref<1xf32, #tpu.memory_space<smem>>, %arg2: memref<128x576xbf16, #tpu.memory_space<vmem>>, %arg3: memref<576x64xbf16, #tpu.memory_space<vmem>>, %arg4: memref<128x64xf32, #tpu.memory_space<vmem>>) attributes {dimension_semantics = [#tpu.dimension_semantics<arbitrary>], iteration_bounds = array<i64: 1>, scalar_prefetch = 0 : i64, scratch_operands = 0 : i64, tpu.core_type = #tpu.core_type<tc>, window_params = [{transform_indices = @transform_0, window_bounds = array<i64: 1>}, {transform_indices = @transform_1, window_bounds = array<i64: 128, 576>}, {pipeline_mode = #tpu.pipeline_mode<synchronous>, transform_indices = @transform_2, window_bounds = array<i64: 576, 64>}, {transform_indices = @transform_3, window_bounds = array<i64: 128, 64>}]} {
    %c0 = arith.constant 0 : index
    %c0_0 = arith.constant 0 : index
    %0 = vector.load %arg2[%c0, %c0_0] : memref<128x576xbf16, #tpu.memory_space<vmem>>, vector<128x576xbf16>
    %c0_1 = arith.constant 0 : index
    %c0_2 = arith.constant 0 : index
    %1 = vector.load %arg3[%c0_1, %c0_2] : memref<576x64xbf16, #tpu.memory_space<vmem>>, vector<576x64xbf16>
    %cst = arith.constant dense<0.000000e+00> : vector<128x64xf32>
    %2 = tpu.matmul %0, %1, %cst {dimension_numbers = #tpu.dot_dimension_numbers<[1], [0], [0], [1], [0, 0, 1, 1], [], []>} : vector<128x576xbf16>, vector<576x64xbf16>, vector<128x64xf32> -> vector<128x64xf32>
    %cst_3 = arith.constant dense<0.000000e+00> : vector<64xf32>
    %3 = vector.multi_reduction <add>, %2, %cst_3 [0] : vector<128x64xf32> to vector<64xf32>
    %4 = vector.shape_cast %3 : vector<64xf32> to vector<1x64xf32>
    %cst_4 = arith.constant 1.280000e+02 : f32
    %5 = vector.broadcast %cst_4 : f32 to vector<1x64xf32>
    %6 = arith.divf %4, %5 : vector<1x64xf32>
    %7 = vector.broadcast %6 : vector<1x64xf32> to vector<128x64xf32>
    %8 = arith.subf %2, %7 : vector<128x64xf32>
    %9 = arith.mulf %8, %8 : vector<128x64xf32>
    %cst_5 = arith.constant dense<0.000000e+00> : vector<64xf32>
    %10 = vector.multi_reduction <add>, %9, %cst_5 [0] : vector<128x64xf32> to vector<64xf32>
    %11 = vector.shape_cast %10 : vector<64xf32> to vector<1x64xf32>
    %cst_6 = arith.constant 1.280000e+02 : f32
    %12 = vector.broadcast %cst_6 : f32 to vector<1x64xf32>
    %13 = arith.divf %11, %12 : vector<1x64xf32>
    %14 = vector.broadcast %6 : vector<1x64xf32> to vector<128x64xf32>
    %15 = arith.subf %2, %14 : vector<128x64xf32>
    %cst_7 = arith.constant 9.99999974E-6 : f32
    %16 = vector.broadcast %cst_7 : f32 to vector<1x64xf32>
    %17 = arith.addf %13, %16 : vector<1x64xf32>
    %18 = math.rsqrt %17 : vector<1x64xf32>
    %19 = vector.broadcast %18 : vector<1x64xf32> to vector<128x64xf32>
    %20 = arith.mulf %15, %19 : vector<128x64xf32>
    %c0_8 = arith.constant 0 : index
    %21 = memref.load %arg1[%c0_8] : memref<1xf32, #tpu.memory_space<smem>>
    %cst_9 = arith.constant 0.000000e+00 : f32
    %22 = vector.broadcast %cst_9 : f32 to vector<128x64xf32>
    %23 = arith.cmpf oge, %20, %22 : vector<128x64xf32>
    %24 = vector.broadcast %21 : f32 to vector<128x64xf32>
    %25 = arith.mulf %24, %20 : vector<128x64xf32>
    %26 = arith.select %23, %20, %25 : vector<128x64xi1>, vector<128x64xf32>
    %c0_10 = arith.constant 0 : index
    %c0_11 = arith.constant 0 : index
    %27 = vector.load %arg4[%c0_10, %c0_11] : memref<128x64xf32, #tpu.memory_space<vmem>>, vector<128x64xf32>
    tpu.vector_store %arg4[%c0_10, %c0_11], %26 {strides = array<i32>} : memref<128x64xf32, #tpu.memory_space<vmem>>, vector<128x64xf32>,
    return
  }
  func.func @transform_0(%arg0: i32) -> i32 {
    %c0_i32 = arith.constant 0 : i32
    %c0_i32_0 = arith.constant 0 : i32
    return %c0_i32 : i32
  }
  func.func @transform_1(%arg0: i32) -> (i32, i32) {
    %c0_i32 = arith.constant 0 : i32
    %c0_i32_0 = arith.constant 0 : i32
    return %arg0, %c0_i32 : i32, i32
  }
  func.func @transform_2(%arg0: i32) -> (i32, i32) {
    %c0_i32 = arith.constant 0 : i32
    %c0_i32_0 = arith.constant 0 : i32
    %c0_i32_1 = arith.constant 0 : i32
    return %c0_i32, %c0_i32_0 : i32, i32
  }
  func.func @transform_3(%arg0: i32) -> (i32, i32) {
    %c0_i32 = arith.constant 0 : i32
    %c0_i32_0 = arith.constant 0 : i32
    return %arg0, %c0_i32 : i32, i32
  }
}

module attributes {stable_mosaic.version = 11 : i64} {
  func.func @_fused_conv_kernel(%arg0: i32, %arg1: memref<1xf32, #tpu.memory_space<smem>>, %arg2: memref<128x576xbf16, #tpu.memory_space<vmem>>, %arg3: memref<576x64xbf16, #tpu.memory_space<vmem>>, %arg4: memref<128x64xf32, #tpu.memory_space<vmem>>, %arg5: memref<128x64xf32, #tpu.memory_space<vmem>>) attributes {dimension_semantics = [#tpu.dimension_semantics<arbitrary>], iteration_bounds = array<i64: 1>, scalar_prefetch = 0 : i64, scratch_operands = 0 : i64, tpu.core_type = #tpu.core_type<tc>, window_params = [{transform_indices = @transform_0, window_bounds = array<i64: 1>}, {transform_indices = @transform_1, window_bounds = array<i64: 128, 576>}, {pipeline_mode = #tpu.pipeline_mode<synchronous>, transform_indices = @transform_2, window_bounds = array<i64: 576, 64>}, {transform_indices = @transform_3, window_bounds = array<i64: 128, 64>}, {transform_indices = @transform_4, window_bounds = array<i64: 128, 64>}]} {
    %c0 = arith.constant 0 : index
    %c0_0 = arith.constant 0 : index
    %0 = vector.load %arg2[%c0, %c0_0] : memref<128x576xbf16, #tpu.memory_space<vmem>>, vector<128x576xbf16>
    %c0_1 = arith.constant 0 : index
    %c0_2 = arith.constant 0 : index
    %1 = vector.load %arg3[%c0_1, %c0_2] : memref<576x64xbf16, #tpu.memory_space<vmem>>, vector<576x64xbf16>
    %cst = arith.constant dense<0.000000e+00> : vector<128x64xf32>
    %2 = tpu.matmul %0, %1, %cst {dimension_numbers = #tpu.dot_dimension_numbers<[1], [0], [0], [1], [0, 0, 1, 1], [], []>} : vector<128x576xbf16>, vector<576x64xbf16>, vector<128x64xf32> -> vector<128x64xf32>
    %cst_3 = arith.constant dense<0.000000e+00> : vector<64xf32>
    %3 = vector.multi_reduction <add>, %2, %cst_3 [0] : vector<128x64xf32> to vector<64xf32>
    %4 = vector.shape_cast %3 : vector<64xf32> to vector<1x64xf32>
    %cst_4 = arith.constant 1.280000e+02 : f32
    %5 = vector.broadcast %cst_4 : f32 to vector<1x64xf32>
    %6 = arith.divf %4, %5 : vector<1x64xf32>
    %7 = vector.broadcast %6 : vector<1x64xf32> to vector<128x64xf32>
    %8 = arith.subf %2, %7 : vector<128x64xf32>
    %9 = arith.mulf %8, %8 : vector<128x64xf32>
    %cst_5 = arith.constant dense<0.000000e+00> : vector<64xf32>
    %10 = vector.multi_reduction <add>, %9, %cst_5 [0] : vector<128x64xf32> to vector<64xf32>
    %11 = vector.shape_cast %10 : vector<64xf32> to vector<1x64xf32>
    %cst_6 = arith.constant 1.280000e+02 : f32
    %12 = vector.broadcast %cst_6 : f32 to vector<1x64xf32>
    %13 = arith.divf %11, %12 : vector<1x64xf32>
    %14 = vector.broadcast %6 : vector<1x64xf32> to vector<128x64xf32>
    %15 = arith.subf %2, %14 : vector<128x64xf32>
    %cst_7 = arith.constant 9.99999974E-6 : f32
    %16 = vector.broadcast %cst_7 : f32 to vector<1x64xf32>
    %17 = arith.addf %13, %16 : vector<1x64xf32>
    %18 = math.rsqrt %17 : vector<1x64xf32>
    %19 = vector.broadcast %18 : vector<1x64xf32> to vector<128x64xf32>
    %20 = arith.mulf %15, %19 : vector<128x64xf32>
    %c0_8 = arith.constant 0 : index
    %c0_9 = arith.constant 0 : index
    %21 = vector.load %arg4[%c0_8, %c0_9] : memref<128x64xf32, #tpu.memory_space<vmem>>, vector<128x64xf32>
    %22 = arith.addf %20, %21 : vector<128x64xf32>
    %c0_10 = arith.constant 0 : index
    %c0_11 = arith.constant 0 : index
    %23 = vector.load %arg5[%c0_10, %c0_11] : memref<128x64xf32, #tpu.memory_space<vmem>>, vector<128x64xf32>
    tpu.vector_store %arg5[%c0_10, %c0_11], %22 {strides = array<i32>} : memref<128x64xf32, #tpu.memory_space<vmem>>, vector<128x64xf32>,
    return
  }
  func.func @transform_0(%arg0: i32) -> i32 {
    %c0_i32 = arith.constant 0 : i32
    %c0_i32_0 = arith.constant 0 : i32
    return %c0_i32 : i32
  }
  func.func @transform_1(%arg0: i32) -> (i32, i32) {
    %c0_i32 = arith.constant 0 : i32
    %c0_i32_0 = arith.constant 0 : i32
    return %arg0, %c0_i32 : i32, i32
  }
  func.func @transform_2(%arg0: i32) -> (i32, i32) {
    %c0_i32 = arith.constant 0 : i32
    %c0_i32_0 = arith.constant 0 : i32
    %c0_i32_1 = arith.constant 0 : i32
    return %c0_i32, %c0_i32_0 : i32, i32
  }
  func.func @transform_3(%arg0: i32) -> (i32, i32) {
    %c0_i32 = arith.constant 0 : i32
    %c0_i32_0 = arith.constant 0 : i32
    return %arg0, %c0_i32 : i32, i32
  }
  func.func @transform_4(%arg0: i32) -> (i32, i32) {
    %c0_i32 = arith.constant 0 : i32
    %c0_i32_0 = arith.constant 0 : i32
    return %arg0, %c0_i32 : i32, i32
  }
}

module attributes {stable_mosaic.version = 11 : i64} {
  func.func @_fused_conv_kernel(%arg0: i32, %arg1: memref<1xf32, #tpu.memory_space<smem>>, %arg2: memref<64x576xbf16, #tpu.memory_space<vmem>>, %arg3: memref<576x256xbf16, #tpu.memory_space<vmem>>, %arg4: memref<64x256xf32, #tpu.memory_space<vmem>>) attributes {dimension_semantics = [#tpu.dimension_semantics<parallel>], iteration_bounds = array<i64: 2>, scalar_prefetch = 0 : i64, scratch_operands = 0 : i64, tpu.core_type = #tpu.core_type<tc>, window_params = [{transform_indices = @transform_0, window_bounds = array<i64: 1>}, {transform_indices = @transform_1, window_bounds = array<i64: 64, 576>}, {pipeline_mode = #tpu.pipeline_mode<synchronous>, transform_indices = @transform_2, window_bounds = array<i64: 576, 256>}, {transform_indices = @transform_3, window_bounds = array<i64: 64, 256>}]} {
    %c0 = arith.constant 0 : index
    %c0_0 = arith.constant 0 : index
    %0 = vector.load %arg2[%c0, %c0_0] : memref<64x576xbf16, #tpu.memory_space<vmem>>, vector<64x576xbf16>
    %c0_1 = arith.constant 0 : index
    %c0_2 = arith.constant 0 : index
    %1 = vector.load %arg3[%c0_1, %c0_2] : memref<576x256xbf16, #tpu.memory_space<vmem>>, vector<576x256xbf16>
    %cst = arith.constant dense<0.000000e+00> : vector<64x256xf32>
    %2 = tpu.matmul %0, %1, %cst {dimension_numbers = #tpu.dot_dimension_numbers<[1], [0], [0], [1], [0, 0, 1, 1], [], []>} : vector<64x576xbf16>, vector<576x256xbf16>, vector<64x256xf32> -> vector<64x256xf32>
    %c0_3 = arith.constant 0 : index
    %3 = memref.load %arg1[%c0_3] : memref<1xf32, #tpu.memory_space<smem>>
    %cst_4 = arith.constant 0.000000e+00 : f32
    %4 = vector.broadcast %cst_4 : f32 to vector<64x256xf32>
    %5 = arith.cmpf oge, %2, %4 : vector<64x256xf32>
    %6 = vector.broadcast %3 : f32 to vector<64x256xf32>
    %7 = arith.mulf %6, %2 : vector<64x256xf32>
    %8 = arith.select %5, %2, %7 : vector<64x256xi1>, vector<64x256xf32>
    %c0_5 = arith.constant 0 : index
    %c0_6 = arith.constant 0 : index
    %9 = vector.load %arg4[%c0_5, %c0_6] : memref<64x256xf32, #tpu.memory_space<vmem>>, vector<64x256xf32>
    tpu.vector_store %arg4[%c0_5, %c0_6], %8 {strides = array<i32>} : memref<64x256xf32, #tpu.memory_space<vmem>>, vector<64x256xf32>,
    return
  }
  func.func @transform_0(%arg0: i32) -> i32 {
    %c0_i32 = arith.constant 0 : i32
    %c0_i32_0 = arith.constant 0 : i32
    return %c0_i32 : i32
  }
  func.func @transform_1(%arg0: i32) -> (i32, i32) {
    %c0_i32 = arith.constant 0 : i32
    %c0_i32_0 = arith.constant 0 : i32
    return %arg0, %c0_i32 : i32, i32
  }
  func.func @transform_2(%arg0: i32) -> (i32, i32) {
    %c0_i32 = arith.constant 0 : i32
    %c0_i32_0 = arith.constant 0 : i32
    %c0_i32_1 = arith.constant 0 : i32
    return %c0_i32, %c0_i32_0 : i32, i32
  }
  func.func @transform_3(%arg0: i32) -> (i32, i32) {
    %c0_i32 = arith.constant 0 : i32
    %c0_i32_0 = arith.constant 0 : i32
    return %arg0, %c0_i32 : i32, i32
  }
}

module attributes {stable_mosaic.version = 11 : i64} {
  func.func @_fused_conv_kernel(%arg0: i32, %arg1: memref<1xf32, #tpu.memory_space<smem>>, %arg2: memref<256x576xbf16, #tpu.memory_space<vmem>>, %arg3: memref<576x256xbf16, #tpu.memory_space<vmem>>, %arg4: memref<256x256xf32, #tpu.memory_space<vmem>>) attributes {dimension_semantics = [#tpu.dimension_semantics<parallel>], iteration_bounds = array<i64: 2>, scalar_prefetch = 0 : i64, scratch_operands = 0 : i64, tpu.core_type = #tpu.core_type<tc>, window_params = [{transform_indices = @transform_0, window_bounds = array<i64: 1>}, {transform_indices = @transform_1, window_bounds = array<i64: 256, 576>}, {pipeline_mode = #tpu.pipeline_mode<synchronous>, transform_indices = @transform_2, window_bounds = array<i64: 576, 256>}, {transform_indices = @transform_3, window_bounds = array<i64: 256, 256>}]} {
    %c0 = arith.constant 0 : index
    %c0_0 = arith.constant 0 : index
    %0 = vector.load %arg2[%c0, %c0_0] : memref<256x576xbf16, #tpu.memory_space<vmem>>, vector<256x576xbf16>
    %c0_1 = arith.constant 0 : index
    %c0_2 = arith.constant 0 : index
    %1 = vector.load %arg3[%c0_1, %c0_2] : memref<576x256xbf16, #tpu.memory_space<vmem>>, vector<576x256xbf16>
    %cst = arith.constant dense<0.000000e+00> : vector<256x256xf32>
    %2 = tpu.matmul %0, %1, %cst {dimension_numbers = #tpu.dot_dimension_numbers<[1], [0], [0], [1], [0, 0, 1, 1], [], []>} : vector<256x576xbf16>, vector<576x256xbf16>, vector<256x256xf32> -> vector<256x256xf32>
    %c0_3 = arith.constant 0 : index
    %3 = memref.load %arg1[%c0_3] : memref<1xf32, #tpu.memory_space<smem>>
    %cst_4 = arith.constant 0.000000e+00 : f32
    %4 = vector.broadcast %cst_4 : f32 to vector<256x256xf32>
    %5 = arith.cmpf oge, %2, %4 : vector<256x256xf32>
    %6 = vector.broadcast %3 : f32 to vector<256x256xf32>
    %7 = arith.mulf %6, %2 : vector<256x256xf32>
    %8 = arith.select %5, %2, %7 : vector<256x256xi1>, vector<256x256xf32>
    %c0_5 = arith.constant 0 : index
    %c0_6 = arith.constant 0 : index
    %9 = vector.load %arg4[%c0_5, %c0_6] : memref<256x256xf32, #tpu.memory_space<vmem>>, vector<256x256xf32>
    tpu.vector_store %arg4[%c0_5, %c0_6], %8 {strides = array<i32>} : memref<256x256xf32, #tpu.memory_space<vmem>>, vector<256x256xf32>,
    return
  }
  func.func @transform_0(%arg0: i32) -> i32 {
    %c0_i32 = arith.constant 0 : i32
    %c0_i32_0 = arith.constant 0 : i32
    return %c0_i32 : i32
  }
  func.func @transform_1(%arg0: i32) -> (i32, i32) {
    %c0_i32 = arith.constant 0 : i32
    %c0_i32_0 = arith.constant 0 : i32
    return %arg0, %c0_i32 : i32, i32
  }
  func.func @transform_2(%arg0: i32) -> (i32, i32) {
    %c0_i32 = arith.constant 0 : i32
    %c0_i32_0 = arith.constant 0 : i32
    %c0_i32_1 = arith.constant 0 : i32
    return %c0_i32, %c0_i32_0 : i32, i32
  }
  func.func @transform_3(%arg0: i32) -> (i32, i32) {
    %c0_i32 = arith.constant 0 : i32
    %c0_i32_0 = arith.constant 0 : i32
    return %arg0, %c0_i32 : i32, i32
  }
}

module attributes {stable_mosaic.version = 11 : i64} {
  func.func @_fused_conv_kernel(%arg0: i32, %arg1: memref<1xf32, #tpu.memory_space<smem>>, %arg2: memref<1024x576xbf16, #tpu.memory_space<vmem>>, %arg3: memref<576x128xbf16, #tpu.memory_space<vmem>>, %arg4: memref<1024x128xf32, #tpu.memory_space<vmem>>) attributes {dimension_semantics = [#tpu.dimension_semantics<parallel>], iteration_bounds = array<i64: 2>, scalar_prefetch = 0 : i64, scratch_operands = 0 : i64, tpu.core_type = #tpu.core_type<tc>, window_params = [{transform_indices = @transform_0, window_bounds = array<i64: 1>}, {transform_indices = @transform_1, window_bounds = array<i64: 1024, 576>}, {pipeline_mode = #tpu.pipeline_mode<synchronous>, transform_indices = @transform_2, window_bounds = array<i64: 576, 128>}, {transform_indices = @transform_3, window_bounds = array<i64: 1024, 128>}]} {
    %c0 = arith.constant 0 : index
    %c0_0 = arith.constant 0 : index
    %0 = vector.load %arg2[%c0, %c0_0] : memref<1024x576xbf16, #tpu.memory_space<vmem>>, vector<1024x576xbf16>
    %c0_1 = arith.constant 0 : index
    %c0_2 = arith.constant 0 : index
    %1 = vector.load %arg3[%c0_1, %c0_2] : memref<576x128xbf16, #tpu.memory_space<vmem>>, vector<576x128xbf16>
    %cst = arith.constant dense<0.000000e+00> : vector<1024x128xf32>
    %2 = tpu.matmul %0, %1, %cst {dimension_numbers = #tpu.dot_dimension_numbers<[1], [0], [0], [1], [0, 0, 1, 1], [], []>} : vector<1024x576xbf16>, vector<576x128xbf16>, vector<1024x128xf32> -> vector<1024x128xf32>
    %3 = math.tanh %2 : vector<1024x128xf32>
    %c0_3 = arith.constant 0 : index
    %c0_4 = arith.constant 0 : index
    %4 = vector.load %arg4[%c0_3, %c0_4] : memref<1024x128xf32, #tpu.memory_space<vmem>>, vector<1024x128xf32>
    tpu.vector_store %arg4[%c0_3, %c0_4], %3 {strides = array<i32>} : memref<1024x128xf32, #tpu.memory_space<vmem>>, vector<1024x128xf32>,
    return
  }
  func.func @transform_0(%arg0: i32) -> i32 {
    %c0_i32 = arith.constant 0 : i32
    %c0_i32_0 = arith.constant 0 : i32
    return %c0_i32 : i32
  }
  func.func @transform_1(%arg0: i32) -> (i32, i32) {
    %c0_i32 = arith.constant 0 : i32
    %c0_i32_0 = arith.constant 0 : i32
    return %arg0, %c0_i32 : i32, i32
  }
  func.func @transform_2(%arg0: i32) -> (i32, i32) {
    %c0_i32 = arith.constant 0 : i32
    %c0_i32_0 = arith.constant 0 : i32
    %c0_i32_1 = arith.constant 0 : i32
    return %c0_i32, %c0_i32_0 : i32, i32
  }
  func.func @transform_3(%arg0: i32) -> (i32, i32) {
    %c0_i32 = arith.constant 0 : i32
    %c0_i32_0 = arith.constant 0 : i32
    return %arg0, %c0_i32 : i32, i32
  }
}

</mosaic_0001>

<llo_original>
// kernel: netg_forward.11
$region0: #{netg_forward.11}
  #allocation0 [shape = 'u32[]', space=smem, size = 0x4, offset = 0x4, fixed_abs, tag = 'smem constant byte address 0x4 - core index']
  #allocation1 [shape = 'u32[144,128]{1,0:T(1,128)}', space=vmem, size = 0x12000, scoped, tag = 'internal scratch']
  #allocation2 [shape = 'f32[1]{0:T(128)S(6)}', space=smem, size = 0x200, scoped, tag = 'scoped memory for netg_forward.11']
  %s0 = inlined_call_operand.<no memory space> [shape: f32[1], index: 0, kind: input, shape index: {}]
  %s1 = inlined_call_operand.vmem [shape: bf16[128,48], index: 1, kind: input, shape index: {}]
  %s2 = inlined_call_operand.hbm [shape: bf16[48,64], index: 2, kind: input, shape index: {}]
  %s3 = inlined_call_operand.vmem [shape: f32[128,64], index: 3, kind: output, shape index: {}]
  %s4 = sld [smem:[#allocation0]]
  $region49: #{netg_forward.11} parent=0
    _
  %s6 = ssub.s32 1, %s4
  %s7 = scalar_select 0, %s6, %s4
  %8 = sst [smem:[#allocation2]] %s0
  $region1: #{netg_forward.11} parent=0
    #allocation3 [shape = 'u8[12288]{0}', space=vmem, size = 0x3000, scoped, tag = 'input window, operand 2, single buffered']
    #allocation4 [shape = 's32[2]{0}', space=sflag, size = 0x8, scoped, tag = 'scoped memory for netg_forward.11']
    %9 = vsyncpa [#allocation4], 0
    loop: start=0, step=1, limit=4
    $region2: #{netg_forward.11} parent=1 // loop_pre_header
      _
    $region3: #{netg_forward.11} parent=1 // loop_header
      %s11 = sphi 0, %s15
      %p12 = scmp.ge.s32.totalorder %s11, 4
      %s19 = sphi 0, %s19
      %s21 = sphi 0, %s19
      %s22 = sphi 0, %s21
      %s36 = sphi 0, %s22
      %s42 = sphi 0, %s44
      %s45 = sphi 0, %s42
      %s46 = sphi 0, %s45
      %s62 = sphi 0, %s46
      %s66 = sphi 0, %s66
      %s68 = sphi 0, %s66
      %s69 = sphi 0, %s68
      %s83 = sphi 0, %s69
      %s89 = sphi 0, %s91
      %s92 = sphi 0, %s89
      %s93 = sphi 0, %s92
      %s109 = sphi 0, %s93
    $region4: #{netg_forward.11} parent=1 // loop_header_branch
      %14 = sbr.rel (%p12) target = $region8
    $region5: #{netg_forward.11} parent=1 // loop_body
      %s16 = ssub.s32 %s11, 1
      %s17 = ssub.s32 %s11, 2
      %s18 = sadd.s32 %s11, 1
      %s20 = sadd.s32 %s19, 1
      %p23 = scmp.eq.s32.totalorder %s11, 1
      %p24 = scmp.ne.s32.totalorder %s19, %s21
      %p25 = scmp.eq.s32.totalorder %s11, 0
      %p26 = por %p24, %p25
      %p27 = scmp.ne.s32.totalorder %s19, %s21
      %p28 = scmp.eq.s32.totalorder %s16, 1
      %p29 = por %p27, %p28
      %p30 = scmp.ne.s32.totalorder %s21, %s22
      %p31 = scmp.eq.s32.totalorder %s16, 0
      %p32 = por %p30, %p31
      %p33 = scmp.ne.s32.totalorder %s21, %s22
      %p34 = scmp.eq.s32.totalorder %s17, 1
      %p35 = por %p33, %p34
      %p37 = scmp.ne.s32.totalorder %s22, %s36
      %p38 = scmp.eq.s32.totalorder %s17, 0
      %p39 = por %p37, %p38
      %s40 = ssub.s32 %s11, %s18
      %p41 = scmp.eq.s32.totalorder %s40, 0
      %s43 = sadd.s32 %s42, 1
      %s44 = scalar_select %p41, %s42, %s43
      %p47 = pneg %p41
      %p48 = scmp.eq.s32.totalorder %s11, 1
      %p49 = por %p47, %p48
      %p50 = scmp.ne.s32.totalorder %s42, %s45
      %p51 = scmp.eq.s32.totalorder %s11, 0
      %p52 = por %p50, %p51
      %p53 = scmp.ne.s32.totalorder %s42, %s45
      %p54 = scmp.eq.s32.totalorder %s16, 1
      %p55 = por %p53, %p54
      %p56 = scmp.ne.s32.totalorder %s45, %s46
      %p57 = scmp.eq.s32.totalorder %s16, 0
      %p58 = por %p56, %p57
      %p59 = scmp.ne.s32.totalorder %s45, %s46
      %p60 = scmp.eq.s32.totalorder %s17, 1
      %p61 = por %p59, %p60
      %p63 = scmp.ne.s32.totalorder %s46, %s62
      %p64 = scmp.eq.s32.totalorder %s17, 0
      %p65 = por %p63, %p64
      %s67 = sadd.s32 %s66, 1
      %p70 = scmp.eq.s32.totalorder %s11, 1
      %p71 = scmp.ne.s32.totalorder %s66, %s68
      %p72 = scmp.eq.s32.totalorder %s11, 0
      %p73 = por %p71, %p72
      %p74 = scmp.ne.s32.totalorder %s66, %s68
      %p75 = scmp.eq.s32.totalorder %s16, 1
      %p76 = por %p74, %p75
      %p77 = scmp.ne.s32.totalorder %s68, %s69
      %p78 = scmp.eq.s32.totalorder %s16, 0
      %p79 = por %p77, %p78
      %p80 = scmp.ne.s32.totalorder %s68, %s69
      %p81 = scmp.eq.s32.totalorder %s17, 1
      %p82 = por %p80, %p81
      %p84 = scmp.ne.s32.totalorder %s69, %s83
      %p85 = scmp.eq.s32.totalorder %s17, 0
      %p86 = por %p84, %p85
      %s87 = ssub.s32 %s11, %s18
      %p88 = scmp.eq.s32.totalorder %s87, 0
      %s90 = sadd.s32 %s89, 1
      %s91 = scalar_select %p88, %s89, %s90
      %p94 = pneg %p88
      %p95 = scmp.eq.s32.totalorder %s11, 1
      %p96 = por %p94, %p95
      %p97 = scmp.ne.s32.totalorder %s89, %s92
      %p98 = scmp.eq.s32.totalorder %s11, 0
      %p99 = por %p97, %p98
      %p100 = scmp.ne.s32.totalorder %s89, %s92
      %p101 = scmp.eq.s32.totalorder %s16, 1
      %p102 = por %p100, %p101
      %p103 = scmp.ne.s32.totalorder %s92, %s93
      %p104 = scmp.eq.s32.totalorder %s16, 0
      %p105 = por %p103, %p104
      %p106 = scmp.ne.s32.totalorder %s92, %s93
      %p107 = scmp.eq.s32.totalorder %s17, 1
      %p108 = por %p106, %p107
      %p110 = scmp.ne.s32.totalorder %s93, %s109
      %p111 = scmp.eq.s32.totalorder %s17, 0
      %p112 = por %p110, %p111
      %p113 = scmp.le.s32.totalorder 1, %s11
      %p114 = scmp.lt.s32.totalorder %s11, 3
      %p115 = pnand %p113, %p114
      %p116 = pneg %p115
      // Predicated region
      $region9: #{netg_forward.11} parent=5 // pred_check
        _
      $region10: #{netg_forward.11} parent=5 // pred_check_branch
        %118 = sbr.rel (%p115) target = $region12
      $region11: #{netg_forward.11} parent=5 // pred_region
        %s119 = ssub.s32 %s11, 1
        // Predicated region
        $region13: #{netg_forward.11} parent=11 // pred_check
          %p120 = pneg %p32
        $region14: #{netg_forward.11} parent=11 // pred_check_branch
          %122 = sbr.rel (%p120) target = $region16
        $region15: #{netg_forward.11} parent=11 // pred_region
          _
        $region16: #{netg_forward.11} parent=11 // pred_fallthru
          _
        // Predicated region
        $region17: #{netg_forward.11} parent=11 // pred_check
          %p123 = pneg %p79
        $region18: #{netg_forward.11} parent=11 // pred_check_branch
          %125 = sbr.rel (%p123) target = $region20
        $region19: #{netg_forward.11} parent=11 // pred_region
          %s127 = ssub.s32 384, 384
          %128 = vsyncadd [#allocation4], %s127
          %s129 = sshll.u32 [#allocation3], 4
          %s130 = int_to_ptr.vmem [resolvable:$true] %s129
          %135 = dma.hbm_to_vmem [thread:$0]  %s2, 384, %s130, [#allocation4], 64, 64, 4
        $region20: #{netg_forward.11} parent=11 // pred_fallthru
          _
      $region12: #{netg_forward.11} parent=5 // pred_fallthru
        _
      %p136 = scmp.lt.s32.totalorder %s11, 2
      // Predicated region
      $region21: #{netg_forward.11} parent=5 // pred_check
        %p137 = pneg %p136
      $region22: #{netg_forward.11} parent=5 // pred_check_branch
        %139 = sbr.rel (%p137) target = $region24
      $region23: #{netg_forward.11} parent=5 // pred_region
        // Predicated region
        $region25: #{netg_forward.11} parent=23 // pred_check
          %p140 = pneg %p52
        $region26: #{netg_forward.11} parent=23 // pred_check_branch
          %142 = sbr.rel (%p140) target = $region28
        $region27: #{netg_forward.11} parent=23 // pred_region
          %s143 = smul.u32 8, %s11
          %p144 = scmp.lt.s32.totalorder %s143, 15
          %s145 = scalar_select %p144, %s143, 15
          %s146 = smul.addr %s145, 4
          %s147 = scalar_lea.vmem %s1, %s146
          %s148 = smul.u32 8, %s11
        $region28: #{netg_forward.11} parent=23 // pred_fallthru
          _
      $region24: #{netg_forward.11} parent=5 // pred_fallthru
        _
      %p149 = scmp.le.s32.totalorder 1, %s11
      %p150 = scmp.lt.s32.totalorder %s11, 3
      %p151 = pnand %p149, %p150
      %p152 = pneg %p151
      // Predicated region
      $region29: #{netg_forward.11} parent=5 // pred_check
        _
      $region30: #{netg_forward.11} parent=5 // pred_check_branch
        %154 = sbr.rel (%p151) target = $region32
      $region31: #{netg_forward.11} parent=5 // pred_region
        %s155 = ssub.s32 %s11, 1
        // Predicated region
        $region33: #{netg_forward.11} parent=31 // pred_check
          %p156 = pneg %p79
        $region34: #{netg_forward.11} parent=31 // pred_check_branch
          %158 = sbr.rel (%p156) target = $region36
        $region35: #{netg_forward.11} parent=31 // pred_region
          %159 = dma.done [#allocation4], 384
        $region36: #{netg_forward.11} parent=31 // pred_fallthru
          _
        %p160 = pneg %p32
        %p161 = pneg %p29
        %s162 = smul.u32 8, %s16
        %p163 = scmp.lt.s32.totalorder %s162, 15
        %s164 = scalar_select %p163, %s162, 15
        %s165 = smul.addr %s164, 4
        %s166 = scalar_lea.vmem %s1, %s165
        %p167 = pneg %p58
        %p168 = pneg %p55
        %p169 = pneg %p79
        %p170 = pneg %p76
        %p171 = pneg %p105
        %p172 = pneg %p102
        %s173 = smul.u32 8, %s16
        %p174 = scmp.lt.s32.totalorder %s173, 15
        %s175 = scalar_select %p174, %s173, 15
        %s176 = smul.addr %s175, 8
        %s177 = scalar_lea.vmem %s3, %s176
        %s178 = smul.u32 8, %s16
        %p179 = scmp.lt.s32.totalorder %s178, 15
        %s180 = scalar_select %p179, %s178, 15
        %s181 = smul.addr %s180, 4
        %s182 = scalar_lea.vmem %s1, %s181
        %s183 = smul.u32 8, %s16
        %s184 = smul.u32 8, %s16
        %p185 = scmp.lt.s32.totalorder %s184, 15
        %s186 = scalar_select %p185, %s184, 15
        %s187 = smul.addr %s186, 8
        %s188 = scalar_lea.vmem %s3, %s187
        %s189 = smul.u32 8, %s16
        %v191 = vld [vmem:[%s182] sm:$0xf]
        %v192 = vld [vmem:[%s182 + $0x4] sm:$0xf]
        %v193 = vld [vmem:[%s182 + $0x8] sm:$0xf]
        %v194 = vld [vmem:[%s182 + $0xc] sm:$0xf]
        %v195 = vld [vmem:[%s182 + $0x10] sm:$0xf]
        %v196 = vld [vmem:[%s182 + $0x14] sm:$0xf]
        %v197 = vld [vmem:[%s182 + $0x18] sm:$0xf]
        %v198 = vld [vmem:[%s182 + $0x1c] sm:$0xf]
        %v199 = vld [vmem:[#allocation3] sm:$0xf]
        %v200 = vld [vmem:[#allocation3 + $0x4] sm:$0xf]
        %v201 = vld [vmem:[#allocation3 + $0x8] sm:$0xf]
        %v202 = vld [vmem:[#allocation3 + $0xc] sm:$0xf]
        %v203 = vld [vmem:[#allocation3 + $0x10] sm:$0xf]
        %v204 = vld [vmem:[#allocation3 + $0x14] sm:$0xf]
        %v213 = vunpack.c.l.b16 %v191
        %v214 = vunpack.c.l.b16 %v192
        %v215 = vunpack.c.l.b16 %v193
        %v216 = vunpack.c.l.b16 %v194
        %v217 = vunpack.c.l.b16 %v195
        %v218 = vunpack.c.l.b16 %v196
        %v219 = vunpack.c.l.b16 %v197
        %v220 = vunpack.c.l.b16 %v198
        %v221 = vpack.c.b16 %v214, %v213
        %v222 = vpack.c.b16 %v216, %v215
        %v223 = vpack.c.b16 %v218, %v217
        %v224 = vpack.c.b16 %v220, %v219
        %v231 = vunpack.c.l.b16 %v199
        %v232 = vunpack.c.l.b16 %v200
        %v233 = vunpack.c.l.b16 %v201
        %v234 = vunpack.c.l.b16 %v202
        %v235 = vunpack.c.l.b16 %v203
        %v236 = vunpack.c.l.b16 %v204
        %v237 = vpack.c.b16 %v232, %v231
        %v238 = vpack.c.b16 %v234, %v233
        %v239 = vpack.c.b16 %v236, %v235
        %vm243 = vcmask 392192
        %v245 = vsel %vm243, %v221, 0
        %v248 = vsel %vm243, %v222, 0
        %v251 = vsel %vm243, %v223, 0
        %v254 = vsel %vm243, %v224, 0
        %256 = vmatprep.subr.bf16.mxu0 0
        %257 = vmatpush1.bf16.msra.mxu0 0
        %258 = vmatprep.subr.bf16.mxu0 0
        %259 = vmatpush1.bf16.msra.mxu0 0
        %260 = vmatprep.subr.bf16.mxu0 0
        %261 = vmatpush1.bf16.msra.mxu0 0
        %262 = vmatprep.subr.bf16.mxu0 0
        %263 = vmatpush1.bf16.msra.mxu0 0
        %264 = vmatprep.subr.bf16.mxu0 0
        %265 = vmatpush1.bf16.msra.mxu0 0
        %266 = vmatprep.subr.bf16.mxu0 0
        %267 = vmatpush1.bf16.msra.mxu0 %v239
        %268 = vmatprep.subr.bf16.mxu0 0
        %269 = vmatpush1.bf16.msra.mxu0 %v238
        %270 = vmatprep.subr.bf16.mxu0 0
        %271 = vmatpush1.bf16.msra.mxu0 %v237
        %272 = vmatprep.subr.bf16.mxu0 0
        %273 = vmatpush2.bf16.msra.mxu0 0
        %274 = vmatprep.subr.bf16.mxu0 0
        %275 = vmatpush2.bf16.msra.mxu0 0
        %276 = vmatprep.subr.bf16.mxu0 0
        %277 = vmatpush2.bf16.msra.mxu0 0
        %278 = vmatprep.subr.bf16.mxu0 0
        %279 = vmatpush2.bf16.msra.mxu0 0
        %280 = vmatprep.subr.bf16.mxu0 0
        %281 = vmatpush2.bf16.msra.mxu0 0
        %282 = vmatprep.subr.bf16.mxu0 0
        %283 = vmatpush2.bf16.msra.mxu0 0
        %284 = vmatprep.subr.bf16.mxu0 0
        %285 = vmatpush2.bf16.msra.mxu0 0
        %286 = vmatprep.subr.bf16.mxu0 0
        %287 = vmatpush2.bf16.msra.mxu0 0
        %288 = vmatprep.mubr.bf16.mxu0 0
        %289 = vmatmul.mubr.bf16.gmra.mxu0 %v245
        %v290 = vpop.f32.mrf.mxu0
        %v291 = vadd.f32 0.0, %v290
        %v292 = vpop.f32.mrf.mxu0
        %v293 = vpop.f32.mrf.mxu0
        %v294 = vadd.f32 0.0, %v293
        %v295 = vpop.f32.mrf.mxu0
        %296 = vmatprep.mubr.bf16.mxu0 0
        %297 = vmatmul.mubr.bf16.gmra.mxu0 %v248
        %v298 = vpop.f32.mrf.mxu0
        %v299 = vadd.f32 0.0, %v298
        %v300 = vpop.f32.mrf.mxu0
        %v301 = vpop.f32.mrf.mxu0
        %v302 = vadd.f32 0.0, %v301
        %v303 = vpop.f32.mrf.mxu0
        %304 = vmatprep.mubr.bf16.mxu0 0
        %305 = vmatmul.mubr.bf16.gmra.mxu0 %v251
        %v306 = vpop.f32.mrf.mxu0
        %v307 = vadd.f32 0.0, %v306
        %v308 = vpop.f32.mrf.mxu0
        %v309 = vpop.f32.mrf.mxu0
        %v310 = vadd.f32 0.0, %v309
        %v311 = vpop.f32.mrf.mxu0
        %312 = vmatprep.mubr.bf16.mxu0 0
        %313 = vmatmul.mubr.bf16.gmra.mxu0 %v254
        %v314 = vpop.f32.mrf.mxu0
        %v315 = vadd.f32 0.0, %v314
        %v316 = vpop.f32.mrf.mxu0
        %v317 = vpop.f32.mrf.mxu0
        %v318 = vadd.f32 0.0, %v317
        %v319 = vpop.f32.mrf.mxu0
        %320 = vdwg.mxu0
        %s321 = sld [smem:[#allocation2]]
        %vm322 = vcmp.ge.f32.partialorder %v291, 0.0
        %vm323 = vcmp.ge.f32.partialorder %v294, 0.0
        %vm324 = vcmp.ge.f32.partialorder %v299, 0.0
        %vm325 = vcmp.ge.f32.partialorder %v302, 0.0
        %vm326 = vcmp.ge.f32.partialorder %v307, 0.0
        %vm327 = vcmp.ge.f32.partialorder %v310, 0.0
        %vm328 = vcmp.ge.f32.partialorder %v315, 0.0
        %vm329 = vcmp.ge.f32.partialorder %v318, 0.0
        %v330 = vstv %s321
        %v331 = vmul.f32 %v330, %v291
        %v332 = vmul.f32 %v330, %v294
        %v333 = vmul.f32 %v330, %v299
        %v334 = vmul.f32 %v330, %v302
        %v335 = vmul.f32 %v330, %v307
        %v336 = vmul.f32 %v330, %v310
        %v337 = vmul.f32 %v330, %v315
        %v338 = vmul.f32 %v330, %v318
        %v339 = vsel %vm322, %v291, %v331
        %v340 = vsel %vm323, %v294, %v332
        %v341 = vsel %vm324, %v299, %v333
        %v342 = vsel %vm325, %v302, %v334
        %v343 = vsel %vm326, %v307, %v335
        %v344 = vsel %vm327, %v310, %v336
        %v345 = vsel %vm328, %v315, %v337
        %v346 = vsel %vm329, %v318, %v338
        %vm347 = vcmask 523264
        %348 = vst.msk [vmem:[%s188] sm:$0xff] %vm347, %v339
        %349 = vst.msk [vmem:[%s188 + $0x8] sm:$0xff] %vm347, %v340
        %350 = vst.msk [vmem:[%s188 + $0x10] sm:$0xff] %vm347, %v341
        %351 = vst.msk [vmem:[%s188 + $0x18] sm:$0xff] %vm347, %v342
        %352 = vst.msk [vmem:[%s188 + $0x20] sm:$0xff] %vm347, %v343
        %353 = vst.msk [vmem:[%s188 + $0x28] sm:$0xff] %vm347, %v344
        %354 = vst.msk [vmem:[%s188 + $0x30] sm:$0xff] %vm347, %v345
        %355 = vst.msk [vmem:[%s188 + $0x38] sm:$0xff] %vm347, %v346
        %s356 = smul.u32 8, %s16
        %p357 = scmp.lt.s32.totalorder %s356, 15
        %s358 = scalar_select %p357, %s356, 15
        %s359 = smul.addr %s358, 8
        %s360 = scalar_lea.vmem %s3, %s359
        // Predicated region
        $region37: #{netg_forward.11} parent=31 // pred_check
          %p361 = pneg %p102
        $region38: #{netg_forward.11} parent=31 // pred_check_branch
          %363 = sbr.rel (%p361) target = $region40
        $region39: #{netg_forward.11} parent=31 // pred_region
          %s364 = smul.u32 8, %s16
        $region40: #{netg_forward.11} parent=31 // pred_fallthru
          _
      $region32: #{netg_forward.11} parent=5 // pred_fallthru
        _
      %p365 = scmp.le.s32.totalorder 2, %s11
      // Predicated region
      $region41: #{netg_forward.11} parent=5 // pred_check
        %p366 = pneg %p365
      $region42: #{netg_forward.11} parent=5 // pred_check_branch
        %368 = sbr.rel (%p366) target = $region44
      $region43: #{netg_forward.11} parent=5 // pred_region
        %s369 = ssub.s32 %s11, 2
        // Predicated region
        $region45: #{netg_forward.11} parent=43 // pred_check
          %p370 = pneg %p108
        $region46: #{netg_forward.11} parent=43 // pred_check_branch
          %372 = sbr.rel (%p370) target = $region48
        $region47: #{netg_forward.11} parent=43 // pred_region
          %s373 = smul.u32 8, %s17
          %p374 = scmp.lt.s32.totalorder %s373, 15
          %s375 = scalar_select %p374, %s373, 15
          %s376 = smul.addr %s375, 8
          %s377 = scalar_lea.vmem %s3, %s376
        $region48: #{netg_forward.11} parent=43 // pred_fallthru
          _
      $region44: #{netg_forward.11} parent=5 // pred_fallthru
        _
    $region6: #{netg_forward.11} parent=1 // loop_footer
      %s15 = sadd.s32 1, %s11
    $region7: #{netg_forward.11} parent=1 // loop_footer_branch
      %10 = sbr.rel target = $region3
    $region8: #{netg_forward.11} parent=1 // loop_exit
      _
    %378 = vsyncpa [#allocation4], 1
    %s379 = scalar_lea.sflag [#allocation4], 1
    %380 = vsyncpa %s379, 1

// kernel: netg_forward.12
$region0: #{netg_forward.12}
  #allocation0 [shape = 'u32[]', space=smem, size = 0x4, offset = 0x4, fixed_abs, tag = 'smem constant byte address 0x4 - core index']
  #allocation1 [shape = 'u32[144,128]{1,0:T(1,128)}', space=vmem, size = 0x12000, scoped, tag = 'internal scratch']
  #allocation2 [shape = 'f32[1]{0:T(128)S(6)}', space=smem, size = 0x200, scoped, tag = 'scoped memory for netg_forward.12']
  %s0 = inlined_call_operand.<no memory space> [shape: f32[1], index: 0, kind: input, shape index: {}]
  %s1 = inlined_call_operand.vmem [shape: bf16[128,576], index: 1, kind: input, shape index: {}]
  %s2 = inlined_call_operand.vmem [shape: bf16[576,64], index: 2, kind: input, shape index: {}]
  %s3 = inlined_call_operand.vmem [shape: f32[128,64], index: 3, kind: output, shape index: {}]
  %s4 = sld [smem:[#allocation0]]
  $region22: #{netg_forward.12} parent=0
    _
  %s6 = ssub.s32 1, %s4
  %s7 = scalar_select 0, %s6, %s4
  %8 = sst [smem:[#allocation2]] %s0
  // Predicated region
  $region2: #{netg_forward.12} parent=0 // pred_check
    _
  $region3: #{netg_forward.12} parent=0 // pred_check_branch
    %10 = sbr.rel (0) target = $region5
  $region4: #{netg_forward.12} parent=0 // pred_region
    _
  $region5: #{netg_forward.12} parent=0 // pred_fallthru
    _
  // Predicated region
  $region6: #{netg_forward.12} parent=0 // pred_check
    _
  $region7: #{netg_forward.12} parent=0 // pred_check_branch
    %12 = sbr.rel (0) target = $region9
  $region8: #{netg_forward.12} parent=0 // pred_region
    _
  $region9: #{netg_forward.12} parent=0 // pred_fallthru
    _
  // Predicated region
  $region10: #{netg_forward.12} parent=0 // pred_check
    _
  $region11: #{netg_forward.12} parent=0 // pred_check_branch
    %14 = sbr.rel (0) target = $region13
  $region12: #{netg_forward.12} parent=0 // pred_region
    _
  $region13: #{netg_forward.12} parent=0 // pred_fallthru
    _
  %v16 = vld [vmem:[%s1] sm:$0xff]
  %v17 = vld [vmem:[%s1 + $0x8] sm:$0xff]
  %v18 = vld [vmem:[%s1 + $0x10] sm:$0xf]
  %v19 = vld [vmem:[%s1 + $0x14] sm:$0xff]
  %v20 = vld [vmem:[%s1 + $0x1c] sm:$0xff]
  %v21 = vld [vmem:[%s1 + $0x24] sm:$0xf]
  %v22 = vld [vmem:[%s1 + $0x28] sm:$0xff]
  %v23 = vld [vmem:[%s1 + $0x30] sm:$0xff]
  %v24 = vld [vmem:[%s1 + $0x38] sm:$0xf]
  %v25 = vld [vmem:[%s1 + $0x3c] sm:$0xff]
  %v26 = vld [vmem:[%s1 + $0x44] sm:$0xff]
  %v27 = vld [vmem:[%s1 + $0x4c] sm:$0xf]
  %v28 = vld [vmem:[%s1 + $0x50] sm:$0xff]
  %v29 = vld [vmem:[%s1 + $0x58] sm:$0xff]
  %v30 = vld [vmem:[%s1 + $0x60] sm:$0xf]
  %v31 = vld [vmem:[%s1 + $0x64] sm:$0xff]
  %v32 = vld [vmem:[%s1 + $0x6c] sm:$0xff]
  %v33 = vld [vmem:[%s1 + $0x74] sm:$0xf]
  %v34 = vld [vmem:[%s1 + $0x78] sm:$0xff]
  %v35 = vld [vmem:[%s1 + $0x80] sm:$0xff]
  %v36 = vld [vmem:[%s1 + $0x88] sm:$0xf]
  %v37 = vld [vmem:[%s1 + $0x8c] sm:$0xff]
  %v38 = vld [vmem:[%s1 + $0x94] sm:$0xff]
  %v39 = vld [vmem:[%s1 + $0x9c] sm:$0xf]
  %v40 = vld [vmem:[%s1 + $0xa0] sm:$0xff]
  %v41 = vld [vmem:[%s1 + $0xa8] sm:$0xff]
  %v42 = vld [vmem:[%s1 + $0xb0] sm:$0xf]
  %v43 = vld [vmem:[%s1 + $0xb4] sm:$0xff]
  %v44 = vld [vmem:[%s1 + $0xbc] sm:$0xff]
  %v45 = vld [vmem:[%s1 + $0xc4] sm:$0xf]
  %v46 = vld [vmem:[%s1 + $0xc8] sm:$0xff]
  %v47 = vld [vmem:[%s1 + $0xd0] sm:$0xff]
  %v48 = vld [vmem:[%s1 + $0xd8] sm:$0xf]
  %v49 = vld [vmem:[%s1 + $0xdc] sm:$0xff]
  %v50 = vld [vmem:[%s1 + $0xe4] sm:$0xff]
  %v51 = vld [vmem:[%s1 + $0xec] sm:$0xf]
  %v52 = vld [vmem:[%s1 + $0xf0] sm:$0xff]
  %v53 = vld [vmem:[%s1 + $0xf8] sm:$0xff]
  %v54 = vld [vmem:[%s1 + $0x100] sm:$0xf]
  %v55 = vld [vmem:[%s1 + $0x104] sm:$0xff]
  %v56 = vld [vmem:[%s1 + $0x10c] sm:$0xff]
  %v57 = vld [vmem:[%s1 + $0x114] sm:$0xf]
  %v58 = vld [vmem:[%s1 + $0x118] sm:$0xff]
  %v59 = vld [vmem:[%s1 + $0x120] sm:$0xff]
  %v60 = vld [vmem:[%s1 + $0x128] sm:$0xf]
  %v61 = vld [vmem:[%s1 + $0x12c] sm:$0xff]
  %v62 = vld [vmem:[%s1 + $0x134] sm:$0xff]
  %v63 = vld [vmem:[%s1 + $0x13c] sm:$0xf]
  %v64 = vld [vmem:[%s2] sm:$0xf]
  %v65 = vld [vmem:[%s2 + $0x4] sm:$0xf]
  %v66 = vld [vmem:[%s2 + $0x8] sm:$0xf]
  %v67 = vld [vmem:[%s2 + $0xc] sm:$0xf]
  %v68 = vld [vmem:[%s2 + $0x10] sm:$0xf]
  %v69 = vld [vmem:[%s2 + $0x14] sm:$0xf]
  %v70 = vld [vmem:[%s2 + $0x18] sm:$0xf]
  %v71 = vld [vmem:[%s2 + $0x1c] sm:$0xf]
  %v72 = vld [vmem:[%s2 + $0x20] sm:$0xf]
  %v73 = vld [vmem:[%s2 + $0x24] sm:$0xf]
  %v74 = vld [vmem:[%s2 + $0x28] sm:$0xf]
  %v75 = vld [vmem:[%s2 + $0x2c] sm:$0xf]
  %v76 = vld [vmem:[%s2 + $0x30] sm:$0xf]
  %v77 = vld [vmem:[%s2 + $0x34] sm:$0xf]
  %v78 = vld [vmem:[%s2 + $0x38] sm:$0xf]
  %v79 = vld [vmem:[%s2 + $0x3c] sm:$0xf]
  %v80 = vld [vmem:[%s2 + $0x40] sm:$0xf]
  %v81 = vld [vmem:[%s2 + $0x44] sm:$0xf]
  %v82 = vld [vmem:[%s2 + $0x48] sm:$0xf]
  %v83 = vld [vmem:[%s2 + $0x4c] sm:$0xf]
  %v84 = vld [vmem:[%s2 + $0x50] sm:$0xf]
  %v85 = vld [vmem:[%s2 + $0x54] sm:$0xf]
  %v86 = vld [vmem:[%s2 + $0x58] sm:$0xf]
  %v87 = vld [vmem:[%s2 + $0x5c] sm:$0xf]
  %v88 = vld [vmem:[%s2 + $0x60] sm:$0xf]
  %v89 = vld [vmem:[%s2 + $0x64] sm:$0xf]
  %v90 = vld [vmem:[%s2 + $0x68] sm:$0xf]
  %v91 = vld [vmem:[%s2 + $0x6c] sm:$0xf]
  %v92 = vld [vmem:[%s2 + $0x70] sm:$0xf]
  %v93 = vld [vmem:[%s2 + $0x74] sm:$0xf]
  %v94 = vld [vmem:[%s2 + $0x78] sm:$0xf]
  %v95 = vld [vmem:[%s2 + $0x7c] sm:$0xf]
  %v96 = vld [vmem:[%s2 + $0x80] sm:$0xf]
  %v97 = vld [vmem:[%s2 + $0x84] sm:$0xf]
  %v98 = vld [vmem:[%s2 + $0x88] sm:$0xf]
  %v99 = vld [vmem:[%s2 + $0x8c] sm:$0xf]
  %v100 = vld [vmem:[%s2 + $0x90] sm:$0xf]
  %v101 = vld [vmem:[%s2 + $0x94] sm:$0xf]
  %v102 = vld [vmem:[%s2 + $0x98] sm:$0xf]
  %v103 = vld [vmem:[%s2 + $0x9c] sm:$0xf]
  %v104 = vld [vmem:[%s2 + $0xa0] sm:$0xf]
  %v105 = vld [vmem:[%s2 + $0xa4] sm:$0xf]
  %v106 = vld [vmem:[%s2 + $0xa8] sm:$0xf]
  %v107 = vld [vmem:[%s2 + $0xac] sm:$0xf]
  %v108 = vld [vmem:[%s2 + $0xb0] sm:$0xf]
  %v109 = vld [vmem:[%s2 + $0xb4] sm:$0xf]
  %v110 = vld [vmem:[%s2 + $0xb8] sm:$0xf]
  %v111 = vld [vmem:[%s2 + $0xbc] sm:$0xf]
  %v112 = vld [vmem:[%s2 + $0xc0] sm:$0xf]
  %v113 = vld [vmem:[%s2 + $0xc4] sm:$0xf]
  %v114 = vld [vmem:[%s2 + $0xc8] sm:$0xf]
  %v115 = vld [vmem:[%s2 + $0xcc] sm:$0xf]
  %v116 = vld [vmem:[%s2 + $0xd0] sm:$0xf]
  %v117 = vld [vmem:[%s2 + $0xd4] sm:$0xf]
  %v118 = vld [vmem:[%s2 + $0xd8] sm:$0xf]
  %v119 = vld [vmem:[%s2 + $0xdc] sm:$0xf]
  %v120 = vld [vmem:[%s2 + $0xe0] sm:$0xf]
  %v121 = vld [vmem:[%s2 + $0xe4] sm:$0xf]
  %v122 = vld [vmem:[%s2 + $0xe8] sm:$0xf]
  %v123 = vld [vmem:[%s2 + $0xec] sm:$0xf]
  %v124 = vld [vmem:[%s2 + $0xf0] sm:$0xf]
  %v125 = vld [vmem:[%s2 + $0xf4] sm:$0xf]
  %v126 = vld [vmem:[%s2 + $0xf8] sm:$0xf]
  %v127 = vld [vmem:[%s2 + $0xfc] sm:$0xf]
  %v128 = vld [vmem:[%s2 + $0x100] sm:$0xf]
  %v129 = vld [vmem:[%s2 + $0x104] sm:$0xf]
  %v130 = vld [vmem:[%s2 + $0x108] sm:$0xf]
  %v131 = vld [vmem:[%s2 + $0x10c] sm:$0xf]
  %v132 = vld [vmem:[%s2 + $0x110] sm:$0xf]
  %v133 = vld [vmem:[%s2 + $0x114] sm:$0xf]
  %v134 = vld [vmem:[%s2 + $0x118] sm:$0xf]
  %v135 = vld [vmem:[%s2 + $0x11c] sm:$0xf]
  %v184 = vunpack.c.l.b16 %v16
  %v185 = vunpack.c.h.b16 %v16
  %v186 = vunpack.c.l.b16 %v17
  %v187 = vunpack.c.h.b16 %v17
  %v188 = vunpack.c.l.b16 %v18
  %v189 = vunpack.c.l.b16 %v19
  %v190 = vunpack.c.h.b16 %v19
  %v191 = vunpack.c.l.b16 %v20
  %v192 = vunpack.c.h.b16 %v20
  %v193 = vunpack.c.l.b16 %v21
  %v194 = vunpack.c.l.b16 %v22
  %v195 = vunpack.c.h.b16 %v22
  %v196 = vunpack.c.l.b16 %v23
  %v197 = vunpack.c.h.b16 %v23
  %v198 = vunpack.c.l.b16 %v24
  %v199 = vunpack.c.l.b16 %v25
  %v200 = vunpack.c.h.b16 %v25
  %v201 = vunpack.c.l.b16 %v26
  %v202 = vunpack.c.h.b16 %v26
  %v203 = vunpack.c.l.b16 %v27
  %v204 = vunpack.c.l.b16 %v28
  %v205 = vunpack.c.h.b16 %v28
  %v206 = vunpack.c.l.b16 %v29
  %v207 = vunpack.c.h.b16 %v29
  %v208 = vunpack.c.l.b16 %v30
  %v209 = vunpack.c.l.b16 %v31
  %v210 = vunpack.c.h.b16 %v31
  %v211 = vunpack.c.l.b16 %v32
  %v212 = vunpack.c.h.b16 %v32
  %v213 = vunpack.c.l.b16 %v33
  %v214 = vunpack.c.l.b16 %v34
  %v215 = vunpack.c.h.b16 %v34
  %v216 = vunpack.c.l.b16 %v35
  %v217 = vunpack.c.h.b16 %v35
  %v218 = vunpack.c.l.b16 %v36
  %v219 = vunpack.c.l.b16 %v37
  %v220 = vunpack.c.h.b16 %v37
  %v221 = vunpack.c.l.b16 %v38
  %v222 = vunpack.c.h.b16 %v38
  %v223 = vunpack.c.l.b16 %v39
  %v224 = vunpack.c.l.b16 %v40
  %v225 = vunpack.c.h.b16 %v40
  %v226 = vunpack.c.l.b16 %v41
  %v227 = vunpack.c.h.b16 %v41
  %v228 = vunpack.c.l.b16 %v42
  %v229 = vunpack.c.l.b16 %v43
  %v230 = vunpack.c.h.b16 %v43
  %v231 = vunpack.c.l.b16 %v44
  %v232 = vunpack.c.h.b16 %v44
  %v233 = vunpack.c.l.b16 %v45
  %v234 = vunpack.c.l.b16 %v46
  %v235 = vunpack.c.h.b16 %v46
  %v236 = vunpack.c.l.b16 %v47
  %v237 = vunpack.c.h.b16 %v47
  %v238 = vunpack.c.l.b16 %v48
  %v239 = vunpack.c.l.b16 %v49
  %v240 = vunpack.c.h.b16 %v49
  %v241 = vunpack.c.l.b16 %v50
  %v242 = vunpack.c.h.b16 %v50
  %v243 = vunpack.c.l.b16 %v51
  %v244 = vunpack.c.l.b16 %v52
  %v245 = vunpack.c.h.b16 %v52
  %v246 = vunpack.c.l.b16 %v53
  %v247 = vunpack.c.h.b16 %v53
  %v248 = vunpack.c.l.b16 %v54
  %v249 = vunpack.c.l.b16 %v55
  %v250 = vunpack.c.h.b16 %v55
  %v251 = vunpack.c.l.b16 %v56
  %v252 = vunpack.c.h.b16 %v56
  %v253 = vunpack.c.l.b16 %v57
  %v254 = vunpack.c.l.b16 %v58
  %v255 = vunpack.c.h.b16 %v58
  %v256 = vunpack.c.l.b16 %v59
  %v257 = vunpack.c.h.b16 %v59
  %v258 = vunpack.c.l.b16 %v60
  %v259 = vunpack.c.l.b16 %v61
  %v260 = vunpack.c.h.b16 %v61
  %v261 = vunpack.c.l.b16 %v62
  %v262 = vunpack.c.h.b16 %v62
  %v263 = vunpack.c.l.b16 %v63
  %v264 = vpack.c.b16 %v189, %v184
  %v265 = vpack.c.b16 %v190, %v185
  %v266 = vpack.c.b16 %v191, %v186
  %v267 = vpack.c.b16 %v192, %v187
  %v268 = vpack.c.b16 %v193, %v188
  %v269 = vpack.c.b16 %v199, %v194
  %v270 = vpack.c.b16 %v200, %v195
  %v271 = vpack.c.b16 %v201, %v196
  %v272 = vpack.c.b16 %v202, %v197
  %v273 = vpack.c.b16 %v203, %v198
  %v274 = vpack.c.b16 %v209, %v204
  %v275 = vpack.c.b16 %v210, %v205
  %v276 = vpack.c.b16 %v211, %v206
  %v277 = vpack.c.b16 %v212, %v207
  %v278 = vpack.c.b16 %v213, %v208
  %v279 = vpack.c.b16 %v219, %v214
  %v280 = vpack.c.b16 %v220, %v215
  %v281 = vpack.c.b16 %v221, %v216
  %v282 = vpack.c.b16 %v222, %v217
  %v283 = vpack.c.b16 %v223, %v218
  %v284 = vpack.c.b16 %v229, %v224
  %v285 = vpack.c.b16 %v230, %v225
  %v286 = vpack.c.b16 %v231, %v226
  %v287 = vpack.c.b16 %v232, %v227
  %v288 = vpack.c.b16 %v233, %v228
  %v289 = vpack.c.b16 %v239, %v234
  %v290 = vpack.c.b16 %v240, %v235
  %v291 = vpack.c.b16 %v241, %v236
  %v292 = vpack.c.b16 %v242, %v237
  %v293 = vpack.c.b16 %v243, %v238
  %v294 = vpack.c.b16 %v249, %v244
  %v295 = vpack.c.b16 %v250, %v245
  %v296 = vpack.c.b16 %v251, %v246
  %v297 = vpack.c.b16 %v252, %v247
  %v298 = vpack.c.b16 %v253, %v248
  %v299 = vpack.c.b16 %v259, %v254
  %v300 = vpack.c.b16 %v260, %v255
  %v301 = vpack.c.b16 %v261, %v256
  %v302 = vpack.c.b16 %v262, %v257
  %v303 = vpack.c.b16 %v263, %v258
  %v408 = vunpack.c.l.b16 %v64
  %v409 = vunpack.c.l.b16 %v65
  %v410 = vunpack.c.l.b16 %v66
  %v411 = vunpack.c.l.b16 %v67
  %v412 = vunpack.c.l.b16 %v68
  %v413 = vunpack.c.l.b16 %v69
  %v414 = vunpack.c.l.b16 %v70
  %v415 = vunpack.c.l.b16 %v71
  %v416 = vunpack.c.l.b16 %v72
  %v417 = vunpack.c.l.b16 %v73
  %v418 = vunpack.c.l.b16 %v74
  %v419 = vunpack.c.l.b16 %v75
  %v420 = vunpack.c.l.b16 %v76
  %v421 = vunpack.c.l.b16 %v77
  %v422 = vunpack.c.l.b16 %v78
  %v423 = vunpack.c.l.b16 %v79
  %v424 = vunpack.c.l.b16 %v80
  %v425 = vunpack.c.l.b16 %v81
  %v426 = vunpack.c.l.b16 %v82
  %v427 = vunpack.c.l.b16 %v83
  %v428 = vunpack.c.l.b16 %v84
  %v429 = vunpack.c.l.b16 %v85
  %v430 = vunpack.c.l.b16 %v86
  %v431 = vunpack.c.l.b16 %v87
  %v432 = vunpack.c.l.b16 %v88
  %v433 = vunpack.c.l.b16 %v89
  %v434 = vunpack.c.l.b16 %v90
  %v435 = vunpack.c.l.b16 %v91
  %v436 = vunpack.c.l.b16 %v92
  %v437 = vunpack.c.l.b16 %v93
  %v438 = vunpack.c.l.b16 %v94
  %v439 = vunpack.c.l.b16 %v95
  %v440 = vunpack.c.l.b16 %v96
  %v441 = vunpack.c.l.b16 %v97
  %v442 = vunpack.c.l.b16 %v98
  %v443 = vunpack.c.l.b16 %v99
  %v444 = vunpack.c.l.b16 %v100
  %v445 = vunpack.c.l.b16 %v101
  %v446 = vunpack.c.l.b16 %v102
  %v447 = vunpack.c.l.b16 %v103
  %v448 = vunpack.c.l.b16 %v104
  %v449 = vunpack.c.l.b16 %v105
  %v450 = vunpack.c.l.b16 %v106
  %v451 = vunpack.c.l.b16 %v107
  %v452 = vunpack.c.l.b16 %v108
  %v453 = vunpack.c.l.b16 %v109
  %v454 = vunpack.c.l.b16 %v110
  %v455 = vunpack.c.l.b16 %v111
  %v456 = vunpack.c.l.b16 %v112
  %v457 = vunpack.c.l.b16 %v113
  %v458 = vunpack.c.l.b16 %v114
  %v459 = vunpack.c.l.b16 %v115
  %v460 = vunpack.c.l.b16 %v116
  %v461 = vunpack.c.l.b16 %v117
  %v462 = vunpack.c.l.b16 %v118
  %v463 = vunpack.c.l.b16 %v119
  %v464 = vunpack.c.l.b16 %v120
  %v465 = vunpack.c.l.b16 %v121
  %v466 = vunpack.c.l.b16 %v122
  %v467 = vunpack.c.l.b16 %v123
  %v468 = vunpack.c.l.b16 %v124
  %v469 = vunpack.c.l.b16 %v125
  %v470 = vunpack.c.l.b16 %v126
  %v471 = vunpack.c.l.b16 %v127
  %v472 = vunpack.c.l.b16 %v128
  %v473 = vunpack.c.l.b16 %v129
  %v474 = vunpack.c.l.b16 %v130
  %v475 = vunpack.c.l.b16 %v131
  %v476 = vunpack.c.l.b16 %v132
  %v477 = vunpack.c.l.b16 %v133
  %v478 = vunpack.c.l.b16 %v134
  %v479 = vunpack.c.l.b16 %v135
  %v480 = vpack.c.b16 %v409, %v408
  %v481 = vpack.c.b16 %v411, %v410
  %v482 = vpack.c.b16 %v413, %v412
  %v483 = vpack.c.b16 %v415, %v414
  %v484 = vpack.c.b16 %v417, %v416
  %v485 = vpack.c.b16 %v419, %v418
  %v486 = vpack.c.b16 %v421, %v420
  %v487 = vpack.c.b16 %v423, %v422
  %v488 = vpack.c.b16 %v425, %v424
  %v489 = vpack.c.b16 %v427, %v426
  %v490 = vpack.c.b16 %v429, %v428
  %v491 = vpack.c.b16 %v431, %v430
  %v492 = vpack.c.b16 %v433, %v432
  %v493 = vpack.c.b16 %v435, %v434
  %v494 = vpack.c.b16 %v437, %v436
  %v495 = vpack.c.b16 %v439, %v438
  %v496 = vpack.c.b16 %v441, %v440
  %v497 = vpack.c.b16 %v443, %v442
  %v498 = vpack.c.b16 %v445, %v444
  %v499 = vpack.c.b16 %v447, %v446
  %v500 = vpack.c.b16 %v449, %v448
  %v501 = vpack.c.b16 %v451, %v450
  %v502 = vpack.c.b16 %v453, %v452
  %v503 = vpack.c.b16 %v455, %v454
  %v504 = vpack.c.b16 %v457, %v456
  %v505 = vpack.c.b16 %v459, %v458
  %v506 = vpack.c.b16 %v461, %v460
  %v507 = vpack.c.b16 %v463, %v462
  %v508 = vpack.c.b16 %v465, %v464
  %v509 = vpack.c.b16 %v467, %v466
  %v510 = vpack.c.b16 %v469, %v468
  %v511 = vpack.c.b16 %v471, %v470
  %v512 = vpack.c.b16 %v473, %v472
  %v513 = vpack.c.b16 %v475, %v474
  %v514 = vpack.c.b16 %v477, %v476
  %v515 = vpack.c.b16 %v479, %v478
  %vm552 = vcmask 523264
  %v554 = vsel %vm552, %v268, 0
  %v557 = vsel %vm552, %v273, 0
  %v560 = vsel %vm552, %v278, 0
  %v563 = vsel %vm552, %v283, 0
  %v566 = vsel %vm552, %v288, 0
  %v569 = vsel %vm552, %v293, 0
  %v572 = vsel %vm552, %v298, 0
  %v575 = vsel %vm552, %v303, 0
  %577 = vmatprep.subr.bf16.mxu0 0
  %578 = vmatpush1.bf16.msra.mxu0 %v487
  %579 = vmatprep.subr.bf16.mxu0 0
  %580 = vmatpush1.bf16.msra.mxu0 %v486
  %581 = vmatprep.subr.bf16.mxu0 0
  %582 = vmatpush1.bf16.msra.mxu0 %v485
  %583 = vmatprep.subr.bf16.mxu0 0
  %584 = vmatpush1.bf16.msra.mxu0 %v484
  %585 = vmatprep.subr.bf16.mxu0 0
  %586 = vmatpush1.bf16.msra.mxu0 %v483
  %587 = vmatprep.subr.bf16.mxu0 0
  %588 = vmatpush1.bf16.msra.mxu0 %v482
  %589 = vmatprep.subr.bf16.mxu0 0
  %590 = vmatpush1.bf16.msra.mxu0 %v481
  %591 = vmatprep.subr.bf16.mxu0 0
  %592 = vmatpush1.bf16.msra.mxu0 %v480
  %593 = vmatprep.subr.bf16.mxu0 0
  %594 = vmatpush2.bf16.msra.mxu0 %v495
  %595 = vmatprep.subr.bf16.mxu0 0
  %596 = vmatpush2.bf16.msra.mxu0 %v494
  %597 = vmatprep.subr.bf16.mxu0 0
  %598 = vmatpush2.bf16.msra.mxu0 %v493
  %599 = vmatprep.subr.bf16.mxu0 0
  %600 = vmatpush2.bf16.msra.mxu0 %v492
  %601 = vmatprep.subr.bf16.mxu0 0
  %602 = vmatpush2.bf16.msra.mxu0 %v491
  %603 = vmatprep.subr.bf16.mxu0 0
  %604 = vmatpush2.bf16.msra.mxu0 %v490
  %605 = vmatprep.subr.bf16.mxu0 0
  %606 = vmatpush2.bf16.msra.mxu0 %v489
  %607 = vmatprep.subr.bf16.mxu0 0
  %608 = vmatpush2.bf16.msra.mxu0 %v488
  %609 = vmatprep.mubr.bf16.mxu0 %v265
  %610 = vmatmul.mubr.bf16.gmra.mxu0 %v264
  %v611 = vpop.f32.mrf.mxu0
  %v612 = vadd.f32 0.0, %v611
  %v613 = vpop.f32.mrf.mxu0
  %v614 = vpop.f32.mrf.mxu0
  %v615 = vadd.f32 0.0, %v614
  %v616 = vpop.f32.mrf.mxu0
  %617 = vmatprep.mubr.bf16.mxu0 %v270
  %618 = vmatmul.mubr.bf16.gmra.mxu0 %v269
  %v619 = vpop.f32.mrf.mxu0
  %v620 = vadd.f32 0.0, %v619
  %v621 = vpop.f32.mrf.mxu0
  %v622 = vpop.f32.mrf.mxu0
  %v623 = vadd.f32 0.0, %v622
  %v624 = vpop.f32.mrf.mxu0
  %625 = vmatprep.mubr.bf16.mxu0 %v275
  %626 = vmatmul.mubr.bf16.gmra.mxu0 %v274
  %v627 = vpop.f32.mrf.mxu0
  %v628 = vadd.f32 0.0, %v627
  %v629 = vpop.f32.mrf.mxu0
  %v630 = vpop.f32.mrf.mxu0
  %v631 = vadd.f32 0.0, %v630
  %v632 = vpop.f32.mrf.mxu0
  %633 = vmatprep.mubr.bf16.mxu0 %v280
  %634 = vmatmul.mubr.bf16.gmra.mxu0 %v279
  %v635 = vpop.f32.mrf.mxu0
  %v636 = vadd.f32 0.0, %v635
  %v637 = vpop.f32.mrf.mxu0
  %v638 = vpop.f32.mrf.mxu0
  %v639 = vadd.f32 0.0, %v638
  %v640 = vpop.f32.mrf.mxu0
  %641 = vmatprep.mubr.bf16.mxu0 %v285
  %642 = vmatmul.mubr.bf16.gmra.mxu0 %v284
  %v643 = vpop.f32.mrf.mxu0
  %v644 = vadd.f32 0.0, %v643
  %v645 = vpop.f32.mrf.mxu0
  %v646 = vpop.f32.mrf.mxu0
  %v647 = vadd.f32 0.0, %v646
  %v648 = vpop.f32.mrf.mxu0
  %649 = vmatprep.mubr.bf16.mxu0 %v290
  %650 = vmatmul.mubr.bf16.gmra.mxu0 %v289
  %v651 = vpop.f32.mrf.mxu0
  %v652 = vadd.f32 0.0, %v651
  %v653 = vpop.f32.mrf.mxu0
  %v654 = vpop.f32.mrf.mxu0
  %v655 = vadd.f32 0.0, %v654
  %v656 = vpop.f32.mrf.mxu0
  %657 = vmatprep.mubr.bf16.mxu0 %v295
  %658 = vmatmul.mubr.bf16.gmra.mxu0 %v294
  %v659 = vpop.f32.mrf.mxu0
  %v660 = vadd.f32 0.0, %v659
  %v661 = vpop.f32.mrf.mxu0
  %v662 = vpop.f32.mrf.mxu0
  %v663 = vadd.f32 0.0, %v662
  %v664 = vpop.f32.mrf.mxu0
  %665 = vmatprep.mubr.bf16.mxu0 %v300
  %666 = vmatmul.mubr.bf16.gmra.mxu0 %v299
  %v667 = vpop.f32.mrf.mxu0
  %v668 = vadd.f32 0.0, %v667
  %v669 = vpop.f32.mrf.mxu0
  %v670 = vpop.f32.mrf.mxu0
  %v671 = vadd.f32 0.0, %v670
  %v672 = vpop.f32.mrf.mxu0
  %673 = vdwg.mxu0
  %674 = vmatprep.subr.bf16.mxu0 0
  %675 = vmatpush1.bf16.msra.mxu0 %v503
  %676 = vmatprep.subr.bf16.mxu0 0
  %677 = vmatpush1.bf16.msra.mxu0 %v502
  %678 = vmatprep.subr.bf16.mxu0 0
  %679 = vmatpush1.bf16.msra.mxu0 %v501
  %680 = vmatprep.subr.bf16.mxu0 0
  %681 = vmatpush1.bf16.msra.mxu0 %v500
  %682 = vmatprep.subr.bf16.mxu0 0
  %683 = vmatpush1.bf16.msra.mxu0 %v499
  %684 = vmatprep.subr.bf16.mxu0 0
  %685 = vmatpush1.bf16.msra.mxu0 %v498
  %686 = vmatprep.subr.bf16.mxu0 0
  %687 = vmatpush1.bf16.msra.mxu0 %v497
  %688 = vmatprep.subr.bf16.mxu0 0
  %689 = vmatpush1.bf16.msra.mxu0 %v496
  %690 = vmatprep.subr.bf16.mxu0 0
  %691 = vmatpush2.bf16.msra.mxu0 %v511
  %692 = vmatprep.subr.bf16.mxu0 0
  %693 = vmatpush2.bf16.msra.mxu0 %v510
  %694 = vmatprep.subr.bf16.mxu0 0
  %695 = vmatpush2.bf16.msra.mxu0 %v509
  %696 = vmatprep.subr.bf16.mxu0 0
  %697 = vmatpush2.bf16.msra.mxu0 %v508
  %698 = vmatprep.subr.bf16.mxu0 0
  %699 = vmatpush2.bf16.msra.mxu0 %v507
  %700 = vmatprep.subr.bf16.mxu0 0
  %701 = vmatpush2.bf16.msra.mxu0 %v506
  %702 = vmatprep.subr.bf16.mxu0 0
  %703 = vmatpush2.bf16.msra.mxu0 %v505
  %704 = vmatprep.subr.bf16.mxu0 0
  %705 = vmatpush2.bf16.msra.mxu0 %v504
  %706 = vmatprep.mubr.bf16.mxu0 %v267
  %707 = vmatmul.mubr.bf16.gmra.mxu0 %v266
  %v708 = vpop.f32.mrf.mxu0
  %v709 = vadd.f32 %v612, %v708
  %v710 = vpop.f32.mrf.mxu0
  %v711 = vpop.f32.mrf.mxu0
  %v712 = vadd.f32 %v615, %v711
  %v713 = vpop.f32.mrf.mxu0
  %714 = vmatprep.mubr.bf16.mxu0 %v272
  %715 = vmatmul.mubr.bf16.gmra.mxu0 %v271
  %v716 = vpop.f32.mrf.mxu0
  %v717 = vadd.f32 %v620, %v716
  %v718 = vpop.f32.mrf.mxu0
  %v719 = vpop.f32.mrf.mxu0
  %v720 = vadd.f32 %v623, %v719
  %v721 = vpop.f32.mrf.mxu0
  %722 = vmatprep.mubr.bf16.mxu0 %v277
  %723 = vmatmul.mubr.bf16.gmra.mxu0 %v276
  %v724 = vpop.f32.mrf.mxu0
  %v725 = vadd.f32 %v628, %v724
  %v726 = vpop.f32.mrf.mxu0
  %v727 = vpop.f32.mrf.mxu0
  %v728 = vadd.f32 %v631, %v727
  %v729 = vpop.f32.mrf.mxu0
  %730 = vmatprep.mubr.bf16.mxu0 %v282
  %731 = vmatmul.mubr.bf16.gmra.mxu0 %v281
  %v732 = vpop.f32.mrf.mxu0
  %v733 = vadd.f32 %v636, %v732
  %v734 = vpop.f32.mrf.mxu0
  %v735 = vpop.f32.mrf.mxu0
  %v736 = vadd.f32 %v639, %v735
  %v737 = vpop.f32.mrf.mxu0
  %738 = vmatprep.mubr.bf16.mxu0 %v287
  %739 = vmatmul.mubr.bf16.gmra.mxu0 %v286
  %v740 = vpop.f32.mrf.mxu0
  %v741 = vadd.f32 %v644, %v740
  %v742 = vpop.f32.mrf.mxu0
  %v743 = vpop.f32.mrf.mxu0
  %v744 = vadd.f32 %v647, %v743
  %v745 = vpop.f32.mrf.mxu0
  %746 = vmatprep.mubr.bf16.mxu0 %v292
  %747 = vmatmul.mubr.bf16.gmra.mxu0 %v291
  %v748 = vpop.f32.mrf.mxu0
  %v749 = vadd.f32 %v652, %v748
  %v750 = vpop.f32.mrf.mxu0
  %v751 = vpop.f32.mrf.mxu0
  %v752 = vadd.f32 %v655, %v751
  %v753 = vpop.f32.mrf.mxu0
  %754 = vmatprep.mubr.bf16.mxu0 %v297
  %755 = vmatmul.mubr.bf16.gmra.mxu0 %v296
  %v756 = vpop.f32.mrf.mxu0
  %v757 = vadd.f32 %v660, %v756
  %v758 = vpop.f32.mrf.mxu0
  %v759 = vpop.f32.mrf.mxu0
  %v760 = vadd.f32 %v663, %v759
  %v761 = vpop.f32.mrf.mxu0
  %762 = vmatprep.mubr.bf16.mxu0 %v302
  %763 = vmatmul.mubr.bf16.gmra.mxu0 %v301
  %v764 = vpop.f32.mrf.mxu0
  %v765 = vadd.f32 %v668, %v764
  %v766 = vpop.f32.mrf.mxu0
  %v767 = vpop.f32.mrf.mxu0
  %v768 = vadd.f32 %v671, %v767
  %v769 = vpop.f32.mrf.mxu0
  %770 = vdwg.mxu0
  %771 = vmatprep.subr.bf16.mxu0 0
  %772 = vmatpush1.bf16.msra.mxu0 0
  %773 = vmatprep.subr.bf16.mxu0 0
  %774 = vmatpush1.bf16.msra.mxu0 0
  %775 = vmatprep.subr.bf16.mxu0 0
  %776 = vmatpush1.bf16.msra.mxu0 0
  %777 = vmatprep.subr.bf16.mxu0 0
  %778 = vmatpush1.bf16.msra.mxu0 0
  %779 = vmatprep.subr.bf16.mxu0 0
  %780 = vmatpush1.bf16.msra.mxu0 %v515
  %781 = vmatprep.subr.bf16.mxu0 0
  %782 = vmatpush1.bf16.msra.mxu0 %v514
  %783 = vmatprep.subr.bf16.mxu0 0
  %784 = vmatpush1.bf16.msra.mxu0 %v513
  %785 = vmatprep.subr.bf16.mxu0 0
  %786 = vmatpush1.bf16.msra.mxu0 %v512
  %787 = vmatprep.subr.bf16.mxu0 0
  %788 = vmatpush2.bf16.msra.mxu0 0
  %789 = vmatprep.subr.bf16.mxu0 0
  %790 = vmatpush2.bf16.msra.mxu0 0
  %791 = vmatprep.subr.bf16.mxu0 0
  %792 = vmatpush2.bf16.msra.mxu0 0
  %793 = vmatprep.subr.bf16.mxu0 0
  %794 = vmatpush2.bf16.msra.mxu0 0
  %795 = vmatprep.subr.bf16.mxu0 0
  %796 = vmatpush2.bf16.msra.mxu0 0
  %797 = vmatprep.subr.bf16.mxu0 0
  %798 = vmatpush2.bf16.msra.mxu0 0
  %799 = vmatprep.subr.bf16.mxu0 0
  %800 = vmatpush2.bf16.msra.mxu0 0
  %801 = vmatprep.subr.bf16.mxu0 0
  %802 = vmatpush2.bf16.msra.mxu0 0
  %803 = vmatprep.mubr.bf16.mxu0 0
  %804 = vmatmul.mubr.bf16.gmra.mxu0 %v554
  %v805 = vpop.f32.mrf.mxu0
  %v806 = vadd.f32 %v709, %v805
  %v807 = vpop.f32.mrf.mxu0
  %v808 = vpop.f32.mrf.mxu0
  %v809 = vadd.f32 %v712, %v808
  %v810 = vpop.f32.mrf.mxu0
  %811 = vmatprep.mubr.bf16.mxu0 0
  %812 = vmatmul.mubr.bf16.gmra.mxu0 %v557
  %v813 = vpop.f32.mrf.mxu0
  %v814 = vadd.f32 %v717, %v813
  %v815 = vpop.f32.mrf.mxu0
  %v816 = vpop.f32.mrf.mxu0
  %v817 = vadd.f32 %v720, %v816
  %v818 = vpop.f32.mrf.mxu0
  %819 = vmatprep.mubr.bf16.mxu0 0
  %820 = vmatmul.mubr.bf16.gmra.mxu0 %v560
  %v821 = vpop.f32.mrf.mxu0
  %v822 = vadd.f32 %v725, %v821
  %v823 = vpop.f32.mrf.mxu0
  %v824 = vpop.f32.mrf.mxu0
  %v825 = vadd.f32 %v728, %v824
  %v826 = vpop.f32.mrf.mxu0
  %827 = vmatprep.mubr.bf16.mxu0 0
  %828 = vmatmul.mubr.bf16.gmra.mxu0 %v563
  %v829 = vpop.f32.mrf.mxu0
  %v830 = vadd.f32 %v733, %v829
  %v831 = vpop.f32.mrf.mxu0
  %v832 = vpop.f32.mrf.mxu0
  %v833 = vadd.f32 %v736, %v832
  %v834 = vpop.f32.mrf.mxu0
  %835 = vmatprep.mubr.bf16.mxu0 0
  %836 = vmatmul.mubr.bf16.gmra.mxu0 %v566
  %v837 = vpop.f32.mrf.mxu0
  %v838 = vadd.f32 %v741, %v837
  %v839 = vpop.f32.mrf.mxu0
  %v840 = vpop.f32.mrf.mxu0
  %v841 = vadd.f32 %v744, %v840
  %v842 = vpop.f32.mrf.mxu0
  %843 = vmatprep.mubr.bf16.mxu0 0
  %844 = vmatmul.mubr.bf16.gmra.mxu0 %v569
  %v845 = vpop.f32.mrf.mxu0
  %v846 = vadd.f32 %v749, %v845
  %v847 = vpop.f32.mrf.mxu0
  %v848 = vpop.f32.mrf.mxu0
  %v849 = vadd.f32 %v752, %v848
  %v850 = vpop.f32.mrf.mxu0
  %851 = vmatprep.mubr.bf16.mxu0 0
  %852 = vmatmul.mubr.bf16.gmra.mxu0 %v572
  %v853 = vpop.f32.mrf.mxu0
  %v854 = vadd.f32 %v757, %v853
  %v855 = vpop.f32.mrf.mxu0
  %v856 = vpop.f32.mrf.mxu0
  %v857 = vadd.f32 %v760, %v856
  %v858 = vpop.f32.mrf.mxu0
  %859 = vmatprep.mubr.bf16.mxu0 0
  %860 = vmatmul.mubr.bf16.gmra.mxu0 %v575
  %v861 = vpop.f32.mrf.mxu0
  %v862 = vadd.f32 %v765, %v861
  %v863 = vpop.f32.mrf.mxu0
  %v864 = vpop.f32.mrf.mxu0
  %v865 = vadd.f32 %v768, %v864
  %v866 = vpop.f32.mrf.mxu0
  %867 = vdwg.mxu0
  %v868 = vsel %vm552, %v806, 0.0
  %v869 = vsel %vm552, %v809, 0.0
  %v870 = vadd.f32 %v868, %v869
  %v871 = vsel %vm552, %v814, 0.0
  %v872 = vadd.f32 %v870, %v871
  %v873 = vsel %vm552, %v817, 0.0
  %v874 = vadd.f32 %v872, %v873
  %v875 = vsel %vm552, %v822, 0.0
  %v876 = vadd.f32 %v874, %v875
  %v877 = vsel %vm552, %v825, 0.0
  %v878 = vadd.f32 %v876, %v877
  %v879 = vsel %vm552, %v830, 0.0
  %v880 = vadd.f32 %v878, %v879
  %v881 = vsel %vm552, %v833, 0.0
  %v882 = vadd.f32 %v880, %v881
  %v883 = vsel %vm552, %v838, 0.0
  %v884 = vadd.f32 %v882, %v883
  %v885 = vsel %vm552, %v841, 0.0
  %v886 = vadd.f32 %v884, %v885
  %v887 = vsel %vm552, %v846, 0.0
  %v888 = vadd.f32 %v886, %v887
  %v889 = vsel %vm552, %v849, 0.0
  %v890 = vadd.f32 %v888, %v889
  %v891 = vsel %vm552, %v854, 0.0
  %v892 = vadd.f32 %v890, %v891
  %v893 = vsel %vm552, %v857, 0.0
  %v894 = vadd.f32 %v892, %v893
  %v895 = vsel %vm552, %v862, 0.0
  %v896 = vadd.f32 %v894, %v895
  %v897 = vsel %vm552, %v865, 0.0
  %v898 = vadd.f32 %v896, %v897
  %v899 = vrot.slane %v898, 4
  %v900 = vadd.f32 %v898, %v899
  %v901 = vrot.slane %v900, 2
  %v902 = vadd.f32 %v900, %v901
  %v903 = vrot.slane %v902, 1
  %v904 = vadd.f32 %v902, %v903
  %v905 = vrcp.pop 128.0
  %v906 = vmul.f32 %v904, %v905
  %v907 = vsub.f32 %v806, %v906
  %v908 = vsub.f32 %v809, %v906
  %v909 = vsub.f32 %v814, %v906
  %v910 = vsub.f32 %v817, %v906
  %v911 = vsub.f32 %v822, %v906
  %v912 = vsub.f32 %v825, %v906
  %v913 = vsub.f32 %v830, %v906
  %v914 = vsub.f32 %v833, %v906
  %v915 = vsub.f32 %v838, %v906
  %v916 = vsub.f32 %v841, %v906
  %v917 = vsub.f32 %v846, %v906
  %v918 = vsub.f32 %v849, %v906
  %v919 = vsub.f32 %v854, %v906
  %v920 = vsub.f32 %v857, %v906
  %v921 = vsub.f32 %v862, %v906
  %v922 = vsub.f32 %v865, %v906
  %v923 = vmul.f32 %v907, %v907
  %v924 = vmul.f32 %v908, %v908
  %v925 = vmul.f32 %v909, %v909
  %v926 = vmul.f32 %v910, %v910
  %v927 = vmul.f32 %v911, %v911
  %v928 = vmul.f32 %v912, %v912
  %v929 = vmul.f32 %v913, %v913
  %v930 = vmul.f32 %v914, %v914
  %v931 = vmul.f32 %v915, %v915
  %v932 = vmul.f32 %v916, %v916
  %v933 = vmul.f32 %v917, %v917
  %v934 = vmul.f32 %v918, %v918
  %v935 = vmul.f32 %v919, %v919
  %v936 = vmul.f32 %v920, %v920
  %v937 = vmul.f32 %v921, %v921
  %v938 = vmul.f32 %v922, %v922
  %v939 = vsel %vm552, %v923, 0.0
  %v940 = vsel %vm552, %v924, 0.0
  %v941 = vadd.f32 %v939, %v940
  %v942 = vsel %vm552, %v925, 0.0
  %v943 = vadd.f32 %v941, %v942
  %v944 = vsel %vm552, %v926, 0.0
  %v945 = vadd.f32 %v943, %v944
  %v946 = vsel %vm552, %v927, 0.0
  %v947 = vadd.f32 %v945, %v946
  %v948 = vsel %vm552, %v928, 0.0
  %v949 = vadd.f32 %v947, %v948
  %v950 = vsel %vm552, %v929, 0.0
  %v951 = vadd.f32 %v949, %v950
  %v952 = vsel %vm552, %v930, 0.0
  %v953 = vadd.f32 %v951, %v952
  %v954 = vsel %vm552, %v931, 0.0
  %v955 = vadd.f32 %v953, %v954
  %v956 = vsel %vm552, %v932, 0.0
  %v957 = vadd.f32 %v955, %v956
  %v958 = vsel %vm552, %v933, 0.0
  %v959 = vadd.f32 %v957, %v958
  %v960 = vsel %vm552, %v934, 0.0
  %v961 = vadd.f32 %v959, %v960
  %v962 = vsel %vm552, %v935, 0.0
  %v963 = vadd.f32 %v961, %v962
  %v964 = vsel %vm552, %v936, 0.0
  %v965 = vadd.f32 %v963, %v964
  %v966 = vsel %vm552, %v937, 0.0
  %v967 = vadd.f32 %v965, %v966
  %v968 = vsel %vm552, %v938, 0.0
  %v969 = vadd.f32 %v967, %v968
  %v970 = vrot.slane %v969, 4
  %v971 = vadd.f32 %v969, %v970
  %v972 = vrot.slane %v971, 2
  %v973 = vadd.f32 %v971, %v972
  %v974 = vrot.slane %v973, 1
  %v975 = vadd.f32 %v973, %v974
  %v976 = vmul.f32 %v975, %v905
  %v977 = vadd.f32 %v976, 1e-05
  %v978 = vrsqrt.pop %v977
  %v979 = vmul.f32 %v907, %v978
  %v980 = vmul.f32 %v908, %v978
  %v981 = vmul.f32 %v909, %v978
  %v982 = vmul.f32 %v910, %v978
  %v983 = vmul.f32 %v911, %v978
  %v984 = vmul.f32 %v912, %v978
  %v985 = vmul.f32 %v913, %v978
  %v986 = vmul.f32 %v914, %v978
  %v987 = vmul.f32 %v915, %v978
  %v988 = vmul.f32 %v916, %v978
  %v989 = vmul.f32 %v917, %v978
  %v990 = vmul.f32 %v918, %v978
  %v991 = vmul.f32 %v919, %v978
  %v992 = vmul.f32 %v920, %v978
  %v993 = vmul.f32 %v921, %v978
  %v994 = vmul.f32 %v922, %v978
  %s995 = sld [smem:[#allocation2]]
  %vm996 = vcmp.ge.f32.partialorder %v979, 0.0
  %vm997 = vcmp.ge.f32.partialorder %v980, 0.0
  %vm998 = vcmp.ge.f32.partialorder %v981, 0.0
  %vm999 = vcmp.ge.f32.partialorder %v982, 0.0
  %vm1000 = vcmp.ge.f32.partialorder %v983, 0.0
  %vm1001 = vcmp.ge.f32.partialorder %v984, 0.0
  %vm1002 = vcmp.ge.f32.partialorder %v985, 0.0
  %vm1003 = vcmp.ge.f32.partialorder %v986, 0.0
  %vm1004 = vcmp.ge.f32.partialorder %v987, 0.0
  %vm1005 = vcmp.ge.f32.partialorder %v988, 0.0
  %vm1006 = vcmp.ge.f32.partialorder %v989, 0.0
  %vm1007 = vcmp.ge.f32.partialorder %v990, 0.0
  %vm1008 = vcmp.ge.f32.partialorder %v991, 0.0
  %vm1009 = vcmp.ge.f32.partialorder %v992, 0.0
  %vm1010 = vcmp.ge.f32.partialorder %v993, 0.0
  %vm1011 = vcmp.ge.f32.partialorder %v994, 0.0
  %v1012 = vstv %s995
  %v1013 = vmul.f32 %v1012, %v979
  %v1014 = vmul.f32 %v1012, %v980
  %v1015 = vmul.f32 %v1012, %v981
  %v1016 = vmul.f32 %v1012, %v982
  %v1017 = vmul.f32 %v1012, %v983
  %v1018 = vmul.f32 %v1012, %v984
  %v1019 = vmul.f32 %v1012, %v985
  %v1020 = vmul.f32 %v1012, %v986
  %v1021 = vmul.f32 %v1012, %v987
  %v1022 = vmul.f32 %v1012, %v988
  %v1023 = vmul.f32 %v1012, %v989
  %v1024 = vmul.f32 %v1012, %v990
  %v1025 = vmul.f32 %v1012, %v991
  %v1026 = vmul.f32 %v1012, %v992
  %v1027 = vmul.f32 %v1012, %v993
  %v1028 = vmul.f32 %v1012, %v994
  %v1029 = vsel %vm996, %v979, %v1013
  %v1030 = vsel %vm997, %v980, %v1014
  %v1031 = vsel %vm998, %v981, %v1015
  %v1032 = vsel %vm999, %v982, %v1016
  %v1033 = vsel %vm1000, %v983, %v1017
  %v1034 = vsel %vm1001, %v984, %v1018
  %v1035 = vsel %vm1002, %v985, %v1019
  %v1036 = vsel %vm1003, %v986, %v1020
  %v1037 = vsel %vm1004, %v987, %v1021
  %v1038 = vsel %vm1005, %v988, %v1022
  %v1039 = vsel %vm1006, %v989, %v1023
  %v1040 = vsel %vm1007, %v990, %v1024
  %v1041 = vsel %vm1008, %v991, %v1025
  %v1042 = vsel %vm1009, %v992, %v1026
  %v1043 = vsel %vm1010, %v993, %v1027
  %v1044 = vsel %vm1011, %v994, %v1028
  %1045 = vst.msk [vmem:[%s3] sm:$0xff] %vm552, %v1029
  %1046 = vst.msk [vmem:[%s3 + $0x8] sm:$0xff] %vm552, %v1030
  %1047 = vst.msk [vmem:[%s3 + $0x10] sm:$0xff] %vm552, %v1031
  %1048 = vst.msk [vmem:[%s3 + $0x18] sm:$0xff] %vm552, %v1032
  %1049 = vst.msk [vmem:[%s3 + $0x20] sm:$0xff] %vm552, %v1033
  %1050 = vst.msk [vmem:[%s3 + $0x28] sm:$0xff] %vm552, %v1034
  %1051 = vst.msk [vmem:[%s3 + $0x30] sm:$0xff] %vm552, %v1035
  %1052 = vst.msk [vmem:[%s3 + $0x38] sm:$0xff] %vm552, %v1036
  %1053 = vst.msk [vmem:[%s3 + $0x40] sm:$0xff] %vm552, %v1037
  %1054 = vst.msk [vmem:[%s3 + $0x48] sm:$0xff] %vm552, %v1038
  %1055 = vst.msk [vmem:[%s3 + $0x50] sm:$0xff] %vm552, %v1039
  %1056 = vst.msk [vmem:[%s3 + $0x58] sm:$0xff] %vm552, %v1040
  %1057 = vst.msk [vmem:[%s3 + $0x60] sm:$0xff] %vm552, %v1041
  %1058 = vst.msk [vmem:[%s3 + $0x68] sm:$0xff] %vm552, %v1042
  %1059 = vst.msk [vmem:[%s3 + $0x70] sm:$0xff] %vm552, %v1043
  %1060 = vst.msk [vmem:[%s3 + $0x78] sm:$0xff] %vm552, %v1044
  // Predicated region
  $region14: #{netg_forward.12} parent=0 // pred_check
    _
  $region15: #{netg_forward.12} parent=0 // pred_check_branch
    %1062 = sbr.rel (0) target = $region17
  $region16: #{netg_forward.12} parent=0 // pred_region
    _
  $region17: #{netg_forward.12} parent=0 // pred_fallthru
    _
  // Predicated region
  $region18: #{netg_forward.12} parent=0 // pred_check
    _
  $region19: #{netg_forward.12} parent=0 // pred_check_branch
    %1064 = sbr.rel (0) target = $region21
  $region20: #{netg_forward.12} parent=0 // pred_region
    _
  $region21: #{netg_forward.12} parent=0 // pred_fallthru
    _

// kernel: netg_forward.13
$region0: #{netg_forward.13}
  #allocation0 [shape = 'u32[]', space=smem, size = 0x4, offset = 0x4, fixed_abs, tag = 'smem constant byte address 0x4 - core index']
  #allocation1 [shape = 'u32[144,128]{1,0:T(1,128)}', space=vmem, size = 0x12000, scoped, tag = 'internal scratch']
  #allocation2 [shape = 'f32[1]{0:T(128)S(6)}', space=smem, size = 0x200, scoped, tag = 'scoped memory for netg_forward.13']
  %s0 = inlined_call_operand.<no memory space> [shape: f32[1], index: 0, kind: input, shape index: {}]
  %s1 = inlined_call_operand.vmem [shape: bf16[128,576], index: 1, kind: input, shape index: {}]
  %s2 = inlined_call_operand.vmem [shape: bf16[576,64], index: 2, kind: input, shape index: {}]
  %s3 = inlined_call_operand.vmem [shape: f32[128,64], index: 3, kind: input, shape index: {}]
  %s4 = inlined_call_operand.vmem [shape: f32[128,64], index: 4, kind: output, shape index: {}]
  %s5 = sld [smem:[#allocation0]]
  $region26: #{netg_forward.13} parent=0
    _
  %s7 = ssub.s32 1, %s5
  %s8 = scalar_select 0, %s7, %s5
  %9 = sst [smem:[#allocation2]] %s0
  // Predicated region
  $region2: #{netg_forward.13} parent=0 // pred_check
    _
  $region3: #{netg_forward.13} parent=0 // pred_check_branch
    %11 = sbr.rel (0) target = $region5
  $region4: #{netg_forward.13} parent=0 // pred_region
    _
  $region5: #{netg_forward.13} parent=0 // pred_fallthru
    _
  // Predicated region
  $region6: #{netg_forward.13} parent=0 // pred_check
    _
  $region7: #{netg_forward.13} parent=0 // pred_check_branch
    %13 = sbr.rel (0) target = $region9
  $region8: #{netg_forward.13} parent=0 // pred_region
    _
  $region9: #{netg_forward.13} parent=0 // pred_fallthru
    _
  // Predicated region
  $region10: #{netg_forward.13} parent=0 // pred_check
    _
  $region11: #{netg_forward.13} parent=0 // pred_check_branch
    %15 = sbr.rel (0) target = $region13
  $region12: #{netg_forward.13} parent=0 // pred_region
    _
  $region13: #{netg_forward.13} parent=0 // pred_fallthru
    _
  // Predicated region
  $region14: #{netg_forward.13} parent=0 // pred_check
    _
  $region15: #{netg_forward.13} parent=0 // pred_check_branch
    %17 = sbr.rel (0) target = $region17
  $region16: #{netg_forward.13} parent=0 // pred_region
    _
  $region17: #{netg_forward.13} parent=0 // pred_fallthru
    _
  %v19 = vld [vmem:[%s1] sm:$0xff]
  %v20 = vld [vmem:[%s1 + $0x8] sm:$0xff]
  %v21 = vld [vmem:[%s1 + $0x10] sm:$0xf]
  %v22 = vld [vmem:[%s1 + $0x14] sm:$0xff]
  %v23 = vld [vmem:[%s1 + $0x1c] sm:$0xff]
  %v24 = vld [vmem:[%s1 + $0x24] sm:$0xf]
  %v25 = vld [vmem:[%s1 + $0x28] sm:$0xff]
  %v26 = vld [vmem:[%s1 + $0x30] sm:$0xff]
  %v27 = vld [vmem:[%s1 + $0x38] sm:$0xf]
  %v28 = vld [vmem:[%s1 + $0x3c] sm:$0xff]
  %v29 = vld [vmem:[%s1 + $0x44] sm:$0xff]
  %v30 = vld [vmem:[%s1 + $0x4c] sm:$0xf]
  %v31 = vld [vmem:[%s1 + $0x50] sm:$0xff]
  %v32 = vld [vmem:[%s1 + $0x58] sm:$0xff]
  %v33 = vld [vmem:[%s1 + $0x60] sm:$0xf]
  %v34 = vld [vmem:[%s1 + $0x64] sm:$0xff]
  %v35 = vld [vmem:[%s1 + $0x6c] sm:$0xff]
  %v36 = vld [vmem:[%s1 + $0x74] sm:$0xf]
  %v37 = vld [vmem:[%s1 + $0x78] sm:$0xff]
  %v38 = vld [vmem:[%s1 + $0x80] sm:$0xff]
  %v39 = vld [vmem:[%s1 + $0x88] sm:$0xf]
  %v40 = vld [vmem:[%s1 + $0x8c] sm:$0xff]
  %v41 = vld [vmem:[%s1 + $0x94] sm:$0xff]
  %v42 = vld [vmem:[%s1 + $0x9c] sm:$0xf]
  %v43 = vld [vmem:[%s1 + $0xa0] sm:$0xff]
  %v44 = vld [vmem:[%s1 + $0xa8] sm:$0xff]
  %v45 = vld [vmem:[%s1 + $0xb0] sm:$0xf]
  %v46 = vld [vmem:[%s1 + $0xb4] sm:$0xff]
  %v47 = vld [vmem:[%s1 + $0xbc] sm:$0xff]
  %v48 = vld [vmem:[%s1 + $0xc4] sm:$0xf]
  %v49 = vld [vmem:[%s1 + $0xc8] sm:$0xff]
  %v50 = vld [vmem:[%s1 + $0xd0] sm:$0xff]
  %v51 = vld [vmem:[%s1 + $0xd8] sm:$0xf]
  %v52 = vld [vmem:[%s1 + $0xdc] sm:$0xff]
  %v53 = vld [vmem:[%s1 + $0xe4] sm:$0xff]
  %v54 = vld [vmem:[%s1 + $0xec] sm:$0xf]
  %v55 = vld [vmem:[%s1 + $0xf0] sm:$0xff]
  %v56 = vld [vmem:[%s1 + $0xf8] sm:$0xff]
  %v57 = vld [vmem:[%s1 + $0x100] sm:$0xf]
  %v58 = vld [vmem:[%s1 + $0x104] sm:$0xff]
  %v59 = vld [vmem:[%s1 + $0x10c] sm:$0xff]
  %v60 = vld [vmem:[%s1 + $0x114] sm:$0xf]
  %v61 = vld [vmem:[%s1 + $0x118] sm:$0xff]
  %v62 = vld [vmem:[%s1 + $0x120] sm:$0xff]
  %v63 = vld [vmem:[%s1 + $0x128] sm:$0xf]
  %v64 = vld [vmem:[%s1 + $0x12c] sm:$0xff]
  %v65 = vld [vmem:[%s1 + $0x134] sm:$0xff]
  %v66 = vld [vmem:[%s1 + $0x13c] sm:$0xf]
  %v67 = vld [vmem:[%s2] sm:$0xf]
  %v68 = vld [vmem:[%s2 + $0x4] sm:$0xf]
  %v69 = vld [vmem:[%s2 + $0x8] sm:$0xf]
  %v70 = vld [vmem:[%s2 + $0xc] sm:$0xf]
  %v71 = vld [vmem:[%s2 + $0x10] sm:$0xf]
  %v72 = vld [vmem:[%s2 + $0x14] sm:$0xf]
  %v73 = vld [vmem:[%s2 + $0x18] sm:$0xf]
  %v74 = vld [vmem:[%s2 + $0x1c] sm:$0xf]
  %v75 = vld [vmem:[%s2 + $0x20] sm:$0xf]
  %v76 = vld [vmem:[%s2 + $0x24] sm:$0xf]
  %v77 = vld [vmem:[%s2 + $0x28] sm:$0xf]
  %v78 = vld [vmem:[%s2 + $0x2c] sm:$0xf]
  %v79 = vld [vmem:[%s2 + $0x30] sm:$0xf]
  %v80 = vld [vmem:[%s2 + $0x34] sm:$0xf]
  %v81 = vld [vmem:[%s2 + $0x38] sm:$0xf]
  %v82 = vld [vmem:[%s2 + $0x3c] sm:$0xf]
  %v83 = vld [vmem:[%s2 + $0x40] sm:$0xf]
  %v84 = vld [vmem:[%s2 + $0x44] sm:$0xf]
  %v85 = vld [vmem:[%s2 + $0x48] sm:$0xf]
  %v86 = vld [vmem:[%s2 + $0x4c] sm:$0xf]
  %v87 = vld [vmem:[%s2 + $0x50] sm:$0xf]
  %v88 = vld [vmem:[%s2 + $0x54] sm:$0xf]
  %v89 = vld [vmem:[%s2 + $0x58] sm:$0xf]
  %v90 = vld [vmem:[%s2 + $0x5c] sm:$0xf]
  %v91 = vld [vmem:[%s2 + $0x60] sm:$0xf]
  %v92 = vld [vmem:[%s2 + $0x64] sm:$0xf]
  %v93 = vld [vmem:[%s2 + $0x68] sm:$0xf]
  %v94 = vld [vmem:[%s2 + $0x6c] sm:$0xf]
  %v95 = vld [vmem:[%s2 + $0x70] sm:$0xf]
  %v96 = vld [vmem:[%s2 + $0x74] sm:$0xf]
  %v97 = vld [vmem:[%s2 + $0x78] sm:$0xf]
  %v98 = vld [vmem:[%s2 + $0x7c] sm:$0xf]
  %v99 = vld [vmem:[%s2 + $0x80] sm:$0xf]
  %v100 = vld [vmem:[%s2 + $0x84] sm:$0xf]
  %v101 = vld [vmem:[%s2 + $0x88] sm:$0xf]
  %v102 = vld [vmem:[%s2 + $0x8c] sm:$0xf]
  %v103 = vld [vmem:[%s2 + $0x90] sm:$0xf]
  %v104 = vld [vmem:[%s2 + $0x94] sm:$0xf]
  %v105 = vld [vmem:[%s2 + $0x98] sm:$0xf]
  %v106 = vld [vmem:[%s2 + $0x9c] sm:$0xf]
  %v107 = vld [vmem:[%s2 + $0xa0] sm:$0xf]
  %v108 = vld [vmem:[%s2 + $0xa4] sm:$0xf]
  %v109 = vld [vmem:[%s2 + $0xa8] sm:$0xf]
  %v110 = vld [vmem:[%s2 + $0xac] sm:$0xf]
  %v111 = vld [vmem:[%s2 + $0xb0] sm:$0xf]
  %v112 = vld [vmem:[%s2 + $0xb4] sm:$0xf]
  %v113 = vld [vmem:[%s2 + $0xb8] sm:$0xf]
  %v114 = vld [vmem:[%s2 + $0xbc] sm:$0xf]
  %v115 = vld [vmem:[%s2 + $0xc0] sm:$0xf]
  %v116 = vld [vmem:[%s2 + $0xc4] sm:$0xf]
  %v117 = vld [vmem:[%s2 + $0xc8] sm:$0xf]
  %v118 = vld [vmem:[%s2 + $0xcc] sm:$0xf]
  %v119 = vld [vmem:[%s2 + $0xd0] sm:$0xf]
  %v120 = vld [vmem:[%s2 + $0xd4] sm:$0xf]
  %v121 = vld [vmem:[%s2 + $0xd8] sm:$0xf]
  %v122 = vld [vmem:[%s2 + $0xdc] sm:$0xf]
  %v123 = vld [vmem:[%s2 + $0xe0] sm:$0xf]
  %v124 = vld [vmem:[%s2 + $0xe4] sm:$0xf]
  %v125 = vld [vmem:[%s2 + $0xe8] sm:$0xf]
  %v126 = vld [vmem:[%s2 + $0xec] sm:$0xf]
  %v127 = vld [vmem:[%s2 + $0xf0] sm:$0xf]
  %v128 = vld [vmem:[%s2 + $0xf4] sm:$0xf]
  %v129 = vld [vmem:[%s2 + $0xf8] sm:$0xf]
  %v130 = vld [vmem:[%s2 + $0xfc] sm:$0xf]
  %v131 = vld [vmem:[%s2 + $0x100] sm:$0xf]
  %v132 = vld [vmem:[%s2 + $0x104] sm:$0xf]
  %v133 = vld [vmem:[%s2 + $0x108] sm:$0xf]
  %v134 = vld [vmem:[%s2 + $0x10c] sm:$0xf]
  %v135 = vld [vmem:[%s2 + $0x110] sm:$0xf]
  %v136 = vld [vmem:[%s2 + $0x114] sm:$0xf]
  %v137 = vld [vmem:[%s2 + $0x118] sm:$0xf]
  %v138 = vld [vmem:[%s2 + $0x11c] sm:$0xf]
  %v187 = vunpack.c.l.b16 %v19
  %v188 = vunpack.c.h.b16 %v19
  %v189 = vunpack.c.l.b16 %v20
  %v190 = vunpack.c.h.b16 %v20
  %v191 = vunpack.c.l.b16 %v21
  %v192 = vunpack.c.l.b16 %v22
  %v193 = vunpack.c.h.b16 %v22
  %v194 = vunpack.c.l.b16 %v23
  %v195 = vunpack.c.h.b16 %v23
  %v196 = vunpack.c.l.b16 %v24
  %v197 = vunpack.c.l.b16 %v25
  %v198 = vunpack.c.h.b16 %v25
  %v199 = vunpack.c.l.b16 %v26
  %v200 = vunpack.c.h.b16 %v26
  %v201 = vunpack.c.l.b16 %v27
  %v202 = vunpack.c.l.b16 %v28
  %v203 = vunpack.c.h.b16 %v28
  %v204 = vunpack.c.l.b16 %v29
  %v205 = vunpack.c.h.b16 %v29
  %v206 = vunpack.c.l.b16 %v30
  %v207 = vunpack.c.l.b16 %v31
  %v208 = vunpack.c.h.b16 %v31
  %v209 = vunpack.c.l.b16 %v32
  %v210 = vunpack.c.h.b16 %v32
  %v211 = vunpack.c.l.b16 %v33
  %v212 = vunpack.c.l.b16 %v34
  %v213 = vunpack.c.h.b16 %v34
  %v214 = vunpack.c.l.b16 %v35
  %v215 = vunpack.c.h.b16 %v35
  %v216 = vunpack.c.l.b16 %v36
  %v217 = vunpack.c.l.b16 %v37
  %v218 = vunpack.c.h.b16 %v37
  %v219 = vunpack.c.l.b16 %v38
  %v220 = vunpack.c.h.b16 %v38
  %v221 = vunpack.c.l.b16 %v39
  %v222 = vunpack.c.l.b16 %v40
  %v223 = vunpack.c.h.b16 %v40
  %v224 = vunpack.c.l.b16 %v41
  %v225 = vunpack.c.h.b16 %v41
  %v226 = vunpack.c.l.b16 %v42
  %v227 = vunpack.c.l.b16 %v43
  %v228 = vunpack.c.h.b16 %v43
  %v229 = vunpack.c.l.b16 %v44
  %v230 = vunpack.c.h.b16 %v44
  %v231 = vunpack.c.l.b16 %v45
  %v232 = vunpack.c.l.b16 %v46
  %v233 = vunpack.c.h.b16 %v46
  %v234 = vunpack.c.l.b16 %v47
  %v235 = vunpack.c.h.b16 %v47
  %v236 = vunpack.c.l.b16 %v48
  %v237 = vunpack.c.l.b16 %v49
  %v238 = vunpack.c.h.b16 %v49
  %v239 = vunpack.c.l.b16 %v50
  %v240 = vunpack.c.h.b16 %v50
  %v241 = vunpack.c.l.b16 %v51
  %v242 = vunpack.c.l.b16 %v52
  %v243 = vunpack.c.h.b16 %v52
  %v244 = vunpack.c.l.b16 %v53
  %v245 = vunpack.c.h.b16 %v53
  %v246 = vunpack.c.l.b16 %v54
  %v247 = vunpack.c.l.b16 %v55
  %v248 = vunpack.c.h.b16 %v55
  %v249 = vunpack.c.l.b16 %v56
  %v250 = vunpack.c.h.b16 %v56
  %v251 = vunpack.c.l.b16 %v57
  %v252 = vunpack.c.l.b16 %v58
  %v253 = vunpack.c.h.b16 %v58
  %v254 = vunpack.c.l.b16 %v59
  %v255 = vunpack.c.h.b16 %v59
  %v256 = vunpack.c.l.b16 %v60
  %v257 = vunpack.c.l.b16 %v61
  %v258 = vunpack.c.h.b16 %v61
  %v259 = vunpack.c.l.b16 %v62
  %v260 = vunpack.c.h.b16 %v62
  %v261 = vunpack.c.l.b16 %v63
  %v262 = vunpack.c.l.b16 %v64
  %v263 = vunpack.c.h.b16 %v64
  %v264 = vunpack.c.l.b16 %v65
  %v265 = vunpack.c.h.b16 %v65
  %v266 = vunpack.c.l.b16 %v66
  %v267 = vpack.c.b16 %v192, %v187
  %v268 = vpack.c.b16 %v193, %v188
  %v269 = vpack.c.b16 %v194, %v189
  %v270 = vpack.c.b16 %v195, %v190
  %v271 = vpack.c.b16 %v196, %v191
  %v272 = vpack.c.b16 %v202, %v197
  %v273 = vpack.c.b16 %v203, %v198
  %v274 = vpack.c.b16 %v204, %v199
  %v275 = vpack.c.b16 %v205, %v200
  %v276 = vpack.c.b16 %v206, %v201
  %v277 = vpack.c.b16 %v212, %v207
  %v278 = vpack.c.b16 %v213, %v208
  %v279 = vpack.c.b16 %v214, %v209
  %v280 = vpack.c.b16 %v215, %v210
  %v281 = vpack.c.b16 %v216, %v211
  %v282 = vpack.c.b16 %v222, %v217
  %v283 = vpack.c.b16 %v223, %v218
  %v284 = vpack.c.b16 %v224, %v219
  %v285 = vpack.c.b16 %v225, %v220
  %v286 = vpack.c.b16 %v226, %v221
  %v287 = vpack.c.b16 %v232, %v227
  %v288 = vpack.c.b16 %v233, %v228
  %v289 = vpack.c.b16 %v234, %v229
  %v290 = vpack.c.b16 %v235, %v230
  %v291 = vpack.c.b16 %v236, %v231
  %v292 = vpack.c.b16 %v242, %v237
  %v293 = vpack.c.b16 %v243, %v238
  %v294 = vpack.c.b16 %v244, %v239
  %v295 = vpack.c.b16 %v245, %v240
  %v296 = vpack.c.b16 %v246, %v241
  %v297 = vpack.c.b16 %v252, %v247
  %v298 = vpack.c.b16 %v253, %v248
  %v299 = vpack.c.b16 %v254, %v249
  %v300 = vpack.c.b16 %v255, %v250
  %v301 = vpack.c.b16 %v256, %v251
  %v302 = vpack.c.b16 %v262, %v257
  %v303 = vpack.c.b16 %v263, %v258
  %v304 = vpack.c.b16 %v264, %v259
  %v305 = vpack.c.b16 %v265, %v260
  %v306 = vpack.c.b16 %v266, %v261
  %v411 = vunpack.c.l.b16 %v67
  %v412 = vunpack.c.l.b16 %v68
  %v413 = vunpack.c.l.b16 %v69
  %v414 = vunpack.c.l.b16 %v70
  %v415 = vunpack.c.l.b16 %v71
  %v416 = vunpack.c.l.b16 %v72
  %v417 = vunpack.c.l.b16 %v73
  %v418 = vunpack.c.l.b16 %v74
  %v419 = vunpack.c.l.b16 %v75
  %v420 = vunpack.c.l.b16 %v76
  %v421 = vunpack.c.l.b16 %v77
  %v422 = vunpack.c.l.b16 %v78
  %v423 = vunpack.c.l.b16 %v79
  %v424 = vunpack.c.l.b16 %v80
  %v425 = vunpack.c.l.b16 %v81
  %v426 = vunpack.c.l.b16 %v82
  %v427 = vunpack.c.l.b16 %v83
  %v428 = vunpack.c.l.b16 %v84
  %v429 = vunpack.c.l.b16 %v85
  %v430 = vunpack.c.l.b16 %v86
  %v431 = vunpack.c.l.b16 %v87
  %v432 = vunpack.c.l.b16 %v88
  %v433 = vunpack.c.l.b16 %v89
  %v434 = vunpack.c.l.b16 %v90
  %v435 = vunpack.c.l.b16 %v91
  %v436 = vunpack.c.l.b16 %v92
  %v437 = vunpack.c.l.b16 %v93
  %v438 = vunpack.c.l.b16 %v94
  %v439 = vunpack.c.l.b16 %v95
  %v440 = vunpack.c.l.b16 %v96
  %v441 = vunpack.c.l.b16 %v97
  %v442 = vunpack.c.l.b16 %v98
  %v443 = vunpack.c.l.b16 %v99
  %v444 = vunpack.c.l.b16 %v100
  %v445 = vunpack.c.l.b16 %v101
  %v446 = vunpack.c.l.b16 %v102
  %v447 = vunpack.c.l.b16 %v103
  %v448 = vunpack.c.l.b16 %v104
  %v449 = vunpack.c.l.b16 %v105
  %v450 = vunpack.c.l.b16 %v106
  %v451 = vunpack.c.l.b16 %v107
  %v452 = vunpack.c.l.b16 %v108
  %v453 = vunpack.c.l.b16 %v109
  %v454 = vunpack.c.l.b16 %v110
  %v455 = vunpack.c.l.b16 %v111
  %v456 = vunpack.c.l.b16 %v112
  %v457 = vunpack.c.l.b16 %v113
  %v458 = vunpack.c.l.b16 %v114
  %v459 = vunpack.c.l.b16 %v115
  %v460 = vunpack.c.l.b16 %v116
  %v461 = vunpack.c.l.b16 %v117
  %v462 = vunpack.c.l.b16 %v118
  %v463 = vunpack.c.l.b16 %v119
  %v464 = vunpack.c.l.b16 %v120
  %v465 = vunpack.c.l.b16 %v121
  %v466 = vunpack.c.l.b16 %v122
  %v467 = vunpack.c.l.b16 %v123
  %v468 = vunpack.c.l.b16 %v124
  %v469 = vunpack.c.l.b16 %v125
  %v470 = vunpack.c.l.b16 %v126
  %v471 = vunpack.c.l.b16 %v127
  %v472 = vunpack.c.l.b16 %v128
  %v473 = vunpack.c.l.b16 %v129
  %v474 = vunpack.c.l.b16 %v130
  %v475 = vunpack.c.l.b16 %v131
  %v476 = vunpack.c.l.b16 %v132
  %v477 = vunpack.c.l.b16 %v133
  %v478 = vunpack.c.l.b16 %v134
  %v479 = vunpack.c.l.b16 %v135
  %v480 = vunpack.c.l.b16 %v136
  %v481 = vunpack.c.l.b16 %v137
  %v482 = vunpack.c.l.b16 %v138
  %v483 = vpack.c.b16 %v412, %v411
  %v484 = vpack.c.b16 %v414, %v413
  %v485 = vpack.c.b16 %v416, %v415
  %v486 = vpack.c.b16 %v418, %v417
  %v487 = vpack.c.b16 %v420, %v419
  %v488 = vpack.c.b16 %v422, %v421
  %v489 = vpack.c.b16 %v424, %v423
  %v490 = vpack.c.b16 %v426, %v425
  %v491 = vpack.c.b16 %v428, %v427
  %v492 = vpack.c.b16 %v430, %v429
  %v493 = vpack.c.b16 %v432, %v431
  %v494 = vpack.c.b16 %v434, %v433
  %v495 = vpack.c.b16 %v436, %v435
  %v496 = vpack.c.b16 %v438, %v437
  %v497 = vpack.c.b16 %v440, %v439
  %v498 = vpack.c.b16 %v442, %v441
  %v499 = vpack.c.b16 %v444, %v443
  %v500 = vpack.c.b16 %v446, %v445
  %v501 = vpack.c.b16 %v448, %v447
  %v502 = vpack.c.b16 %v450, %v449
  %v503 = vpack.c.b16 %v452, %v451
  %v504 = vpack.c.b16 %v454, %v453
  %v505 = vpack.c.b16 %v456, %v455
  %v506 = vpack.c.b16 %v458, %v457
  %v507 = vpack.c.b16 %v460, %v459
  %v508 = vpack.c.b16 %v462, %v461
  %v509 = vpack.c.b16 %v464, %v463
  %v510 = vpack.c.b16 %v466, %v465
  %v511 = vpack.c.b16 %v468, %v467
  %v512 = vpack.c.b16 %v470, %v469
  %v513 = vpack.c.b16 %v472, %v471
  %v514 = vpack.c.b16 %v474, %v473
  %v515 = vpack.c.b16 %v476, %v475
  %v516 = vpack.c.b16 %v478, %v477
  %v517 = vpack.c.b16 %v480, %v479
  %v518 = vpack.c.b16 %v482, %v481
  %vm555 = vcmask 523264
  %v557 = vsel %vm555, %v271, 0
  %v560 = vsel %vm555, %v276, 0
  %v563 = vsel %vm555, %v281, 0
  %v566 = vsel %vm555, %v286, 0
  %v569 = vsel %vm555, %v291, 0
  %v572 = vsel %vm555, %v296, 0
  %v575 = vsel %vm555, %v301, 0
  %v578 = vsel %vm555, %v306, 0
  %580 = vmatprep.subr.bf16.mxu0 0
  %581 = vmatpush1.bf16.msra.mxu0 %v490
  %582 = vmatprep.subr.bf16.mxu0 0
  %583 = vmatpush1.bf16.msra.mxu0 %v489
  %584 = vmatprep.subr.bf16.mxu0 0
  %585 = vmatpush1.bf16.msra.mxu0 %v488
  %586 = vmatprep.subr.bf16.mxu0 0
  %587 = vmatpush1.bf16.msra.mxu0 %v487
  %588 = vmatprep.subr.bf16.mxu0 0
  %589 = vmatpush1.bf16.msra.mxu0 %v486
  %590 = vmatprep.subr.bf16.mxu0 0
  %591 = vmatpush1.bf16.msra.mxu0 %v485
  %592 = vmatprep.subr.bf16.mxu0 0
  %593 = vmatpush1.bf16.msra.mxu0 %v484
  %594 = vmatprep.subr.bf16.mxu0 0
  %595 = vmatpush1.bf16.msra.mxu0 %v483
  %596 = vmatprep.subr.bf16.mxu0 0
  %597 = vmatpush2.bf16.msra.mxu0 %v498
  %598 = vmatprep.subr.bf16.mxu0 0
  %599 = vmatpush2.bf16.msra.mxu0 %v497
  %600 = vmatprep.subr.bf16.mxu0 0
  %601 = vmatpush2.bf16.msra.mxu0 %v496
  %602 = vmatprep.subr.bf16.mxu0 0
  %603 = vmatpush2.bf16.msra.mxu0 %v495
  %604 = vmatprep.subr.bf16.mxu0 0
  %605 = vmatpush2.bf16.msra.mxu0 %v494
  %606 = vmatprep.subr.bf16.mxu0 0
  %607 = vmatpush2.bf16.msra.mxu0 %v493
  %608 = vmatprep.subr.bf16.mxu0 0
  %609 = vmatpush2.bf16.msra.mxu0 %v492
  %610 = vmatprep.subr.bf16.mxu0 0
  %611 = vmatpush2.bf16.msra.mxu0 %v491
  %612 = vmatprep.mubr.bf16.mxu0 %v268
  %613 = vmatmul.mubr.bf16.gmra.mxu0 %v267
  %v614 = vpop.f32.mrf.mxu0
  %v615 = vadd.f32 0.0, %v614
  %v616 = vpop.f32.mrf.mxu0
  %v617 = vpop.f32.mrf.mxu0
  %v618 = vadd.f32 0.0, %v617
  %v619 = vpop.f32.mrf.mxu0
  %620 = vmatprep.mubr.bf16.mxu0 %v273
  %621 = vmatmul.mubr.bf16.gmra.mxu0 %v272
  %v622 = vpop.f32.mrf.mxu0
  %v623 = vadd.f32 0.0, %v622
  %v624 = vpop.f32.mrf.mxu0
  %v625 = vpop.f32.mrf.mxu0
  %v626 = vadd.f32 0.0, %v625
  %v627 = vpop.f32.mrf.mxu0
  %628 = vmatprep.mubr.bf16.mxu0 %v278
  %629 = vmatmul.mubr.bf16.gmra.mxu0 %v277
  %v630 = vpop.f32.mrf.mxu0
  %v631 = vadd.f32 0.0, %v630
  %v632 = vpop.f32.mrf.mxu0
  %v633 = vpop.f32.mrf.mxu0
  %v634 = vadd.f32 0.0, %v633
  %v635 = vpop.f32.mrf.mxu0
  %636 = vmatprep.mubr.bf16.mxu0 %v283
  %637 = vmatmul.mubr.bf16.gmra.mxu0 %v282
  %v638 = vpop.f32.mrf.mxu0
  %v639 = vadd.f32 0.0, %v638
  %v640 = vpop.f32.mrf.mxu0
  %v641 = vpop.f32.mrf.mxu0
  %v642 = vadd.f32 0.0, %v641
  %v643 = vpop.f32.mrf.mxu0
  %644 = vmatprep.mubr.bf16.mxu0 %v288
  %645 = vmatmul.mubr.bf16.gmra.mxu0 %v287
  %v646 = vpop.f32.mrf.mxu0
  %v647 = vadd.f32 0.0, %v646
  %v648 = vpop.f32.mrf.mxu0
  %v649 = vpop.f32.mrf.mxu0
  %v650 = vadd.f32 0.0, %v649
  %v651 = vpop.f32.mrf.mxu0
  %652 = vmatprep.mubr.bf16.mxu0 %v293
  %653 = vmatmul.mubr.bf16.gmra.mxu0 %v292
  %v654 = vpop.f32.mrf.mxu0
  %v655 = vadd.f32 0.0, %v654
  %v656 = vpop.f32.mrf.mxu0
  %v657 = vpop.f32.mrf.mxu0
  %v658 = vadd.f32 0.0, %v657
  %v659 = vpop.f32.mrf.mxu0
  %660 = vmatprep.mubr.bf16.mxu0 %v298
  %661 = vmatmul.mubr.bf16.gmra.mxu0 %v297
  %v662 = vpop.f32.mrf.mxu0
  %v663 = vadd.f32 0.0, %v662
  %v664 = vpop.f32.mrf.mxu0
  %v665 = vpop.f32.mrf.mxu0
  %v666 = vadd.f32 0.0, %v665
  %v667 = vpop.f32.mrf.mxu0
  %668 = vmatprep.mubr.bf16.mxu0 %v303
  %669 = vmatmul.mubr.bf16.gmra.mxu0 %v302
  %v670 = vpop.f32.mrf.mxu0
  %v671 = vadd.f32 0.0, %v670
  %v672 = vpop.f32.mrf.mxu0
  %v673 = vpop.f32.mrf.mxu0
  %v674 = vadd.f32 0.0, %v673
  %v675 = vpop.f32.mrf.mxu0
  %676 = vdwg.mxu0
  %677 = vmatprep.subr.bf16.mxu0 0
  %678 = vmatpush1.bf16.msra.mxu0 %v506
  %679 = vmatprep.subr.bf16.mxu0 0
  %680 = vmatpush1.bf16.msra.mxu0 %v505
  %681 = vmatprep.subr.bf16.mxu0 0
  %682 = vmatpush1.bf16.msra.mxu0 %v504
  %683 = vmatprep.subr.bf16.mxu0 0
  %684 = vmatpush1.bf16.msra.mxu0 %v503
  %685 = vmatprep.subr.bf16.mxu0 0
  %686 = vmatpush1.bf16.msra.mxu0 %v502
  %687 = vmatprep.subr.bf16.mxu0 0
  %688 = vmatpush1.bf16.msra.mxu0 %v501
  %689 = vmatprep.subr.bf16.mxu0 0
  %690 = vmatpush1.bf16.msra.mxu0 %v500
  %691 = vmatprep.subr.bf16.mxu0 0
  %692 = vmatpush1.bf16.msra.mxu0 %v499
  %693 = vmatprep.subr.bf16.mxu0 0
  %694 = vmatpush2.bf16.msra.mxu0 %v514
  %695 = vmatprep.subr.bf16.mxu0 0
  %696 = vmatpush2.bf16.msra.mxu0 %v513
  %697 = vmatprep.subr.bf16.mxu0 0
  %698 = vmatpush2.bf16.msra.mxu0 %v512
  %699 = vmatprep.subr.bf16.mxu0 0
  %700 = vmatpush2.bf16.msra.mxu0 %v511
  %701 = vmatprep.subr.bf16.mxu0 0
  %702 = vmatpush2.bf16.msra.mxu0 %v510
  %703 = vmatprep.subr.bf16.mxu0 0
  %704 = vmatpush2.bf16.msra.mxu0 %v509
  %705 = vmatprep.subr.bf16.mxu0 0
  %706 = vmatpush2.bf16.msra.mxu0 %v508
  %707 = vmatprep.subr.bf16.mxu0 0
  %708 = vmatpush2.bf16.msra.mxu0 %v507
  %709 = vmatprep.mubr.bf16.mxu0 %v270
  %710 = vmatmul.mubr.bf16.gmra.mxu0 %v269
  %v711 = vpop.f32.mrf.mxu0
  %v712 = vadd.f32 %v615, %v711
  %v713 = vpop.f32.mrf.mxu0
  %v714 = vpop.f32.mrf.mxu0
  %v715 = vadd.f32 %v618, %v714
  %v716 = vpop.f32.mrf.mxu0
  %717 = vmatprep.mubr.bf16.mxu0 %v275
  %718 = vmatmul.mubr.bf16.gmra.mxu0 %v274
  %v719 = vpop.f32.mrf.mxu0
  %v720 = vadd.f32 %v623, %v719
  %v721 = vpop.f32.mrf.mxu0
  %v722 = vpop.f32.mrf.mxu0
  %v723 = vadd.f32 %v626, %v722
  %v724 = vpop.f32.mrf.mxu0
  %725 = vmatprep.mubr.bf16.mxu0 %v280
  %726 = vmatmul.mubr.bf16.gmra.mxu0 %v279
  %v727 = vpop.f32.mrf.mxu0
  %v728 = vadd.f32 %v631, %v727
  %v729 = vpop.f32.mrf.mxu0
  %v730 = vpop.f32.mrf.mxu0
  %v731 = vadd.f32 %v634, %v730
  %v732 = vpop.f32.mrf.mxu0
  %733 = vmatprep.mubr.bf16.mxu0 %v285
  %734 = vmatmul.mubr.bf16.gmra.mxu0 %v284
  %v735 = vpop.f32.mrf.mxu0
  %v736 = vadd.f32 %v639, %v735
  %v737 = vpop.f32.mrf.mxu0
  %v738 = vpop.f32.mrf.mxu0
  %v739 = vadd.f32 %v642, %v738
  %v740 = vpop.f32.mrf.mxu0
  %741 = vmatprep.mubr.bf16.mxu0 %v290
  %742 = vmatmul.mubr.bf16.gmra.mxu0 %v289
  %v743 = vpop.f32.mrf.mxu0
  %v744 = vadd.f32 %v647, %v743
  %v745 = vpop.f32.mrf.mxu0
  %v746 = vpop.f32.mrf.mxu0
  %v747 = vadd.f32 %v650, %v746
  %v748 = vpop.f32.mrf.mxu0
  %749 = vmatprep.mubr.bf16.mxu0 %v295
  %750 = vmatmul.mubr.bf16.gmra.mxu0 %v294
  %v751 = vpop.f32.mrf.mxu0
  %v752 = vadd.f32 %v655, %v751
  %v753 = vpop.f32.mrf.mxu0
  %v754 = vpop.f32.mrf.mxu0
  %v755 = vadd.f32 %v658, %v754
  %v756 = vpop.f32.mrf.mxu0
  %757 = vmatprep.mubr.bf16.mxu0 %v300
  %758 = vmatmul.mubr.bf16.gmra.mxu0 %v299
  %v759 = vpop.f32.mrf.mxu0
  %v760 = vadd.f32 %v663, %v759
  %v761 = vpop.f32.mrf.mxu0
  %v762 = vpop.f32.mrf.mxu0
  %v763 = vadd.f32 %v666, %v762
  %v764 = vpop.f32.mrf.mxu0
  %765 = vmatprep.mubr.bf16.mxu0 %v305
  %766 = vmatmul.mubr.bf16.gmra.mxu0 %v304
  %v767 = vpop.f32.mrf.mxu0
  %v768 = vadd.f32 %v671, %v767
  %v769 = vpop.f32.mrf.mxu0
  %v770 = vpop.f32.mrf.mxu0
  %v771 = vadd.f32 %v674, %v770
  %v772 = vpop.f32.mrf.mxu0
  %773 = vdwg.mxu0
  %774 = vmatprep.subr.bf16.mxu0 0
  %775 = vmatpush1.bf16.msra.mxu0 0
  %776 = vmatprep.subr.bf16.mxu0 0
  %777 = vmatpush1.bf16.msra.mxu0 0
  %778 = vmatprep.subr.bf16.mxu0 0
  %779 = vmatpush1.bf16.msra.mxu0 0
  %780 = vmatprep.subr.bf16.mxu0 0
  %781 = vmatpush1.bf16.msra.mxu0 0
  %782 = vmatprep.subr.bf16.mxu0 0
  %783 = vmatpush1.bf16.msra.mxu0 %v518
  %784 = vmatprep.subr.bf16.mxu0 0
  %785 = vmatpush1.bf16.msra.mxu0 %v517
  %786 = vmatprep.subr.bf16.mxu0 0
  %787 = vmatpush1.bf16.msra.mxu0 %v516
  %788 = vmatprep.subr.bf16.mxu0 0
  %789 = vmatpush1.bf16.msra.mxu0 %v515
  %790 = vmatprep.subr.bf16.mxu0 0
  %791 = vmatpush2.bf16.msra.mxu0 0
  %792 = vmatprep.subr.bf16.mxu0 0
  %793 = vmatpush2.bf16.msra.mxu0 0
  %794 = vmatprep.subr.bf16.mxu0 0
  %795 = vmatpush2.bf16.msra.mxu0 0
  %796 = vmatprep.subr.bf16.mxu0 0
  %797 = vmatpush2.bf16.msra.mxu0 0
  %798 = vmatprep.subr.bf16.mxu0 0
  %799 = vmatpush2.bf16.msra.mxu0 0
  %800 = vmatprep.subr.bf16.mxu0 0
  %801 = vmatpush2.bf16.msra.mxu0 0
  %802 = vmatprep.subr.bf16.mxu0 0
  %803 = vmatpush2.bf16.msra.mxu0 0
  %804 = vmatprep.subr.bf16.mxu0 0
  %805 = vmatpush2.bf16.msra.mxu0 0
  %806 = vmatprep.mubr.bf16.mxu0 0
  %807 = vmatmul.mubr.bf16.gmra.mxu0 %v557
  %v808 = vpop.f32.mrf.mxu0
  %v809 = vadd.f32 %v712, %v808
  %v810 = vpop.f32.mrf.mxu0
  %v811 = vpop.f32.mrf.mxu0
  %v812 = vadd.f32 %v715, %v811
  %v813 = vpop.f32.mrf.mxu0
  %814 = vmatprep.mubr.bf16.mxu0 0
  %815 = vmatmul.mubr.bf16.gmra.mxu0 %v560
  %v816 = vpop.f32.mrf.mxu0
  %v817 = vadd.f32 %v720, %v816
  %v818 = vpop.f32.mrf.mxu0
  %v819 = vpop.f32.mrf.mxu0
  %v820 = vadd.f32 %v723, %v819
  %v821 = vpop.f32.mrf.mxu0
  %822 = vmatprep.mubr.bf16.mxu0 0
  %823 = vmatmul.mubr.bf16.gmra.mxu0 %v563
  %v824 = vpop.f32.mrf.mxu0
  %v825 = vadd.f32 %v728, %v824
  %v826 = vpop.f32.mrf.mxu0
  %v827 = vpop.f32.mrf.mxu0
  %v828 = vadd.f32 %v731, %v827
  %v829 = vpop.f32.mrf.mxu0
  %830 = vmatprep.mubr.bf16.mxu0 0
  %831 = vmatmul.mubr.bf16.gmra.mxu0 %v566
  %v832 = vpop.f32.mrf.mxu0
  %v833 = vadd.f32 %v736, %v832
  %v834 = vpop.f32.mrf.mxu0
  %v835 = vpop.f32.mrf.mxu0
  %v836 = vadd.f32 %v739, %v835
  %v837 = vpop.f32.mrf.mxu0
  %838 = vmatprep.mubr.bf16.mxu0 0
  %839 = vmatmul.mubr.bf16.gmra.mxu0 %v569
  %v840 = vpop.f32.mrf.mxu0
  %v841 = vadd.f32 %v744, %v840
  %v842 = vpop.f32.mrf.mxu0
  %v843 = vpop.f32.mrf.mxu0
  %v844 = vadd.f32 %v747, %v843
  %v845 = vpop.f32.mrf.mxu0
  %846 = vmatprep.mubr.bf16.mxu0 0
  %847 = vmatmul.mubr.bf16.gmra.mxu0 %v572
  %v848 = vpop.f32.mrf.mxu0
  %v849 = vadd.f32 %v752, %v848
  %v850 = vpop.f32.mrf.mxu0
  %v851 = vpop.f32.mrf.mxu0
  %v852 = vadd.f32 %v755, %v851
  %v853 = vpop.f32.mrf.mxu0
  %854 = vmatprep.mubr.bf16.mxu0 0
  %855 = vmatmul.mubr.bf16.gmra.mxu0 %v575
  %v856 = vpop.f32.mrf.mxu0
  %v857 = vadd.f32 %v760, %v856
  %v858 = vpop.f32.mrf.mxu0
  %v859 = vpop.f32.mrf.mxu0
  %v860 = vadd.f32 %v763, %v859
  %v861 = vpop.f32.mrf.mxu0
  %862 = vmatprep.mubr.bf16.mxu0 0
  %863 = vmatmul.mubr.bf16.gmra.mxu0 %v578
  %v864 = vpop.f32.mrf.mxu0
  %v865 = vadd.f32 %v768, %v864
  %v866 = vpop.f32.mrf.mxu0
  %v867 = vpop.f32.mrf.mxu0
  %v868 = vadd.f32 %v771, %v867
  %v869 = vpop.f32.mrf.mxu0
  %870 = vdwg.mxu0
  %v871 = vsel %vm555, %v809, 0.0
  %v872 = vsel %vm555, %v812, 0.0
  %v873 = vadd.f32 %v871, %v872
  %v874 = vsel %vm555, %v817, 0.0
  %v875 = vadd.f32 %v873, %v874
  %v876 = vsel %vm555, %v820, 0.0
  %v877 = vadd.f32 %v875, %v876
  %v878 = vsel %vm555, %v825, 0.0
  %v879 = vadd.f32 %v877, %v878
  %v880 = vsel %vm555, %v828, 0.0
  %v881 = vadd.f32 %v879, %v880
  %v882 = vsel %vm555, %v833, 0.0
  %v883 = vadd.f32 %v881, %v882
  %v884 = vsel %vm555, %v836, 0.0
  %v885 = vadd.f32 %v883, %v884
  %v886 = vsel %vm555, %v841, 0.0
  %v887 = vadd.f32 %v885, %v886
  %v888 = vsel %vm555, %v844, 0.0
  %v889 = vadd.f32 %v887, %v888
  %v890 = vsel %vm555, %v849, 0.0
  %v891 = vadd.f32 %v889, %v890
  %v892 = vsel %vm555, %v852, 0.0
  %v893 = vadd.f32 %v891, %v892
  %v894 = vsel %vm555, %v857, 0.0
  %v895 = vadd.f32 %v893, %v894
  %v896 = vsel %vm555, %v860, 0.0
  %v897 = vadd.f32 %v895, %v896
  %v898 = vsel %vm555, %v865, 0.0
  %v899 = vadd.f32 %v897, %v898
  %v900 = vsel %vm555, %v868, 0.0
  %v901 = vadd.f32 %v899, %v900
  %v902 = vrot.slane %v901, 4
  %v903 = vadd.f32 %v901, %v902
  %v904 = vrot.slane %v903, 2
  %v905 = vadd.f32 %v903, %v904
  %v906 = vrot.slane %v905, 1
  %v907 = vadd.f32 %v905, %v906
  %v908 = vrcp.pop 128.0
  %v909 = vmul.f32 %v907, %v908
  %v910 = vsub.f32 %v809, %v909
  %v911 = vsub.f32 %v812, %v909
  %v912 = vsub.f32 %v817, %v909
  %v913 = vsub.f32 %v820, %v909
  %v914 = vsub.f32 %v825, %v909
  %v915 = vsub.f32 %v828, %v909
  %v916 = vsub.f32 %v833, %v909
  %v917 = vsub.f32 %v836, %v909
  %v918 = vsub.f32 %v841, %v909
  %v919 = vsub.f32 %v844, %v909
  %v920 = vsub.f32 %v849, %v909
  %v921 = vsub.f32 %v852, %v909
  %v922 = vsub.f32 %v857, %v909
  %v923 = vsub.f32 %v860, %v909
  %v924 = vsub.f32 %v865, %v909
  %v925 = vsub.f32 %v868, %v909
  %v926 = vmul.f32 %v910, %v910
  %v927 = vmul.f32 %v911, %v911
  %v928 = vmul.f32 %v912, %v912
  %v929 = vmul.f32 %v913, %v913
  %v930 = vmul.f32 %v914, %v914
  %v931 = vmul.f32 %v915, %v915
  %v932 = vmul.f32 %v916, %v916
  %v933 = vmul.f32 %v917, %v917
  %v934 = vmul.f32 %v918, %v918
  %v935 = vmul.f32 %v919, %v919
  %v936 = vmul.f32 %v920, %v920
  %v937 = vmul.f32 %v921, %v921
  %v938 = vmul.f32 %v922, %v922
  %v939 = vmul.f32 %v923, %v923
  %v940 = vmul.f32 %v924, %v924
  %v941 = vmul.f32 %v925, %v925
  %v942 = vsel %vm555, %v926, 0.0
  %v943 = vsel %vm555, %v927, 0.0
  %v944 = vadd.f32 %v942, %v943
  %v945 = vsel %vm555, %v928, 0.0
  %v946 = vadd.f32 %v944, %v945
  %v947 = vsel %vm555, %v929, 0.0
  %v948 = vadd.f32 %v946, %v947
  %v949 = vsel %vm555, %v930, 0.0
  %v950 = vadd.f32 %v948, %v949
  %v951 = vsel %vm555, %v931, 0.0
  %v952 = vadd.f32 %v950, %v951
  %v953 = vsel %vm555, %v932, 0.0
  %v954 = vadd.f32 %v952, %v953
  %v955 = vsel %vm555, %v933, 0.0
  %v956 = vadd.f32 %v954, %v955
  %v957 = vsel %vm555, %v934, 0.0
  %v958 = vadd.f32 %v956, %v957
  %v959 = vsel %vm555, %v935, 0.0
  %v960 = vadd.f32 %v958, %v959
  %v961 = vsel %vm555, %v936, 0.0
  %v962 = vadd.f32 %v960, %v961
  %v963 = vsel %vm555, %v937, 0.0
  %v964 = vadd.f32 %v962, %v963
  %v965 = vsel %vm555, %v938, 0.0
  %v966 = vadd.f32 %v964, %v965
  %v967 = vsel %vm555, %v939, 0.0
  %v968 = vadd.f32 %v966, %v967
  %v969 = vsel %vm555, %v940, 0.0
  %v970 = vadd.f32 %v968, %v969
  %v971 = vsel %vm555, %v941, 0.0
  %v972 = vadd.f32 %v970, %v971
  %v973 = vrot.slane %v972, 4
  %v974 = vadd.f32 %v972, %v973
  %v975 = vrot.slane %v974, 2
  %v976 = vadd.f32 %v974, %v975
  %v977 = vrot.slane %v976, 1
  %v978 = vadd.f32 %v976, %v977
  %v979 = vmul.f32 %v978, %v908
  %v980 = vadd.f32 %v979, 1e-05
  %v981 = vrsqrt.pop %v980
  %v982 = vmul.f32 %v910, %v981
  %v983 = vmul.f32 %v911, %v981
  %v984 = vmul.f32 %v912, %v981
  %v985 = vmul.f32 %v913, %v981
  %v986 = vmul.f32 %v914, %v981
  %v987 = vmul.f32 %v915, %v981
  %v988 = vmul.f32 %v916, %v981
  %v989 = vmul.f32 %v917, %v981
  %v990 = vmul.f32 %v918, %v981
  %v991 = vmul.f32 %v919, %v981
  %v992 = vmul.f32 %v920, %v981
  %v993 = vmul.f32 %v921, %v981
  %v994 = vmul.f32 %v922, %v981
  %v995 = vmul.f32 %v923, %v981
  %v996 = vmul.f32 %v924, %v981
  %v997 = vmul.f32 %v925, %v981
  %v998 = vld [vmem:[%s3] sm:$0xff]
  %v999 = vld [vmem:[%s3 + $0x8] sm:$0xff]
  %v1000 = vld [vmem:[%s3 + $0x10] sm:$0xff]
  %v1001 = vld [vmem:[%s3 + $0x18] sm:$0xff]
  %v1002 = vld [vmem:[%s3 + $0x20] sm:$0xff]
  %v1003 = vld [vmem:[%s3 + $0x28] sm:$0xff]
  %v1004 = vld [vmem:[%s3 + $0x30] sm:$0xff]
  %v1005 = vld [vmem:[%s3 + $0x38] sm:$0xff]
  %v1006 = vld [vmem:[%s3 + $0x40] sm:$0xff]
  %v1007 = vld [vmem:[%s3 + $0x48] sm:$0xff]
  %v1008 = vld [vmem:[%s3 + $0x50] sm:$0xff]
  %v1009 = vld [vmem:[%s3 + $0x58] sm:$0xff]
  %v1010 = vld [vmem:[%s3 + $0x60] sm:$0xff]
  %v1011 = vld [vmem:[%s3 + $0x68] sm:$0xff]
  %v1012 = vld [vmem:[%s3 + $0x70] sm:$0xff]
  %v1013 = vld [vmem:[%s3 + $0x78] sm:$0xff]
  %v1014 = vadd.f32 %v982, %v998
  %v1015 = vadd.f32 %v983, %v999
  %v1016 = vadd.f32 %v984, %v1000
  %v1017 = vadd.f32 %v985, %v1001
  %v1018 = vadd.f32 %v986, %v1002
  %v1019 = vadd.f32 %v987, %v1003
  %v1020 = vadd.f32 %v988, %v1004
  %v1021 = vadd.f32 %v989, %v1005
  %v1022 = vadd.f32 %v990, %v1006
  %v1023 = vadd.f32 %v991, %v1007
  %v1024 = vadd.f32 %v992, %v1008
  %v1025 = vadd.f32 %v993, %v1009
  %v1026 = vadd.f32 %v994, %v1010
  %v1027 = vadd.f32 %v995, %v1011
  %v1028 = vadd.f32 %v996, %v1012
  %v1029 = vadd.f32 %v997, %v1013
  %1030 = vst.msk [vmem:[%s4] sm:$0xff] %vm555, %v1014
  %1031 = vst.msk [vmem:[%s4 + $0x8] sm:$0xff] %vm555, %v1015
  %1032 = vst.msk [vmem:[%s4 + $0x10] sm:$0xff] %vm555, %v1016
  %1033 = vst.msk [vmem:[%s4 + $0x18] sm:$0xff] %vm555, %v1017
  %1034 = vst.msk [vmem:[%s4 + $0x20] sm:$0xff] %vm555, %v1018
  %1035 = vst.msk [vmem:[%s4 + $0x28] sm:$0xff] %vm555, %v1019
  %1036 = vst.msk [vmem:[%s4 + $0x30] sm:$0xff] %vm555, %v1020
  %1037 = vst.msk [vmem:[%s4 + $0x38] sm:$0xff] %vm555, %v1021
  %1038 = vst.msk [vmem:[%s4 + $0x40] sm:$0xff] %vm555, %v1022
  %1039 = vst.msk [vmem:[%s4 + $0x48] sm:$0xff] %vm555, %v1023
  %1040 = vst.msk [vmem:[%s4 + $0x50] sm:$0xff] %vm555, %v1024
  %1041 = vst.msk [vmem:[%s4 + $0x58] sm:$0xff] %vm555, %v1025
  %1042 = vst.msk [vmem:[%s4 + $0x60] sm:$0xff] %vm555, %v1026
  %1043 = vst.msk [vmem:[%s4 + $0x68] sm:$0xff] %vm555, %v1027
  %1044 = vst.msk [vmem:[%s4 + $0x70] sm:$0xff] %vm555, %v1028
  %1045 = vst.msk [vmem:[%s4 + $0x78] sm:$0xff] %vm555, %v1029
  // Predicated region
  $region18: #{netg_forward.13} parent=0 // pred_check
    _
  $region19: #{netg_forward.13} parent=0 // pred_check_branch
    %1047 = sbr.rel (0) target = $region21
  $region20: #{netg_forward.13} parent=0 // pred_region
    _
  $region21: #{netg_forward.13} parent=0 // pred_fallthru
    _
  // Predicated region
  $region22: #{netg_forward.13} parent=0 // pred_check
    _
  $region23: #{netg_forward.13} parent=0 // pred_check_branch
    %1049 = sbr.rel (0) target = $region25
  $region24: #{netg_forward.13} parent=0 // pred_region
    _
  $region25: #{netg_forward.13} parent=0 // pred_fallthru
    _

// kernel: netg_forward.19
$region0: #{netg_forward.19}
  #allocation0 [shape = 'u32[]', space=smem, size = 0x4, offset = 0x4, fixed_abs, tag = 'smem constant byte address 0x4 - core index']
  #allocation1 [shape = 'u32[144,128]{1,0:T(1,128)}', space=vmem, size = 0x12000, scoped, tag = 'internal scratch']
  #allocation2 [shape = 'f32[1]{0:T(128)S(6)}', space=smem, size = 0x200, scoped, tag = 'scoped memory for netg_forward.19']
  %s0 = inlined_call_operand.<no memory space> [shape: f32[1], index: 0, kind: input, shape index: {}]
  %s1 = inlined_call_operand.vmem [shape: bf16[128,576], index: 1, kind: input, shape index: {}]
  %s2 = inlined_call_operand.vmem [shape: bf16[576,256], index: 2, kind: input, shape index: {}]
  %s3 = inlined_call_operand.vmem [shape: f32[128,256], index: 3, kind: output, shape index: {}]
  %s4 = sld [smem:[#allocation0]]
  $region45: #{netg_forward.19} parent=0
    _
  %s6 = ssub.s32 1, %s4
  %s7 = scalar_select 0, %s6, %s4
  %8 = sst [smem:[#allocation2]] %s0
  loop: start=0, step=1, limit=4
  $region2: #{netg_forward.19} parent=0 // loop_pre_header
    _
  $region3: #{netg_forward.19} parent=0 // loop_header
    %s10 = sphi 0, %s14
    %p11 = scmp.ge.s32.totalorder %s10, 4
    %s18 = sphi 0, %s18
    %s20 = sphi 0, %s18
    %s21 = sphi 0, %s20
    %s35 = sphi 0, %s21
    %s41 = sphi 0, %s43
    %s44 = sphi 0, %s41
    %s45 = sphi 0, %s44
    %s61 = sphi 0, %s45
    %s65 = sphi 0, %s65
    %s67 = sphi 0, %s65
    %s68 = sphi 0, %s67
    %s82 = sphi 0, %s68
    %s88 = sphi 0, %s90
    %s91 = sphi 0, %s88
    %s92 = sphi 0, %s91
    %s108 = sphi 0, %s92
  $region4: #{netg_forward.19} parent=0 // loop_header_branch
    %13 = sbr.rel (%p11) target = $region8
  $region5: #{netg_forward.19} parent=0 // loop_body
    %s15 = ssub.s32 %s10, 1
    %s16 = ssub.s32 %s10, 2
    %s17 = sadd.s32 %s10, 1
    %s19 = sadd.s32 %s18, 1
    %p22 = scmp.eq.s32.totalorder %s10, 1
    %p23 = scmp.ne.s32.totalorder %s18, %s20
    %p24 = scmp.eq.s32.totalorder %s10, 0
    %p25 = por %p23, %p24
    %p26 = scmp.ne.s32.totalorder %s18, %s20
    %p27 = scmp.eq.s32.totalorder %s15, 1
    %p28 = por %p26, %p27
    %p29 = scmp.ne.s32.totalorder %s20, %s21
    %p30 = scmp.eq.s32.totalorder %s15, 0
    %p31 = por %p29, %p30
    %p32 = scmp.ne.s32.totalorder %s20, %s21
    %p33 = scmp.eq.s32.totalorder %s16, 1
    %p34 = por %p32, %p33
    %p36 = scmp.ne.s32.totalorder %s21, %s35
    %p37 = scmp.eq.s32.totalorder %s16, 0
    %p38 = por %p36, %p37
    %s39 = ssub.s32 %s10, %s17
    %p40 = scmp.eq.s32.totalorder %s39, 0
    %s42 = sadd.s32 %s41, 1
    %s43 = scalar_select %p40, %s41, %s42
    %p46 = pneg %p40
    %p47 = scmp.eq.s32.totalorder %s10, 1
    %p48 = por %p46, %p47
    %p49 = scmp.ne.s32.totalorder %s41, %s44
    %p50 = scmp.eq.s32.totalorder %s10, 0
    %p51 = por %p49, %p50
    %p52 = scmp.ne.s32.totalorder %s41, %s44
    %p53 = scmp.eq.s32.totalorder %s15, 1
    %p54 = por %p52, %p53
    %p55 = scmp.ne.s32.totalorder %s44, %s45
    %p56 = scmp.eq.s32.totalorder %s15, 0
    %p57 = por %p55, %p56
    %p58 = scmp.ne.s32.totalorder %s44, %s45
    %p59 = scmp.eq.s32.totalorder %s16, 1
    %p60 = por %p58, %p59
    %p62 = scmp.ne.s32.totalorder %s45, %s61
    %p63 = scmp.eq.s32.totalorder %s16, 0
    %p64 = por %p62, %p63
    %s66 = sadd.s32 %s65, 1
    %p69 = scmp.eq.s32.totalorder %s10, 1
    %p70 = scmp.ne.s32.totalorder %s65, %s67
    %p71 = scmp.eq.s32.totalorder %s10, 0
    %p72 = por %p70, %p71
    %p73 = scmp.ne.s32.totalorder %s65, %s67
    %p74 = scmp.eq.s32.totalorder %s15, 1
    %p75 = por %p73, %p74
    %p76 = scmp.ne.s32.totalorder %s67, %s68
    %p77 = scmp.eq.s32.totalorder %s15, 0
    %p78 = por %p76, %p77
    %p79 = scmp.ne.s32.totalorder %s67, %s68
    %p80 = scmp.eq.s32.totalorder %s16, 1
    %p81 = por %p79, %p80
    %p83 = scmp.ne.s32.totalorder %s68, %s82
    %p84 = scmp.eq.s32.totalorder %s16, 0
    %p85 = por %p83, %p84
    %s86 = ssub.s32 %s10, %s17
    %p87 = scmp.eq.s32.totalorder %s86, 0
    %s89 = sadd.s32 %s88, 1
    %s90 = scalar_select %p87, %s88, %s89
    %p93 = pneg %p87
    %p94 = scmp.eq.s32.totalorder %s10, 1
    %p95 = por %p93, %p94
    %p96 = scmp.ne.s32.totalorder %s88, %s91
    %p97 = scmp.eq.s32.totalorder %s10, 0
    %p98 = por %p96, %p97
    %p99 = scmp.ne.s32.totalorder %s88, %s91
    %p100 = scmp.eq.s32.totalorder %s15, 1
    %p101 = por %p99, %p100
    %p102 = scmp.ne.s32.totalorder %s91, %s92
    %p103 = scmp.eq.s32.totalorder %s15, 0
    %p104 = por %p102, %p103
    %p105 = scmp.ne.s32.totalorder %s91, %s92
    %p106 = scmp.eq.s32.totalorder %s16, 1
    %p107 = por %p105, %p106
    %p109 = scmp.ne.s32.totalorder %s92, %s108
    %p110 = scmp.eq.s32.totalorder %s16, 0
    %p111 = por %p109, %p110
    %p112 = scmp.le.s32.totalorder 1, %s10
    %p113 = scmp.lt.s32.totalorder %s10, 3
    %p114 = pnand %p112, %p113
    %p115 = pneg %p114
    // Predicated region
    $region9: #{netg_forward.19} parent=5 // pred_check
      _
    $region10: #{netg_forward.19} parent=5 // pred_check_branch
      %117 = sbr.rel (%p114) target = $region12
    $region11: #{netg_forward.19} parent=5 // pred_region
      %s118 = ssub.s32 %s10, 1
      // Predicated region
      $region13: #{netg_forward.19} parent=11 // pred_check
        %p119 = pneg %p31
      $region14: #{netg_forward.19} parent=11 // pred_check_branch
        %121 = sbr.rel (%p119) target = $region16
      $region15: #{netg_forward.19} parent=11 // pred_region
        _
      $region16: #{netg_forward.19} parent=11 // pred_fallthru
        _
      // Predicated region
      $region17: #{netg_forward.19} parent=11 // pred_check
        %p122 = pneg %p78
      $region18: #{netg_forward.19} parent=11 // pred_check_branch
        %124 = sbr.rel (%p122) target = $region20
      $region19: #{netg_forward.19} parent=11 // pred_region
        _
      $region20: #{netg_forward.19} parent=11 // pred_fallthru
        _
    $region12: #{netg_forward.19} parent=5 // pred_fallthru
      _
    %p125 = scmp.lt.s32.totalorder %s10, 2
    // Predicated region
    $region21: #{netg_forward.19} parent=5 // pred_check
      %p126 = pneg %p125
    $region22: #{netg_forward.19} parent=5 // pred_check_branch
      %128 = sbr.rel (%p126) target = $region24
    $region23: #{netg_forward.19} parent=5 // pred_region
      // Predicated region
      $region25: #{netg_forward.19} parent=23 // pred_check
        %p129 = pneg %p51
      $region26: #{netg_forward.19} parent=23 // pred_check_branch
        %131 = sbr.rel (%p129) target = $region28
      $region27: #{netg_forward.19} parent=23 // pred_region
        %s132 = smul.u32 8, %s10
        %p133 = scmp.lt.s32.totalorder %s132, 15
        %s134 = scalar_select %p133, %s132, 15
        %s135 = smul.addr %s134, 5
        %s136 = smul.addr %s135, 4
        %s137 = scalar_lea.vmem %s1, %s136
        %s138 = smul.u32 8, %s10
      $region28: #{netg_forward.19} parent=23 // pred_fallthru
        _
    $region24: #{netg_forward.19} parent=5 // pred_fallthru
      _
    %p139 = scmp.le.s32.totalorder 1, %s10
    %p140 = scmp.lt.s32.totalorder %s10, 3
    %p141 = pnand %p139, %p140
    %p142 = pneg %p141
    // Predicated region
    $region29: #{netg_forward.19} parent=5 // pred_check
      _
    $region30: #{netg_forward.19} parent=5 // pred_check_branch
      %144 = sbr.rel (%p141) target = $region32
    $region31: #{netg_forward.19} parent=5 // pred_region
      %s145 = ssub.s32 %s10, 1
      %p146 = pneg %p31
      %p147 = pneg %p28
      %s148 = smul.u32 8, %s15
      %p149 = scmp.lt.s32.totalorder %s148, 15
      %s150 = scalar_select %p149, %s148, 15
      %s151 = smul.addr %s150, 5
      %s152 = smul.addr %s151, 4
      %s153 = scalar_lea.vmem %s1, %s152
      %p154 = pneg %p57
      %p155 = pneg %p54
      %p156 = pneg %p78
      %p157 = pneg %p75
      %p158 = pneg %p104
      %p159 = pneg %p101
      %s160 = smul.u32 8, %s15
      %p161 = scmp.lt.s32.totalorder %s160, 15
      %s162 = scalar_select %p161, %s160, 15
      %s163 = smul.addr %s162, 2
      %s164 = smul.addr %s163, 8
      %s165 = scalar_lea.vmem %s3, %s164
      %s166 = smul.u32 8, %s15
      %p167 = scmp.lt.s32.totalorder %s166, 15
      %s168 = scalar_select %p167, %s166, 15
      %s169 = smul.addr %s168, 5
      %s170 = smul.addr %s169, 4
      %s171 = scalar_lea.vmem %s1, %s170
      %s172 = smul.u32 8, %s15
      %s173 = smul.u32 8, %s15
      %p174 = scmp.lt.s32.totalorder %s173, 15
      %s175 = scalar_select %p174, %s173, 15
      %s176 = smul.addr %s175, 2
      %s177 = smul.addr %s176, 8
      %s178 = scalar_lea.vmem %s3, %s177
      %s179 = smul.u32 8, %s15
      %v181 = vld [vmem:[%s171] sm:$0xff]
      %v182 = vld [vmem:[%s171 + $0x8] sm:$0xff]
      %v183 = vld [vmem:[%s171 + $0x10] sm:$0xf]
      %v184 = vld [vmem:[%s171 + $0x14] sm:$0xff]
      %v185 = vld [vmem:[%s171 + $0x1c] sm:$0xff]
      %v186 = vld [vmem:[%s171 + $0x24] sm:$0xf]
      %v187 = vld [vmem:[%s171 + $0x28] sm:$0xff]
      %v188 = vld [vmem:[%s171 + $0x30] sm:$0xff]
      %v189 = vld [vmem:[%s171 + $0x38] sm:$0xf]
      %v190 = vld [vmem:[%s171 + $0x3c] sm:$0xff]
      %v191 = vld [vmem:[%s171 + $0x44] sm:$0xff]
      %v192 = vld [vmem:[%s171 + $0x4c] sm:$0xf]
      %v193 = vld [vmem:[%s171 + $0x50] sm:$0xff]
      %v194 = vld [vmem:[%s171 + $0x58] sm:$0xff]
      %v195 = vld [vmem:[%s171 + $0x60] sm:$0xf]
      %v196 = vld [vmem:[%s171 + $0x64] sm:$0xff]
      %v197 = vld [vmem:[%s171 + $0x6c] sm:$0xff]
      %v198 = vld [vmem:[%s171 + $0x74] sm:$0xf]
      %v199 = vld [vmem:[%s171 + $0x78] sm:$0xff]
      %v200 = vld [vmem:[%s171 + $0x80] sm:$0xff]
      %v201 = vld [vmem:[%s171 + $0x88] sm:$0xf]
      %v202 = vld [vmem:[%s171 + $0x8c] sm:$0xff]
      %v203 = vld [vmem:[%s171 + $0x94] sm:$0xff]
      %v204 = vld [vmem:[%s171 + $0x9c] sm:$0xf]
      %v205 = vld [vmem:[%s2] sm:$0xff]
      %v206 = vld [vmem:[%s2 + $0x8] sm:$0xff]
      %v207 = vld [vmem:[%s2 + $0x10] sm:$0xff]
      %v208 = vld [vmem:[%s2 + $0x18] sm:$0xff]
      %v209 = vld [vmem:[%s2 + $0x20] sm:$0xff]
      %v210 = vld [vmem:[%s2 + $0x28] sm:$0xff]
      %v211 = vld [vmem:[%s2 + $0x30] sm:$0xff]
      %v212 = vld [vmem:[%s2 + $0x38] sm:$0xff]
      %v213 = vld [vmem:[%s2 + $0x40] sm:$0xff]
      %v214 = vld [vmem:[%s2 + $0x48] sm:$0xff]
      %v215 = vld [vmem:[%s2 + $0x50] sm:$0xff]
      %v216 = vld [vmem:[%s2 + $0x58] sm:$0xff]
      %v217 = vld [vmem:[%s2 + $0x60] sm:$0xff]
      %v218 = vld [vmem:[%s2 + $0x68] sm:$0xff]
      %v219 = vld [vmem:[%s2 + $0x70] sm:$0xff]
      %v220 = vld [vmem:[%s2 + $0x78] sm:$0xff]
      %v221 = vld [vmem:[%s2 + $0x80] sm:$0xff]
      %v222 = vld [vmem:[%s2 + $0x88] sm:$0xff]
      %v223 = vld [vmem:[%s2 + $0x90] sm:$0xff]
      %v224 = vld [vmem:[%s2 + $0x98] sm:$0xff]
      %v225 = vld [vmem:[%s2 + $0xa0] sm:$0xff]
      %v226 = vld [vmem:[%s2 + $0xa8] sm:$0xff]
      %v227 = vld [vmem:[%s2 + $0xb0] sm:$0xff]
      %v228 = vld [vmem:[%s2 + $0xb8] sm:$0xff]
      %v229 = vld [vmem:[%s2 + $0xc0] sm:$0xff]
      %v230 = vld [vmem:[%s2 + $0xc8] sm:$0xff]
      %v231 = vld [vmem:[%s2 + $0xd0] sm:$0xff]
      %v232 = vld [vmem:[%s2 + $0xd8] sm:$0xff]
      %v233 = vld [vmem:[%s2 + $0xe0] sm:$0xff]
      %v234 = vld [vmem:[%s2 + $0xe8] sm:$0xff]
      %v235 = vld [vmem:[%s2 + $0xf0] sm:$0xff]
      %v236 = vld [vmem:[%s2 + $0xf8] sm:$0xff]
      %v237 = vld [vmem:[%s2 + $0x100] sm:$0xff]
      %v238 = vld [vmem:[%s2 + $0x108] sm:$0xff]
      %v239 = vld [vmem:[%s2 + $0x110] sm:$0xff]
      %v240 = vld [vmem:[%s2 + $0x118] sm:$0xff]
      %v241 = vld [vmem:[%s2 + $0x120] sm:$0xff]
      %v242 = vld [vmem:[%s2 + $0x128] sm:$0xff]
      %v243 = vld [vmem:[%s2 + $0x130] sm:$0xff]
      %v244 = vld [vmem:[%s2 + $0x138] sm:$0xff]
      %v245 = vld [vmem:[%s2 + $0x140] sm:$0xff]
      %v246 = vld [vmem:[%s2 + $0x148] sm:$0xff]
      %v247 = vld [vmem:[%s2 + $0x150] sm:$0xff]
      %v248 = vld [vmem:[%s2 + $0x158] sm:$0xff]
      %v249 = vld [vmem:[%s2 + $0x160] sm:$0xff]
      %v250 = vld [vmem:[%s2 + $0x168] sm:$0xff]
      %v251 = vld [vmem:[%s2 + $0x170] sm:$0xff]
      %v252 = vld [vmem:[%s2 + $0x178] sm:$0xff]
      %v253 = vld [vmem:[%s2 + $0x180] sm:$0xff]
      %v254 = vld [vmem:[%s2 + $0x188] sm:$0xff]
      %v255 = vld [vmem:[%s2 + $0x190] sm:$0xff]
      %v256 = vld [vmem:[%s2 + $0x198] sm:$0xff]
      %v257 = vld [vmem:[%s2 + $0x1a0] sm:$0xff]
      %v258 = vld [vmem:[%s2 + $0x1a8] sm:$0xff]
      %v259 = vld [vmem:[%s2 + $0x1b0] sm:$0xff]
      %v260 = vld [vmem:[%s2 + $0x1b8] sm:$0xff]
      %v261 = vld [vmem:[%s2 + $0x1c0] sm:$0xff]
      %v262 = vld [vmem:[%s2 + $0x1c8] sm:$0xff]
      %v263 = vld [vmem:[%s2 + $0x1d0] sm:$0xff]
      %v264 = vld [vmem:[%s2 + $0x1d8] sm:$0xff]
      %v265 = vld [vmem:[%s2 + $0x1e0] sm:$0xff]
      %v266 = vld [vmem:[%s2 + $0x1e8] sm:$0xff]
      %v267 = vld [vmem:[%s2 + $0x1f0] sm:$0xff]
      %v268 = vld [vmem:[%s2 + $0x1f8] sm:$0xff]
      %v269 = vld [vmem:[%s2 + $0x200] sm:$0xff]
      %v270 = vld [vmem:[%s2 + $0x208] sm:$0xff]
      %v271 = vld [vmem:[%s2 + $0x210] sm:$0xff]
      %v272 = vld [vmem:[%s2 + $0x218] sm:$0xff]
      %v273 = vld [vmem:[%s2 + $0x220] sm:$0xff]
      %v274 = vld [vmem:[%s2 + $0x228] sm:$0xff]
      %v275 = vld [vmem:[%s2 + $0x230] sm:$0xff]
      %v276 = vld [vmem:[%s2 + $0x238] sm:$0xff]
      %v301 = vunpack.c.l.b16 %v181
      %v302 = vunpack.c.h.b16 %v181
      %v303 = vunpack.c.l.b16 %v182
      %v304 = vunpack.c.h.b16 %v182
      %v305 = vunpack.c.l.b16 %v183
      %v306 = vunpack.c.l.b16 %v184
      %v307 = vunpack.c.h.b16 %v184
      %v308 = vunpack.c.l.b16 %v185
      %v309 = vunpack.c.h.b16 %v185
      %v310 = vunpack.c.l.b16 %v186
      %v311 = vunpack.c.l.b16 %v187
      %v312 = vunpack.c.h.b16 %v187
      %v313 = vunpack.c.l.b16 %v188
      %v314 = vunpack.c.h.b16 %v188
      %v315 = vunpack.c.l.b16 %v189
      %v316 = vunpack.c.l.b16 %v190
      %v317 = vunpack.c.h.b16 %v190
      %v318 = vunpack.c.l.b16 %v191
      %v319 = vunpack.c.h.b16 %v191
      %v320 = vunpack.c.l.b16 %v192
      %v321 = vunpack.c.l.b16 %v193
      %v322 = vunpack.c.h.b16 %v193
      %v323 = vunpack.c.l.b16 %v194
      %v324 = vunpack.c.h.b16 %v194
      %v325 = vunpack.c.l.b16 %v195
      %v326 = vunpack.c.l.b16 %v196
      %v327 = vunpack.c.h.b16 %v196
      %v328 = vunpack.c.l.b16 %v197
      %v329 = vunpack.c.h.b16 %v197
      %v330 = vunpack.c.l.b16 %v198
      %v331 = vunpack.c.l.b16 %v199
      %v332 = vunpack.c.h.b16 %v199
      %v333 = vunpack.c.l.b16 %v200
      %v334 = vunpack.c.h.b16 %v200
      %v335 = vunpack.c.l.b16 %v201
      %v336 = vunpack.c.l.b16 %v202
      %v337 = vunpack.c.h.b16 %v202
      %v338 = vunpack.c.l.b16 %v203
      %v339 = vunpack.c.h.b16 %v203
      %v340 = vunpack.c.l.b16 %v204
      %v341 = vpack.c.b16 %v306, %v301
      %v342 = vpack.c.b16 %v307, %v302
      %v343 = vpack.c.b16 %v308, %v303
      %v344 = vpack.c.b16 %v309, %v304
      %v345 = vpack.c.b16 %v310, %v305
      %v346 = vpack.c.b16 %v316, %v311
      %v347 = vpack.c.b16 %v317, %v312
      %v348 = vpack.c.b16 %v318, %v313
      %v349 = vpack.c.b16 %v319, %v314
      %v350 = vpack.c.b16 %v320, %v315
      %v351 = vpack.c.b16 %v326, %v321
      %v352 = vpack.c.b16 %v327, %v322
      %v353 = vpack.c.b16 %v328, %v323
      %v354 = vpack.c.b16 %v329, %v324
      %v355 = vpack.c.b16 %v330, %v325
      %v356 = vpack.c.b16 %v336, %v331
      %v357 = vpack.c.b16 %v337, %v332
      %v358 = vpack.c.b16 %v338, %v333
      %v359 = vpack.c.b16 %v339, %v334
      %v360 = vpack.c.b16 %v340, %v335
      %v449 = vunpack.c.l.b16 %v205
      %v450 = vunpack.c.h.b16 %v205
      %v451 = vunpack.c.l.b16 %v206
      %v452 = vunpack.c.h.b16 %v206
      %v453 = vunpack.c.l.b16 %v207
      %v454 = vunpack.c.h.b16 %v207
      %v455 = vunpack.c.l.b16 %v208
      %v456 = vunpack.c.h.b16 %v208
      %v457 = vunpack.c.l.b16 %v209
      %v458 = vunpack.c.h.b16 %v209
      %v459 = vunpack.c.l.b16 %v210
      %v460 = vunpack.c.h.b16 %v210
      %v461 = vunpack.c.l.b16 %v211
      %v462 = vunpack.c.h.b16 %v211
      %v463 = vunpack.c.l.b16 %v212
      %v464 = vunpack.c.h.b16 %v212
      %v465 = vunpack.c.l.b16 %v213
      %v466 = vunpack.c.h.b16 %v213
      %v467 = vunpack.c.l.b16 %v214
      %v468 = vunpack.c.h.b16 %v214
      %v469 = vunpack.c.l.b16 %v215
      %v470 = vunpack.c.h.b16 %v215
      %v471 = vunpack.c.l.b16 %v216
      %v472 = vunpack.c.h.b16 %v216
      %v473 = vunpack.c.l.b16 %v217
      %v474 = vunpack.c.h.b16 %v217
      %v475 = vunpack.c.l.b16 %v218
      %v476 = vunpack.c.h.b16 %v218
      %v477 = vunpack.c.l.b16 %v219
      %v478 = vunpack.c.h.b16 %v219
      %v479 = vunpack.c.l.b16 %v220
      %v480 = vunpack.c.h.b16 %v220
      %v481 = vunpack.c.l.b16 %v221
      %v482 = vunpack.c.h.b16 %v221
      %v483 = vunpack.c.l.b16 %v222
      %v484 = vunpack.c.h.b16 %v222
      %v485 = vunpack.c.l.b16 %v223
      %v486 = vunpack.c.h.b16 %v223
      %v487 = vunpack.c.l.b16 %v224
      %v488 = vunpack.c.h.b16 %v224
      %v489 = vunpack.c.l.b16 %v225
      %v490 = vunpack.c.h.b16 %v225
      %v491 = vunpack.c.l.b16 %v226
      %v492 = vunpack.c.h.b16 %v226
      %v493 = vunpack.c.l.b16 %v227
      %v494 = vunpack.c.h.b16 %v227
      %v495 = vunpack.c.l.b16 %v228
      %v496 = vunpack.c.h.b16 %v228
      %v497 = vunpack.c.l.b16 %v229
      %v498 = vunpack.c.h.b16 %v229
      %v499 = vunpack.c.l.b16 %v230
      %v500 = vunpack.c.h.b16 %v230
      %v501 = vunpack.c.l.b16 %v231
      %v502 = vunpack.c.h.b16 %v231
      %v503 = vunpack.c.l.b16 %v232
      %v504 = vunpack.c.h.b16 %v232
      %v505 = vunpack.c.l.b16 %v233
      %v506 = vunpack.c.h.b16 %v233
      %v507 = vunpack.c.l.b16 %v234
      %v508 = vunpack.c.h.b16 %v234
      %v509 = vunpack.c.l.b16 %v235
      %v510 = vunpack.c.h.b16 %v235
      %v511 = vunpack.c.l.b16 %v236
      %v512 = vunpack.c.h.b16 %v236
      %v513 = vunpack.c.l.b16 %v237
      %v514 = vunpack.c.h.b16 %v237
      %v515 = vunpack.c.l.b16 %v238
      %v516 = vunpack.c.h.b16 %v238
      %v517 = vunpack.c.l.b16 %v239
      %v518 = vunpack.c.h.b16 %v239
      %v519 = vunpack.c.l.b16 %v240
      %v520 = vunpack.c.h.b16 %v240
      %v521 = vunpack.c.l.b16 %v241
      %v522 = vunpack.c.h.b16 %v241
      %v523 = vunpack.c.l.b16 %v242
      %v524 = vunpack.c.h.b16 %v242
      %v525 = vunpack.c.l.b16 %v243
      %v526 = vunpack.c.h.b16 %v243
      %v527 = vunpack.c.l.b16 %v244
      %v528 = vunpack.c.h.b16 %v244
      %v529 = vunpack.c.l.b16 %v245
      %v530 = vunpack.c.h.b16 %v245
      %v531 = vunpack.c.l.b16 %v246
      %v532 = vunpack.c.h.b16 %v246
      %v533 = vunpack.c.l.b16 %v247
      %v534 = vunpack.c.h.b16 %v247
      %v535 = vunpack.c.l.b16 %v248
      %v536 = vunpack.c.h.b16 %v248
      %v537 = vunpack.c.l.b16 %v249
      %v538 = vunpack.c.h.b16 %v249
      %v539 = vunpack.c.l.b16 %v250
      %v540 = vunpack.c.h.b16 %v250
      %v541 = vunpack.c.l.b16 %v251
      %v542 = vunpack.c.h.b16 %v251
      %v543 = vunpack.c.l.b16 %v252
      %v544 = vunpack.c.h.b16 %v252
      %v545 = vunpack.c.l.b16 %v253
      %v546 = vunpack.c.h.b16 %v253
      %v547 = vunpack.c.l.b16 %v254
      %v548 = vunpack.c.h.b16 %v254
      %v549 = vunpack.c.l.b16 %v255
      %v550 = vunpack.c.h.b16 %v255
      %v551 = vunpack.c.l.b16 %v256
      %v552 = vunpack.c.h.b16 %v256
      %v553 = vunpack.c.l.b16 %v257
      %v554 = vunpack.c.h.b16 %v257
      %v555 = vunpack.c.l.b16 %v258
      %v556 = vunpack.c.h.b16 %v258
      %v557 = vunpack.c.l.b16 %v259
      %v558 = vunpack.c.h.b16 %v259
      %v559 = vunpack.c.l.b16 %v260
      %v560 = vunpack.c.h.b16 %v260
      %v561 = vunpack.c.l.b16 %v261
      %v562 = vunpack.c.h.b16 %v261
      %v563 = vunpack.c.l.b16 %v262
      %v564 = vunpack.c.h.b16 %v262
      %v565 = vunpack.c.l.b16 %v263
      %v566 = vunpack.c.h.b16 %v263
      %v567 = vunpack.c.l.b16 %v264
      %v568 = vunpack.c.h.b16 %v264
      %v569 = vunpack.c.l.b16 %v265
      %v570 = vunpack.c.h.b16 %v265
      %v571 = vunpack.c.l.b16 %v266
      %v572 = vunpack.c.h.b16 %v266
      %v573 = vunpack.c.l.b16 %v267
      %v574 = vunpack.c.h.b16 %v267
      %v575 = vunpack.c.l.b16 %v268
      %v576 = vunpack.c.h.b16 %v268
      %v577 = vunpack.c.l.b16 %v269
      %v578 = vunpack.c.h.b16 %v269
      %v579 = vunpack.c.l.b16 %v270
      %v580 = vunpack.c.h.b16 %v270
      %v581 = vunpack.c.l.b16 %v271
      %v582 = vunpack.c.h.b16 %v271
      %v583 = vunpack.c.l.b16 %v272
      %v584 = vunpack.c.h.b16 %v272
      %v585 = vunpack.c.l.b16 %v273
      %v586 = vunpack.c.h.b16 %v273
      %v587 = vunpack.c.l.b16 %v274
      %v588 = vunpack.c.h.b16 %v274
      %v589 = vunpack.c.l.b16 %v275
      %v590 = vunpack.c.h.b16 %v275
      %v591 = vunpack.c.l.b16 %v276
      %v592 = vunpack.c.h.b16 %v276
      %v593 = vpack.c.b16 %v451, %v449
      %v594 = vpack.c.b16 %v452, %v450
      %v595 = vpack.c.b16 %v455, %v453
      %v596 = vpack.c.b16 %v456, %v454
      %v597 = vpack.c.b16 %v459, %v457
      %v598 = vpack.c.b16 %v460, %v458
      %v599 = vpack.c.b16 %v463, %v461
      %v600 = vpack.c.b16 %v464, %v462
      %v601 = vpack.c.b16 %v467, %v465
      %v602 = vpack.c.b16 %v468, %v466
      %v603 = vpack.c.b16 %v471, %v469
      %v604 = vpack.c.b16 %v472, %v470
      %v605 = vpack.c.b16 %v475, %v473
      %v606 = vpack.c.b16 %v476, %v474
      %v607 = vpack.c.b16 %v479, %v477
      %v608 = vpack.c.b16 %v480, %v478
      %v609 = vpack.c.b16 %v483, %v481
      %v610 = vpack.c.b16 %v484, %v482
      %v611 = vpack.c.b16 %v487, %v485
      %v612 = vpack.c.b16 %v488, %v486
      %v613 = vpack.c.b16 %v491, %v489
      %v614 = vpack.c.b16 %v492, %v490
      %v615 = vpack.c.b16 %v495, %v493
      %v616 = vpack.c.b16 %v496, %v494
      %v617 = vpack.c.b16 %v499, %v497
      %v618 = vpack.c.b16 %v500, %v498
      %v619 = vpack.c.b16 %v503, %v501
      %v620 = vpack.c.b16 %v504, %v502
      %v621 = vpack.c.b16 %v507, %v505
      %v622 = vpack.c.b16 %v508, %v506
      %v623 = vpack.c.b16 %v511, %v509
      %v624 = vpack.c.b16 %v512, %v510
      %v625 = vpack.c.b16 %v515, %v513
      %v626 = vpack.c.b16 %v516, %v514
      %v627 = vpack.c.b16 %v519, %v517
      %v628 = vpack.c.b16 %v520, %v518
      %v629 = vpack.c.b16 %v523, %v521
      %v630 = vpack.c.b16 %v524, %v522
      %v631 = vpack.c.b16 %v527, %v525
      %v632 = vpack.c.b16 %v528, %v526
      %v633 = vpack.c.b16 %v531, %v529
      %v634 = vpack.c.b16 %v532, %v530
      %v635 = vpack.c.b16 %v535, %v533
      %v636 = vpack.c.b16 %v536, %v534
      %v637 = vpack.c.b16 %v539, %v537
      %v638 = vpack.c.b16 %v540, %v538
      %v639 = vpack.c.b16 %v543, %v541
      %v640 = vpack.c.b16 %v544, %v542
      %v641 = vpack.c.b16 %v547, %v545
      %v642 = vpack.c.b16 %v548, %v546
      %v643 = vpack.c.b16 %v551, %v549
      %v644 = vpack.c.b16 %v552, %v550
      %v645 = vpack.c.b16 %v555, %v553
      %v646 = vpack.c.b16 %v556, %v554
      %v647 = vpack.c.b16 %v559, %v557
      %v648 = vpack.c.b16 %v560, %v558
      %v649 = vpack.c.b16 %v563, %v561
      %v650 = vpack.c.b16 %v564, %v562
      %v651 = vpack.c.b16 %v567, %v565
      %v652 = vpack.c.b16 %v568, %v566
      %v653 = vpack.c.b16 %v571, %v569
      %v654 = vpack.c.b16 %v572, %v570
      %v655 = vpack.c.b16 %v575, %v573
      %v656 = vpack.c.b16 %v576, %v574
      %v657 = vpack.c.b16 %v579, %v577
      %v658 = vpack.c.b16 %v580, %v578
      %v659 = vpack.c.b16 %v583, %v581
      %v660 = vpack.c.b16 %v584, %v582
      %v661 = vpack.c.b16 %v587, %v585
      %v662 = vpack.c.b16 %v588, %v586
      %v663 = vpack.c.b16 %v591, %v589
      %v664 = vpack.c.b16 %v592, %v590
      %vm737 = vcmask 523264
      %v739 = vsel %vm737, %v345, 0
      %v742 = vsel %vm737, %v350, 0
      %v745 = vsel %vm737, %v355, 0
      %v748 = vsel %vm737, %v360, 0
      %750 = vmatprep.subr.bf16.mxu0 %v608
      %751 = vmatpush1.bf16.msra.mxu0 %v607
      %752 = vmatprep.subr.bf16.mxu0 %v606
      %753 = vmatpush1.bf16.msra.mxu0 %v605
      %754 = vmatprep.subr.bf16.mxu0 %v604
      %755 = vmatpush1.bf16.msra.mxu0 %v603
      %756 = vmatprep.subr.bf16.mxu0 %v602
      %757 = vmatpush1.bf16.msra.mxu0 %v601
      %758 = vmatprep.subr.bf16.mxu0 %v600
      %759 = vmatpush1.bf16.msra.mxu0 %v599
      %760 = vmatprep.subr.bf16.mxu0 %v598
      %761 = vmatpush1.bf16.msra.mxu0 %v597
      %762 = vmatprep.subr.bf16.mxu0 %v596
      %763 = vmatpush1.bf16.msra.mxu0 %v595
      %764 = vmatprep.subr.bf16.mxu0 %v594
      %765 = vmatpush1.bf16.msra.mxu0 %v593
      %766 = vmatprep.subr.bf16.mxu0 %v624
      %767 = vmatpush2.bf16.msra.mxu0 %v623
      %768 = vmatprep.subr.bf16.mxu0 %v622
      %769 = vmatpush2.bf16.msra.mxu0 %v621
      %770 = vmatprep.subr.bf16.mxu0 %v620
      %771 = vmatpush2.bf16.msra.mxu0 %v619
      %772 = vmatprep.subr.bf16.mxu0 %v618
      %773 = vmatpush2.bf16.msra.mxu0 %v617
      %774 = vmatprep.subr.bf16.mxu0 %v616
      %775 = vmatpush2.bf16.msra.mxu0 %v615
      %776 = vmatprep.subr.bf16.mxu0 %v614
      %777 = vmatpush2.bf16.msra.mxu0 %v613
      %778 = vmatprep.subr.bf16.mxu0 %v612
      %779 = vmatpush2.bf16.msra.mxu0 %v611
      %780 = vmatprep.subr.bf16.mxu0 %v610
      %781 = vmatpush2.bf16.msra.mxu0 %v609
      %782 = vmatprep.mubr.bf16.mxu0 %v342
      %783 = vmatmul.mubr.bf16.gmra.mxu0 %v341
      %v784 = vpop.f32.mrf.mxu0
      %v785 = vadd.f32 0.0, %v784
      %v786 = vpop.f32.mrf.mxu0
      %v787 = vadd.f32 0.0, %v786
      %v788 = vpop.f32.mrf.mxu0
      %v789 = vadd.f32 0.0, %v788
      %v790 = vpop.f32.mrf.mxu0
      %v791 = vadd.f32 0.0, %v790
      %792 = vmatprep.mubr.bf16.mxu0 %v347
      %793 = vmatmul.mubr.bf16.gmra.mxu0 %v346
      %v794 = vpop.f32.mrf.mxu0
      %v795 = vadd.f32 0.0, %v794
      %v796 = vpop.f32.mrf.mxu0
      %v797 = vadd.f32 0.0, %v796
      %v798 = vpop.f32.mrf.mxu0
      %v799 = vadd.f32 0.0, %v798
      %v800 = vpop.f32.mrf.mxu0
      %v801 = vadd.f32 0.0, %v800
      %802 = vmatprep.mubr.bf16.mxu0 %v352
      %803 = vmatmul.mubr.bf16.gmra.mxu0 %v351
      %v804 = vpop.f32.mrf.mxu0
      %v805 = vadd.f32 0.0, %v804
      %v806 = vpop.f32.mrf.mxu0
      %v807 = vadd.f32 0.0, %v806
      %v808 = vpop.f32.mrf.mxu0
      %v809 = vadd.f32 0.0, %v808
      %v810 = vpop.f32.mrf.mxu0
      %v811 = vadd.f32 0.0, %v810
      %812 = vmatprep.mubr.bf16.mxu0 %v357
      %813 = vmatmul.mubr.bf16.gmra.mxu0 %v356
      %v814 = vpop.f32.mrf.mxu0
      %v815 = vadd.f32 0.0, %v814
      %v816 = vpop.f32.mrf.mxu0
      %v817 = vadd.f32 0.0, %v816
      %v818 = vpop.f32.mrf.mxu0
      %v819 = vadd.f32 0.0, %v818
      %v820 = vpop.f32.mrf.mxu0
      %v821 = vadd.f32 0.0, %v820
      %822 = vdwg.mxu0
      %823 = vmatprep.subr.bf16.mxu0 %v640
      %824 = vmatpush1.bf16.msra.mxu0 %v639
      %825 = vmatprep.subr.bf16.mxu0 %v638
      %826 = vmatpush1.bf16.msra.mxu0 %v637
      %827 = vmatprep.subr.bf16.mxu0 %v636
      %828 = vmatpush1.bf16.msra.mxu0 %v635
      %829 = vmatprep.subr.bf16.mxu0 %v634
      %830 = vmatpush1.bf16.msra.mxu0 %v633
      %831 = vmatprep.subr.bf16.mxu0 %v632
      %832 = vmatpush1.bf16.msra.mxu0 %v631
      %833 = vmatprep.subr.bf16.mxu0 %v630
      %834 = vmatpush1.bf16.msra.mxu0 %v629
      %835 = vmatprep.subr.bf16.mxu0 %v628
      %836 = vmatpush1.bf16.msra.mxu0 %v627
      %837 = vmatprep.subr.bf16.mxu0 %v626
      %838 = vmatpush1.bf16.msra.mxu0 %v625
      %839 = vmatprep.subr.bf16.mxu0 %v656
      %840 = vmatpush2.bf16.msra.mxu0 %v655
      %841 = vmatprep.subr.bf16.mxu0 %v654
      %842 = vmatpush2.bf16.msra.mxu0 %v653
      %843 = vmatprep.subr.bf16.mxu0 %v652
      %844 = vmatpush2.bf16.msra.mxu0 %v651
      %845 = vmatprep.subr.bf16.mxu0 %v650
      %846 = vmatpush2.bf16.msra.mxu0 %v649
      %847 = vmatprep.subr.bf16.mxu0 %v648
      %848 = vmatpush2.bf16.msra.mxu0 %v647
      %849 = vmatprep.subr.bf16.mxu0 %v646
      %850 = vmatpush2.bf16.msra.mxu0 %v645
      %851 = vmatprep.subr.bf16.mxu0 %v644
      %852 = vmatpush2.bf16.msra.mxu0 %v643
      %853 = vmatprep.subr.bf16.mxu0 %v642
      %854 = vmatpush2.bf16.msra.mxu0 %v641
      %855 = vmatprep.mubr.bf16.mxu0 %v344
      %856 = vmatmul.mubr.bf16.gmra.mxu0 %v343
      %v857 = vpop.f32.mrf.mxu0
      %v858 = vadd.f32 %v785, %v857
      %v859 = vpop.f32.mrf.mxu0
      %v860 = vadd.f32 %v787, %v859
      %v861 = vpop.f32.mrf.mxu0
      %v862 = vadd.f32 %v789, %v861
      %v863 = vpop.f32.mrf.mxu0
      %v864 = vadd.f32 %v791, %v863
      %865 = vmatprep.mubr.bf16.mxu0 %v349
      %866 = vmatmul.mubr.bf16.gmra.mxu0 %v348
      %v867 = vpop.f32.mrf.mxu0
      %v868 = vadd.f32 %v795, %v867
      %v869 = vpop.f32.mrf.mxu0
      %v870 = vadd.f32 %v797, %v869
      %v871 = vpop.f32.mrf.mxu0
      %v872 = vadd.f32 %v799, %v871
      %v873 = vpop.f32.mrf.mxu0
      %v874 = vadd.f32 %v801, %v873
      %875 = vmatprep.mubr.bf16.mxu0 %v354
      %876 = vmatmul.mubr.bf16.gmra.mxu0 %v353
      %v877 = vpop.f32.mrf.mxu0
      %v878 = vadd.f32 %v805, %v877
      %v879 = vpop.f32.mrf.mxu0
      %v880 = vadd.f32 %v807, %v879
      %v881 = vpop.f32.mrf.mxu0
      %v882 = vadd.f32 %v809, %v881
      %v883 = vpop.f32.mrf.mxu0
      %v884 = vadd.f32 %v811, %v883
      %885 = vmatprep.mubr.bf16.mxu0 %v359
      %886 = vmatmul.mubr.bf16.gmra.mxu0 %v358
      %v887 = vpop.f32.mrf.mxu0
      %v888 = vadd.f32 %v815, %v887
      %v889 = vpop.f32.mrf.mxu0
      %v890 = vadd.f32 %v817, %v889
      %v891 = vpop.f32.mrf.mxu0
      %v892 = vadd.f32 %v819, %v891
      %v893 = vpop.f32.mrf.mxu0
      %v894 = vadd.f32 %v821, %v893
      %895 = vdwg.mxu0
      %896 = vmatprep.subr.bf16.mxu0 0
      %897 = vmatpush1.bf16.msra.mxu0 0
      %898 = vmatprep.subr.bf16.mxu0 0
      %899 = vmatpush1.bf16.msra.mxu0 0
      %900 = vmatprep.subr.bf16.mxu0 0
      %901 = vmatpush1.bf16.msra.mxu0 0
      %902 = vmatprep.subr.bf16.mxu0 0
      %903 = vmatpush1.bf16.msra.mxu0 0
      %904 = vmatprep.subr.bf16.mxu0 %v664
      %905 = vmatpush1.bf16.msra.mxu0 %v663
      %906 = vmatprep.subr.bf16.mxu0 %v662
      %907 = vmatpush1.bf16.msra.mxu0 %v661
      %908 = vmatprep.subr.bf16.mxu0 %v660
      %909 = vmatpush1.bf16.msra.mxu0 %v659
      %910 = vmatprep.subr.bf16.mxu0 %v658
      %911 = vmatpush1.bf16.msra.mxu0 %v657
      %912 = vmatprep.subr.bf16.mxu0 0
      %913 = vmatpush2.bf16.msra.mxu0 0
      %914 = vmatprep.subr.bf16.mxu0 0
      %915 = vmatpush2.bf16.msra.mxu0 0
      %916 = vmatprep.subr.bf16.mxu0 0
      %917 = vmatpush2.bf16.msra.mxu0 0
      %918 = vmatprep.subr.bf16.mxu0 0
      %919 = vmatpush2.bf16.msra.mxu0 0
      %920 = vmatprep.subr.bf16.mxu0 0
      %921 = vmatpush2.bf16.msra.mxu0 0
      %922 = vmatprep.subr.bf16.mxu0 0
      %923 = vmatpush2.bf16.msra.mxu0 0
      %924 = vmatprep.subr.bf16.mxu0 0
      %925 = vmatpush2.bf16.msra.mxu0 0
      %926 = vmatprep.subr.bf16.mxu0 0
      %927 = vmatpush2.bf16.msra.mxu0 0
      %928 = vmatprep.mubr.bf16.mxu0 0
      %929 = vmatmul.mubr.bf16.gmra.mxu0 %v739
      %v930 = vpop.f32.mrf.mxu0
      %v931 = vadd.f32 %v858, %v930
      %v932 = vpop.f32.mrf.mxu0
      %v933 = vadd.f32 %v860, %v932
      %v934 = vpop.f32.mrf.mxu0
      %v935 = vadd.f32 %v862, %v934
      %v936 = vpop.f32.mrf.mxu0
      %v937 = vadd.f32 %v864, %v936
      %938 = vmatprep.mubr.bf16.mxu0 0
      %939 = vmatmul.mubr.bf16.gmra.mxu0 %v742
      %v940 = vpop.f32.mrf.mxu0
      %v941 = vadd.f32 %v868, %v940
      %v942 = vpop.f32.mrf.mxu0
      %v943 = vadd.f32 %v870, %v942
      %v944 = vpop.f32.mrf.mxu0
      %v945 = vadd.f32 %v872, %v944
      %v946 = vpop.f32.mrf.mxu0
      %v947 = vadd.f32 %v874, %v946
      %948 = vmatprep.mubr.bf16.mxu0 0
      %949 = vmatmul.mubr.bf16.gmra.mxu0 %v745
      %v950 = vpop.f32.mrf.mxu0
      %v951 = vadd.f32 %v878, %v950
      %v952 = vpop.f32.mrf.mxu0
      %v953 = vadd.f32 %v880, %v952
      %v954 = vpop.f32.mrf.mxu0
      %v955 = vadd.f32 %v882, %v954
      %v956 = vpop.f32.mrf.mxu0
      %v957 = vadd.f32 %v884, %v956
      %958 = vmatprep.mubr.bf16.mxu0 0
      %959 = vmatmul.mubr.bf16.gmra.mxu0 %v748
      %v960 = vpop.f32.mrf.mxu0
      %v961 = vadd.f32 %v888, %v960
      %v962 = vpop.f32.mrf.mxu0
      %v963 = vadd.f32 %v890, %v962
      %v964 = vpop.f32.mrf.mxu0
      %v965 = vadd.f32 %v892, %v964
      %v966 = vpop.f32.mrf.mxu0
      %v967 = vadd.f32 %v894, %v966
      %968 = vdwg.mxu0
      %s969 = sld [smem:[#allocation2]]
      %vm970 = vcmp.ge.f32.partialorder %v931, 0.0
      %vm971 = vcmp.ge.f32.partialorder %v933, 0.0
      %vm972 = vcmp.ge.f32.partialorder %v935, 0.0
      %vm973 = vcmp.ge.f32.partialorder %v937, 0.0
      %vm974 = vcmp.ge.f32.partialorder %v941, 0.0
      %vm975 = vcmp.ge.f32.partialorder %v943, 0.0
      %vm976 = vcmp.ge.f32.partialorder %v945, 0.0
      %vm977 = vcmp.ge.f32.partialorder %v947, 0.0
      %vm978 = vcmp.ge.f32.partialorder %v951, 0.0
      %vm979 = vcmp.ge.f32.partialorder %v953, 0.0
      %vm980 = vcmp.ge.f32.partialorder %v955, 0.0
      %vm981 = vcmp.ge.f32.partialorder %v957, 0.0
      %vm982 = vcmp.ge.f32.partialorder %v961, 0.0
      %vm983 = vcmp.ge.f32.partialorder %v963, 0.0
      %vm984 = vcmp.ge.f32.partialorder %v965, 0.0
      %vm985 = vcmp.ge.f32.partialorder %v967, 0.0
      %v986 = vstv %s969
      %v987 = vmul.f32 %v986, %v931
      %v988 = vmul.f32 %v986, %v933
      %v989 = vmul.f32 %v986, %v935
      %v990 = vmul.f32 %v986, %v937
      %v991 = vmul.f32 %v986, %v941
      %v992 = vmul.f32 %v986, %v943
      %v993 = vmul.f32 %v986, %v945
      %v994 = vmul.f32 %v986, %v947
      %v995 = vmul.f32 %v986, %v951
      %v996 = vmul.f32 %v986, %v953
      %v997 = vmul.f32 %v986, %v955
      %v998 = vmul.f32 %v986, %v957
      %v999 = vmul.f32 %v986, %v961
      %v1000 = vmul.f32 %v986, %v963
      %v1001 = vmul.f32 %v986, %v965
      %v1002 = vmul.f32 %v986, %v967
      %v1003 = vsel %vm970, %v931, %v987
      %v1004 = vsel %vm971, %v933, %v988
      %v1005 = vsel %vm972, %v935, %v989
      %v1006 = vsel %vm973, %v937, %v990
      %v1007 = vsel %vm974, %v941, %v991
      %v1008 = vsel %vm975, %v943, %v992
      %v1009 = vsel %vm976, %v945, %v993
      %v1010 = vsel %vm977, %v947, %v994
      %v1011 = vsel %vm978, %v951, %v995
      %v1012 = vsel %vm979, %v953, %v996
      %v1013 = vsel %vm980, %v955, %v997
      %v1014 = vsel %vm981, %v957, %v998
      %v1015 = vsel %vm982, %v961, %v999
      %v1016 = vsel %vm983, %v963, %v1000
      %v1017 = vsel %vm984, %v965, %v1001
      %v1018 = vsel %vm985, %v967, %v1002
      %1019 = vst [vmem:[%s178] sm:$0xff] %v1003
      %1020 = vst [vmem:[%s178 + $0x8] sm:$0xff] %v1004
      %1021 = vst [vmem:[%s178 + $0x10] sm:$0xff] %v1005
      %1022 = vst [vmem:[%s178 + $0x18] sm:$0xff] %v1006
      %1023 = vst [vmem:[%s178 + $0x20] sm:$0xff] %v1007
      %1024 = vst [vmem:[%s178 + $0x28] sm:$0xff] %v1008
      %1025 = vst [vmem:[%s178 + $0x30] sm:$0xff] %v1009
      %1026 = vst [vmem:[%s178 + $0x38] sm:$0xff] %v1010
      %1027 = vst [vmem:[%s178 + $0x40] sm:$0xff] %v1011
      %1028 = vst [vmem:[%s178 + $0x48] sm:$0xff] %v1012
      %1029 = vst [vmem:[%s178 + $0x50] sm:$0xff] %v1013
      %1030 = vst [vmem:[%s178 + $0x58] sm:$0xff] %v1014
      %1031 = vst [vmem:[%s178 + $0x60] sm:$0xff] %v1015
      %1032 = vst [vmem:[%s178 + $0x68] sm:$0xff] %v1016
      %1033 = vst [vmem:[%s178 + $0x70] sm:$0xff] %v1017
      %1034 = vst [vmem:[%s178 + $0x78] sm:$0xff] %v1018
      %s1035 = smul.u32 8, %s15
      %p1036 = scmp.lt.s32.totalorder %s1035, 15
      %s1037 = scalar_select %p1036, %s1035, 15
      %s1038 = smul.addr %s1037, 2
      %s1039 = smul.addr %s1038, 8
      %s1040 = scalar_lea.vmem %s3, %s1039
      // Predicated region
      $region33: #{netg_forward.19} parent=31 // pred_check
        %p1041 = pneg %p101
      $region34: #{netg_forward.19} parent=31 // pred_check_branch
        %1043 = sbr.rel (%p1041) target = $region36
      $region35: #{netg_forward.19} parent=31 // pred_region
        %s1044 = smul.u32 8, %s15
      $region36: #{netg_forward.19} parent=31 // pred_fallthru
        _
    $region32: #{netg_forward.19} parent=5 // pred_fallthru
      _
    %p1045 = scmp.le.s32.totalorder 2, %s10
    // Predicated region
    $region37: #{netg_forward.19} parent=5 // pred_check
      %p1046 = pneg %p1045
    $region38: #{netg_forward.19} parent=5 // pred_check_branch
      %1048 = sbr.rel (%p1046) target = $region40
    $region39: #{netg_forward.19} parent=5 // pred_region
      %s1049 = ssub.s32 %s10, 2
      // Predicated region
      $region41: #{netg_forward.19} parent=39 // pred_check
        %p1050 = pneg %p107
      $region42: #{netg_forward.19} parent=39 // pred_check_branch
        %1052 = sbr.rel (%p1050) target = $region44
      $region43: #{netg_forward.19} parent=39 // pred_region
        %s1053 = smul.u32 8, %s16
        %p1054 = scmp.lt.s32.totalorder %s1053, 15
        %s1055 = scalar_select %p1054, %s1053, 15
        %s1056 = smul.addr %s1055, 2
        %s1057 = smul.addr %s1056, 8
        %s1058 = scalar_lea.vmem %s3, %s1057
      $region44: #{netg_forward.19} parent=39 // pred_fallthru
        _
    $region40: #{netg_forward.19} parent=5 // pred_fallthru
      _
  $region6: #{netg_forward.19} parent=0 // loop_footer
    %s14 = sadd.s32 1, %s10
  $region7: #{netg_forward.19} parent=0 // loop_footer_branch
    %9 = sbr.rel target = $region3
  $region8: #{netg_forward.19} parent=0 // loop_exit
    _

// kernel: netg_forward.20
$region0: #{netg_forward.20}
  #allocation0 [shape = 'u32[]', space=smem, size = 0x4, offset = 0x4, fixed_abs, tag = 'smem constant byte address 0x4 - core index']
  #allocation1 [shape = 'u32[144,128]{1,0:T(1,128)}', space=vmem, size = 0x12000, scoped, tag = 'internal scratch']
  #allocation2 [shape = 'f32[1]{0:T(128)S(6)}', space=smem, size = 0x200, scoped, tag = 'scoped memory for netg_forward.20']
  %s0 = inlined_call_operand.<no memory space> [shape: f32[1], index: 0, kind: input, shape index: {}]
  %s1 = inlined_call_operand.vmem [shape: bf16[512,576], index: 1, kind: input, shape index: {}]
  %s2 = inlined_call_operand.vmem [shape: bf16[576,256], index: 2, kind: input, shape index: {}]
  %s3 = inlined_call_operand.vmem [shape: f32[512,256], index: 3, kind: output, shape index: {}]
  %s4 = sld [smem:[#allocation0]]
  $region45: #{netg_forward.20} parent=0
    _
  %s6 = ssub.s32 1, %s4
  %s7 = scalar_select 0, %s6, %s4
  %8 = sst [smem:[#allocation2]] %s0
  loop: start=0, step=1, limit=4
  $region2: #{netg_forward.20} parent=0 // loop_pre_header
    _
  $region3: #{netg_forward.20} parent=0 // loop_header
    %s10 = sphi 0, %s14
    %p11 = scmp.ge.s32.totalorder %s10, 4
    %s18 = sphi 0, %s18
    %s20 = sphi 0, %s18
    %s21 = sphi 0, %s20
    %s35 = sphi 0, %s21
    %s41 = sphi 0, %s43
    %s44 = sphi 0, %s41
    %s45 = sphi 0, %s44
    %s61 = sphi 0, %s45
    %s65 = sphi 0, %s65
    %s67 = sphi 0, %s65
    %s68 = sphi 0, %s67
    %s82 = sphi 0, %s68
    %s88 = sphi 0, %s90
    %s91 = sphi 0, %s88
    %s92 = sphi 0, %s91
    %s108 = sphi 0, %s92
  $region4: #{netg_forward.20} parent=0 // loop_header_branch
    %13 = sbr.rel (%p11) target = $region8
  $region5: #{netg_forward.20} parent=0 // loop_body
    %s15 = ssub.s32 %s10, 1
    %s16 = ssub.s32 %s10, 2
    %s17 = sadd.s32 %s10, 1
    %s19 = sadd.s32 %s18, 1
    %p22 = scmp.eq.s32.totalorder %s10, 1
    %p23 = scmp.ne.s32.totalorder %s18, %s20
    %p24 = scmp.eq.s32.totalorder %s10, 0
    %p25 = por %p23, %p24
    %p26 = scmp.ne.s32.totalorder %s18, %s20
    %p27 = scmp.eq.s32.totalorder %s15, 1
    %p28 = por %p26, %p27
    %p29 = scmp.ne.s32.totalorder %s20, %s21
    %p30 = scmp.eq.s32.totalorder %s15, 0
    %p31 = por %p29, %p30
    %p32 = scmp.ne.s32.totalorder %s20, %s21
    %p33 = scmp.eq.s32.totalorder %s16, 1
    %p34 = por %p32, %p33
    %p36 = scmp.ne.s32.totalorder %s21, %s35
    %p37 = scmp.eq.s32.totalorder %s16, 0
    %p38 = por %p36, %p37
    %s39 = ssub.s32 %s10, %s17
    %p40 = scmp.eq.s32.totalorder %s39, 0
    %s42 = sadd.s32 %s41, 1
    %s43 = scalar_select %p40, %s41, %s42
    %p46 = pneg %p40
    %p47 = scmp.eq.s32.totalorder %s10, 1
    %p48 = por %p46, %p47
    %p49 = scmp.ne.s32.totalorder %s41, %s44
    %p50 = scmp.eq.s32.totalorder %s10, 0
    %p51 = por %p49, %p50
    %p52 = scmp.ne.s32.totalorder %s41, %s44
    %p53 = scmp.eq.s32.totalorder %s15, 1
    %p54 = por %p52, %p53
    %p55 = scmp.ne.s32.totalorder %s44, %s45
    %p56 = scmp.eq.s32.totalorder %s15, 0
    %p57 = por %p55, %p56
    %p58 = scmp.ne.s32.totalorder %s44, %s45
    %p59 = scmp.eq.s32.totalorder %s16, 1
    %p60 = por %p58, %p59
    %p62 = scmp.ne.s32.totalorder %s45, %s61
    %p63 = scmp.eq.s32.totalorder %s16, 0
    %p64 = por %p62, %p63
    %s66 = sadd.s32 %s65, 1
    %p69 = scmp.eq.s32.totalorder %s10, 1
    %p70 = scmp.ne.s32.totalorder %s65, %s67
    %p71 = scmp.eq.s32.totalorder %s10, 0
    %p72 = por %p70, %p71
    %p73 = scmp.ne.s32.totalorder %s65, %s67
    %p74 = scmp.eq.s32.totalorder %s15, 1
    %p75 = por %p73, %p74
    %p76 = scmp.ne.s32.totalorder %s67, %s68
    %p77 = scmp.eq.s32.totalorder %s15, 0
    %p78 = por %p76, %p77
    %p79 = scmp.ne.s32.totalorder %s67, %s68
    %p80 = scmp.eq.s32.totalorder %s16, 1
    %p81 = por %p79, %p80
    %p83 = scmp.ne.s32.totalorder %s68, %s82
    %p84 = scmp.eq.s32.totalorder %s16, 0
    %p85 = por %p83, %p84
    %s86 = ssub.s32 %s10, %s17
    %p87 = scmp.eq.s32.totalorder %s86, 0
    %s89 = sadd.s32 %s88, 1
    %s90 = scalar_select %p87, %s88, %s89
    %p93 = pneg %p87
    %p94 = scmp.eq.s32.totalorder %s10, 1
    %p95 = por %p93, %p94
    %p96 = scmp.ne.s32.totalorder %s88, %s91
    %p97 = scmp.eq.s32.totalorder %s10, 0
    %p98 = por %p96, %p97
    %p99 = scmp.ne.s32.totalorder %s88, %s91
    %p100 = scmp.eq.s32.totalorder %s15, 1
    %p101 = por %p99, %p100
    %p102 = scmp.ne.s32.totalorder %s91, %s92
    %p103 = scmp.eq.s32.totalorder %s15, 0
    %p104 = por %p102, %p103
    %p105 = scmp.ne.s32.totalorder %s91, %s92
    %p106 = scmp.eq.s32.totalorder %s16, 1
    %p107 = por %p105, %p106
    %p109 = scmp.ne.s32.totalorder %s92, %s108
    %p110 = scmp.eq.s32.totalorder %s16, 0
    %p111 = por %p109, %p110
    %p112 = scmp.le.s32.totalorder 1, %s10
    %p113 = scmp.lt.s32.totalorder %s10, 3
    %p114 = pnand %p112, %p113
    %p115 = pneg %p114
    // Predicated region
    $region9: #{netg_forward.20} parent=5 // pred_check
      _
    $region10: #{netg_forward.20} parent=5 // pred_check_branch
      %117 = sbr.rel (%p114) target = $region12
    $region11: #{netg_forward.20} parent=5 // pred_region
      %s118 = ssub.s32 %s10, 1
      // Predicated region
      $region13: #{netg_forward.20} parent=11 // pred_check
        %p119 = pneg %p31
      $region14: #{netg_forward.20} parent=11 // pred_check_branch
        %121 = sbr.rel (%p119) target = $region16
      $region15: #{netg_forward.20} parent=11 // pred_region
        _
      $region16: #{netg_forward.20} parent=11 // pred_fallthru
        _
      // Predicated region
      $region17: #{netg_forward.20} parent=11 // pred_check
        %p122 = pneg %p78
      $region18: #{netg_forward.20} parent=11 // pred_check_branch
        %124 = sbr.rel (%p122) target = $region20
      $region19: #{netg_forward.20} parent=11 // pred_region
        _
      $region20: #{netg_forward.20} parent=11 // pred_fallthru
        _
    $region12: #{netg_forward.20} parent=5 // pred_fallthru
      _
    %p125 = scmp.lt.s32.totalorder %s10, 2
    // Predicated region
    $region21: #{netg_forward.20} parent=5 // pred_check
      %p126 = pneg %p125
    $region22: #{netg_forward.20} parent=5 // pred_check_branch
      %128 = sbr.rel (%p126) target = $region24
    $region23: #{netg_forward.20} parent=5 // pred_region
      // Predicated region
      $region25: #{netg_forward.20} parent=23 // pred_check
        %p129 = pneg %p51
      $region26: #{netg_forward.20} parent=23 // pred_check_branch
        %131 = sbr.rel (%p129) target = $region28
      $region27: #{netg_forward.20} parent=23 // pred_region
        %s132 = smul.u32 32, %s10
        %p133 = scmp.lt.s32.totalorder %s132, 63
        %s134 = scalar_select %p133, %s132, 63
        %s135 = smul.addr %s134, 5
        %s136 = smul.addr %s135, 4
        %s137 = scalar_lea.vmem %s1, %s136
        %s138 = smul.u32 32, %s10
      $region28: #{netg_forward.20} parent=23 // pred_fallthru
        _
    $region24: #{netg_forward.20} parent=5 // pred_fallthru
      _
    %p139 = scmp.le.s32.totalorder 1, %s10
    %p140 = scmp.lt.s32.totalorder %s10, 3
    %p141 = pnand %p139, %p140
    %p142 = pneg %p141
    // Predicated region
    $region29: #{netg_forward.20} parent=5 // pred_check
      _
    $region30: #{netg_forward.20} parent=5 // pred_check_branch
      %144 = sbr.rel (%p141) target = $region32
    $region31: #{netg_forward.20} parent=5 // pred_region
      %s145 = ssub.s32 %s10, 1
      %p146 = pneg %p31
      %p147 = pneg %p28
      %s148 = smul.u32 32, %s15
      %p149 = scmp.lt.s32.totalorder %s148, 63
      %s150 = scalar_select %p149, %s148, 63
      %s151 = smul.addr %s150, 5
      %s152 = smul.addr %s151, 4
      %s153 = scalar_lea.vmem %s1, %s152
      %p154 = pneg %p57
      %p155 = pneg %p54
      %p156 = pneg %p78
      %p157 = pneg %p75
      %p158 = pneg %p104
      %p159 = pneg %p101
      %s160 = smul.u32 32, %s15
      %p161 = scmp.lt.s32.totalorder %s160, 63
      %s162 = scalar_select %p161, %s160, 63
      %s163 = smul.addr %s162, 2
      %s164 = smul.addr %s163, 8
      %s165 = scalar_lea.vmem %s3, %s164
      %s166 = smul.u32 32, %s15
      %p167 = scmp.lt.s32.totalorder %s166, 63
      %s168 = scalar_select %p167, %s166, 63
      %s169 = smul.addr %s168, 5
      %s170 = smul.addr %s169, 4
      %s171 = scalar_lea.vmem %s1, %s170
      %s172 = smul.u32 32, %s15
      %s173 = smul.u32 32, %s15
      %p174 = scmp.lt.s32.totalorder %s173, 63
      %s175 = scalar_select %p174, %s173, 63
      %s176 = smul.addr %s175, 2
      %s177 = smul.addr %s176, 8
      %s178 = scalar_lea.vmem %s3, %s177
      %s179 = smul.u32 32, %s15
      %v181 = vld [vmem:[%s171] sm:$0xff]
      %v182 = vld [vmem:[%s171 + $0x8] sm:$0xff]
      %v183 = vld [vmem:[%s171 + $0x10] sm:$0xf]
      %v184 = vld [vmem:[%s171 + $0x14] sm:$0xff]
      %v185 = vld [vmem:[%s171 + $0x1c] sm:$0xff]
      %v186 = vld [vmem:[%s171 + $0x24] sm:$0xf]
      %v187 = vld [vmem:[%s171 + $0x28] sm:$0xff]
      %v188 = vld [vmem:[%s171 + $0x30] sm:$0xff]
      %v189 = vld [vmem:[%s171 + $0x38] sm:$0xf]
      %v190 = vld [vmem:[%s171 + $0x3c] sm:$0xff]
      %v191 = vld [vmem:[%s171 + $0x44] sm:$0xff]
      %v192 = vld [vmem:[%s171 + $0x4c] sm:$0xf]
      %v193 = vld [vmem:[%s171 + $0x50] sm:$0xff]
      %v194 = vld [vmem:[%s171 + $0x58] sm:$0xff]
      %v195 = vld [vmem:[%s171 + $0x60] sm:$0xf]
      %v196 = vld [vmem:[%s171 + $0x64] sm:$0xff]
      %v197 = vld [vmem:[%s171 + $0x6c] sm:$0xff]
      %v198 = vld [vmem:[%s171 + $0x74] sm:$0xf]
      %v199 = vld [vmem:[%s171 + $0x78] sm:$0xff]
      %v200 = vld [vmem:[%s171 + $0x80] sm:$0xff]
      %v201 = vld [vmem:[%s171 + $0x88] sm:$0xf]
      %v202 = vld [vmem:[%s171 + $0x8c] sm:$0xff]
      %v203 = vld [vmem:[%s171 + $0x94] sm:$0xff]
      %v204 = vld [vmem:[%s171 + $0x9c] sm:$0xf]
      %v205 = vld [vmem:[%s171 + $0xa0] sm:$0xff]
      %v206 = vld [vmem:[%s171 + $0xa8] sm:$0xff]
      %v207 = vld [vmem:[%s171 + $0xb0] sm:$0xf]
      %v208 = vld [vmem:[%s171 + $0xb4] sm:$0xff]
      %v209 = vld [vmem:[%s171 + $0xbc] sm:$0xff]
      %v210 = vld [vmem:[%s171 + $0xc4] sm:$0xf]
      %v211 = vld [vmem:[%s171 + $0xc8] sm:$0xff]
      %v212 = vld [vmem:[%s171 + $0xd0] sm:$0xff]
      %v213 = vld [vmem:[%s171 + $0xd8] sm:$0xf]
      %v214 = vld [vmem:[%s171 + $0xdc] sm:$0xff]
      %v215 = vld [vmem:[%s171 + $0xe4] sm:$0xff]
      %v216 = vld [vmem:[%s171 + $0xec] sm:$0xf]
      %v217 = vld [vmem:[%s171 + $0xf0] sm:$0xff]
      %v218 = vld [vmem:[%s171 + $0xf8] sm:$0xff]
      %v219 = vld [vmem:[%s171 + $0x100] sm:$0xf]
      %v220 = vld [vmem:[%s171 + $0x104] sm:$0xff]
      %v221 = vld [vmem:[%s171 + $0x10c] sm:$0xff]
      %v222 = vld [vmem:[%s171 + $0x114] sm:$0xf]
      %v223 = vld [vmem:[%s171 + $0x118] sm:$0xff]
      %v224 = vld [vmem:[%s171 + $0x120] sm:$0xff]
      %v225 = vld [vmem:[%s171 + $0x128] sm:$0xf]
      %v226 = vld [vmem:[%s171 + $0x12c] sm:$0xff]
      %v227 = vld [vmem:[%s171 + $0x134] sm:$0xff]
      %v228 = vld [vmem:[%s171 + $0x13c] sm:$0xf]
      %v229 = vld [vmem:[%s171 + $0x140] sm:$0xff]
      %v230 = vld [vmem:[%s171 + $0x148] sm:$0xff]
      %v231 = vld [vmem:[%s171 + $0x150] sm:$0xf]
      %v232 = vld [vmem:[%s171 + $0x154] sm:$0xff]
      %v233 = vld [vmem:[%s171 + $0x15c] sm:$0xff]
      %v234 = vld [vmem:[%s171 + $0x164] sm:$0xf]
      %v235 = vld [vmem:[%s171 + $0x168] sm:$0xff]
      %v236 = vld [vmem:[%s171 + $0x170] sm:$0xff]
      %v237 = vld [vmem:[%s171 + $0x178] sm:$0xf]
      %v238 = vld [vmem:[%s171 + $0x17c] sm:$0xff]
      %v239 = vld [vmem:[%s171 + $0x184] sm:$0xff]
      %v240 = vld [vmem:[%s171 + $0x18c] sm:$0xf]
      %v241 = vld [vmem:[%s171 + $0x190] sm:$0xff]
      %v242 = vld [vmem:[%s171 + $0x198] sm:$0xff]
      %v243 = vld [vmem:[%s171 + $0x1a0] sm:$0xf]
      %v244 = vld [vmem:[%s171 + $0x1a4] sm:$0xff]
      %v245 = vld [vmem:[%s171 + $0x1ac] sm:$0xff]
      %v246 = vld [vmem:[%s171 + $0x1b4] sm:$0xf]
      %v247 = vld [vmem:[%s171 + $0x1b8] sm:$0xff]
      %v248 = vld [vmem:[%s171 + $0x1c0] sm:$0xff]
      %v249 = vld [vmem:[%s171 + $0x1c8] sm:$0xf]
      %v250 = vld [vmem:[%s171 + $0x1cc] sm:$0xff]
      %v251 = vld [vmem:[%s171 + $0x1d4] sm:$0xff]
      %v252 = vld [vmem:[%s171 + $0x1dc] sm:$0xf]
      %v253 = vld [vmem:[%s171 + $0x1e0] sm:$0xff]
      %v254 = vld [vmem:[%s171 + $0x1e8] sm:$0xff]
      %v255 = vld [vmem:[%s171 + $0x1f0] sm:$0xf]
      %v256 = vld [vmem:[%s171 + $0x1f4] sm:$0xff]
      %v257 = vld [vmem:[%s171 + $0x1fc] sm:$0xff]
      %v258 = vld [vmem:[%s171 + $0x204] sm:$0xf]
      %v259 = vld [vmem:[%s171 + $0x208] sm:$0xff]
      %v260 = vld [vmem:[%s171 + $0x210] sm:$0xff]
      %v261 = vld [vmem:[%s171 + $0x218] sm:$0xf]
      %v262 = vld [vmem:[%s171 + $0x21c] sm:$0xff]
      %v263 = vld [vmem:[%s171 + $0x224] sm:$0xff]
      %v264 = vld [vmem:[%s171 + $0x22c] sm:$0xf]
      %v265 = vld [vmem:[%s171 + $0x230] sm:$0xff]
      %v266 = vld [vmem:[%s171 + $0x238] sm:$0xff]
      %v267 = vld [vmem:[%s171 + $0x240] sm:$0xf]
      %v268 = vld [vmem:[%s171 + $0x244] sm:$0xff]
      %v269 = vld [vmem:[%s171 + $0x24c] sm:$0xff]
      %v270 = vld [vmem:[%s171 + $0x254] sm:$0xf]
      %v271 = vld [vmem:[%s171 + $0x258] sm:$0xff]
      %v272 = vld [vmem:[%s171 + $0x260] sm:$0xff]
      %v273 = vld [vmem:[%s171 + $0x268] sm:$0xf]
      %v274 = vld [vmem:[%s171 + $0x26c] sm:$0xff]
      %v275 = vld [vmem:[%s171 + $0x274] sm:$0xff]
      %v276 = vld [vmem:[%s171 + $0x27c] sm:$0xf]
      %v277 = vld [vmem:[%s2] sm:$0xff]
      %v278 = vld [vmem:[%s2 + $0x8] sm:$0xff]
      %v279 = vld [vmem:[%s2 + $0x10] sm:$0xff]
      %v280 = vld [vmem:[%s2 + $0x18] sm:$0xff]
      %v281 = vld [vmem:[%s2 + $0x20] sm:$0xff]
      %v282 = vld [vmem:[%s2 + $0x28] sm:$0xff]
      %v283 = vld [vmem:[%s2 + $0x30] sm:$0xff]
      %v284 = vld [vmem:[%s2 + $0x38] sm:$0xff]
      %v285 = vld [vmem:[%s2 + $0x40] sm:$0xff]
      %v286 = vld [vmem:[%s2 + $0x48] sm:$0xff]
      %v287 = vld [vmem:[%s2 + $0x50] sm:$0xff]
      %v288 = vld [vmem:[%s2 + $0x58] sm:$0xff]
      %v289 = vld [vmem:[%s2 + $0x60] sm:$0xff]
      %v290 = vld [vmem:[%s2 + $0x68] sm:$0xff]
      %v291 = vld [vmem:[%s2 + $0x70] sm:$0xff]
      %v292 = vld [vmem:[%s2 + $0x78] sm:$0xff]
      %v293 = vld [vmem:[%s2 + $0x80] sm:$0xff]
      %v294 = vld [vmem:[%s2 + $0x88] sm:$0xff]
      %v295 = vld [vmem:[%s2 + $0x90] sm:$0xff]
      %v296 = vld [vmem:[%s2 + $0x98] sm:$0xff]
      %v297 = vld [vmem:[%s2 + $0xa0] sm:$0xff]
      %v298 = vld [vmem:[%s2 + $0xa8] sm:$0xff]
      %v299 = vld [vmem:[%s2 + $0xb0] sm:$0xff]
      %v300 = vld [vmem:[%s2 + $0xb8] sm:$0xff]
      %v301 = vld [vmem:[%s2 + $0xc0] sm:$0xff]
      %v302 = vld [vmem:[%s2 + $0xc8] sm:$0xff]
      %v303 = vld [vmem:[%s2 + $0xd0] sm:$0xff]
      %v304 = vld [vmem:[%s2 + $0xd8] sm:$0xff]
      %v305 = vld [vmem:[%s2 + $0xe0] sm:$0xff]
      %v306 = vld [vmem:[%s2 + $0xe8] sm:$0xff]
      %v307 = vld [vmem:[%s2 + $0xf0] sm:$0xff]
      %v308 = vld [vmem:[%s2 + $0xf8] sm:$0xff]
      %v309 = vld [vmem:[%s2 + $0x100] sm:$0xff]
      %v310 = vld [vmem:[%s2 + $0x108] sm:$0xff]
      %v311 = vld [vmem:[%s2 + $0x110] sm:$0xff]
      %v312 = vld [vmem:[%s2 + $0x118] sm:$0xff]
      %v313 = vld [vmem:[%s2 + $0x120] sm:$0xff]
      %v314 = vld [vmem:[%s2 + $0x128] sm:$0xff]
      %v315 = vld [vmem:[%s2 + $0x130] sm:$0xff]
      %v316 = vld [vmem:[%s2 + $0x138] sm:$0xff]
      %v317 = vld [vmem:[%s2 + $0x140] sm:$0xff]
      %v318 = vld [vmem:[%s2 + $0x148] sm:$0xff]
      %v319 = vld [vmem:[%s2 + $0x150] sm:$0xff]
      %v320 = vld [vmem:[%s2 + $0x158] sm:$0xff]
      %v321 = vld [vmem:[%s2 + $0x160] sm:$0xff]
      %v322 = vld [vmem:[%s2 + $0x168] sm:$0xff]
      %v323 = vld [vmem:[%s2 + $0x170] sm:$0xff]
      %v324 = vld [vmem:[%s2 + $0x178] sm:$0xff]
      %v325 = vld [vmem:[%s2 + $0x180] sm:$0xff]
      %v326 = vld [vmem:[%s2 + $0x188] sm:$0xff]
      %v327 = vld [vmem:[%s2 + $0x190] sm:$0xff]
      %v328 = vld [vmem:[%s2 + $0x198] sm:$0xff]
      %v329 = vld [vmem:[%s2 + $0x1a0] sm:$0xff]
      %v330 = vld [vmem:[%s2 + $0x1a8] sm:$0xff]
      %v331 = vld [vmem:[%s2 + $0x1b0] sm:$0xff]
      %v332 = vld [vmem:[%s2 + $0x1b8] sm:$0xff]
      %v333 = vld [vmem:[%s2 + $0x1c0] sm:$0xff]
      %v334 = vld [vmem:[%s2 + $0x1c8] sm:$0xff]
      %v335 = vld [vmem:[%s2 + $0x1d0] sm:$0xff]
      %v336 = vld [vmem:[%s2 + $0x1d8] sm:$0xff]
      %v337 = vld [vmem:[%s2 + $0x1e0] sm:$0xff]
      %v338 = vld [vmem:[%s2 + $0x1e8] sm:$0xff]
      %v339 = vld [vmem:[%s2 + $0x1f0] sm:$0xff]
      %v340 = vld [vmem:[%s2 + $0x1f8] sm:$0xff]
      %v341 = vld [vmem:[%s2 + $0x200] sm:$0xff]
      %v342 = vld [vmem:[%s2 + $0x208] sm:$0xff]
      %v343 = vld [vmem:[%s2 + $0x210] sm:$0xff]
      %v344 = vld [vmem:[%s2 + $0x218] sm:$0xff]
      %v345 = vld [vmem:[%s2 + $0x220] sm:$0xff]
      %v346 = vld [vmem:[%s2 + $0x228] sm:$0xff]
      %v347 = vld [vmem:[%s2 + $0x230] sm:$0xff]
      %v348 = vld [vmem:[%s2 + $0x238] sm:$0xff]
      %v445 = vunpack.c.l.b16 %v181
      %v446 = vunpack.c.h.b16 %v181
      %v447 = vunpack.c.l.b16 %v182
      %v448 = vunpack.c.h.b16 %v182
      %v449 = vunpack.c.l.b16 %v183
      %v450 = vunpack.c.l.b16 %v184
      %v451 = vunpack.c.h.b16 %v184
      %v452 = vunpack.c.l.b16 %v185
      %v453 = vunpack.c.h.b16 %v185
      %v454 = vunpack.c.l.b16 %v186
      %v455 = vunpack.c.l.b16 %v187
      %v456 = vunpack.c.h.b16 %v187
      %v457 = vunpack.c.l.b16 %v188
      %v458 = vunpack.c.h.b16 %v188
      %v459 = vunpack.c.l.b16 %v189
      %v460 = vunpack.c.l.b16 %v190
      %v461 = vunpack.c.h.b16 %v190
      %v462 = vunpack.c.l.b16 %v191
      %v463 = vunpack.c.h.b16 %v191
      %v464 = vunpack.c.l.b16 %v192
      %v465 = vunpack.c.l.b16 %v193
      %v466 = vunpack.c.h.b16 %v193
      %v467 = vunpack.c.l.b16 %v194
      %v468 = vunpack.c.h.b16 %v194
      %v469 = vunpack.c.l.b16 %v195
      %v470 = vunpack.c.l.b16 %v196
      %v471 = vunpack.c.h.b16 %v196
      %v472 = vunpack.c.l.b16 %v197
      %v473 = vunpack.c.h.b16 %v197
      %v474 = vunpack.c.l.b16 %v198
      %v475 = vunpack.c.l.b16 %v199
      %v476 = vunpack.c.h.b16 %v199
      %v477 = vunpack.c.l.b16 %v200
      %v478 = vunpack.c.h.b16 %v200
      %v479 = vunpack.c.l.b16 %v201
      %v480 = vunpack.c.l.b16 %v202
      %v481 = vunpack.c.h.b16 %v202
      %v482 = vunpack.c.l.b16 %v203
      %v483 = vunpack.c.h.b16 %v203
      %v484 = vunpack.c.l.b16 %v204
      %v485 = vunpack.c.l.b16 %v205
      %v486 = vunpack.c.h.b16 %v205
      %v487 = vunpack.c.l.b16 %v206
      %v488 = vunpack.c.h.b16 %v206
      %v489 = vunpack.c.l.b16 %v207
      %v490 = vunpack.c.l.b16 %v208
      %v491 = vunpack.c.h.b16 %v208
      %v492 = vunpack.c.l.b16 %v209
      %v493 = vunpack.c.h.b16 %v209
      %v494 = vunpack.c.l.b16 %v210
      %v495 = vunpack.c.l.b16 %v211
      %v496 = vunpack.c.h.b16 %v211
      %v497 = vunpack.c.l.b16 %v212
      %v498 = vunpack.c.h.b16 %v212
      %v499 = vunpack.c.l.b16 %v213
      %v500 = vunpack.c.l.b16 %v214
      %v501 = vunpack.c.h.b16 %v214
      %v502 = vunpack.c.l.b16 %v215
      %v503 = vunpack.c.h.b16 %v215
      %v504 = vunpack.c.l.b16 %v216
      %v505 = vunpack.c.l.b16 %v217
      %v506 = vunpack.c.h.b16 %v217
      %v507 = vunpack.c.l.b16 %v218
      %v508 = vunpack.c.h.b16 %v218
      %v509 = vunpack.c.l.b16 %v219
      %v510 = vunpack.c.l.b16 %v220
      %v511 = vunpack.c.h.b16 %v220
      %v512 = vunpack.c.l.b16 %v221
      %v513 = vunpack.c.h.b16 %v221
      %v514 = vunpack.c.l.b16 %v222
      %v515 = vunpack.c.l.b16 %v223
      %v516 = vunpack.c.h.b16 %v223
      %v517 = vunpack.c.l.b16 %v224
      %v518 = vunpack.c.h.b16 %v224
      %v519 = vunpack.c.l.b16 %v225
      %v520 = vunpack.c.l.b16 %v226
      %v521 = vunpack.c.h.b16 %v226
      %v522 = vunpack.c.l.b16 %v227
      %v523 = vunpack.c.h.b16 %v227
      %v524 = vunpack.c.l.b16 %v228
      %v525 = vunpack.c.l.b16 %v229
      %v526 = vunpack.c.h.b16 %v229
      %v527 = vunpack.c.l.b16 %v230
      %v528 = vunpack.c.h.b16 %v230
      %v529 = vunpack.c.l.b16 %v231
      %v530 = vunpack.c.l.b16 %v232
      %v531 = vunpack.c.h.b16 %v232
      %v532 = vunpack.c.l.b16 %v233
      %v533 = vunpack.c.h.b16 %v233
      %v534 = vunpack.c.l.b16 %v234
      %v535 = vunpack.c.l.b16 %v235
      %v536 = vunpack.c.h.b16 %v235
      %v537 = vunpack.c.l.b16 %v236
      %v538 = vunpack.c.h.b16 %v236
      %v539 = vunpack.c.l.b16 %v237
      %v540 = vunpack.c.l.b16 %v238
      %v541 = vunpack.c.h.b16 %v238
      %v542 = vunpack.c.l.b16 %v239
      %v543 = vunpack.c.h.b16 %v239
      %v544 = vunpack.c.l.b16 %v240
      %v545 = vunpack.c.l.b16 %v241
      %v546 = vunpack.c.h.b16 %v241
      %v547 = vunpack.c.l.b16 %v242
      %v548 = vunpack.c.h.b16 %v242
      %v549 = vunpack.c.l.b16 %v243
      %v550 = vunpack.c.l.b16 %v244
      %v551 = vunpack.c.h.b16 %v244
      %v552 = vunpack.c.l.b16 %v245
      %v553 = vunpack.c.h.b16 %v245
      %v554 = vunpack.c.l.b16 %v246
      %v555 = vunpack.c.l.b16 %v247
      %v556 = vunpack.c.h.b16 %v247
      %v557 = vunpack.c.l.b16 %v248
      %v558 = vunpack.c.h.b16 %v248
      %v559 = vunpack.c.l.b16 %v249
      %v560 = vunpack.c.l.b16 %v250
      %v561 = vunpack.c.h.b16 %v250
      %v562 = vunpack.c.l.b16 %v251
      %v563 = vunpack.c.h.b16 %v251
      %v564 = vunpack.c.l.b16 %v252
      %v565 = vunpack.c.l.b16 %v253
      %v566 = vunpack.c.h.b16 %v253
      %v567 = vunpack.c.l.b16 %v254
      %v568 = vunpack.c.h.b16 %v254
      %v569 = vunpack.c.l.b16 %v255
      %v570 = vunpack.c.l.b16 %v256
      %v571 = vunpack.c.h.b16 %v256
      %v572 = vunpack.c.l.b16 %v257
      %v573 = vunpack.c.h.b16 %v257
      %v574 = vunpack.c.l.b16 %v258
      %v575 = vunpack.c.l.b16 %v259
      %v576 = vunpack.c.h.b16 %v259
      %v577 = vunpack.c.l.b16 %v260
      %v578 = vunpack.c.h.b16 %v260
      %v579 = vunpack.c.l.b16 %v261
      %v580 = vunpack.c.l.b16 %v262
      %v581 = vunpack.c.h.b16 %v262
      %v582 = vunpack.c.l.b16 %v263
      %v583 = vunpack.c.h.b16 %v263
      %v584 = vunpack.c.l.b16 %v264
      %v585 = vunpack.c.l.b16 %v265
      %v586 = vunpack.c.h.b16 %v265
      %v587 = vunpack.c.l.b16 %v266
      %v588 = vunpack.c.h.b16 %v266
      %v589 = vunpack.c.l.b16 %v267
      %v590 = vunpack.c.l.b16 %v268
      %v591 = vunpack.c.h.b16 %v268
      %v592 = vunpack.c.l.b16 %v269
      %v593 = vunpack.c.h.b16 %v269
      %v594 = vunpack.c.l.b16 %v270
      %v595 = vunpack.c.l.b16 %v271
      %v596 = vunpack.c.h.b16 %v271
      %v597 = vunpack.c.l.b16 %v272
      %v598 = vunpack.c.h.b16 %v272
      %v599 = vunpack.c.l.b16 %v273
      %v600 = vunpack.c.l.b16 %v274
      %v601 = vunpack.c.h.b16 %v274
      %v602 = vunpack.c.l.b16 %v275
      %v603 = vunpack.c.h.b16 %v275
      %v604 = vunpack.c.l.b16 %v276
      %v605 = vpack.c.b16 %v450, %v445
      %v606 = vpack.c.b16 %v451, %v446
      %v607 = vpack.c.b16 %v452, %v447
      %v608 = vpack.c.b16 %v453, %v448
      %v609 = vpack.c.b16 %v454, %v449
      %v610 = vpack.c.b16 %v460, %v455
      %v611 = vpack.c.b16 %v461, %v456
      %v612 = vpack.c.b16 %v462, %v457
      %v613 = vpack.c.b16 %v463, %v458
      %v614 = vpack.c.b16 %v464, %v459
      %v615 = vpack.c.b16 %v470, %v465
      %v616 = vpack.c.b16 %v471, %v466
      %v617 = vpack.c.b16 %v472, %v467
      %v618 = vpack.c.b16 %v473, %v468
      %v619 = vpack.c.b16 %v474, %v469
      %v620 = vpack.c.b16 %v480, %v475
      %v621 = vpack.c.b16 %v481, %v476
      %v622 = vpack.c.b16 %v482, %v477
      %v623 = vpack.c.b16 %v483, %v478
      %v624 = vpack.c.b16 %v484, %v479
      %v625 = vpack.c.b16 %v490, %v485
      %v626 = vpack.c.b16 %v491, %v486
      %v627 = vpack.c.b16 %v492, %v487
      %v628 = vpack.c.b16 %v493, %v488
      %v629 = vpack.c.b16 %v494, %v489
      %v630 = vpack.c.b16 %v500, %v495
      %v631 = vpack.c.b16 %v501, %v496
      %v632 = vpack.c.b16 %v502, %v497
      %v633 = vpack.c.b16 %v503, %v498
      %v634 = vpack.c.b16 %v504, %v499
      %v635 = vpack.c.b16 %v510, %v505
      %v636 = vpack.c.b16 %v511, %v506
      %v637 = vpack.c.b16 %v512, %v507
      %v638 = vpack.c.b16 %v513, %v508
      %v639 = vpack.c.b16 %v514, %v509
      %v640 = vpack.c.b16 %v520, %v515
      %v641 = vpack.c.b16 %v521, %v516
      %v642 = vpack.c.b16 %v522, %v517
      %v643 = vpack.c.b16 %v523, %v518
      %v644 = vpack.c.b16 %v524, %v519
      %v645 = vpack.c.b16 %v530, %v525
      %v646 = vpack.c.b16 %v531, %v526
      %v647 = vpack.c.b16 %v532, %v527
      %v648 = vpack.c.b16 %v533, %v528
      %v649 = vpack.c.b16 %v534, %v529
      %v650 = vpack.c.b16 %v540, %v535
      %v651 = vpack.c.b16 %v541, %v536
      %v652 = vpack.c.b16 %v542, %v537
      %v653 = vpack.c.b16 %v543, %v538
      %v654 = vpack.c.b16 %v544, %v539
      %v655 = vpack.c.b16 %v550, %v545
      %v656 = vpack.c.b16 %v551, %v546
      %v657 = vpack.c.b16 %v552, %v547
      %v658 = vpack.c.b16 %v553, %v548
      %v659 = vpack.c.b16 %v554, %v549
      %v660 = vpack.c.b16 %v560, %v555
      %v661 = vpack.c.b16 %v561, %v556
      %v662 = vpack.c.b16 %v562, %v557
      %v663 = vpack.c.b16 %v563, %v558
      %v664 = vpack.c.b16 %v564, %v559
      %v665 = vpack.c.b16 %v570, %v565
      %v666 = vpack.c.b16 %v571, %v566
      %v667 = vpack.c.b16 %v572, %v567
      %v668 = vpack.c.b16 %v573, %v568
      %v669 = vpack.c.b16 %v574, %v569
      %v670 = vpack.c.b16 %v580, %v575
      %v671 = vpack.c.b16 %v581, %v576
      %v672 = vpack.c.b16 %v582, %v577
      %v673 = vpack.c.b16 %v583, %v578
      %v674 = vpack.c.b16 %v584, %v579
      %v675 = vpack.c.b16 %v590, %v585
      %v676 = vpack.c.b16 %v591, %v586
      %v677 = vpack.c.b16 %v592, %v587
      %v678 = vpack.c.b16 %v593, %v588
      %v679 = vpack.c.b16 %v594, %v589
      %v680 = vpack.c.b16 %v600, %v595
      %v681 = vpack.c.b16 %v601, %v596
      %v682 = vpack.c.b16 %v602, %v597
      %v683 = vpack.c.b16 %v603, %v598
      %v684 = vpack.c.b16 %v604, %v599
      %v821 = vunpack.c.l.b16 %v277
      %v822 = vunpack.c.h.b16 %v277
      %v823 = vunpack.c.l.b16 %v278
      %v824 = vunpack.c.h.b16 %v278
      %v825 = vunpack.c.l.b16 %v279
      %v826 = vunpack.c.h.b16 %v279
      %v827 = vunpack.c.l.b16 %v280
      %v828 = vunpack.c.h.b16 %v280
      %v829 = vunpack.c.l.b16 %v281
      %v830 = vunpack.c.h.b16 %v281
      %v831 = vunpack.c.l.b16 %v282
      %v832 = vunpack.c.h.b16 %v282
      %v833 = vunpack.c.l.b16 %v283
      %v834 = vunpack.c.h.b16 %v283
      %v835 = vunpack.c.l.b16 %v284
      %v836 = vunpack.c.h.b16 %v284
      %v837 = vunpack.c.l.b16 %v285
      %v838 = vunpack.c.h.b16 %v285
      %v839 = vunpack.c.l.b16 %v286
      %v840 = vunpack.c.h.b16 %v286
      %v841 = vunpack.c.l.b16 %v287
      %v842 = vunpack.c.h.b16 %v287
      %v843 = vunpack.c.l.b16 %v288
      %v844 = vunpack.c.h.b16 %v288
      %v845 = vunpack.c.l.b16 %v289
      %v846 = vunpack.c.h.b16 %v289
      %v847 = vunpack.c.l.b16 %v290
      %v848 = vunpack.c.h.b16 %v290
      %v849 = vunpack.c.l.b16 %v291
      %v850 = vunpack.c.h.b16 %v291
      %v851 = vunpack.c.l.b16 %v292
      %v852 = vunpack.c.h.b16 %v292
      %v853 = vunpack.c.l.b16 %v293
      %v854 = vunpack.c.h.b16 %v293
      %v855 = vunpack.c.l.b16 %v294
      %v856 = vunpack.c.h.b16 %v294
      %v857 = vunpack.c.l.b16 %v295
      %v858 = vunpack.c.h.b16 %v295
      %v859 = vunpack.c.l.b16 %v296
      %v860 = vunpack.c.h.b16 %v296
      %v861 = vunpack.c.l.b16 %v297
      %v862 = vunpack.c.h.b16 %v297
      %v863 = vunpack.c.l.b16 %v298
      %v864 = vunpack.c.h.b16 %v298
      %v865 = vunpack.c.l.b16 %v299
      %v866 = vunpack.c.h.b16 %v299
      %v867 = vunpack.c.l.b16 %v300
      %v868 = vunpack.c.h.b16 %v300
      %v869 = vunpack.c.l.b16 %v301
      %v870 = vunpack.c.h.b16 %v301
      %v871 = vunpack.c.l.b16 %v302
      %v872 = vunpack.c.h.b16 %v302
      %v873 = vunpack.c.l.b16 %v303
      %v874 = vunpack.c.h.b16 %v303
      %v875 = vunpack.c.l.b16 %v304
      %v876 = vunpack.c.h.b16 %v304
      %v877 = vunpack.c.l.b16 %v305
      %v878 = vunpack.c.h.b16 %v305
      %v879 = vunpack.c.l.b16 %v306
      %v880 = vunpack.c.h.b16 %v306
      %v881 = vunpack.c.l.b16 %v307
      %v882 = vunpack.c.h.b16 %v307
      %v883 = vunpack.c.l.b16 %v308
      %v884 = vunpack.c.h.b16 %v308
      %v885 = vunpack.c.l.b16 %v309
      %v886 = vunpack.c.h.b16 %v309
      %v887 = vunpack.c.l.b16 %v310
      %v888 = vunpack.c.h.b16 %v310
      %v889 = vunpack.c.l.b16 %v311
      %v890 = vunpack.c.h.b16 %v311
      %v891 = vunpack.c.l.b16 %v312
      %v892 = vunpack.c.h.b16 %v312
      %v893 = vunpack.c.l.b16 %v313
      %v894 = vunpack.c.h.b16 %v313
      %v895 = vunpack.c.l.b16 %v314
      %v896 = vunpack.c.h.b16 %v314
      %v897 = vunpack.c.l.b16 %v315
      %v898 = vunpack.c.h.b16 %v315
      %v899 = vunpack.c.l.b16 %v316
      %v900 = vunpack.c.h.b16 %v316
      %v901 = vunpack.c.l.b16 %v317
      %v902 = vunpack.c.h.b16 %v317
      %v903 = vunpack.c.l.b16 %v318
      %v904 = vunpack.c.h.b16 %v318
      %v905 = vunpack.c.l.b16 %v319
      %v906 = vunpack.c.h.b16 %v319
      %v907 = vunpack.c.l.b16 %v320
      %v908 = vunpack.c.h.b16 %v320
      %v909 = vunpack.c.l.b16 %v321
      %v910 = vunpack.c.h.b16 %v321
      %v911 = vunpack.c.l.b16 %v322
      %v912 = vunpack.c.h.b16 %v322
      %v913 = vunpack.c.l.b16 %v323
      %v914 = vunpack.c.h.b16 %v323
      %v915 = vunpack.c.l.b16 %v324
      %v916 = vunpack.c.h.b16 %v324
      %v917 = vunpack.c.l.b16 %v325
      %v918 = vunpack.c.h.b16 %v325
      %v919 = vunpack.c.l.b16 %v326
      %v920 = vunpack.c.h.b16 %v326
      %v921 = vunpack.c.l.b16 %v327
      %v922 = vunpack.c.h.b16 %v327
      %v923 = vunpack.c.l.b16 %v328
      %v924 = vunpack.c.h.b16 %v328
      %v925 = vunpack.c.l.b16 %v329
      %v926 = vunpack.c.h.b16 %v329
      %v927 = vunpack.c.l.b16 %v330
      %v928 = vunpack.c.h.b16 %v330
      %v929 = vunpack.c.l.b16 %v331
      %v930 = vunpack.c.h.b16 %v331
      %v931 = vunpack.c.l.b16 %v332
      %v932 = vunpack.c.h.b16 %v332
      %v933 = vunpack.c.l.b16 %v333
      %v934 = vunpack.c.h.b16 %v333
      %v935 = vunpack.c.l.b16 %v334
      %v936 = vunpack.c.h.b16 %v334
      %v937 = vunpack.c.l.b16 %v335
      %v938 = vunpack.c.h.b16 %v335
      %v939 = vunpack.c.l.b16 %v336
      %v940 = vunpack.c.h.b16 %v336
      %v941 = vunpack.c.l.b16 %v337
      %v942 = vunpack.c.h.b16 %v337
      %v943 = vunpack.c.l.b16 %v338
      %v944 = vunpack.c.h.b16 %v338
      %v945 = vunpack.c.l.b16 %v339
      %v946 = vunpack.c.h.b16 %v339
      %v947 = vunpack.c.l.b16 %v340
      %v948 = vunpack.c.h.b16 %v340
      %v949 = vunpack.c.l.b16 %v341
      %v950 = vunpack.c.h.b16 %v341
      %v951 = vunpack.c.l.b16 %v342
      %v952 = vunpack.c.h.b16 %v342
      %v953 = vunpack.c.l.b16 %v343
      %v954 = vunpack.c.h.b16 %v343
      %v955 = vunpack.c.l.b16 %v344
      %v956 = vunpack.c.h.b16 %v344
      %v957 = vunpack.c.l.b16 %v345
      %v958 = vunpack.c.h.b16 %v345
      %v959 = vunpack.c.l.b16 %v346
      %v960 = vunpack.c.h.b16 %v346
      %v961 = vunpack.c.l.b16 %v347
      %v962 = vunpack.c.h.b16 %v347
      %v963 = vunpack.c.l.b16 %v348
      %v964 = vunpack.c.h.b16 %v348
      %v965 = vpack.c.b16 %v823, %v821
      %v966 = vpack.c.b16 %v824, %v822
      %v967 = vpack.c.b16 %v827, %v825
      %v968 = vpack.c.b16 %v828, %v826
      %v969 = vpack.c.b16 %v831, %v829
      %v970 = vpack.c.b16 %v832, %v830
      %v971 = vpack.c.b16 %v835, %v833
      %v972 = vpack.c.b16 %v836, %v834
      %v973 = vpack.c.b16 %v839, %v837
      %v974 = vpack.c.b16 %v840, %v838
      %v975 = vpack.c.b16 %v843, %v841
      %v976 = vpack.c.b16 %v844, %v842
      %v977 = vpack.c.b16 %v847, %v845
      %v978 = vpack.c.b16 %v848, %v846
      %v979 = vpack.c.b16 %v851, %v849
      %v980 = vpack.c.b16 %v852, %v850
      %v981 = vpack.c.b16 %v855, %v853
      %v982 = vpack.c.b16 %v856, %v854
      %v983 = vpack.c.b16 %v859, %v857
      %v984 = vpack.c.b16 %v860, %v858
      %v985 = vpack.c.b16 %v863, %v861
      %v986 = vpack.c.b16 %v864, %v862
      %v987 = vpack.c.b16 %v867, %v865
      %v988 = vpack.c.b16 %v868, %v866
      %v989 = vpack.c.b16 %v871, %v869
      %v990 = vpack.c.b16 %v872, %v870
      %v991 = vpack.c.b16 %v875, %v873
      %v992 = vpack.c.b16 %v876, %v874
      %v993 = vpack.c.b16 %v879, %v877
      %v994 = vpack.c.b16 %v880, %v878
      %v995 = vpack.c.b16 %v883, %v881
      %v996 = vpack.c.b16 %v884, %v882
      %v997 = vpack.c.b16 %v887, %v885
      %v998 = vpack.c.b16 %v888, %v886
      %v999 = vpack.c.b16 %v891, %v889
      %v1000 = vpack.c.b16 %v892, %v890
      %v1001 = vpack.c.b16 %v895, %v893
      %v1002 = vpack.c.b16 %v896, %v894
      %v1003 = vpack.c.b16 %v899, %v897
      %v1004 = vpack.c.b16 %v900, %v898
      %v1005 = vpack.c.b16 %v903, %v901
      %v1006 = vpack.c.b16 %v904, %v902
      %v1007 = vpack.c.b16 %v907, %v905
      %v1008 = vpack.c.b16 %v908, %v906
      %v1009 = vpack.c.b16 %v911, %v909
      %v1010 = vpack.c.b16 %v912, %v910
      %v1011 = vpack.c.b16 %v915, %v913
      %v1012 = vpack.c.b16 %v916, %v914
      %v1013 = vpack.c.b16 %v919, %v917
      %v1014 = vpack.c.b16 %v920, %v918
      %v1015 = vpack.c.b16 %v923, %v921
      %v1016 = vpack.c.b16 %v924, %v922
      %v1017 = vpack.c.b16 %v927, %v925
      %v1018 = vpack.c.b16 %v928, %v926
      %v1019 = vpack.c.b16 %v931, %v929
      %v1020 = vpack.c.b16 %v932, %v930
      %v1021 = vpack.c.b16 %v935, %v933
      %v1022 = vpack.c.b16 %v936, %v934
      %v1023 = vpack.c.b16 %v939, %v937
      %v1024 = vpack.c.b16 %v940, %v938
      %v1025 = vpack.c.b16 %v943, %v941
      %v1026 = vpack.c.b16 %v944, %v942
      %v1027 = vpack.c.b16 %v947, %v945
      %v1028 = vpack.c.b16 %v948, %v946
      %v1029 = vpack.c.b16 %v951, %v949
      %v1030 = vpack.c.b16 %v952, %v950
      %v1031 = vpack.c.b16 %v955, %v953
      %v1032 = vpack.c.b16 %v956, %v954
      %v1033 = vpack.c.b16 %v959, %v957
      %v1034 = vpack.c.b16 %v960, %v958
      %v1035 = vpack.c.b16 %v963, %v961
      %v1036 = vpack.c.b16 %v964, %v962
      %vm1109 = vcmask 523264
      %v1111 = vsel %vm1109, %v609, 0
      %v1114 = vsel %vm1109, %v614, 0
      %v1117 = vsel %vm1109, %v619, 0
      %v1120 = vsel %vm1109, %v624, 0
      %v1123 = vsel %vm1109, %v629, 0
      %v1126 = vsel %vm1109, %v634, 0
      %v1129 = vsel %vm1109, %v639, 0
      %v1132 = vsel %vm1109, %v644, 0
      %v1135 = vsel %vm1109, %v649, 0
      %v1138 = vsel %vm1109, %v654, 0
      %v1141 = vsel %vm1109, %v659, 0
      %v1144 = vsel %vm1109, %v664, 0
      %v1147 = vsel %vm1109, %v669, 0
      %v1150 = vsel %vm1109, %v674, 0
      %v1153 = vsel %vm1109, %v679, 0
      %v1156 = vsel %vm1109, %v684, 0
      %1158 = vmatprep.subr.bf16.mxu0 %v980
      %1159 = vmatpush1.bf16.msra.mxu0 %v979
      %1160 = vmatprep.subr.bf16.mxu0 %v978
      %1161 = vmatpush1.bf16.msra.mxu0 %v977
      %1162 = vmatprep.subr.bf16.mxu0 %v976
      %1163 = vmatpush1.bf16.msra.mxu0 %v975
      %1164 = vmatprep.subr.bf16.mxu0 %v974
      %1165 = vmatpush1.bf16.msra.mxu0 %v973
      %1166 = vmatprep.subr.bf16.mxu0 %v972
      %1167 = vmatpush1.bf16.msra.mxu0 %v971
      %1168 = vmatprep.subr.bf16.mxu0 %v970
      %1169 = vmatpush1.bf16.msra.mxu0 %v969
      %1170 = vmatprep.subr.bf16.mxu0 %v968
      %1171 = vmatpush1.bf16.msra.mxu0 %v967
      %1172 = vmatprep.subr.bf16.mxu0 %v966
      %1173 = vmatpush1.bf16.msra.mxu0 %v965
      %1174 = vmatprep.subr.bf16.mxu0 %v996
      %1175 = vmatpush2.bf16.msra.mxu0 %v995
      %1176 = vmatprep.subr.bf16.mxu0 %v994
      %1177 = vmatpush2.bf16.msra.mxu0 %v993
      %1178 = vmatprep.subr.bf16.mxu0 %v992
      %1179 = vmatpush2.bf16.msra.mxu0 %v991
      %1180 = vmatprep.subr.bf16.mxu0 %v990
      %1181 = vmatpush2.bf16.msra.mxu0 %v989
      %1182 = vmatprep.subr.bf16.mxu0 %v988
      %1183 = vmatpush2.bf16.msra.mxu0 %v987
      %1184 = vmatprep.subr.bf16.mxu0 %v986
      %1185 = vmatpush2.bf16.msra.mxu0 %v985
      %1186 = vmatprep.subr.bf16.mxu0 %v984
      %1187 = vmatpush2.bf16.msra.mxu0 %v983
      %1188 = vmatprep.subr.bf16.mxu0 %v982
      %1189 = vmatpush2.bf16.msra.mxu0 %v981
      %1190 = vmatprep.mubr.bf16.mxu0 %v606
      %1191 = vmatmul.mubr.bf16.gmra.mxu0 %v605
      %v1192 = vpop.f32.mrf.mxu0
      %v1193 = vadd.f32 0.0, %v1192
      %v1194 = vpop.f32.mrf.mxu0
      %v1195 = vadd.f32 0.0, %v1194
      %v1196 = vpop.f32.mrf.mxu0
      %v1197 = vadd.f32 0.0, %v1196
      %v1198 = vpop.f32.mrf.mxu0
      %v1199 = vadd.f32 0.0, %v1198
      %1200 = vmatprep.mubr.bf16.mxu0 %v611
      %1201 = vmatmul.mubr.bf16.gmra.mxu0 %v610
      %v1202 = vpop.f32.mrf.mxu0
      %v1203 = vadd.f32 0.0, %v1202
      %v1204 = vpop.f32.mrf.mxu0
      %v1205 = vadd.f32 0.0, %v1204
      %v1206 = vpop.f32.mrf.mxu0
      %v1207 = vadd.f32 0.0, %v1206
      %v1208 = vpop.f32.mrf.mxu0
      %v1209 = vadd.f32 0.0, %v1208
      %1210 = vmatprep.mubr.bf16.mxu0 %v616
      %1211 = vmatmul.mubr.bf16.gmra.mxu0 %v615
      %v1212 = vpop.f32.mrf.mxu0
      %v1213 = vadd.f32 0.0, %v1212
      %v1214 = vpop.f32.mrf.mxu0
      %v1215 = vadd.f32 0.0, %v1214
      %v1216 = vpop.f32.mrf.mxu0
      %v1217 = vadd.f32 0.0, %v1216
      %v1218 = vpop.f32.mrf.mxu0
      %v1219 = vadd.f32 0.0, %v1218
      %1220 = vmatprep.mubr.bf16.mxu0 %v621
      %1221 = vmatmul.mubr.bf16.gmra.mxu0 %v620
      %v1222 = vpop.f32.mrf.mxu0
      %v1223 = vadd.f32 0.0, %v1222
      %v1224 = vpop.f32.mrf.mxu0
      %v1225 = vadd.f32 0.0, %v1224
      %v1226 = vpop.f32.mrf.mxu0
      %v1227 = vadd.f32 0.0, %v1226
      %v1228 = vpop.f32.mrf.mxu0
      %v1229 = vadd.f32 0.0, %v1228
      %1230 = vmatprep.mubr.bf16.mxu0 %v626
      %1231 = vmatmul.mubr.bf16.gmra.mxu0 %v625
      %v1232 = vpop.f32.mrf.mxu0
      %v1233 = vadd.f32 0.0, %v1232
      %v1234 = vpop.f32.mrf.mxu0
      %v1235 = vadd.f32 0.0, %v1234
      %v1236 = vpop.f32.mrf.mxu0
      %v1237 = vadd.f32 0.0, %v1236
      %v1238 = vpop.f32.mrf.mxu0
      %v1239 = vadd.f32 0.0, %v1238
      %1240 = vmatprep.mubr.bf16.mxu0 %v631
      %1241 = vmatmul.mubr.bf16.gmra.mxu0 %v630
      %v1242 = vpop.f32.mrf.mxu0
      %v1243 = vadd.f32 0.0, %v1242
      %v1244 = vpop.f32.mrf.mxu0
      %v1245 = vadd.f32 0.0, %v1244
      %v1246 = vpop.f32.mrf.mxu0
      %v1247 = vadd.f32 0.0, %v1246
      %v1248 = vpop.f32.mrf.mxu0
      %v1249 = vadd.f32 0.0, %v1248
      %1250 = vmatprep.mubr.bf16.mxu0 %v636
      %1251 = vmatmul.mubr.bf16.gmra.mxu0 %v635
      %v1252 = vpop.f32.mrf.mxu0
      %v1253 = vadd.f32 0.0, %v1252
      %v1254 = vpop.f32.mrf.mxu0
      %v1255 = vadd.f32 0.0, %v1254
      %v1256 = vpop.f32.mrf.mxu0
      %v1257 = vadd.f32 0.0, %v1256
      %v1258 = vpop.f32.mrf.mxu0
      %v1259 = vadd.f32 0.0, %v1258
      %1260 = vmatprep.mubr.bf16.mxu0 %v641
      %1261 = vmatmul.mubr.bf16.gmra.mxu0 %v640
      %v1262 = vpop.f32.mrf.mxu0
      %v1263 = vadd.f32 0.0, %v1262
      %v1264 = vpop.f32.mrf.mxu0
      %v1265 = vadd.f32 0.0, %v1264
      %v1266 = vpop.f32.mrf.mxu0
      %v1267 = vadd.f32 0.0, %v1266
      %v1268 = vpop.f32.mrf.mxu0
      %v1269 = vadd.f32 0.0, %v1268
      %1270 = vmatprep.mubr.bf16.mxu0 %v646
      %1271 = vmatmul.mubr.bf16.gmra.mxu0 %v645
      %v1272 = vpop.f32.mrf.mxu0
      %v1273 = vadd.f32 0.0, %v1272
      %v1274 = vpop.f32.mrf.mxu0
      %v1275 = vadd.f32 0.0, %v1274
      %v1276 = vpop.f32.mrf.mxu0
      %v1277 = vadd.f32 0.0, %v1276
      %v1278 = vpop.f32.mrf.mxu0
      %v1279 = vadd.f32 0.0, %v1278
      %1280 = vmatprep.mubr.bf16.mxu0 %v651
      %1281 = vmatmul.mubr.bf16.gmra.mxu0 %v650
      %v1282 = vpop.f32.mrf.mxu0
      %v1283 = vadd.f32 0.0, %v1282
      %v1284 = vpop.f32.mrf.mxu0
      %v1285 = vadd.f32 0.0, %v1284
      %v1286 = vpop.f32.mrf.mxu0
      %v1287 = vadd.f32 0.0, %v1286
      %v1288 = vpop.f32.mrf.mxu0
      %v1289 = vadd.f32 0.0, %v1288
      %1290 = vmatprep.mubr.bf16.mxu0 %v656
      %1291 = vmatmul.mubr.bf16.gmra.mxu0 %v655
      %v1292 = vpop.f32.mrf.mxu0
      %v1293 = vadd.f32 0.0, %v1292
      %v1294 = vpop.f32.mrf.mxu0
      %v1295 = vadd.f32 0.0, %v1294
      %v1296 = vpop.f32.mrf.mxu0
      %v1297 = vadd.f32 0.0, %v1296
      %v1298 = vpop.f32.mrf.mxu0
      %v1299 = vadd.f32 0.0, %v1298
      %1300 = vmatprep.mubr.bf16.mxu0 %v661
      %1301 = vmatmul.mubr.bf16.gmra.mxu0 %v660
      %v1302 = vpop.f32.mrf.mxu0
      %v1303 = vadd.f32 0.0, %v1302
      %v1304 = vpop.f32.mrf.mxu0
      %v1305 = vadd.f32 0.0, %v1304
      %v1306 = vpop.f32.mrf.mxu0
      %v1307 = vadd.f32 0.0, %v1306
      %v1308 = vpop.f32.mrf.mxu0
      %v1309 = vadd.f32 0.0, %v1308
      %1310 = vmatprep.mubr.bf16.mxu0 %v666
      %1311 = vmatmul.mubr.bf16.gmra.mxu0 %v665
      %v1312 = vpop.f32.mrf.mxu0
      %v1313 = vadd.f32 0.0, %v1312
      %v1314 = vpop.f32.mrf.mxu0
      %v1315 = vadd.f32 0.0, %v1314
      %v1316 = vpop.f32.mrf.mxu0
      %v1317 = vadd.f32 0.0, %v1316
      %v1318 = vpop.f32.mrf.mxu0
      %v1319 = vadd.f32 0.0, %v1318
      %1320 = vmatprep.mubr.bf16.mxu0 %v671
      %1321 = vmatmul.mubr.bf16.gmra.mxu0 %v670
      %v1322 = vpop.f32.mrf.mxu0
      %v1323 = vadd.f32 0.0, %v1322
      %v1324 = vpop.f32.mrf.mxu0
      %v1325 = vadd.f32 0.0, %v1324
      %v1326 = vpop.f32.mrf.mxu0
      %v1327 = vadd.f32 0.0, %v1326
      %v1328 = vpop.f32.mrf.mxu0
      %v1329 = vadd.f32 0.0, %v1328
      %1330 = vmatprep.mubr.bf16.mxu0 %v676
      %1331 = vmatmul.mubr.bf16.gmra.mxu0 %v675
      %v1332 = vpop.f32.mrf.mxu0
      %v1333 = vadd.f32 0.0, %v1332
      %v1334 = vpop.f32.mrf.mxu0
      %v1335 = vadd.f32 0.0, %v1334
      %v1336 = vpop.f32.mrf.mxu0
      %v1337 = vadd.f32 0.0, %v1336
      %v1338 = vpop.f32.mrf.mxu0
      %v1339 = vadd.f32 0.0, %v1338
      %1340 = vmatprep.mubr.bf16.mxu0 %v681
      %1341 = vmatmul.mubr.bf16.gmra.mxu0 %v680
      %v1342 = vpop.f32.mrf.mxu0
      %v1343 = vadd.f32 0.0, %v1342
      %v1344 = vpop.f32.mrf.mxu0
      %v1345 = vadd.f32 0.0, %v1344
      %v1346 = vpop.f32.mrf.mxu0
      %v1347 = vadd.f32 0.0, %v1346
      %v1348 = vpop.f32.mrf.mxu0
      %v1349 = vadd.f32 0.0, %v1348
      %1350 = vdwg.mxu0
      %1351 = vmatprep.subr.bf16.mxu0 %v1012
      %1352 = vmatpush1.bf16.msra.mxu0 %v1011
      %1353 = vmatprep.subr.bf16.mxu0 %v1010
      %1354 = vmatpush1.bf16.msra.mxu0 %v1009
      %1355 = vmatprep.subr.bf16.mxu0 %v1008
      %1356 = vmatpush1.bf16.msra.mxu0 %v1007
      %1357 = vmatprep.subr.bf16.mxu0 %v1006
      %1358 = vmatpush1.bf16.msra.mxu0 %v1005
      %1359 = vmatprep.subr.bf16.mxu0 %v1004
      %1360 = vmatpush1.bf16.msra.mxu0 %v1003
      %1361 = vmatprep.subr.bf16.mxu0 %v1002
      %1362 = vmatpush1.bf16.msra.mxu0 %v1001
      %1363 = vmatprep.subr.bf16.mxu0 %v1000
      %1364 = vmatpush1.bf16.msra.mxu0 %v999
      %1365 = vmatprep.subr.bf16.mxu0 %v998
      %1366 = vmatpush1.bf16.msra.mxu0 %v997
      %1367 = vmatprep.subr.bf16.mxu0 %v1028
      %1368 = vmatpush2.bf16.msra.mxu0 %v1027
      %1369 = vmatprep.subr.bf16.mxu0 %v1026
      %1370 = vmatpush2.bf16.msra.mxu0 %v1025
      %1371 = vmatprep.subr.bf16.mxu0 %v1024
      %1372 = vmatpush2.bf16.msra.mxu0 %v1023
      %1373 = vmatprep.subr.bf16.mxu0 %v1022
      %1374 = vmatpush2.bf16.msra.mxu0 %v1021
      %1375 = vmatprep.subr.bf16.mxu0 %v1020
      %1376 = vmatpush2.bf16.msra.mxu0 %v1019
      %1377 = vmatprep.subr.bf16.mxu0 %v1018
      %1378 = vmatpush2.bf16.msra.mxu0 %v1017
      %1379 = vmatprep.subr.bf16.mxu0 %v1016
      %1380 = vmatpush2.bf16.msra.mxu0 %v1015
      %1381 = vmatprep.subr.bf16.mxu0 %v1014
      %1382 = vmatpush2.bf16.msra.mxu0 %v1013
      %1383 = vmatprep.mubr.bf16.mxu0 %v608
      %1384 = vmatmul.mubr.bf16.gmra.mxu0 %v607
      %v1385 = vpop.f32.mrf.mxu0
      %v1386 = vadd.f32 %v1193, %v1385
      %v1387 = vpop.f32.mrf.mxu0
      %v1388 = vadd.f32 %v1195, %v1387
      %v1389 = vpop.f32.mrf.mxu0
      %v1390 = vadd.f32 %v1197, %v1389
      %v1391 = vpop.f32.mrf.mxu0
      %v1392 = vadd.f32 %v1199, %v1391
      %1393 = vmatprep.mubr.bf16.mxu0 %v613
      %1394 = vmatmul.mubr.bf16.gmra.mxu0 %v612
      %v1395 = vpop.f32.mrf.mxu0
      %v1396 = vadd.f32 %v1203, %v1395
      %v1397 = vpop.f32.mrf.mxu0
      %v1398 = vadd.f32 %v1205, %v1397
      %v1399 = vpop.f32.mrf.mxu0
      %v1400 = vadd.f32 %v1207, %v1399
      %v1401 = vpop.f32.mrf.mxu0
      %v1402 = vadd.f32 %v1209, %v1401
      %1403 = vmatprep.mubr.bf16.mxu0 %v618
      %1404 = vmatmul.mubr.bf16.gmra.mxu0 %v617
      %v1405 = vpop.f32.mrf.mxu0
      %v1406 = vadd.f32 %v1213, %v1405
      %v1407 = vpop.f32.mrf.mxu0
      %v1408 = vadd.f32 %v1215, %v1407
      %v1409 = vpop.f32.mrf.mxu0
      %v1410 = vadd.f32 %v1217, %v1409
      %v1411 = vpop.f32.mrf.mxu0
      %v1412 = vadd.f32 %v1219, %v1411
      %1413 = vmatprep.mubr.bf16.mxu0 %v623
      %1414 = vmatmul.mubr.bf16.gmra.mxu0 %v622
      %v1415 = vpop.f32.mrf.mxu0
      %v1416 = vadd.f32 %v1223, %v1415
      %v1417 = vpop.f32.mrf.mxu0
      %v1418 = vadd.f32 %v1225, %v1417
      %v1419 = vpop.f32.mrf.mxu0
      %v1420 = vadd.f32 %v1227, %v1419
      %v1421 = vpop.f32.mrf.mxu0
      %v1422 = vadd.f32 %v1229, %v1421
      %1423 = vmatprep.mubr.bf16.mxu0 %v628
      %1424 = vmatmul.mubr.bf16.gmra.mxu0 %v627
      %v1425 = vpop.f32.mrf.mxu0
      %v1426 = vadd.f32 %v1233, %v1425
      %v1427 = vpop.f32.mrf.mxu0
      %v1428 = vadd.f32 %v1235, %v1427
      %v1429 = vpop.f32.mrf.mxu0
      %v1430 = vadd.f32 %v1237, %v1429
      %v1431 = vpop.f32.mrf.mxu0
      %v1432 = vadd.f32 %v1239, %v1431
      %1433 = vmatprep.mubr.bf16.mxu0 %v633
      %1434 = vmatmul.mubr.bf16.gmra.mxu0 %v632
      %v1435 = vpop.f32.mrf.mxu0
      %v1436 = vadd.f32 %v1243, %v1435
      %v1437 = vpop.f32.mrf.mxu0
      %v1438 = vadd.f32 %v1245, %v1437
      %v1439 = vpop.f32.mrf.mxu0
      %v1440 = vadd.f32 %v1247, %v1439
      %v1441 = vpop.f32.mrf.mxu0
      %v1442 = vadd.f32 %v1249, %v1441
      %1443 = vmatprep.mubr.bf16.mxu0 %v638
      %1444 = vmatmul.mubr.bf16.gmra.mxu0 %v637
      %v1445 = vpop.f32.mrf.mxu0
      %v1446 = vadd.f32 %v1253, %v1445
      %v1447 = vpop.f32.mrf.mxu0
      %v1448 = vadd.f32 %v1255, %v1447
      %v1449 = vpop.f32.mrf.mxu0
      %v1450 = vadd.f32 %v1257, %v1449
      %v1451 = vpop.f32.mrf.mxu0
      %v1452 = vadd.f32 %v1259, %v1451
      %1453 = vmatprep.mubr.bf16.mxu0 %v643
      %1454 = vmatmul.mubr.bf16.gmra.mxu0 %v642
      %v1455 = vpop.f32.mrf.mxu0
      %v1456 = vadd.f32 %v1263, %v1455
      %v1457 = vpop.f32.mrf.mxu0
      %v1458 = vadd.f32 %v1265, %v1457
      %v1459 = vpop.f32.mrf.mxu0
      %v1460 = vadd.f32 %v1267, %v1459
      %v1461 = vpop.f32.mrf.mxu0
      %v1462 = vadd.f32 %v1269, %v1461
      %1463 = vmatprep.mubr.bf16.mxu0 %v648
      %1464 = vmatmul.mubr.bf16.gmra.mxu0 %v647
      %v1465 = vpop.f32.mrf.mxu0
      %v1466 = vadd.f32 %v1273, %v1465
      %v1467 = vpop.f32.mrf.mxu0
      %v1468 = vadd.f32 %v1275, %v1467
      %v1469 = vpop.f32.mrf.mxu0
      %v1470 = vadd.f32 %v1277, %v1469
      %v1471 = vpop.f32.mrf.mxu0
      %v1472 = vadd.f32 %v1279, %v1471
      %1473 = vmatprep.mubr.bf16.mxu0 %v653
      %1474 = vmatmul.mubr.bf16.gmra.mxu0 %v652
      %v1475 = vpop.f32.mrf.mxu0
      %v1476 = vadd.f32 %v1283, %v1475
      %v1477 = vpop.f32.mrf.mxu0
      %v1478 = vadd.f32 %v1285, %v1477
      %v1479 = vpop.f32.mrf.mxu0
      %v1480 = vadd.f32 %v1287, %v1479
      %v1481 = vpop.f32.mrf.mxu0
      %v1482 = vadd.f32 %v1289, %v1481
      %1483 = vmatprep.mubr.bf16.mxu0 %v658
      %1484 = vmatmul.mubr.bf16.gmra.mxu0 %v657
      %v1485 = vpop.f32.mrf.mxu0
      %v1486 = vadd.f32 %v1293, %v1485
      %v1487 = vpop.f32.mrf.mxu0
      %v1488 = vadd.f32 %v1295, %v1487
      %v1489 = vpop.f32.mrf.mxu0
      %v1490 = vadd.f32 %v1297, %v1489
      %v1491 = vpop.f32.mrf.mxu0
      %v1492 = vadd.f32 %v1299, %v1491
      %1493 = vmatprep.mubr.bf16.mxu0 %v663
      %1494 = vmatmul.mubr.bf16.gmra.mxu0 %v662
      %v1495 = vpop.f32.mrf.mxu0
      %v1496 = vadd.f32 %v1303, %v1495
      %v1497 = vpop.f32.mrf.mxu0
      %v1498 = vadd.f32 %v1305, %v1497
      %v1499 = vpop.f32.mrf.mxu0
      %v1500 = vadd.f32 %v1307, %v1499
      %v1501 = vpop.f32.mrf.mxu0
      %v1502 = vadd.f32 %v1309, %v1501
      %1503 = vmatprep.mubr.bf16.mxu0 %v668
      %1504 = vmatmul.mubr.bf16.gmra.mxu0 %v667
      %v1505 = vpop.f32.mrf.mxu0
      %v1506 = vadd.f32 %v1313, %v1505
      %v1507 = vpop.f32.mrf.mxu0
      %v1508 = vadd.f32 %v1315, %v1507
      %v1509 = vpop.f32.mrf.mxu0
      %v1510 = vadd.f32 %v1317, %v1509
      %v1511 = vpop.f32.mrf.mxu0
      %v1512 = vadd.f32 %v1319, %v1511
      %1513 = vmatprep.mubr.bf16.mxu0 %v673
      %1514 = vmatmul.mubr.bf16.gmra.mxu0 %v672
      %v1515 = vpop.f32.mrf.mxu0
      %v1516 = vadd.f32 %v1323, %v1515
      %v1517 = vpop.f32.mrf.mxu0
      %v1518 = vadd.f32 %v1325, %v1517
      %v1519 = vpop.f32.mrf.mxu0
      %v1520 = vadd.f32 %v1327, %v1519
      %v1521 = vpop.f32.mrf.mxu0
      %v1522 = vadd.f32 %v1329, %v1521
      %1523 = vmatprep.mubr.bf16.mxu0 %v678
      %1524 = vmatmul.mubr.bf16.gmra.mxu0 %v677
      %v1525 = vpop.f32.mrf.mxu0
      %v1526 = vadd.f32 %v1333, %v1525
      %v1527 = vpop.f32.mrf.mxu0
      %v1528 = vadd.f32 %v1335, %v1527
      %v1529 = vpop.f32.mrf.mxu0
      %v1530 = vadd.f32 %v1337, %v1529
      %v1531 = vpop.f32.mrf.mxu0
      %v1532 = vadd.f32 %v1339, %v1531
      %1533 = vmatprep.mubr.bf16.mxu0 %v683
      %1534 = vmatmul.mubr.bf16.gmra.mxu0 %v682
      %v1535 = vpop.f32.mrf.mxu0
      %v1536 = vadd.f32 %v1343, %v1535
      %v1537 = vpop.f32.mrf.mxu0
      %v1538 = vadd.f32 %v1345, %v1537
      %v1539 = vpop.f32.mrf.mxu0
      %v1540 = vadd.f32 %v1347, %v1539
      %v1541 = vpop.f32.mrf.mxu0
      %v1542 = vadd.f32 %v1349, %v1541
      %1543 = vdwg.mxu0
      %1544 = vmatprep.subr.bf16.mxu0 0
      %1545 = vmatpush1.bf16.msra.mxu0 0
      %1546 = vmatprep.subr.bf16.mxu0 0
      %1547 = vmatpush1.bf16.msra.mxu0 0
      %1548 = vmatprep.subr.bf16.mxu0 0
      %1549 = vmatpush1.bf16.msra.mxu0 0
      %1550 = vmatprep.subr.bf16.mxu0 0
      %1551 = vmatpush1.bf16.msra.mxu0 0
      %1552 = vmatprep.subr.bf16.mxu0 %v1036
      %1553 = vmatpush1.bf16.msra.mxu0 %v1035
      %1554 = vmatprep.subr.bf16.mxu0 %v1034
      %1555 = vmatpush1.bf16.msra.mxu0 %v1033
      %1556 = vmatprep.subr.bf16.mxu0 %v1032
      %1557 = vmatpush1.bf16.msra.mxu0 %v1031
      %1558 = vmatprep.subr.bf16.mxu0 %v1030
      %1559 = vmatpush1.bf16.msra.mxu0 %v1029
      %1560 = vmatprep.subr.bf16.mxu0 0
      %1561 = vmatpush2.bf16.msra.mxu0 0
      %1562 = vmatprep.subr.bf16.mxu0 0
      %1563 = vmatpush2.bf16.msra.mxu0 0
      %1564 = vmatprep.subr.bf16.mxu0 0
      %1565 = vmatpush2.bf16.msra.mxu0 0
      %1566 = vmatprep.subr.bf16.mxu0 0
      %1567 = vmatpush2.bf16.msra.mxu0 0
      %1568 = vmatprep.subr.bf16.mxu0 0
      %1569 = vmatpush2.bf16.msra.mxu0 0
      %1570 = vmatprep.subr.bf16.mxu0 0
      %1571 = vmatpush2.bf16.msra.mxu0 0
      %1572 = vmatprep.subr.bf16.mxu0 0
      %1573 = vmatpush2.bf16.msra.mxu0 0
      %1574 = vmatprep.subr.bf16.mxu0 0
      %1575 = vmatpush2.bf16.msra.mxu0 0
      %1576 = vmatprep.mubr.bf16.mxu0 0
      %1577 = vmatmul.mubr.bf16.gmra.mxu0 %v1111
      %v1578 = vpop.f32.mrf.mxu0
      %v1579 = vadd.f32 %v1386, %v1578
      %v1580 = vpop.f32.mrf.mxu0
      %v1581 = vadd.f32 %v1388, %v1580
      %v1582 = vpop.f32.mrf.mxu0
      %v1583 = vadd.f32 %v1390, %v1582
      %v1584 = vpop.f32.mrf.mxu0
      %v1585 = vadd.f32 %v1392, %v1584
      %1586 = vmatprep.mubr.bf16.mxu0 0
      %1587 = vmatmul.mubr.bf16.gmra.mxu0 %v1114
      %v1588 = vpop.f32.mrf.mxu0
      %v1589 = vadd.f32 %v1396, %v1588
      %v1590 = vpop.f32.mrf.mxu0
      %v1591 = vadd.f32 %v1398, %v1590
      %v1592 = vpop.f32.mrf.mxu0
      %v1593 = vadd.f32 %v1400, %v1592
      %v1594 = vpop.f32.mrf.mxu0
      %v1595 = vadd.f32 %v1402, %v1594
      %1596 = vmatprep.mubr.bf16.mxu0 0
      %1597 = vmatmul.mubr.bf16.gmra.mxu0 %v1117
      %v1598 = vpop.f32.mrf.mxu0
      %v1599 = vadd.f32 %v1406, %v1598
      %v1600 = vpop.f32.mrf.mxu0
      %v1601 = vadd.f32 %v1408, %v1600
      %v1602 = vpop.f32.mrf.mxu0
      %v1603 = vadd.f32 %v1410, %v1602
      %v1604 = vpop.f32.mrf.mxu0
      %v1605 = vadd.f32 %v1412, %v1604
      %1606 = vmatprep.mubr.bf16.mxu0 0
      %1607 = vmatmul.mubr.bf16.gmra.mxu0 %v1120
      %v1608 = vpop.f32.mrf.mxu0
      %v1609 = vadd.f32 %v1416, %v1608
      %v1610 = vpop.f32.mrf.mxu0
      %v1611 = vadd.f32 %v1418, %v1610
      %v1612 = vpop.f32.mrf.mxu0
      %v1613 = vadd.f32 %v1420, %v1612
      %v1614 = vpop.f32.mrf.mxu0
      %v1615 = vadd.f32 %v1422, %v1614
      %1616 = vmatprep.mubr.bf16.mxu0 0
      %1617 = vmatmul.mubr.bf16.gmra.mxu0 %v1123
      %v1618 = vpop.f32.mrf.mxu0
      %v1619 = vadd.f32 %v1426, %v1618
      %v1620 = vpop.f32.mrf.mxu0
      %v1621 = vadd.f32 %v1428, %v1620
      %v1622 = vpop.f32.mrf.mxu0
      %v1623 = vadd.f32 %v1430, %v1622
      %v1624 = vpop.f32.mrf.mxu0
      %v1625 = vadd.f32 %v1432, %v1624
      %1626 = vmatprep.mubr.bf16.mxu0 0
      %1627 = vmatmul.mubr.bf16.gmra.mxu0 %v1126
      %v1628 = vpop.f32.mrf.mxu0
      %v1629 = vadd.f32 %v1436, %v1628
      %v1630 = vpop.f32.mrf.mxu0
      %v1631 = vadd.f32 %v1438, %v1630
      %v1632 = vpop.f32.mrf.mxu0
      %v1633 = vadd.f32 %v1440, %v1632
      %v1634 = vpop.f32.mrf.mxu0
      %v1635 = vadd.f32 %v1442, %v1634
      %1636 = vmatprep.mubr.bf16.mxu0 0
      %1637 = vmatmul.mubr.bf16.gmra.mxu0 %v1129
      %v1638 = vpop.f32.mrf.mxu0
      %v1639 = vadd.f32 %v1446, %v1638
      %v1640 = vpop.f32.mrf.mxu0
      %v1641 = vadd.f32 %v1448, %v1640
      %v1642 = vpop.f32.mrf.mxu0
      %v1643 = vadd.f32 %v1450, %v1642
      %v1644 = vpop.f32.mrf.mxu0
      %v1645 = vadd.f32 %v1452, %v1644
      %1646 = vmatprep.mubr.bf16.mxu0 0
      %1647 = vmatmul.mubr.bf16.gmra.mxu0 %v1132
      %v1648 = vpop.f32.mrf.mxu0
      %v1649 = vadd.f32 %v1456, %v1648
      %v1650 = vpop.f32.mrf.mxu0
      %v1651 = vadd.f32 %v1458, %v1650
      %v1652 = vpop.f32.mrf.mxu0
      %v1653 = vadd.f32 %v1460, %v1652
      %v1654 = vpop.f32.mrf.mxu0
      %v1655 = vadd.f32 %v1462, %v1654
      %1656 = vmatprep.mubr.bf16.mxu0 0
      %1657 = vmatmul.mubr.bf16.gmra.mxu0 %v1135
      %v1658 = vpop.f32.mrf.mxu0
      %v1659 = vadd.f32 %v1466, %v1658
      %v1660 = vpop.f32.mrf.mxu0
      %v1661 = vadd.f32 %v1468, %v1660
      %v1662 = vpop.f32.mrf.mxu0
      %v1663 = vadd.f32 %v1470, %v1662
      %v1664 = vpop.f32.mrf.mxu0
      %v1665 = vadd.f32 %v1472, %v1664
      %1666 = vmatprep.mubr.bf16.mxu0 0
      %1667 = vmatmul.mubr.bf16.gmra.mxu0 %v1138
      %v1668 = vpop.f32.mrf.mxu0
      %v1669 = vadd.f32 %v1476, %v1668
      %v1670 = vpop.f32.mrf.mxu0
      %v1671 = vadd.f32 %v1478, %v1670
      %v1672 = vpop.f32.mrf.mxu0
      %v1673 = vadd.f32 %v1480, %v1672
      %v1674 = vpop.f32.mrf.mxu0
      %v1675 = vadd.f32 %v1482, %v1674
      %1676 = vmatprep.mubr.bf16.mxu0 0
      %1677 = vmatmul.mubr.bf16.gmra.mxu0 %v1141
      %v1678 = vpop.f32.mrf.mxu0
      %v1679 = vadd.f32 %v1486, %v1678
      %v1680 = vpop.f32.mrf.mxu0
      %v1681 = vadd.f32 %v1488, %v1680
      %v1682 = vpop.f32.mrf.mxu0
      %v1683 = vadd.f32 %v1490, %v1682
      %v1684 = vpop.f32.mrf.mxu0
      %v1685 = vadd.f32 %v1492, %v1684
      %1686 = vmatprep.mubr.bf16.mxu0 0
      %1687 = vmatmul.mubr.bf16.gmra.mxu0 %v1144
      %v1688 = vpop.f32.mrf.mxu0
      %v1689 = vadd.f32 %v1496, %v1688
      %v1690 = vpop.f32.mrf.mxu0
      %v1691 = vadd.f32 %v1498, %v1690
      %v1692 = vpop.f32.mrf.mxu0
      %v1693 = vadd.f32 %v1500, %v1692
      %v1694 = vpop.f32.mrf.mxu0
      %v1695 = vadd.f32 %v1502, %v1694
      %1696 = vmatprep.mubr.bf16.mxu0 0
      %1697 = vmatmul.mubr.bf16.gmra.mxu0 %v1147
      %v1698 = vpop.f32.mrf.mxu0
      %v1699 = vadd.f32 %v1506, %v1698
      %v1700 = vpop.f32.mrf.mxu0
      %v1701 = vadd.f32 %v1508, %v1700
      %v1702 = vpop.f32.mrf.mxu0
      %v1703 = vadd.f32 %v1510, %v1702
      %v1704 = vpop.f32.mrf.mxu0
      %v1705 = vadd.f32 %v1512, %v1704
      %1706 = vmatprep.mubr.bf16.mxu0 0
      %1707 = vmatmul.mubr.bf16.gmra.mxu0 %v1150
      %v1708 = vpop.f32.mrf.mxu0
      %v1709 = vadd.f32 %v1516, %v1708
      %v1710 = vpop.f32.mrf.mxu0
      %v1711 = vadd.f32 %v1518, %v1710
      %v1712 = vpop.f32.mrf.mxu0
      %v1713 = vadd.f32 %v1520, %v1712
      %v1714 = vpop.f32.mrf.mxu0
      %v1715 = vadd.f32 %v1522, %v1714
      %1716 = vmatprep.mubr.bf16.mxu0 0
      %1717 = vmatmul.mubr.bf16.gmra.mxu0 %v1153
      %v1718 = vpop.f32.mrf.mxu0
      %v1719 = vadd.f32 %v1526, %v1718
      %v1720 = vpop.f32.mrf.mxu0
      %v1721 = vadd.f32 %v1528, %v1720
      %v1722 = vpop.f32.mrf.mxu0
      %v1723 = vadd.f32 %v1530, %v1722
      %v1724 = vpop.f32.mrf.mxu0
      %v1725 = vadd.f32 %v1532, %v1724
      %1726 = vmatprep.mubr.bf16.mxu0 0
      %1727 = vmatmul.mubr.bf16.gmra.mxu0 %v1156
      %v1728 = vpop.f32.mrf.mxu0
      %v1729 = vadd.f32 %v1536, %v1728
      %v1730 = vpop.f32.mrf.mxu0
      %v1731 = vadd.f32 %v1538, %v1730
      %v1732 = vpop.f32.mrf.mxu0
      %v1733 = vadd.f32 %v1540, %v1732
      %v1734 = vpop.f32.mrf.mxu0
      %v1735 = vadd.f32 %v1542, %v1734
      %1736 = vdwg.mxu0
      %s1737 = sld [smem:[#allocation2]]
      %vm1738 = vcmp.ge.f32.partialorder %v1579, 0.0
      %vm1739 = vcmp.ge.f32.partialorder %v1581, 0.0
      %vm1740 = vcmp.ge.f32.partialorder %v1583, 0.0
      %vm1741 = vcmp.ge.f32.partialorder %v1585, 0.0
      %vm1742 = vcmp.ge.f32.partialorder %v1589, 0.0
      %vm1743 = vcmp.ge.f32.partialorder %v1591, 0.0
      %vm1744 = vcmp.ge.f32.partialorder %v1593, 0.0
      %vm1745 = vcmp.ge.f32.partialorder %v1595, 0.0
      %vm1746 = vcmp.ge.f32.partialorder %v1599, 0.0
      %vm1747 = vcmp.ge.f32.partialorder %v1601, 0.0
      %vm1748 = vcmp.ge.f32.partialorder %v1603, 0.0
      %vm1749 = vcmp.ge.f32.partialorder %v1605, 0.0
      %vm1750 = vcmp.ge.f32.partialorder %v1609, 0.0
      %vm1751 = vcmp.ge.f32.partialorder %v1611, 0.0
      %vm1752 = vcmp.ge.f32.partialorder %v1613, 0.0
      %vm1753 = vcmp.ge.f32.partialorder %v1615, 0.0
      %vm1754 = vcmp.ge.f32.partialorder %v1619, 0.0
      %vm1755 = vcmp.ge.f32.partialorder %v1621, 0.0
      %vm1756 = vcmp.ge.f32.partialorder %v1623, 0.0
      %vm1757 = vcmp.ge.f32.partialorder %v1625, 0.0
      %vm1758 = vcmp.ge.f32.partialorder %v1629, 0.0
      %vm1759 = vcmp.ge.f32.partialorder %v1631, 0.0
      %vm1760 = vcmp.ge.f32.partialorder %v1633, 0.0
      %vm1761 = vcmp.ge.f32.partialorder %v1635, 0.0
      %vm1762 = vcmp.ge.f32.partialorder %v1639, 0.0
      %vm1763 = vcmp.ge.f32.partialorder %v1641, 0.0
      %vm1764 = vcmp.ge.f32.partialorder %v1643, 0.0
      %vm1765 = vcmp.ge.f32.partialorder %v1645, 0.0
      %vm1766 = vcmp.ge.f32.partialorder %v1649, 0.0
      %vm1767 = vcmp.ge.f32.partialorder %v1651, 0.0
      %vm1768 = vcmp.ge.f32.partialorder %v1653, 0.0
      %vm1769 = vcmp.ge.f32.partialorder %v1655, 0.0
      %vm1770 = vcmp.ge.f32.partialorder %v1659, 0.0
      %vm1771 = vcmp.ge.f32.partialorder %v1661, 0.0
      %vm1772 = vcmp.ge.f32.partialorder %v1663, 0.0
      %vm1773 = vcmp.ge.f32.partialorder %v1665, 0.0
      %vm1774 = vcmp.ge.f32.partialorder %v1669, 0.0
      %vm1775 = vcmp.ge.f32.partialorder %v1671, 0.0
      %vm1776 = vcmp.ge.f32.partialorder %v1673, 0.0
      %vm1777 = vcmp.ge.f32.partialorder %v1675, 0.0
      %vm1778 = vcmp.ge.f32.partialorder %v1679, 0.0
      %vm1779 = vcmp.ge.f32.partialorder %v1681, 0.0
      %vm1780 = vcmp.ge.f32.partialorder %v1683, 0.0
      %vm1781 = vcmp.ge.f32.partialorder %v1685, 0.0
      %vm1782 = vcmp.ge.f32.partialorder %v1689, 0.0
      %vm1783 = vcmp.ge.f32.partialorder %v1691, 0.0
      %vm1784 = vcmp.ge.f32.partialorder %v1693, 0.0
      %vm1785 = vcmp.ge.f32.partialorder %v1695, 0.0
      %vm1786 = vcmp.ge.f32.partialorder %v1699, 0.0
      %vm1787 = vcmp.ge.f32.partialorder %v1701, 0.0
      %vm1788 = vcmp.ge.f32.partialorder %v1703, 0.0
      %vm1789 = vcmp.ge.f32.partialorder %v1705, 0.0
      %vm1790 = vcmp.ge.f32.partialorder %v1709, 0.0
      %vm1791 = vcmp.ge.f32.partialorder %v1711, 0.0
      %vm1792 = vcmp.ge.f32.partialorder %v1713, 0.0
      %vm1793 = vcmp.ge.f32.partialorder %v1715, 0.0
      %vm1794 = vcmp.ge.f32.partialorder %v1719, 0.0
      %vm1795 = vcmp.ge.f32.partialorder %v1721, 0.0
      %vm1796 = vcmp.ge.f32.partialorder %v1723, 0.0
      %vm1797 = vcmp.ge.f32.partialorder %v1725, 0.0
      %vm1798 = vcmp.ge.f32.partialorder %v1729, 0.0
      %vm1799 = vcmp.ge.f32.partialorder %v1731, 0.0
      %vm1800 = vcmp.ge.f32.partialorder %v1733, 0.0
      %vm1801 = vcmp.ge.f32.partialorder %v1735, 0.0
      %v1802 = vstv %s1737
      %v1803 = vmul.f32 %v1802, %v1579
      %v1804 = vmul.f32 %v1802, %v1581
      %v1805 = vmul.f32 %v1802, %v1583
      %v1806 = vmul.f32 %v1802, %v1585
      %v1807 = vmul.f32 %v1802, %v1589
      %v1808 = vmul.f32 %v1802, %v1591
      %v1809 = vmul.f32 %v1802, %v1593
      %v1810 = vmul.f32 %v1802, %v1595
      %v1811 = vmul.f32 %v1802, %v1599
      %v1812 = vmul.f32 %v1802, %v1601
      %v1813 = vmul.f32 %v1802, %v1603
      %v1814 = vmul.f32 %v1802, %v1605
      %v1815 = vmul.f32 %v1802, %v1609
      %v1816 = vmul.f32 %v1802, %v1611
      %v1817 = vmul.f32 %v1802, %v1613
      %v1818 = vmul.f32 %v1802, %v1615
      %v1819 = vmul.f32 %v1802, %v1619
      %v1820 = vmul.f32 %v1802, %v1621
      %v1821 = vmul.f32 %v1802, %v1623
      %v1822 = vmul.f32 %v1802, %v1625
      %v1823 = vmul.f32 %v1802, %v1629
      %v1824 = vmul.f32 %v1802, %v1631
      %v1825 = vmul.f32 %v1802, %v1633
      %v1826 = vmul.f32 %v1802, %v1635
      %v1827 = vmul.f32 %v1802, %v1639
      %v1828 = vmul.f32 %v1802, %v1641
      %v1829 = vmul.f32 %v1802, %v1643
      %v1830 = vmul.f32 %v1802, %v1645
      %v1831 = vmul.f32 %v1802, %v1649
      %v1832 = vmul.f32 %v1802, %v1651
      %v1833 = vmul.f32 %v1802, %v1653
      %v1834 = vmul.f32 %v1802, %v1655
      %v1835 = vmul.f32 %v1802, %v1659
      %v1836 = vmul.f32 %v1802, %v1661
      %v1837 = vmul.f32 %v1802, %v1663
      %v1838 = vmul.f32 %v1802, %v1665
      %v1839 = vmul.f32 %v1802, %v1669
      %v1840 = vmul.f32 %v1802, %v1671
      %v1841 = vmul.f32 %v1802, %v1673
      %v1842 = vmul.f32 %v1802, %v1675
      %v1843 = vmul.f32 %v1802, %v1679
      %v1844 = vmul.f32 %v1802, %v1681
      %v1845 = vmul.f32 %v1802, %v1683
      %v1846 = vmul.f32 %v1802, %v1685
      %v1847 = vmul.f32 %v1802, %v1689
      %v1848 = vmul.f32 %v1802, %v1691
      %v1849 = vmul.f32 %v1802, %v1693
      %v1850 = vmul.f32 %v1802, %v1695
      %v1851 = vmul.f32 %v1802, %v1699
      %v1852 = vmul.f32 %v1802, %v1701
      %v1853 = vmul.f32 %v1802, %v1703
      %v1854 = vmul.f32 %v1802, %v1705
      %v1855 = vmul.f32 %v1802, %v1709
      %v1856 = vmul.f32 %v1802, %v1711
      %v1857 = vmul.f32 %v1802, %v1713
      %v1858 = vmul.f32 %v1802, %v1715
      %v1859 = vmul.f32 %v1802, %v1719
      %v1860 = vmul.f32 %v1802, %v1721
      %v1861 = vmul.f32 %v1802, %v1723
      %v1862 = vmul.f32 %v1802, %v1725
      %v1863 = vmul.f32 %v1802, %v1729
      %v1864 = vmul.f32 %v1802, %v1731
      %v1865 = vmul.f32 %v1802, %v1733
      %v1866 = vmul.f32 %v1802, %v1735
      %v1867 = vsel %vm1738, %v1579, %v1803
      %v1868 = vsel %vm1739, %v1581, %v1804
      %v1869 = vsel %vm1740, %v1583, %v1805
      %v1870 = vsel %vm1741, %v1585, %v1806
      %v1871 = vsel %vm1742, %v1589, %v1807
      %v1872 = vsel %vm1743, %v1591, %v1808
      %v1873 = vsel %vm1744, %v1593, %v1809
      %v1874 = vsel %vm1745, %v1595, %v1810
      %v1875 = vsel %vm1746, %v1599, %v1811
      %v1876 = vsel %vm1747, %v1601, %v1812
      %v1877 = vsel %vm1748, %v1603, %v1813
      %v1878 = vsel %vm1749, %v1605, %v1814
      %v1879 = vsel %vm1750, %v1609, %v1815
      %v1880 = vsel %vm1751, %v1611, %v1816
      %v1881 = vsel %vm1752, %v1613, %v1817
      %v1882 = vsel %vm1753, %v1615, %v1818
      %v1883 = vsel %vm1754, %v1619, %v1819
      %v1884 = vsel %vm1755, %v1621, %v1820
      %v1885 = vsel %vm1756, %v1623, %v1821
      %v1886 = vsel %vm1757, %v1625, %v1822
      %v1887 = vsel %vm1758, %v1629, %v1823
      %v1888 = vsel %vm1759, %v1631, %v1824
      %v1889 = vsel %vm1760, %v1633, %v1825
      %v1890 = vsel %vm1761, %v1635, %v1826
      %v1891 = vsel %vm1762, %v1639, %v1827
      %v1892 = vsel %vm1763, %v1641, %v1828
      %v1893 = vsel %vm1764, %v1643, %v1829
      %v1894 = vsel %vm1765, %v1645, %v1830
      %v1895 = vsel %vm1766, %v1649, %v1831
      %v1896 = vsel %vm1767, %v1651, %v1832
      %v1897 = vsel %vm1768, %v1653, %v1833
      %v1898 = vsel %vm1769, %v1655, %v1834
      %v1899 = vsel %vm1770, %v1659, %v1835
      %v1900 = vsel %vm1771, %v1661, %v1836
      %v1901 = vsel %vm1772, %v1663, %v1837
      %v1902 = vsel %vm1773, %v1665, %v1838
      %v1903 = vsel %vm1774, %v1669, %v1839
      %v1904 = vsel %vm1775, %v1671, %v1840
      %v1905 = vsel %vm1776, %v1673, %v1841
      %v1906 = vsel %vm1777, %v1675, %v1842
      %v1907 = vsel %vm1778, %v1679, %v1843
      %v1908 = vsel %vm1779, %v1681, %v1844
      %v1909 = vsel %vm1780, %v1683, %v1845
      %v1910 = vsel %vm1781, %v1685, %v1846
      %v1911 = vsel %vm1782, %v1689, %v1847
      %v1912 = vsel %vm1783, %v1691, %v1848
      %v1913 = vsel %vm1784, %v1693, %v1849
      %v1914 = vsel %vm1785, %v1695, %v1850
      %v1915 = vsel %vm1786, %v1699, %v1851
      %v1916 = vsel %vm1787, %v1701, %v1852
      %v1917 = vsel %vm1788, %v1703, %v1853
      %v1918 = vsel %vm1789, %v1705, %v1854
      %v1919 = vsel %vm1790, %v1709, %v1855
      %v1920 = vsel %vm1791, %v1711, %v1856
      %v1921 = vsel %vm1792, %v1713, %v1857
      %v1922 = vsel %vm1793, %v1715, %v1858
      %v1923 = vsel %vm1794, %v1719, %v1859
      %v1924 = vsel %vm1795, %v1721, %v1860
      %v1925 = vsel %vm1796, %v1723, %v1861
      %v1926 = vsel %vm1797, %v1725, %v1862
      %v1927 = vsel %vm1798, %v1729, %v1863
      %v1928 = vsel %vm1799, %v1731, %v1864
      %v1929 = vsel %vm1800, %v1733, %v1865
      %v1930 = vsel %vm1801, %v1735, %v1866
      %1931 = vst [vmem:[%s178] sm:$0xff] %v1867
      %1932 = vst [vmem:[%s178 + $0x8] sm:$0xff] %v1868
      %1933 = vst [vmem:[%s178 + $0x10] sm:$0xff] %v1869
      %1934 = vst [vmem:[%s178 + $0x18] sm:$0xff] %v1870
      %1935 = vst [vmem:[%s178 + $0x20] sm:$0xff] %v1871
      %1936 = vst [vmem:[%s178 + $0x28] sm:$0xff] %v1872
      %1937 = vst [vmem:[%s178 + $0x30] sm:$0xff] %v1873
      %1938 = vst [vmem:[%s178 + $0x38] sm:$0xff] %v1874
      %1939 = vst [vmem:[%s178 + $0x40] sm:$0xff] %v1875
      %1940 = vst [vmem:[%s178 + $0x48] sm:$0xff] %v1876
      %1941 = vst [vmem:[%s178 + $0x50] sm:$0xff] %v1877
      %1942 = vst [vmem:[%s178 + $0x58] sm:$0xff] %v1878
      %1943 = vst [vmem:[%s178 + $0x60] sm:$0xff] %v1879
      %1944 = vst [vmem:[%s178 + $0x68] sm:$0xff] %v1880
      %1945 = vst [vmem:[%s178 + $0x70] sm:$0xff] %v1881
      %1946 = vst [vmem:[%s178 + $0x78] sm:$0xff] %v1882
      %1947 = vst [vmem:[%s178 + $0x80] sm:$0xff] %v1883
      %1948 = vst [vmem:[%s178 + $0x88] sm:$0xff] %v1884
      %1949 = vst [vmem:[%s178 + $0x90] sm:$0xff] %v1885
      %1950 = vst [vmem:[%s178 + $0x98] sm:$0xff] %v1886
      %1951 = vst [vmem:[%s178 + $0xa0] sm:$0xff] %v1887
      %1952 = vst [vmem:[%s178 + $0xa8] sm:$0xff] %v1888
      %1953 = vst [vmem:[%s178 + $0xb0] sm:$0xff] %v1889
      %1954 = vst [vmem:[%s178 + $0xb8] sm:$0xff] %v1890
      %1955 = vst [vmem:[%s178 + $0xc0] sm:$0xff] %v1891
      %1956 = vst [vmem:[%s178 + $0xc8] sm:$0xff] %v1892
      %1957 = vst [vmem:[%s178 + $0xd0] sm:$0xff] %v1893
      %1958 = vst [vmem:[%s178 + $0xd8] sm:$0xff] %v1894
      %1959 = vst [vmem:[%s178 + $0xe0] sm:$0xff] %v1895
      %1960 = vst [vmem:[%s178 + $0xe8] sm:$0xff] %v1896
      %1961 = vst [vmem:[%s178 + $0xf0] sm:$0xff] %v1897
      %1962 = vst [vmem:[%s178 + $0xf8] sm:$0xff] %v1898
      %1963 = vst [vmem:[%s178 + $0x100] sm:$0xff] %v1899
      %1964 = vst [vmem:[%s178 + $0x108] sm:$0xff] %v1900
      %1965 = vst [vmem:[%s178 + $0x110] sm:$0xff] %v1901
      %1966 = vst [vmem:[%s178 + $0x118] sm:$0xff] %v1902
      %1967 = vst [vmem:[%s178 + $0x120] sm:$0xff] %v1903
      %1968 = vst [vmem:[%s178 + $0x128] sm:$0xff] %v1904
      %1969 = vst [vmem:[%s178 + $0x130] sm:$0xff] %v1905
      %1970 = vst [vmem:[%s178 + $0x138] sm:$0xff] %v1906
      %1971 = vst [vmem:[%s178 + $0x140] sm:$0xff] %v1907
      %1972 = vst [vmem:[%s178 + $0x148] sm:$0xff] %v1908
      %1973 = vst [vmem:[%s178 + $0x150] sm:$0xff] %v1909
      %1974 = vst [vmem:[%s178 + $0x158] sm:$0xff] %v1910
      %1975 = vst [vmem:[%s178 + $0x160] sm:$0xff] %v1911
      %1976 = vst [vmem:[%s178 + $0x168] sm:$0xff] %v1912
      %1977 = vst [vmem:[%s178 + $0x170] sm:$0xff] %v1913
      %1978 = vst [vmem:[%s178 + $0x178] sm:$0xff] %v1914
      %1979 = vst [vmem:[%s178 + $0x180] sm:$0xff] %v1915
      %1980 = vst [vmem:[%s178 + $0x188] sm:$0xff] %v1916
      %1981 = vst [vmem:[%s178 + $0x190] sm:$0xff] %v1917
      %1982 = vst [vmem:[%s178 + $0x198] sm:$0xff] %v1918
      %1983 = vst [vmem:[%s178 + $0x1a0] sm:$0xff] %v1919
      %1984 = vst [vmem:[%s178 + $0x1a8] sm:$0xff] %v1920
      %1985 = vst [vmem:[%s178 + $0x1b0] sm:$0xff] %v1921
      %1986 = vst [vmem:[%s178 + $0x1b8] sm:$0xff] %v1922
      %1987 = vst [vmem:[%s178 + $0x1c0] sm:$0xff] %v1923
      %1988 = vst [vmem:[%s178 + $0x1c8] sm:$0xff] %v1924
      %1989 = vst [vmem:[%s178 + $0x1d0] sm:$0xff] %v1925
      %1990 = vst [vmem:[%s178 + $0x1d8] sm:$0xff] %v1926
      %1991 = vst [vmem:[%s178 + $0x1e0] sm:$0xff] %v1927
      %1992 = vst [vmem:[%s178 + $0x1e8] sm:$0xff] %v1928
      %1993 = vst [vmem:[%s178 + $0x1f0] sm:$0xff] %v1929
      %1994 = vst [vmem:[%s178 + $0x1f8] sm:$0xff] %v1930
      %s1995 = smul.u32 32, %s15
      %p1996 = scmp.lt.s32.totalorder %s1995, 63
      %s1997 = scalar_select %p1996, %s1995, 63
      %s1998 = smul.addr %s1997, 2
      %s1999 = smul.addr %s1998, 8
      %s2000 = scalar_lea.vmem %s3, %s1999
      // Predicated region
      $region33: #{netg_forward.20} parent=31 // pred_check
        %p2001 = pneg %p101
      $region34: #{netg_forward.20} parent=31 // pred_check_branch
        %2003 = sbr.rel (%p2001) target = $region36
      $region35: #{netg_forward.20} parent=31 // pred_region
        %s2004 = smul.u32 32, %s15
      $region36: #{netg_forward.20} parent=31 // pred_fallthru
        _
    $region32: #{netg_forward.20} parent=5 // pred_fallthru
      _
    %p2005 = scmp.le.s32.totalorder 2, %s10
    // Predicated region
    $region37: #{netg_forward.20} parent=5 // pred_check
      %p2006 = pneg %p2005
    $region38: #{netg_forward.20} parent=5 // pred_check_branch
      %2008 = sbr.rel (%p2006) target = $region40
    $region39: #{netg_forward.20} parent=5 // pred_region
      %s2009 = ssub.s32 %s10, 2
      // Predicated region
      $region41: #{netg_forward.20} parent=39 // pred_check
        %p2010 = pneg %p107
      $region42: #{netg_forward.20} parent=39 // pred_check_branch
        %2012 = sbr.rel (%p2010) target = $region44
      $region43: #{netg_forward.20} parent=39 // pred_region
        %s2013 = smul.u32 32, %s16
        %p2014 = scmp.lt.s32.totalorder %s2013, 63
        %s2015 = scalar_select %p2014, %s2013, 63
        %s2016 = smul.addr %s2015, 2
        %s2017 = smul.addr %s2016, 8
        %s2018 = scalar_lea.vmem %s3, %s2017
      $region44: #{netg_forward.20} parent=39 // pred_fallthru
        _
    $region40: #{netg_forward.20} parent=5 // pred_fallthru
      _
  $region6: #{netg_forward.20} parent=0 // loop_footer
    %s14 = sadd.s32 1, %s10
  $region7: #{netg_forward.20} parent=0 // loop_footer_branch
    %9 = sbr.rel target = $region3
  $region8: #{netg_forward.20} parent=0 // loop_exit
    _

// kernel: netg_forward.21
$region0: #{netg_forward.21}
  #allocation0 [shape = 'u32[]', space=smem, size = 0x4, offset = 0x4, fixed_abs, tag = 'smem constant byte address 0x4 - core index']
  #allocation1 [shape = 'u32[144,128]{1,0:T(1,128)}', space=vmem, size = 0x12000, scoped, tag = 'internal scratch']
  #allocation2 [shape = 'f32[1]{0:T(128)S(6)}', space=smem, size = 0x200, scoped, tag = 'scoped memory for netg_forward.21']
  %s0 = inlined_call_operand.<no memory space> [shape: f32[1], index: 0, kind: input, shape index: {}]
  %s1 = inlined_call_operand.vmem [shape: bf16[2048,576], index: 1, kind: input, shape index: {}]
  %s2 = inlined_call_operand.vmem [shape: bf16[576,128], index: 2, kind: input, shape index: {}]
  %s3 = inlined_call_operand.vmem [shape: f32[2048,128], index: 3, kind: output, shape index: {}]
  %s4 = sld [smem:[#allocation0]]
  $region45: #{netg_forward.21} parent=0
    _
  %s6 = ssub.s32 1, %s4
  %s7 = scalar_select 0, %s6, %s4
  %8 = sst [smem:[#allocation2]] %s0
  loop: start=0, step=1, limit=4
  $region2: #{netg_forward.21} parent=0 // loop_pre_header
    _
  $region3: #{netg_forward.21} parent=0 // loop_header
    %s10 = sphi 0, %s14
    %p11 = scmp.ge.s32.totalorder %s10, 4
    %s18 = sphi 0, %s18
    %s20 = sphi 0, %s18
    %s21 = sphi 0, %s20
    %s35 = sphi 0, %s21
    %s41 = sphi 0, %s43
    %s44 = sphi 0, %s41
    %s45 = sphi 0, %s44
    %s61 = sphi 0, %s45
    %s65 = sphi 0, %s65
    %s67 = sphi 0, %s65
    %s68 = sphi 0, %s67
    %s82 = sphi 0, %s68
    %s88 = sphi 0, %s90
    %s91 = sphi 0, %s88
    %s92 = sphi 0, %s91
    %s108 = sphi 0, %s92
  $region4: #{netg_forward.21} parent=0 // loop_header_branch
    %13 = sbr.rel (%p11) target = $region8
  $region5: #{netg_forward.21} parent=0 // loop_body
    %s15 = ssub.s32 %s10, 1
    %s16 = ssub.s32 %s10, 2
    %s17 = sadd.s32 %s10, 1
    %s19 = sadd.s32 %s18, 1
    %p22 = scmp.eq.s32.totalorder %s10, 1
    %p23 = scmp.ne.s32.totalorder %s18, %s20
    %p24 = scmp.eq.s32.totalorder %s10, 0
    %p25 = por %p23, %p24
    %p26 = scmp.ne.s32.totalorder %s18, %s20
    %p27 = scmp.eq.s32.totalorder %s15, 1
    %p28 = por %p26, %p27
    %p29 = scmp.ne.s32.totalorder %s20, %s21
    %p30 = scmp.eq.s32.totalorder %s15, 0
    %p31 = por %p29, %p30
    %p32 = scmp.ne.s32.totalorder %s20, %s21
    %p33 = scmp.eq.s32.totalorder %s16, 1
    %p34 = por %p32, %p33
    %p36 = scmp.ne.s32.totalorder %s21, %s35
    %p37 = scmp.eq.s32.totalorder %s16, 0
    %p38 = por %p36, %p37
    %s39 = ssub.s32 %s10, %s17
    %p40 = scmp.eq.s32.totalorder %s39, 0
    %s42 = sadd.s32 %s41, 1
    %s43 = scalar_select %p40, %s41, %s42
    %p46 = pneg %p40
    %p47 = scmp.eq.s32.totalorder %s10, 1
    %p48 = por %p46, %p47
    %p49 = scmp.ne.s32.totalorder %s41, %s44
    %p50 = scmp.eq.s32.totalorder %s10, 0
    %p51 = por %p49, %p50
    %p52 = scmp.ne.s32.totalorder %s41, %s44
    %p53 = scmp.eq.s32.totalorder %s15, 1
    %p54 = por %p52, %p53
    %p55 = scmp.ne.s32.totalorder %s44, %s45
    %p56 = scmp.eq.s32.totalorder %s15, 0
    %p57 = por %p55, %p56
    %p58 = scmp.ne.s32.totalorder %s44, %s45
    %p59 = scmp.eq.s32.totalorder %s16, 1
    %p60 = por %p58, %p59
    %p62 = scmp.ne.s32.totalorder %s45, %s61
    %p63 = scmp.eq.s32.totalorder %s16, 0
    %p64 = por %p62, %p63
    %s66 = sadd.s32 %s65, 1
    %p69 = scmp.eq.s32.totalorder %s10, 1
    %p70 = scmp.ne.s32.totalorder %s65, %s67
    %p71 = scmp.eq.s32.totalorder %s10, 0
    %p72 = por %p70, %p71
    %p73 = scmp.ne.s32.totalorder %s65, %s67
    %p74 = scmp.eq.s32.totalorder %s15, 1
    %p75 = por %p73, %p74
    %p76 = scmp.ne.s32.totalorder %s67, %s68
    %p77 = scmp.eq.s32.totalorder %s15, 0
    %p78 = por %p76, %p77
    %p79 = scmp.ne.s32.totalorder %s67, %s68
    %p80 = scmp.eq.s32.totalorder %s16, 1
    %p81 = por %p79, %p80
    %p83 = scmp.ne.s32.totalorder %s68, %s82
    %p84 = scmp.eq.s32.totalorder %s16, 0
    %p85 = por %p83, %p84
    %s86 = ssub.s32 %s10, %s17
    %p87 = scmp.eq.s32.totalorder %s86, 0
    %s89 = sadd.s32 %s88, 1
    %s90 = scalar_select %p87, %s88, %s89
    %p93 = pneg %p87
    %p94 = scmp.eq.s32.totalorder %s10, 1
    %p95 = por %p93, %p94
    %p96 = scmp.ne.s32.totalorder %s88, %s91
    %p97 = scmp.eq.s32.totalorder %s10, 0
    %p98 = por %p96, %p97
    %p99 = scmp.ne.s32.totalorder %s88, %s91
    %p100 = scmp.eq.s32.totalorder %s15, 1
    %p101 = por %p99, %p100
    %p102 = scmp.ne.s32.totalorder %s91, %s92
    %p103 = scmp.eq.s32.totalorder %s15, 0
    %p104 = por %p102, %p103
    %p105 = scmp.ne.s32.totalorder %s91, %s92
    %p106 = scmp.eq.s32.totalorder %s16, 1
    %p107 = por %p105, %p106
    %p109 = scmp.ne.s32.totalorder %s92, %s108
    %p110 = scmp.eq.s32.totalorder %s16, 0
    %p111 = por %p109, %p110
    %p112 = scmp.le.s32.totalorder 1, %s10
    %p113 = scmp.lt.s32.totalorder %s10, 3
    %p114 = pnand %p112, %p113
    %p115 = pneg %p114
    // Predicated region
    $region9: #{netg_forward.21} parent=5 // pred_check
      _
    $region10: #{netg_forward.21} parent=5 // pred_check_branch
      %117 = sbr.rel (%p114) target = $region12
    $region11: #{netg_forward.21} parent=5 // pred_region
      %s118 = ssub.s32 %s10, 1
      // Predicated region
      $region13: #{netg_forward.21} parent=11 // pred_check
        %p119 = pneg %p31
      $region14: #{netg_forward.21} parent=11 // pred_check_branch
        %121 = sbr.rel (%p119) target = $region16
      $region15: #{netg_forward.21} parent=11 // pred_region
        _
      $region16: #{netg_forward.21} parent=11 // pred_fallthru
        _
      // Predicated region
      $region17: #{netg_forward.21} parent=11 // pred_check
        %p122 = pneg %p78
      $region18: #{netg_forward.21} parent=11 // pred_check_branch
        %124 = sbr.rel (%p122) target = $region20
      $region19: #{netg_forward.21} parent=11 // pred_region
        _
      $region20: #{netg_forward.21} parent=11 // pred_fallthru
        _
    $region12: #{netg_forward.21} parent=5 // pred_fallthru
      _
    %p125 = scmp.lt.s32.totalorder %s10, 2
    // Predicated region
    $region21: #{netg_forward.21} parent=5 // pred_check
      %p126 = pneg %p125
    $region22: #{netg_forward.21} parent=5 // pred_check_branch
      %128 = sbr.rel (%p126) target = $region24
    $region23: #{netg_forward.21} parent=5 // pred_region
      // Predicated region
      $region25: #{netg_forward.21} parent=23 // pred_check
        %p129 = pneg %p51
      $region26: #{netg_forward.21} parent=23 // pred_check_branch
        %131 = sbr.rel (%p129) target = $region28
      $region27: #{netg_forward.21} parent=23 // pred_region
        %s132 = smul.u32 128, %s10
        %p133 = scmp.lt.s32.totalorder %s132, 255
        %s134 = scalar_select %p133, %s132, 255
        %s135 = smul.addr %s134, 5
        %s136 = smul.addr %s135, 4
        %s137 = scalar_lea.vmem %s1, %s136
        %s138 = smul.u32 128, %s10
      $region28: #{netg_forward.21} parent=23 // pred_fallthru
        _
    $region24: #{netg_forward.21} parent=5 // pred_fallthru
      _
    %p139 = scmp.le.s32.totalorder 1, %s10
    %p140 = scmp.lt.s32.totalorder %s10, 3
    %p141 = pnand %p139, %p140
    %p142 = pneg %p141
    // Predicated region
    $region29: #{netg_forward.21} parent=5 // pred_check
      _
    $region30: #{netg_forward.21} parent=5 // pred_check_branch
      %144 = sbr.rel (%p141) target = $region32
    $region31: #{netg_forward.21} parent=5 // pred_region
      %s145 = ssub.s32 %s10, 1
      %p146 = pneg %p31
      %p147 = pneg %p28
      %s148 = smul.u32 128, %s15
      %p149 = scmp.lt.s32.totalorder %s148, 255
      %s150 = scalar_select %p149, %s148, 255
      %s151 = smul.addr %s150, 5
      %s152 = smul.addr %s151, 4
      %s153 = scalar_lea.vmem %s1, %s152
      %p154 = pneg %p57
      %p155 = pneg %p54
      %p156 = pneg %p78
      %p157 = pneg %p75
      %p158 = pneg %p104
      %p159 = pneg %p101
      %s160 = smul.u32 128, %s15
      %p161 = scmp.lt.s32.totalorder %s160, 255
      %s162 = scalar_select %p161, %s160, 255
      %s163 = smul.addr %s162, 8
      %s164 = scalar_lea.vmem %s3, %s163
      %s165 = smul.u32 128, %s15
      %p166 = scmp.lt.s32.totalorder %s165, 255
      %s167 = scalar_select %p166, %s165, 255
      %s168 = smul.addr %s167, 5
      %s169 = smul.addr %s168, 4
      %s170 = scalar_lea.vmem %s1, %s169
      %s171 = smul.u32 128, %s15
      %s172 = smul.u32 128, %s15
      %p173 = scmp.lt.s32.totalorder %s172, 255
      %s174 = scalar_select %p173, %s172, 255
      %s175 = smul.addr %s174, 8
      %s176 = scalar_lea.vmem %s3, %s175
      %s177 = smul.u32 128, %s15
      %v179 = vld [vmem:[%s170] sm:$0xff]
      %v180 = vld [vmem:[%s170 + $0x8] sm:$0xff]
      %v181 = vld [vmem:[%s170 + $0x10] sm:$0xf]
      %v182 = vld [vmem:[%s170 + $0x14] sm:$0xff]
      %v183 = vld [vmem:[%s170 + $0x1c] sm:$0xff]
      %v184 = vld [vmem:[%s170 + $0x24] sm:$0xf]
      %v185 = vld [vmem:[%s170 + $0x28] sm:$0xff]
      %v186 = vld [vmem:[%s170 + $0x30] sm:$0xff]
      %v187 = vld [vmem:[%s170 + $0x38] sm:$0xf]
      %v188 = vld [vmem:[%s170 + $0x3c] sm:$0xff]
      %v189 = vld [vmem:[%s170 + $0x44] sm:$0xff]
      %v190 = vld [vmem:[%s170 + $0x4c] sm:$0xf]
      %v191 = vld [vmem:[%s170 + $0x50] sm:$0xff]
      %v192 = vld [vmem:[%s170 + $0x58] sm:$0xff]
      %v193 = vld [vmem:[%s170 + $0x60] sm:$0xf]
      %v194 = vld [vmem:[%s170 + $0x64] sm:$0xff]
      %v195 = vld [vmem:[%s170 + $0x6c] sm:$0xff]
      %v196 = vld [vmem:[%s170 + $0x74] sm:$0xf]
      %v197 = vld [vmem:[%s170 + $0x78] sm:$0xff]
      %v198 = vld [vmem:[%s170 + $0x80] sm:$0xff]
      %v199 = vld [vmem:[%s170 + $0x88] sm:$0xf]
      %v200 = vld [vmem:[%s170 + $0x8c] sm:$0xff]
      %v201 = vld [vmem:[%s170 + $0x94] sm:$0xff]
      %v202 = vld [vmem:[%s170 + $0x9c] sm:$0xf]
      %v203 = vld [vmem:[%s170 + $0xa0] sm:$0xff]
      %v204 = vld [vmem:[%s170 + $0xa8] sm:$0xff]
      %v205 = vld [vmem:[%s170 + $0xb0] sm:$0xf]
      %v206 = vld [vmem:[%s170 + $0xb4] sm:$0xff]
      %v207 = vld [vmem:[%s170 + $0xbc] sm:$0xff]
      %v208 = vld [vmem:[%s170 + $0xc4] sm:$0xf]
      %v209 = vld [vmem:[%s170 + $0xc8] sm:$0xff]
      %v210 = vld [vmem:[%s170 + $0xd0] sm:$0xff]
      %v211 = vld [vmem:[%s170 + $0xd8] sm:$0xf]
      %v212 = vld [vmem:[%s170 + $0xdc] sm:$0xff]
      %v213 = vld [vmem:[%s170 + $0xe4] sm:$0xff]
      %v214 = vld [vmem:[%s170 + $0xec] sm:$0xf]
      %v215 = vld [vmem:[%s170 + $0xf0] sm:$0xff]
      %v216 = vld [vmem:[%s170 + $0xf8] sm:$0xff]
      %v217 = vld [vmem:[%s170 + $0x100] sm:$0xf]
      %v218 = vld [vmem:[%s170 + $0x104] sm:$0xff]
      %v219 = vld [vmem:[%s170 + $0x10c] sm:$0xff]
      %v220 = vld [vmem:[%s170 + $0x114] sm:$0xf]
      %v221 = vld [vmem:[%s170 + $0x118] sm:$0xff]
      %v222 = vld [vmem:[%s170 + $0x120] sm:$0xff]
      %v223 = vld [vmem:[%s170 + $0x128] sm:$0xf]
      %v224 = vld [vmem:[%s170 + $0x12c] sm:$0xff]
      %v225 = vld [vmem:[%s170 + $0x134] sm:$0xff]
      %v226 = vld [vmem:[%s170 + $0x13c] sm:$0xf]
      %v227 = vld [vmem:[%s170 + $0x140] sm:$0xff]
      %v228 = vld [vmem:[%s170 + $0x148] sm:$0xff]
      %v229 = vld [vmem:[%s170 + $0x150] sm:$0xf]
      %v230 = vld [vmem:[%s170 + $0x154] sm:$0xff]
      %v231 = vld [vmem:[%s170 + $0x15c] sm:$0xff]
      %v232 = vld [vmem:[%s170 + $0x164] sm:$0xf]
      %v233 = vld [vmem:[%s170 + $0x168] sm:$0xff]
      %v234 = vld [vmem:[%s170 + $0x170] sm:$0xff]
      %v235 = vld [vmem:[%s170 + $0x178] sm:$0xf]
      %v236 = vld [vmem:[%s170 + $0x17c] sm:$0xff]
      %v237 = vld [vmem:[%s170 + $0x184] sm:$0xff]
      %v238 = vld [vmem:[%s170 + $0x18c] sm:$0xf]
      %v239 = vld [vmem:[%s170 + $0x190] sm:$0xff]
      %v240 = vld [vmem:[%s170 + $0x198] sm:$0xff]
      %v241 = vld [vmem:[%s170 + $0x1a0] sm:$0xf]
      %v242 = vld [vmem:[%s170 + $0x1a4] sm:$0xff]
      %v243 = vld [vmem:[%s170 + $0x1ac] sm:$0xff]
      %v244 = vld [vmem:[%s170 + $0x1b4] sm:$0xf]
      %v245 = vld [vmem:[%s170 + $0x1b8] sm:$0xff]
      %v246 = vld [vmem:[%s170 + $0x1c0] sm:$0xff]
      %v247 = vld [vmem:[%s170 + $0x1c8] sm:$0xf]
      %v248 = vld [vmem:[%s170 + $0x1cc] sm:$0xff]
      %v249 = vld [vmem:[%s170 + $0x1d4] sm:$0xff]
      %v250 = vld [vmem:[%s170 + $0x1dc] sm:$0xf]
      %v251 = vld [vmem:[%s170 + $0x1e0] sm:$0xff]
      %v252 = vld [vmem:[%s170 + $0x1e8] sm:$0xff]
      %v253 = vld [vmem:[%s170 + $0x1f0] sm:$0xf]
      %v254 = vld [vmem:[%s170 + $0x1f4] sm:$0xff]
      %v255 = vld [vmem:[%s170 + $0x1fc] sm:$0xff]
      %v256 = vld [vmem:[%s170 + $0x204] sm:$0xf]
      %v257 = vld [vmem:[%s170 + $0x208] sm:$0xff]
      %v258 = vld [vmem:[%s170 + $0x210] sm:$0xff]
      %v259 = vld [vmem:[%s170 + $0x218] sm:$0xf]
      %v260 = vld [vmem:[%s170 + $0x21c] sm:$0xff]
      %v261 = vld [vmem:[%s170 + $0x224] sm:$0xff]
      %v262 = vld [vmem:[%s170 + $0x22c] sm:$0xf]
      %v263 = vld [vmem:[%s170 + $0x230] sm:$0xff]
      %v264 = vld [vmem:[%s170 + $0x238] sm:$0xff]
      %v265 = vld [vmem:[%s170 + $0x240] sm:$0xf]
      %v266 = vld [vmem:[%s170 + $0x244] sm:$0xff]
      %v267 = vld [vmem:[%s170 + $0x24c] sm:$0xff]
      %v268 = vld [vmem:[%s170 + $0x254] sm:$0xf]
      %v269 = vld [vmem:[%s170 + $0x258] sm:$0xff]
      %v270 = vld [vmem:[%s170 + $0x260] sm:$0xff]
      %v271 = vld [vmem:[%s170 + $0x268] sm:$0xf]
      %v272 = vld [vmem:[%s170 + $0x26c] sm:$0xff]
      %v273 = vld [vmem:[%s170 + $0x274] sm:$0xff]
      %v274 = vld [vmem:[%s170 + $0x27c] sm:$0xf]
      %v275 = vld [vmem:[%s170 + $0x280] sm:$0xff]
      %v276 = vld [vmem:[%s170 + $0x288] sm:$0xff]
      %v277 = vld [vmem:[%s170 + $0x290] sm:$0xf]
      %v278 = vld [vmem:[%s170 + $0x294] sm:$0xff]
      %v279 = vld [vmem:[%s170 + $0x29c] sm:$0xff]
      %v280 = vld [vmem:[%s170 + $0x2a4] sm:$0xf]
      %v281 = vld [vmem:[%s170 + $0x2a8] sm:$0xff]
      %v282 = vld [vmem:[%s170 + $0x2b0] sm:$0xff]
      %v283 = vld [vmem:[%s170 + $0x2b8] sm:$0xf]
      %v284 = vld [vmem:[%s170 + $0x2bc] sm:$0xff]
      %v285 = vld [vmem:[%s170 + $0x2c4] sm:$0xff]
      %v286 = vld [vmem:[%s170 + $0x2cc] sm:$0xf]
      %v287 = vld [vmem:[%s170 + $0x2d0] sm:$0xff]
      %v288 = vld [vmem:[%s170 + $0x2d8] sm:$0xff]
      %v289 = vld [vmem:[%s170 + $0x2e0] sm:$0xf]
      %v290 = vld [vmem:[%s170 + $0x2e4] sm:$0xff]
      %v291 = vld [vmem:[%s170 + $0x2ec] sm:$0xff]
      %v292 = vld [vmem:[%s170 + $0x2f4] sm:$0xf]
      %v293 = vld [vmem:[%s170 + $0x2f8] sm:$0xff]
      %v294 = vld [vmem:[%s170 + $0x300] sm:$0xff]
      %v295 = vld [vmem:[%s170 + $0x308] sm:$0xf]
      %v296 = vld [vmem:[%s170 + $0x30c] sm:$0xff]
      %v297 = vld [vmem:[%s170 + $0x314] sm:$0xff]
      %v298 = vld [vmem:[%s170 + $0x31c] sm:$0xf]
      %v299 = vld [vmem:[%s170 + $0x320] sm:$0xff]
      %v300 = vld [vmem:[%s170 + $0x328] sm:$0xff]
      %v301 = vld [vmem:[%s170 + $0x330] sm:$0xf]
      %v302 = vld [vmem:[%s170 + $0x334] sm:$0xff]
      %v303 = vld [vmem:[%s170 + $0x33c] sm:$0xff]
      %v304 = vld [vmem:[%s170 + $0x344] sm:$0xf]
      %v305 = vld [vmem:[%s170 + $0x348] sm:$0xff]
      %v306 = vld [vmem:[%s170 + $0x350] sm:$0xff]
      %v307 = vld [vmem:[%s170 + $0x358] sm:$0xf]
      %v308 = vld [vmem:[%s170 + $0x35c] sm:$0xff]
      %v309 = vld [vmem:[%s170 + $0x364] sm:$0xff]
      %v310 = vld [vmem:[%s170 + $0x36c] sm:$0xf]
      %v311 = vld [vmem:[%s170 + $0x370] sm:$0xff]
      %v312 = vld [vmem:[%s170 + $0x378] sm:$0xff]
      %v313 = vld [vmem:[%s170 + $0x380] sm:$0xf]
      %v314 = vld [vmem:[%s170 + $0x384] sm:$0xff]
      %v315 = vld [vmem:[%s170 + $0x38c] sm:$0xff]
      %v316 = vld [vmem:[%s170 + $0x394] sm:$0xf]
      %v317 = vld [vmem:[%s170 + $0x398] sm:$0xff]
      %v318 = vld [vmem:[%s170 + $0x3a0] sm:$0xff]
      %v319 = vld [vmem:[%s170 + $0x3a8] sm:$0xf]
      %v320 = vld [vmem:[%s170 + $0x3ac] sm:$0xff]
      %v321 = vld [vmem:[%s170 + $0x3b4] sm:$0xff]
      %v322 = vld [vmem:[%s170 + $0x3bc] sm:$0xf]
      %v323 = vld [vmem:[%s170 + $0x3c0] sm:$0xff]
      %v324 = vld [vmem:[%s170 + $0x3c8] sm:$0xff]
      %v325 = vld [vmem:[%s170 + $0x3d0] sm:$0xf]
      %v326 = vld [vmem:[%s170 + $0x3d4] sm:$0xff]
      %v327 = vld [vmem:[%s170 + $0x3dc] sm:$0xff]
      %v328 = vld [vmem:[%s170 + $0x3e4] sm:$0xf]
      %v329 = vld [vmem:[%s170 + $0x3e8] sm:$0xff]
      %v330 = vld [vmem:[%s170 + $0x3f0] sm:$0xff]
      %v331 = vld [vmem:[%s170 + $0x3f8] sm:$0xf]
      %v332 = vld [vmem:[%s170 + $0x3fc] sm:$0xff]
      %v333 = vld [vmem:[%s170 + $0x404] sm:$0xff]
      %v334 = vld [vmem:[%s170 + $0x40c] sm:$0xf]
      %v335 = vld [vmem:[%s170 + $0x410] sm:$0xff]
      %v336 = vld [vmem:[%s170 + $0x418] sm:$0xff]
      %v337 = vld [vmem:[%s170 + $0x420] sm:$0xf]
      %v338 = vld [vmem:[%s170 + $0x424] sm:$0xff]
      %v339 = vld [vmem:[%s170 + $0x42c] sm:$0xff]
      %v340 = vld [vmem:[%s170 + $0x434] sm:$0xf]
      %v341 = vld [vmem:[%s170 + $0x438] sm:$0xff]
      %v342 = vld [vmem:[%s170 + $0x440] sm:$0xff]
      %v343 = vld [vmem:[%s170 + $0x448] sm:$0xf]
      %v344 = vld [vmem:[%s170 + $0x44c] sm:$0xff]
      %v345 = vld [vmem:[%s170 + $0x454] sm:$0xff]
      %v346 = vld [vmem:[%s170 + $0x45c] sm:$0xf]
      %v347 = vld [vmem:[%s170 + $0x460] sm:$0xff]
      %v348 = vld [vmem:[%s170 + $0x468] sm:$0xff]
      %v349 = vld [vmem:[%s170 + $0x470] sm:$0xf]
      %v350 = vld [vmem:[%s170 + $0x474] sm:$0xff]
      %v351 = vld [vmem:[%s170 + $0x47c] sm:$0xff]
      %v352 = vld [vmem:[%s170 + $0x484] sm:$0xf]
      %v353 = vld [vmem:[%s170 + $0x488] sm:$0xff]
      %v354 = vld [vmem:[%s170 + $0x490] sm:$0xff]
      %v355 = vld [vmem:[%s170 + $0x498] sm:$0xf]
      %v356 = vld [vmem:[%s170 + $0x49c] sm:$0xff]
      %v357 = vld [vmem:[%s170 + $0x4a4] sm:$0xff]
      %v358 = vld [vmem:[%s170 + $0x4ac] sm:$0xf]
      %v359 = vld [vmem:[%s170 + $0x4b0] sm:$0xff]
      %v360 = vld [vmem:[%s170 + $0x4b8] sm:$0xff]
      %v361 = vld [vmem:[%s170 + $0x4c0] sm:$0xf]
      %v362 = vld [vmem:[%s170 + $0x4c4] sm:$0xff]
      %v363 = vld [vmem:[%s170 + $0x4cc] sm:$0xff]
      %v364 = vld [vmem:[%s170 + $0x4d4] sm:$0xf]
      %v365 = vld [vmem:[%s170 + $0x4d8] sm:$0xff]
      %v366 = vld [vmem:[%s170 + $0x4e0] sm:$0xff]
      %v367 = vld [vmem:[%s170 + $0x4e8] sm:$0xf]
      %v368 = vld [vmem:[%s170 + $0x4ec] sm:$0xff]
      %v369 = vld [vmem:[%s170 + $0x4f4] sm:$0xff]
      %v370 = vld [vmem:[%s170 + $0x4fc] sm:$0xf]
      %v371 = vld [vmem:[%s170 + $0x500] sm:$0xff]
      %v372 = vld [vmem:[%s170 + $0x508] sm:$0xff]
      %v373 = vld [vmem:[%s170 + $0x510] sm:$0xf]
      %v374 = vld [vmem:[%s170 + $0x514] sm:$0xff]
      %v375 = vld [vmem:[%s170 + $0x51c] sm:$0xff]
      %v376 = vld [vmem:[%s170 + $0x524] sm:$0xf]
      %v377 = vld [vmem:[%s170 + $0x528] sm:$0xff]
      %v378 = vld [vmem:[%s170 + $0x530] sm:$0xff]
      %v379 = vld [vmem:[%s170 + $0x538] sm:$0xf]
      %v380 = vld [vmem:[%s170 + $0x53c] sm:$0xff]
      %v381 = vld [vmem:[%s170 + $0x544] sm:$0xff]
      %v382 = vld [vmem:[%s170 + $0x54c] sm:$0xf]
      %v383 = vld [vmem:[%s170 + $0x550] sm:$0xff]
      %v384 = vld [vmem:[%s170 + $0x558] sm:$0xff]
      %v385 = vld [vmem:[%s170 + $0x560] sm:$0xf]
      %v386 = vld [vmem:[%s170 + $0x564] sm:$0xff]
      %v387 = vld [vmem:[%s170 + $0x56c] sm:$0xff]
      %v388 = vld [vmem:[%s170 + $0x574] sm:$0xf]
      %v389 = vld [vmem:[%s170 + $0x578] sm:$0xff]
      %v390 = vld [vmem:[%s170 + $0x580] sm:$0xff]
      %v391 = vld [vmem:[%s170 + $0x588] sm:$0xf]
      %v392 = vld [vmem:[%s170 + $0x58c] sm:$0xff]
      %v393 = vld [vmem:[%s170 + $0x594] sm:$0xff]
      %v394 = vld [vmem:[%s170 + $0x59c] sm:$0xf]
      %v395 = vld [vmem:[%s170 + $0x5a0] sm:$0xff]
      %v396 = vld [vmem:[%s170 + $0x5a8] sm:$0xff]
      %v397 = vld [vmem:[%s170 + $0x5b0] sm:$0xf]
      %v398 = vld [vmem:[%s170 + $0x5b4] sm:$0xff]
      %v399 = vld [vmem:[%s170 + $0x5bc] sm:$0xff]
      %v400 = vld [vmem:[%s170 + $0x5c4] sm:$0xf]
      %v401 = vld [vmem:[%s170 + $0x5c8] sm:$0xff]
      %v402 = vld [vmem:[%s170 + $0x5d0] sm:$0xff]
      %v403 = vld [vmem:[%s170 + $0x5d8] sm:$0xf]
      %v404 = vld [vmem:[%s170 + $0x5dc] sm:$0xff]
      %v405 = vld [vmem:[%s170 + $0x5e4] sm:$0xff]
      %v406 = vld [vmem:[%s170 + $0x5ec] sm:$0xf]
      %v407 = vld [vmem:[%s170 + $0x5f0] sm:$0xff]
      %v408 = vld [vmem:[%s170 + $0x5f8] sm:$0xff]
      %v409 = vld [vmem:[%s170 + $0x600] sm:$0xf]
      %v410 = vld [vmem:[%s170 + $0x604] sm:$0xff]
      %v411 = vld [vmem:[%s170 + $0x60c] sm:$0xff]
      %v412 = vld [vmem:[%s170 + $0x614] sm:$0xf]
      %v413 = vld [vmem:[%s170 + $0x618] sm:$0xff]
      %v414 = vld [vmem:[%s170 + $0x620] sm:$0xff]
      %v415 = vld [vmem:[%s170 + $0x628] sm:$0xf]
      %v416 = vld [vmem:[%s170 + $0x62c] sm:$0xff]
      %v417 = vld [vmem:[%s170 + $0x634] sm:$0xff]
      %v418 = vld [vmem:[%s170 + $0x63c] sm:$0xf]
      %v419 = vld [vmem:[%s170 + $0x640] sm:$0xff]
      %v420 = vld [vmem:[%s170 + $0x648] sm:$0xff]
      %v421 = vld [vmem:[%s170 + $0x650] sm:$0xf]
      %v422 = vld [vmem:[%s170 + $0x654] sm:$0xff]
      %v423 = vld [vmem:[%s170 + $0x65c] sm:$0xff]
      %v424 = vld [vmem:[%s170 + $0x664] sm:$0xf]
      %v425 = vld [vmem:[%s170 + $0x668] sm:$0xff]
      %v426 = vld [vmem:[%s170 + $0x670] sm:$0xff]
      %v427 = vld [vmem:[%s170 + $0x678] sm:$0xf]
      %v428 = vld [vmem:[%s170 + $0x67c] sm:$0xff]
      %v429 = vld [vmem:[%s170 + $0x684] sm:$0xff]
      %v430 = vld [vmem:[%s170 + $0x68c] sm:$0xf]
      %v431 = vld [vmem:[%s170 + $0x690] sm:$0xff]
      %v432 = vld [vmem:[%s170 + $0x698] sm:$0xff]
      %v433 = vld [vmem:[%s170 + $0x6a0] sm:$0xf]
      %v434 = vld [vmem:[%s170 + $0x6a4] sm:$0xff]
      %v435 = vld [vmem:[%s170 + $0x6ac] sm:$0xff]
      %v436 = vld [vmem:[%s170 + $0x6b4] sm:$0xf]
      %v437 = vld [vmem:[%s170 + $0x6b8] sm:$0xff]
      %v438 = vld [vmem:[%s170 + $0x6c0] sm:$0xff]
      %v439 = vld [vmem:[%s170 + $0x6c8] sm:$0xf]
      %v440 = vld [vmem:[%s170 + $0x6cc] sm:$0xff]
      %v441 = vld [vmem:[%s170 + $0x6d4] sm:$0xff]
      %v442 = vld [vmem:[%s170 + $0x6dc] sm:$0xf]
      %v443 = vld [vmem:[%s170 + $0x6e0] sm:$0xff]
      %v444 = vld [vmem:[%s170 + $0x6e8] sm:$0xff]
      %v445 = vld [vmem:[%s170 + $0x6f0] sm:$0xf]
      %v446 = vld [vmem:[%s170 + $0x6f4] sm:$0xff]
      %v447 = vld [vmem:[%s170 + $0x6fc] sm:$0xff]
      %v448 = vld [vmem:[%s170 + $0x704] sm:$0xf]
      %v449 = vld [vmem:[%s170 + $0x708] sm:$0xff]
      %v450 = vld [vmem:[%s170 + $0x710] sm:$0xff]
      %v451 = vld [vmem:[%s170 + $0x718] sm:$0xf]
      %v452 = vld [vmem:[%s170 + $0x71c] sm:$0xff]
      %v453 = vld [vmem:[%s170 + $0x724] sm:$0xff]
      %v454 = vld [vmem:[%s170 + $0x72c] sm:$0xf]
      %v455 = vld [vmem:[%s170 + $0x730] sm:$0xff]
      %v456 = vld [vmem:[%s170 + $0x738] sm:$0xff]
      %v457 = vld [vmem:[%s170 + $0x740] sm:$0xf]
      %v458 = vld [vmem:[%s170 + $0x744] sm:$0xff]
      %v459 = vld [vmem:[%s170 + $0x74c] sm:$0xff]
      %v460 = vld [vmem:[%s170 + $0x754] sm:$0xf]
      %v461 = vld [vmem:[%s170 + $0x758] sm:$0xff]
      %v462 = vld [vmem:[%s170 + $0x760] sm:$0xff]
      %v463 = vld [vmem:[%s170 + $0x768] sm:$0xf]
      %v464 = vld [vmem:[%s170 + $0x76c] sm:$0xff]
      %v465 = vld [vmem:[%s170 + $0x774] sm:$0xff]
      %v466 = vld [vmem:[%s170 + $0x77c] sm:$0xf]
      %v467 = vld [vmem:[%s170 + $0x780] sm:$0xff]
      %v468 = vld [vmem:[%s170 + $0x788] sm:$0xff]
      %v469 = vld [vmem:[%s170 + $0x790] sm:$0xf]
      %v470 = vld [vmem:[%s170 + $0x794] sm:$0xff]
      %v471 = vld [vmem:[%s170 + $0x79c] sm:$0xff]
      %v472 = vld [vmem:[%s170 + $0x7a4] sm:$0xf]
      %v473 = vld [vmem:[%s170 + $0x7a8] sm:$0xff]
      %v474 = vld [vmem:[%s170 + $0x7b0] sm:$0xff]
      %v475 = vld [vmem:[%s170 + $0x7b8] sm:$0xf]
      %v476 = vld [vmem:[%s170 + $0x7bc] sm:$0xff]
      %v477 = vld [vmem:[%s170 + $0x7c4] sm:$0xff]
      %v478 = vld [vmem:[%s170 + $0x7cc] sm:$0xf]
      %v479 = vld [vmem:[%s170 + $0x7d0] sm:$0xff]
      %v480 = vld [vmem:[%s170 + $0x7d8] sm:$0xff]
      %v481 = vld [vmem:[%s170 + $0x7e0] sm:$0xf]
      %v482 = vld [vmem:[%s170 + $0x7e4] sm:$0xff]
      %v483 = vld [vmem:[%s170 + $0x7ec] sm:$0xff]
      %v484 = vld [vmem:[%s170 + $0x7f4] sm:$0xf]
      %v485 = vld [vmem:[%s170 + $0x7f8] sm:$0xff]
      %v486 = vld [vmem:[%s170 + $0x800] sm:$0xff]
      %v487 = vld [vmem:[%s170 + $0x808] sm:$0xf]
      %v488 = vld [vmem:[%s170 + $0x80c] sm:$0xff]
      %v489 = vld [vmem:[%s170 + $0x814] sm:$0xff]
      %v490 = vld [vmem:[%s170 + $0x81c] sm:$0xf]
      %v491 = vld [vmem:[%s170 + $0x820] sm:$0xff]
      %v492 = vld [vmem:[%s170 + $0x828] sm:$0xff]
      %v493 = vld [vmem:[%s170 + $0x830] sm:$0xf]
      %v494 = vld [vmem:[%s170 + $0x834] sm:$0xff]
      %v495 = vld [vmem:[%s170 + $0x83c] sm:$0xff]
      %v496 = vld [vmem:[%s170 + $0x844] sm:$0xf]
      %v497 = vld [vmem:[%s170 + $0x848] sm:$0xff]
      %v498 = vld [vmem:[%s170 + $0x850] sm:$0xff]
      %v499 = vld [vmem:[%s170 + $0x858] sm:$0xf]
      %v500 = vld [vmem:[%s170 + $0x85c] sm:$0xff]
      %v501 = vld [vmem:[%s170 + $0x864] sm:$0xff]
      %v502 = vld [vmem:[%s170 + $0x86c] sm:$0xf]
      %v503 = vld [vmem:[%s170 + $0x870] sm:$0xff]
      %v504 = vld [vmem:[%s170 + $0x878] sm:$0xff]
      %v505 = vld [vmem:[%s170 + $0x880] sm:$0xf]
      %v506 = vld [vmem:[%s170 + $0x884] sm:$0xff]
      %v507 = vld [vmem:[%s170 + $0x88c] sm:$0xff]
      %v508 = vld [vmem:[%s170 + $0x894] sm:$0xf]
      %v509 = vld [vmem:[%s170 + $0x898] sm:$0xff]
      %v510 = vld [vmem:[%s170 + $0x8a0] sm:$0xff]
      %v511 = vld [vmem:[%s170 + $0x8a8] sm:$0xf]
      %v512 = vld [vmem:[%s170 + $0x8ac] sm:$0xff]
      %v513 = vld [vmem:[%s170 + $0x8b4] sm:$0xff]
      %v514 = vld [vmem:[%s170 + $0x8bc] sm:$0xf]
      %v515 = vld [vmem:[%s170 + $0x8c0] sm:$0xff]
      %v516 = vld [vmem:[%s170 + $0x8c8] sm:$0xff]
      %v517 = vld [vmem:[%s170 + $0x8d0] sm:$0xf]
      %v518 = vld [vmem:[%s170 + $0x8d4] sm:$0xff]
      %v519 = vld [vmem:[%s170 + $0x8dc] sm:$0xff]
      %v520 = vld [vmem:[%s170 + $0x8e4] sm:$0xf]
      %v521 = vld [vmem:[%s170 + $0x8e8] sm:$0xff]
      %v522 = vld [vmem:[%s170 + $0x8f0] sm:$0xff]
      %v523 = vld [vmem:[%s170 + $0x8f8] sm:$0xf]
      %v524 = vld [vmem:[%s170 + $0x8fc] sm:$0xff]
      %v525 = vld [vmem:[%s170 + $0x904] sm:$0xff]
      %v526 = vld [vmem:[%s170 + $0x90c] sm:$0xf]
      %v527 = vld [vmem:[%s170 + $0x910] sm:$0xff]
      %v528 = vld [vmem:[%s170 + $0x918] sm:$0xff]
      %v529 = vld [vmem:[%s170 + $0x920] sm:$0xf]
      %v530 = vld [vmem:[%s170 + $0x924] sm:$0xff]
      %v531 = vld [vmem:[%s170 + $0x92c] sm:$0xff]
      %v532 = vld [vmem:[%s170 + $0x934] sm:$0xf]
      %v533 = vld [vmem:[%s170 + $0x938] sm:$0xff]
      %v534 = vld [vmem:[%s170 + $0x940] sm:$0xff]
      %v535 = vld [vmem:[%s170 + $0x948] sm:$0xf]
      %v536 = vld [vmem:[%s170 + $0x94c] sm:$0xff]
      %v537 = vld [vmem:[%s170 + $0x954] sm:$0xff]
      %v538 = vld [vmem:[%s170 + $0x95c] sm:$0xf]
      %v539 = vld [vmem:[%s170 + $0x960] sm:$0xff]
      %v540 = vld [vmem:[%s170 + $0x968] sm:$0xff]
      %v541 = vld [vmem:[%s170 + $0x970] sm:$0xf]
      %v542 = vld [vmem:[%s170 + $0x974] sm:$0xff]
      %v543 = vld [vmem:[%s170 + $0x97c] sm:$0xff]
      %v544 = vld [vmem:[%s170 + $0x984] sm:$0xf]
      %v545 = vld [vmem:[%s170 + $0x988] sm:$0xff]
      %v546 = vld [vmem:[%s170 + $0x990] sm:$0xff]
      %v547 = vld [vmem:[%s170 + $0x998] sm:$0xf]
      %v548 = vld [vmem:[%s170 + $0x99c] sm:$0xff]
      %v549 = vld [vmem:[%s170 + $0x9a4] sm:$0xff]
      %v550 = vld [vmem:[%s170 + $0x9ac] sm:$0xf]
      %v551 = vld [vmem:[%s170 + $0x9b0] sm:$0xff]
      %v552 = vld [vmem:[%s170 + $0x9b8] sm:$0xff]
      %v553 = vld [vmem:[%s170 + $0x9c0] sm:$0xf]
      %v554 = vld [vmem:[%s170 + $0x9c4] sm:$0xff]
      %v555 = vld [vmem:[%s170 + $0x9cc] sm:$0xff]
      %v556 = vld [vmem:[%s170 + $0x9d4] sm:$0xf]
      %v557 = vld [vmem:[%s170 + $0x9d8] sm:$0xff]
      %v558 = vld [vmem:[%s170 + $0x9e0] sm:$0xff]
      %v559 = vld [vmem:[%s170 + $0x9e8] sm:$0xf]
      %v560 = vld [vmem:[%s170 + $0x9ec] sm:$0xff]
      %v561 = vld [vmem:[%s170 + $0x9f4] sm:$0xff]
      %v562 = vld [vmem:[%s170 + $0x9fc] sm:$0xf]
      %v563 = vld [vmem:[%s2] sm:$0xf]
      %v564 = vld [vmem:[%s2 + $0x4] sm:$0xf]
      %v565 = vld [vmem:[%s2 + $0x8] sm:$0xf]
      %v566 = vld [vmem:[%s2 + $0xc] sm:$0xf]
      %v567 = vld [vmem:[%s2 + $0x10] sm:$0xf]
      %v568 = vld [vmem:[%s2 + $0x14] sm:$0xf]
      %v569 = vld [vmem:[%s2 + $0x18] sm:$0xf]
      %v570 = vld [vmem:[%s2 + $0x1c] sm:$0xf]
      %v571 = vld [vmem:[%s2 + $0x20] sm:$0xf]
      %v572 = vld [vmem:[%s2 + $0x24] sm:$0xf]
      %v573 = vld [vmem:[%s2 + $0x28] sm:$0xf]
      %v574 = vld [vmem:[%s2 + $0x2c] sm:$0xf]
      %v575 = vld [vmem:[%s2 + $0x30] sm:$0xf]
      %v576 = vld [vmem:[%s2 + $0x34] sm:$0xf]
      %v577 = vld [vmem:[%s2 + $0x38] sm:$0xf]
      %v578 = vld [vmem:[%s2 + $0x3c] sm:$0xf]
      %v579 = vld [vmem:[%s2 + $0x40] sm:$0xf]
      %v580 = vld [vmem:[%s2 + $0x44] sm:$0xf]
      %v581 = vld [vmem:[%s2 + $0x48] sm:$0xf]
      %v582 = vld [vmem:[%s2 + $0x4c] sm:$0xf]
      %v583 = vld [vmem:[%s2 + $0x50] sm:$0xf]
      %v584 = vld [vmem:[%s2 + $0x54] sm:$0xf]
      %v585 = vld [vmem:[%s2 + $0x58] sm:$0xf]
      %v586 = vld [vmem:[%s2 + $0x5c] sm:$0xf]
      %v587 = vld [vmem:[%s2 + $0x60] sm:$0xf]
      %v588 = vld [vmem:[%s2 + $0x64] sm:$0xf]
      %v589 = vld [vmem:[%s2 + $0x68] sm:$0xf]
      %v590 = vld [vmem:[%s2 + $0x6c] sm:$0xf]
      %v591 = vld [vmem:[%s2 + $0x70] sm:$0xf]
      %v592 = vld [vmem:[%s2 + $0x74] sm:$0xf]
      %v593 = vld [vmem:[%s2 + $0x78] sm:$0xf]
      %v594 = vld [vmem:[%s2 + $0x7c] sm:$0xf]
      %v595 = vld [vmem:[%s2 + $0x80] sm:$0xf]
      %v596 = vld [vmem:[%s2 + $0x84] sm:$0xf]
      %v597 = vld [vmem:[%s2 + $0x88] sm:$0xf]
      %v598 = vld [vmem:[%s2 + $0x8c] sm:$0xf]
      %v599 = vld [vmem:[%s2 + $0x90] sm:$0xf]
      %v600 = vld [vmem:[%s2 + $0x94] sm:$0xf]
      %v601 = vld [vmem:[%s2 + $0x98] sm:$0xf]
      %v602 = vld [vmem:[%s2 + $0x9c] sm:$0xf]
      %v603 = vld [vmem:[%s2 + $0xa0] sm:$0xf]
      %v604 = vld [vmem:[%s2 + $0xa4] sm:$0xf]
      %v605 = vld [vmem:[%s2 + $0xa8] sm:$0xf]
      %v606 = vld [vmem:[%s2 + $0xac] sm:$0xf]
      %v607 = vld [vmem:[%s2 + $0xb0] sm:$0xf]
      %v608 = vld [vmem:[%s2 + $0xb4] sm:$0xf]
      %v609 = vld [vmem:[%s2 + $0xb8] sm:$0xf]
      %v610 = vld [vmem:[%s2 + $0xbc] sm:$0xf]
      %v611 = vld [vmem:[%s2 + $0xc0] sm:$0xf]
      %v612 = vld [vmem:[%s2 + $0xc4] sm:$0xf]
      %v613 = vld [vmem:[%s2 + $0xc8] sm:$0xf]
      %v614 = vld [vmem:[%s2 + $0xcc] sm:$0xf]
      %v615 = vld [vmem:[%s2 + $0xd0] sm:$0xf]
      %v616 = vld [vmem:[%s2 + $0xd4] sm:$0xf]
      %v617 = vld [vmem:[%s2 + $0xd8] sm:$0xf]
      %v618 = vld [vmem:[%s2 + $0xdc] sm:$0xf]
      %v619 = vld [vmem:[%s2 + $0xe0] sm:$0xf]
      %v620 = vld [vmem:[%s2 + $0xe4] sm:$0xf]
      %v621 = vld [vmem:[%s2 + $0xe8] sm:$0xf]
      %v622 = vld [vmem:[%s2 + $0xec] sm:$0xf]
      %v623 = vld [vmem:[%s2 + $0xf0] sm:$0xf]
      %v624 = vld [vmem:[%s2 + $0xf4] sm:$0xf]
      %v625 = vld [vmem:[%s2 + $0xf8] sm:$0xf]
      %v626 = vld [vmem:[%s2 + $0xfc] sm:$0xf]
      %v627 = vld [vmem:[%s2 + $0x100] sm:$0xf]
      %v628 = vld [vmem:[%s2 + $0x104] sm:$0xf]
      %v629 = vld [vmem:[%s2 + $0x108] sm:$0xf]
      %v630 = vld [vmem:[%s2 + $0x10c] sm:$0xf]
      %v631 = vld [vmem:[%s2 + $0x110] sm:$0xf]
      %v632 = vld [vmem:[%s2 + $0x114] sm:$0xf]
      %v633 = vld [vmem:[%s2 + $0x118] sm:$0xf]
      %v634 = vld [vmem:[%s2 + $0x11c] sm:$0xf]
      %v1019 = vunpack.c.l.b16 %v179
      %v1020 = vunpack.c.h.b16 %v179
      %v1021 = vunpack.c.l.b16 %v180
      %v1022 = vunpack.c.h.b16 %v180
      %v1023 = vunpack.c.l.b16 %v181
      %v1024 = vunpack.c.l.b16 %v182
      %v1025 = vunpack.c.h.b16 %v182
      %v1026 = vunpack.c.l.b16 %v183
      %v1027 = vunpack.c.h.b16 %v183
      %v1028 = vunpack.c.l.b16 %v184
      %v1029 = vunpack.c.l.b16 %v185
      %v1030 = vunpack.c.h.b16 %v185
      %v1031 = vunpack.c.l.b16 %v186
      %v1032 = vunpack.c.h.b16 %v186
      %v1033 = vunpack.c.l.b16 %v187
      %v1034 = vunpack.c.l.b16 %v188
      %v1035 = vunpack.c.h.b16 %v188
      %v1036 = vunpack.c.l.b16 %v189
      %v1037 = vunpack.c.h.b16 %v189
      %v1038 = vunpack.c.l.b16 %v190
      %v1039 = vunpack.c.l.b16 %v191
      %v1040 = vunpack.c.h.b16 %v191
      %v1041 = vunpack.c.l.b16 %v192
      %v1042 = vunpack.c.h.b16 %v192
      %v1043 = vunpack.c.l.b16 %v193
      %v1044 = vunpack.c.l.b16 %v194
      %v1045 = vunpack.c.h.b16 %v194
      %v1046 = vunpack.c.l.b16 %v195
      %v1047 = vunpack.c.h.b16 %v195
      %v1048 = vunpack.c.l.b16 %v196
      %v1049 = vunpack.c.l.b16 %v197
      %v1050 = vunpack.c.h.b16 %v197
      %v1051 = vunpack.c.l.b16 %v198
      %v1052 = vunpack.c.h.b16 %v198
      %v1053 = vunpack.c.l.b16 %v199
      %v1054 = vunpack.c.l.b16 %v200
      %v1055 = vunpack.c.h.b16 %v200
      %v1056 = vunpack.c.l.b16 %v201
      %v1057 = vunpack.c.h.b16 %v201
      %v1058 = vunpack.c.l.b16 %v202
      %v1059 = vunpack.c.l.b16 %v203
      %v1060 = vunpack.c.h.b16 %v203
      %v1061 = vunpack.c.l.b16 %v204
      %v1062 = vunpack.c.h.b16 %v204
      %v1063 = vunpack.c.l.b16 %v205
      %v1064 = vunpack.c.l.b16 %v206
      %v1065 = vunpack.c.h.b16 %v206
      %v1066 = vunpack.c.l.b16 %v207
      %v1067 = vunpack.c.h.b16 %v207
      %v1068 = vunpack.c.l.b16 %v208
      %v1069 = vunpack.c.l.b16 %v209
      %v1070 = vunpack.c.h.b16 %v209
      %v1071 = vunpack.c.l.b16 %v210
      %v1072 = vunpack.c.h.b16 %v210
      %v1073 = vunpack.c.l.b16 %v211
      %v1074 = vunpack.c.l.b16 %v212
      %v1075 = vunpack.c.h.b16 %v212
      %v1076 = vunpack.c.l.b16 %v213
      %v1077 = vunpack.c.h.b16 %v213
      %v1078 = vunpack.c.l.b16 %v214
      %v1079 = vunpack.c.l.b16 %v215
      %v1080 = vunpack.c.h.b16 %v215
      %v1081 = vunpack.c.l.b16 %v216
      %v1082 = vunpack.c.h.b16 %v216
      %v1083 = vunpack.c.l.b16 %v217
      %v1084 = vunpack.c.l.b16 %v218
      %v1085 = vunpack.c.h.b16 %v218
      %v1086 = vunpack.c.l.b16 %v219
      %v1087 = vunpack.c.h.b16 %v219
      %v1088 = vunpack.c.l.b16 %v220
      %v1089 = vunpack.c.l.b16 %v221
      %v1090 = vunpack.c.h.b16 %v221
      %v1091 = vunpack.c.l.b16 %v222
      %v1092 = vunpack.c.h.b16 %v222
      %v1093 = vunpack.c.l.b16 %v223
      %v1094 = vunpack.c.l.b16 %v224
      %v1095 = vunpack.c.h.b16 %v224
      %v1096 = vunpack.c.l.b16 %v225
      %v1097 = vunpack.c.h.b16 %v225
      %v1098 = vunpack.c.l.b16 %v226
      %v1099 = vunpack.c.l.b16 %v227
      %v1100 = vunpack.c.h.b16 %v227
      %v1101 = vunpack.c.l.b16 %v228
      %v1102 = vunpack.c.h.b16 %v228
      %v1103 = vunpack.c.l.b16 %v229
      %v1104 = vunpack.c.l.b16 %v230
      %v1105 = vunpack.c.h.b16 %v230
      %v1106 = vunpack.c.l.b16 %v231
      %v1107 = vunpack.c.h.b16 %v231
      %v1108 = vunpack.c.l.b16 %v232
      %v1109 = vunpack.c.l.b16 %v233
      %v1110 = vunpack.c.h.b16 %v233
      %v1111 = vunpack.c.l.b16 %v234
      %v1112 = vunpack.c.h.b16 %v234
      %v1113 = vunpack.c.l.b16 %v235
      %v1114 = vunpack.c.l.b16 %v236
      %v1115 = vunpack.c.h.b16 %v236
      %v1116 = vunpack.c.l.b16 %v237
      %v1117 = vunpack.c.h.b16 %v237
      %v1118 = vunpack.c.l.b16 %v238
      %v1119 = vunpack.c.l.b16 %v239
      %v1120 = vunpack.c.h.b16 %v239
      %v1121 = vunpack.c.l.b16 %v240
      %v1122 = vunpack.c.h.b16 %v240
      %v1123 = vunpack.c.l.b16 %v241
      %v1124 = vunpack.c.l.b16 %v242
      %v1125 = vunpack.c.h.b16 %v242
      %v1126 = vunpack.c.l.b16 %v243
      %v1127 = vunpack.c.h.b16 %v243
      %v1128 = vunpack.c.l.b16 %v244
      %v1129 = vunpack.c.l.b16 %v245
      %v1130 = vunpack.c.h.b16 %v245
      %v1131 = vunpack.c.l.b16 %v246
      %v1132 = vunpack.c.h.b16 %v246
      %v1133 = vunpack.c.l.b16 %v247
      %v1134 = vunpack.c.l.b16 %v248
      %v1135 = vunpack.c.h.b16 %v248
      %v1136 = vunpack.c.l.b16 %v249
      %v1137 = vunpack.c.h.b16 %v249
      %v1138 = vunpack.c.l.b16 %v250
      %v1139 = vunpack.c.l.b16 %v251
      %v1140 = vunpack.c.h.b16 %v251
      %v1141 = vunpack.c.l.b16 %v252
      %v1142 = vunpack.c.h.b16 %v252
      %v1143 = vunpack.c.l.b16 %v253
      %v1144 = vunpack.c.l.b16 %v254
      %v1145 = vunpack.c.h.b16 %v254
      %v1146 = vunpack.c.l.b16 %v255
      %v1147 = vunpack.c.h.b16 %v255
      %v1148 = vunpack.c.l.b16 %v256
      %v1149 = vunpack.c.l.b16 %v257
      %v1150 = vunpack.c.h.b16 %v257
      %v1151 = vunpack.c.l.b16 %v258
      %v1152 = vunpack.c.h.b16 %v258
      %v1153 = vunpack.c.l.b16 %v259
      %v1154 = vunpack.c.l.b16 %v260
      %v1155 = vunpack.c.h.b16 %v260
      %v1156 = vunpack.c.l.b16 %v261
      %v1157 = vunpack.c.h.b16 %v261
      %v1158 = vunpack.c.l.b16 %v262
      %v1159 = vunpack.c.l.b16 %v263
      %v1160 = vunpack.c.h.b16 %v263
      %v1161 = vunpack.c.l.b16 %v264
      %v1162 = vunpack.c.h.b16 %v264
      %v1163 = vunpack.c.l.b16 %v265
      %v1164 = vunpack.c.l.b16 %v266
      %v1165 = vunpack.c.h.b16 %v266
      %v1166 = vunpack.c.l.b16 %v267
      %v1167 = vunpack.c.h.b16 %v267
      %v1168 = vunpack.c.l.b16 %v268
      %v1169 = vunpack.c.l.b16 %v269
      %v1170 = vunpack.c.h.b16 %v269
      %v1171 = vunpack.c.l.b16 %v270
      %v1172 = vunpack.c.h.b16 %v270
      %v1173 = vunpack.c.l.b16 %v271
      %v1174 = vunpack.c.l.b16 %v272
      %v1175 = vunpack.c.h.b16 %v272
      %v1176 = vunpack.c.l.b16 %v273
      %v1177 = vunpack.c.h.b16 %v273
      %v1178 = vunpack.c.l.b16 %v274
      %v1179 = vunpack.c.l.b16 %v275
      %v1180 = vunpack.c.h.b16 %v275
      %v1181 = vunpack.c.l.b16 %v276
      %v1182 = vunpack.c.h.b16 %v276
      %v1183 = vunpack.c.l.b16 %v277
      %v1184 = vunpack.c.l.b16 %v278
      %v1185 = vunpack.c.h.b16 %v278
      %v1186 = vunpack.c.l.b16 %v279
      %v1187 = vunpack.c.h.b16 %v279
      %v1188 = vunpack.c.l.b16 %v280
      %v1189 = vunpack.c.l.b16 %v281
      %v1190 = vunpack.c.h.b16 %v281
      %v1191 = vunpack.c.l.b16 %v282
      %v1192 = vunpack.c.h.b16 %v282
      %v1193 = vunpack.c.l.b16 %v283
      %v1194 = vunpack.c.l.b16 %v284
      %v1195 = vunpack.c.h.b16 %v284
      %v1196 = vunpack.c.l.b16 %v285
      %v1197 = vunpack.c.h.b16 %v285
      %v1198 = vunpack.c.l.b16 %v286
      %v1199 = vunpack.c.l.b16 %v287
      %v1200 = vunpack.c.h.b16 %v287
      %v1201 = vunpack.c.l.b16 %v288
      %v1202 = vunpack.c.h.b16 %v288
      %v1203 = vunpack.c.l.b16 %v289
      %v1204 = vunpack.c.l.b16 %v290
      %v1205 = vunpack.c.h.b16 %v290
      %v1206 = vunpack.c.l.b16 %v291
      %v1207 = vunpack.c.h.b16 %v291
      %v1208 = vunpack.c.l.b16 %v292
      %v1209 = vunpack.c.l.b16 %v293
      %v1210 = vunpack.c.h.b16 %v293
      %v1211 = vunpack.c.l.b16 %v294
      %v1212 = vunpack.c.h.b16 %v294
      %v1213 = vunpack.c.l.b16 %v295
      %v1214 = vunpack.c.l.b16 %v296
      %v1215 = vunpack.c.h.b16 %v296
      %v1216 = vunpack.c.l.b16 %v297
      %v1217 = vunpack.c.h.b16 %v297
      %v1218 = vunpack.c.l.b16 %v298
      %v1219 = vunpack.c.l.b16 %v299
      %v1220 = vunpack.c.h.b16 %v299
      %v1221 = vunpack.c.l.b16 %v300
      %v1222 = vunpack.c.h.b16 %v300
      %v1223 = vunpack.c.l.b16 %v301
      %v1224 = vunpack.c.l.b16 %v302
      %v1225 = vunpack.c.h.b16 %v302
      %v1226 = vunpack.c.l.b16 %v303
      %v1227 = vunpack.c.h.b16 %v303
      %v1228 = vunpack.c.l.b16 %v304
      %v1229 = vunpack.c.l.b16 %v305
      %v1230 = vunpack.c.h.b16 %v305
      %v1231 = vunpack.c.l.b16 %v306
      %v1232 = vunpack.c.h.b16 %v306
      %v1233 = vunpack.c.l.b16 %v307
      %v1234 = vunpack.c.l.b16 %v308
      %v1235 = vunpack.c.h.b16 %v308
      %v1236 = vunpack.c.l.b16 %v309
      %v1237 = vunpack.c.h.b16 %v309
      %v1238 = vunpack.c.l.b16 %v310
      %v1239 = vunpack.c.l.b16 %v311
      %v1240 = vunpack.c.h.b16 %v311
      %v1241 = vunpack.c.l.b16 %v312
      %v1242 = vunpack.c.h.b16 %v312
      %v1243 = vunpack.c.l.b16 %v313
      %v1244 = vunpack.c.l.b16 %v314
      %v1245 = vunpack.c.h.b16 %v314
      %v1246 = vunpack.c.l.b16 %v315
      %v1247 = vunpack.c.h.b16 %v315
      %v1248 = vunpack.c.l.b16 %v316
      %v1249 = vunpack.c.l.b16 %v317
      %v1250 = vunpack.c.h.b16 %v317
      %v1251 = vunpack.c.l.b16 %v318
      %v1252 = vunpack.c.h.b16 %v318
      %v1253 = vunpack.c.l.b16 %v319
      %v1254 = vunpack.c.l.b16 %v320
      %v1255 = vunpack.c.h.b16 %v320
      %v1256 = vunpack.c.l.b16 %v321
      %v1257 = vunpack.c.h.b16 %v321
      %v1258 = vunpack.c.l.b16 %v322
      %v1259 = vunpack.c.l.b16 %v323
      %v1260 = vunpack.c.h.b16 %v323
      %v1261 = vunpack.c.l.b16 %v324
      %v1262 = vunpack.c.h.b16 %v324
      %v1263 = vunpack.c.l.b16 %v325
      %v1264 = vunpack.c.l.b16 %v326
      %v1265 = vunpack.c.h.b16 %v326
      %v1266 = vunpack.c.l.b16 %v327
      %v1267 = vunpack.c.h.b16 %v327
      %v1268 = vunpack.c.l.b16 %v328
      %v1269 = vunpack.c.l.b16 %v329
      %v1270 = vunpack.c.h.b16 %v329
      %v1271 = vunpack.c.l.b16 %v330
      %v1272 = vunpack.c.h.b16 %v330
      %v1273 = vunpack.c.l.b16 %v331
      %v1274 = vunpack.c.l.b16 %v332
      %v1275 = vunpack.c.h.b16 %v332
      %v1276 = vunpack.c.l.b16 %v333
      %v1277 = vunpack.c.h.b16 %v333
      %v1278 = vunpack.c.l.b16 %v334
      %v1279 = vunpack.c.l.b16 %v335
      %v1280 = vunpack.c.h.b16 %v335
      %v1281 = vunpack.c.l.b16 %v336
      %v1282 = vunpack.c.h.b16 %v336
      %v1283 = vunpack.c.l.b16 %v337
      %v1284 = vunpack.c.l.b16 %v338
      %v1285 = vunpack.c.h.b16 %v338
      %v1286 = vunpack.c.l.b16 %v339
      %v1287 = vunpack.c.h.b16 %v339
      %v1288 = vunpack.c.l.b16 %v340
      %v1289 = vunpack.c.l.b16 %v341
      %v1290 = vunpack.c.h.b16 %v341
      %v1291 = vunpack.c.l.b16 %v342
      %v1292 = vunpack.c.h.b16 %v342
      %v1293 = vunpack.c.l.b16 %v343
      %v1294 = vunpack.c.l.b16 %v344
      %v1295 = vunpack.c.h.b16 %v344
      %v1296 = vunpack.c.l.b16 %v345
      %v1297 = vunpack.c.h.b16 %v345
      %v1298 = vunpack.c.l.b16 %v346
      %v1299 = vunpack.c.l.b16 %v347
      %v1300 = vunpack.c.h.b16 %v347
      %v1301 = vunpack.c.l.b16 %v348
      %v1302 = vunpack.c.h.b16 %v348
      %v1303 = vunpack.c.l.b16 %v349
      %v1304 = vunpack.c.l.b16 %v350
      %v1305 = vunpack.c.h.b16 %v350
      %v1306 = vunpack.c.l.b16 %v351
      %v1307 = vunpack.c.h.b16 %v351
      %v1308 = vunpack.c.l.b16 %v352
      %v1309 = vunpack.c.l.b16 %v353
      %v1310 = vunpack.c.h.b16 %v353
      %v1311 = vunpack.c.l.b16 %v354
      %v1312 = vunpack.c.h.b16 %v354
      %v1313 = vunpack.c.l.b16 %v355
      %v1314 = vunpack.c.l.b16 %v356
      %v1315 = vunpack.c.h.b16 %v356
      %v1316 = vunpack.c.l.b16 %v357
      %v1317 = vunpack.c.h.b16 %v357
      %v1318 = vunpack.c.l.b16 %v358
      %v1319 = vunpack.c.l.b16 %v359
      %v1320 = vunpack.c.h.b16 %v359
      %v1321 = vunpack.c.l.b16 %v360
      %v1322 = vunpack.c.h.b16 %v360
      %v1323 = vunpack.c.l.b16 %v361
      %v1324 = vunpack.c.l.b16 %v362
      %v1325 = vunpack.c.h.b16 %v362
      %v1326 = vunpack.c.l.b16 %v363
      %v1327 = vunpack.c.h.b16 %v363
      %v1328 = vunpack.c.l.b16 %v364
      %v1329 = vunpack.c.l.b16 %v365
      %v1330 = vunpack.c.h.b16 %v365
      %v1331 = vunpack.c.l.b16 %v366
      %v1332 = vunpack.c.h.b16 %v366
      %v1333 = vunpack.c.l.b16 %v367
      %v1334 = vunpack.c.l.b16 %v368
      %v1335 = vunpack.c.h.b16 %v368
      %v1336 = vunpack.c.l.b16 %v369
      %v1337 = vunpack.c.h.b16 %v369
      %v1338 = vunpack.c.l.b16 %v370
      %v1339 = vunpack.c.l.b16 %v371
      %v1340 = vunpack.c.h.b16 %v371
      %v1341 = vunpack.c.l.b16 %v372
      %v1342 = vunpack.c.h.b16 %v372
      %v1343 = vunpack.c.l.b16 %v373
      %v1344 = vunpack.c.l.b16 %v374
      %v1345 = vunpack.c.h.b16 %v374
      %v1346 = vunpack.c.l.b16 %v375
      %v1347 = vunpack.c.h.b16 %v375
      %v1348 = vunpack.c.l.b16 %v376
      %v1349 = vunpack.c.l.b16 %v377
      %v1350 = vunpack.c.h.b16 %v377
      %v1351 = vunpack.c.l.b16 %v378
      %v1352 = vunpack.c.h.b16 %v378
      %v1353 = vunpack.c.l.b16 %v379
      %v1354 = vunpack.c.l.b16 %v380
      %v1355 = vunpack.c.h.b16 %v380
      %v1356 = vunpack.c.l.b16 %v381
      %v1357 = vunpack.c.h.b16 %v381
      %v1358 = vunpack.c.l.b16 %v382
      %v1359 = vunpack.c.l.b16 %v383
      %v1360 = vunpack.c.h.b16 %v383
      %v1361 = vunpack.c.l.b16 %v384
      %v1362 = vunpack.c.h.b16 %v384
      %v1363 = vunpack.c.l.b16 %v385
      %v1364 = vunpack.c.l.b16 %v386
      %v1365 = vunpack.c.h.b16 %v386
      %v1366 = vunpack.c.l.b16 %v387
      %v1367 = vunpack.c.h.b16 %v387
      %v1368 = vunpack.c.l.b16 %v388
      %v1369 = vunpack.c.l.b16 %v389
      %v1370 = vunpack.c.h.b16 %v389
      %v1371 = vunpack.c.l.b16 %v390
      %v1372 = vunpack.c.h.b16 %v390
      %v1373 = vunpack.c.l.b16 %v391
      %v1374 = vunpack.c.l.b16 %v392
      %v1375 = vunpack.c.h.b16 %v392
      %v1376 = vunpack.c.l.b16 %v393
      %v1377 = vunpack.c.h.b16 %v393
      %v1378 = vunpack.c.l.b16 %v394
      %v1379 = vunpack.c.l.b16 %v395
      %v1380 = vunpack.c.h.b16 %v395
      %v1381 = vunpack.c.l.b16 %v396
      %v1382 = vunpack.c.h.b16 %v396
      %v1383 = vunpack.c.l.b16 %v397
      %v1384 = vunpack.c.l.b16 %v398
      %v1385 = vunpack.c.h.b16 %v398
      %v1386 = vunpack.c.l.b16 %v399
      %v1387 = vunpack.c.h.b16 %v399
      %v1388 = vunpack.c.l.b16 %v400
      %v1389 = vunpack.c.l.b16 %v401
      %v1390 = vunpack.c.h.b16 %v401
      %v1391 = vunpack.c.l.b16 %v402
      %v1392 = vunpack.c.h.b16 %v402
      %v1393 = vunpack.c.l.b16 %v403
      %v1394 = vunpack.c.l.b16 %v404
      %v1395 = vunpack.c.h.b16 %v404
      %v1396 = vunpack.c.l.b16 %v405
      %v1397 = vunpack.c.h.b16 %v405
      %v1398 = vunpack.c.l.b16 %v406
      %v1399 = vunpack.c.l.b16 %v407
      %v1400 = vunpack.c.h.b16 %v407
      %v1401 = vunpack.c.l.b16 %v408
      %v1402 = vunpack.c.h.b16 %v408
      %v1403 = vunpack.c.l.b16 %v409
      %v1404 = vunpack.c.l.b16 %v410
      %v1405 = vunpack.c.h.b16 %v410
      %v1406 = vunpack.c.l.b16 %v411
      %v1407 = vunpack.c.h.b16 %v411
      %v1408 = vunpack.c.l.b16 %v412
      %v1409 = vunpack.c.l.b16 %v413
      %v1410 = vunpack.c.h.b16 %v413
      %v1411 = vunpack.c.l.b16 %v414
      %v1412 = vunpack.c.h.b16 %v414
      %v1413 = vunpack.c.l.b16 %v415
      %v1414 = vunpack.c.l.b16 %v416
      %v1415 = vunpack.c.h.b16 %v416
      %v1416 = vunpack.c.l.b16 %v417
      %v1417 = vunpack.c.h.b16 %v417
      %v1418 = vunpack.c.l.b16 %v418
      %v1419 = vunpack.c.l.b16 %v419
      %v1420 = vunpack.c.h.b16 %v419
      %v1421 = vunpack.c.l.b16 %v420
      %v1422 = vunpack.c.h.b16 %v420
      %v1423 = vunpack.c.l.b16 %v421
      %v1424 = vunpack.c.l.b16 %v422
      %v1425 = vunpack.c.h.b16 %v422
      %v1426 = vunpack.c.l.b16 %v423
      %v1427 = vunpack.c.h.b16 %v423
      %v1428 = vunpack.c.l.b16 %v424
      %v1429 = vunpack.c.l.b16 %v425
      %v1430 = vunpack.c.h.b16 %v425
      %v1431 = vunpack.c.l.b16 %v426
      %v1432 = vunpack.c.h.b16 %v426
      %v1433 = vunpack.c.l.b16 %v427
      %v1434 = vunpack.c.l.b16 %v428
      %v1435 = vunpack.c.h.b16 %v428
      %v1436 = vunpack.c.l.b16 %v429
      %v1437 = vunpack.c.h.b16 %v429
      %v1438 = vunpack.c.l.b16 %v430
      %v1439 = vunpack.c.l.b16 %v431
      %v1440 = vunpack.c.h.b16 %v431
      %v1441 = vunpack.c.l.b16 %v432
      %v1442 = vunpack.c.h.b16 %v432
      %v1443 = vunpack.c.l.b16 %v433
      %v1444 = vunpack.c.l.b16 %v434
      %v1445 = vunpack.c.h.b16 %v434
      %v1446 = vunpack.c.l.b16 %v435
      %v1447 = vunpack.c.h.b16 %v435
      %v1448 = vunpack.c.l.b16 %v436
      %v1449 = vunpack.c.l.b16 %v437
      %v1450 = vunpack.c.h.b16 %v437
      %v1451 = vunpack.c.l.b16 %v438
      %v1452 = vunpack.c.h.b16 %v438
      %v1453 = vunpack.c.l.b16 %v439
      %v1454 = vunpack.c.l.b16 %v440
      %v1455 = vunpack.c.h.b16 %v440
      %v1456 = vunpack.c.l.b16 %v441
      %v1457 = vunpack.c.h.b16 %v441
      %v1458 = vunpack.c.l.b16 %v442
      %v1459 = vunpack.c.l.b16 %v443
      %v1460 = vunpack.c.h.b16 %v443
      %v1461 = vunpack.c.l.b16 %v444
      %v1462 = vunpack.c.h.b16 %v444
      %v1463 = vunpack.c.l.b16 %v445
      %v1464 = vunpack.c.l.b16 %v446
      %v1465 = vunpack.c.h.b16 %v446
      %v1466 = vunpack.c.l.b16 %v447
      %v1467 = vunpack.c.h.b16 %v447
      %v1468 = vunpack.c.l.b16 %v448
      %v1469 = vunpack.c.l.b16 %v449
      %v1470 = vunpack.c.h.b16 %v449
      %v1471 = vunpack.c.l.b16 %v450
      %v1472 = vunpack.c.h.b16 %v450
      %v1473 = vunpack.c.l.b16 %v451
      %v1474 = vunpack.c.l.b16 %v452
      %v1475 = vunpack.c.h.b16 %v452
      %v1476 = vunpack.c.l.b16 %v453
      %v1477 = vunpack.c.h.b16 %v453
      %v1478 = vunpack.c.l.b16 %v454
      %v1479 = vunpack.c.l.b16 %v455
      %v1480 = vunpack.c.h.b16 %v455
      %v1481 = vunpack.c.l.b16 %v456
      %v1482 = vunpack.c.h.b16 %v456
      %v1483 = vunpack.c.l.b16 %v457
      %v1484 = vunpack.c.l.b16 %v458
      %v1485 = vunpack.c.h.b16 %v458
      %v1486 = vunpack.c.l.b16 %v459
      %v1487 = vunpack.c.h.b16 %v459
      %v1488 = vunpack.c.l.b16 %v460
      %v1489 = vunpack.c.l.b16 %v461
      %v1490 = vunpack.c.h.b16 %v461
      %v1491 = vunpack.c.l.b16 %v462
      %v1492 = vunpack.c.h.b16 %v462
      %v1493 = vunpack.c.l.b16 %v463
      %v1494 = vunpack.c.l.b16 %v464
      %v1495 = vunpack.c.h.b16 %v464
      %v1496 = vunpack.c.l.b16 %v465
      %v1497 = vunpack.c.h.b16 %v465
      %v1498 = vunpack.c.l.b16 %v466
      %v1499 = vunpack.c.l.b16 %v467
      %v1500 = vunpack.c.h.b16 %v467
      %v1501 = vunpack.c.l.b16 %v468
      %v1502 = vunpack.c.h.b16 %v468
      %v1503 = vunpack.c.l.b16 %v469
      %v1504 = vunpack.c.l.b16 %v470
      %v1505 = vunpack.c.h.b16 %v470
      %v1506 = vunpack.c.l.b16 %v471
      %v1507 = vunpack.c.h.b16 %v471
      %v1508 = vunpack.c.l.b16 %v472
      %v1509 = vunpack.c.l.b16 %v473
      %v1510 = vunpack.c.h.b16 %v473
      %v1511 = vunpack.c.l.b16 %v474
      %v1512 = vunpack.c.h.b16 %v474
      %v1513 = vunpack.c.l.b16 %v475
      %v1514 = vunpack.c.l.b16 %v476
      %v1515 = vunpack.c.h.b16 %v476
      %v1516 = vunpack.c.l.b16 %v477
      %v1517 = vunpack.c.h.b16 %v477
      %v1518 = vunpack.c.l.b16 %v478
      %v1519 = vunpack.c.l.b16 %v479
      %v1520 = vunpack.c.h.b16 %v479
      %v1521 = vunpack.c.l.b16 %v480
      %v1522 = vunpack.c.h.b16 %v480
      %v1523 = vunpack.c.l.b16 %v481
      %v1524 = vunpack.c.l.b16 %v482
      %v1525 = vunpack.c.h.b16 %v482
      %v1526 = vunpack.c.l.b16 %v483
      %v1527 = vunpack.c.h.b16 %v483
      %v1528 = vunpack.c.l.b16 %v484
      %v1529 = vunpack.c.l.b16 %v485
      %v1530 = vunpack.c.h.b16 %v485
      %v1531 = vunpack.c.l.b16 %v486
      %v1532 = vunpack.c.h.b16 %v486
      %v1533 = vunpack.c.l.b16 %v487
      %v1534 = vunpack.c.l.b16 %v488
      %v1535 = vunpack.c.h.b16 %v488
      %v1536 = vunpack.c.l.b16 %v489
      %v1537 = vunpack.c.h.b16 %v489
      %v1538 = vunpack.c.l.b16 %v490
      %v1539 = vunpack.c.l.b16 %v491
      %v1540 = vunpack.c.h.b16 %v491
      %v1541 = vunpack.c.l.b16 %v492
      %v1542 = vunpack.c.h.b16 %v492
      %v1543 = vunpack.c.l.b16 %v493
      %v1544 = vunpack.c.l.b16 %v494
      %v1545 = vunpack.c.h.b16 %v494
      %v1546 = vunpack.c.l.b16 %v495
      %v1547 = vunpack.c.h.b16 %v495
      %v1548 = vunpack.c.l.b16 %v496
      %v1549 = vunpack.c.l.b16 %v497
      %v1550 = vunpack.c.h.b16 %v497
      %v1551 = vunpack.c.l.b16 %v498
      %v1552 = vunpack.c.h.b16 %v498
      %v1553 = vunpack.c.l.b16 %v499
      %v1554 = vunpack.c.l.b16 %v500
      %v1555 = vunpack.c.h.b16 %v500
      %v1556 = vunpack.c.l.b16 %v501
      %v1557 = vunpack.c.h.b16 %v501
      %v1558 = vunpack.c.l.b16 %v502
      %v1559 = vunpack.c.l.b16 %v503
      %v1560 = vunpack.c.h.b16 %v503
      %v1561 = vunpack.c.l.b16 %v504
      %v1562 = vunpack.c.h.b16 %v504
      %v1563 = vunpack.c.l.b16 %v505
      %v1564 = vunpack.c.l.b16 %v506
      %v1565 = vunpack.c.h.b16 %v506
      %v1566 = vunpack.c.l.b16 %v507
      %v1567 = vunpack.c.h.b16 %v507
      %v1568 = vunpack.c.l.b16 %v508
      %v1569 = vunpack.c.l.b16 %v509
      %v1570 = vunpack.c.h.b16 %v509
      %v1571 = vunpack.c.l.b16 %v510
      %v1572 = vunpack.c.h.b16 %v510
      %v1573 = vunpack.c.l.b16 %v511
      %v1574 = vunpack.c.l.b16 %v512
      %v1575 = vunpack.c.h.b16 %v512
      %v1576 = vunpack.c.l.b16 %v513
      %v1577 = vunpack.c.h.b16 %v513
      %v1578 = vunpack.c.l.b16 %v514
      %v1579 = vunpack.c.l.b16 %v515
      %v1580 = vunpack.c.h.b16 %v515
      %v1581 = vunpack.c.l.b16 %v516
      %v1582 = vunpack.c.h.b16 %v516
      %v1583 = vunpack.c.l.b16 %v517
      %v1584 = vunpack.c.l.b16 %v518
      %v1585 = vunpack.c.h.b16 %v518
      %v1586 = vunpack.c.l.b16 %v519
      %v1587 = vunpack.c.h.b16 %v519
      %v1588 = vunpack.c.l.b16 %v520
      %v1589 = vunpack.c.l.b16 %v521
      %v1590 = vunpack.c.h.b16 %v521
      %v1591 = vunpack.c.l.b16 %v522
      %v1592 = vunpack.c.h.b16 %v522
      %v1593 = vunpack.c.l.b16 %v523
      %v1594 = vunpack.c.l.b16 %v524
      %v1595 = vunpack.c.h.b16 %v524
      %v1596 = vunpack.c.l.b16 %v525
      %v1597 = vunpack.c.h.b16 %v525
      %v1598 = vunpack.c.l.b16 %v526
      %v1599 = vunpack.c.l.b16 %v527
      %v1600 = vunpack.c.h.b16 %v527
      %v1601 = vunpack.c.l.b16 %v528
      %v1602 = vunpack.c.h.b16 %v528
      %v1603 = vunpack.c.l.b16 %v529
      %v1604 = vunpack.c.l.b16 %v530
      %v1605 = vunpack.c.h.b16 %v530
      %v1606 = vunpack.c.l.b16 %v531
      %v1607 = vunpack.c.h.b16 %v531
      %v1608 = vunpack.c.l.b16 %v532
      %v1609 = vunpack.c.l.b16 %v533
      %v1610 = vunpack.c.h.b16 %v533
      %v1611 = vunpack.c.l.b16 %v534
      %v1612 = vunpack.c.h.b16 %v534
      %v1613 = vunpack.c.l.b16 %v535
      %v1614 = vunpack.c.l.b16 %v536
      %v1615 = vunpack.c.h.b16 %v536
      %v1616 = vunpack.c.l.b16 %v537
      %v1617 = vunpack.c.h.b16 %v537
      %v1618 = vunpack.c.l.b16 %v538
      %v1619 = vunpack.c.l.b16 %v539
      %v1620 = vunpack.c.h.b16 %v539
      %v1621 = vunpack.c.l.b16 %v540
      %v1622 = vunpack.c.h.b16 %v540
      %v1623 = vunpack.c.l.b16 %v541
      %v1624 = vunpack.c.l.b16 %v542
      %v1625 = vunpack.c.h.b16 %v542
      %v1626 = vunpack.c.l.b16 %v543
      %v1627 = vunpack.c.h.b16 %v543
      %v1628 = vunpack.c.l.b16 %v544
      %v1629 = vunpack.c.l.b16 %v545
      %v1630 = vunpack.c.h.b16 %v545
      %v1631 = vunpack.c.l.b16 %v546
      %v1632 = vunpack.c.h.b16 %v546
      %v1633 = vunpack.c.l.b16 %v547
      %v1634 = vunpack.c.l.b16 %v548
      %v1635 = vunpack.c.h.b16 %v548
      %v1636 = vunpack.c.l.b16 %v549
      %v1637 = vunpack.c.h.b16 %v549
      %v1638 = vunpack.c.l.b16 %v550
      %v1639 = vunpack.c.l.b16 %v551
      %v1640 = vunpack.c.h.b16 %v551
      %v1641 = vunpack.c.l.b16 %v552
      %v1642 = vunpack.c.h.b16 %v552
      %v1643 = vunpack.c.l.b16 %v553
      %v1644 = vunpack.c.l.b16 %v554
      %v1645 = vunpack.c.h.b16 %v554
      %v1646 = vunpack.c.l.b16 %v555
      %v1647 = vunpack.c.h.b16 %v555
      %v1648 = vunpack.c.l.b16 %v556
      %v1649 = vunpack.c.l.b16 %v557
      %v1650 = vunpack.c.h.b16 %v557
      %v1651 = vunpack.c.l.b16 %v558
      %v1652 = vunpack.c.h.b16 %v558
      %v1653 = vunpack.c.l.b16 %v559
      %v1654 = vunpack.c.l.b16 %v560
      %v1655 = vunpack.c.h.b16 %v560
      %v1656 = vunpack.c.l.b16 %v561
      %v1657 = vunpack.c.h.b16 %v561
      %v1658 = vunpack.c.l.b16 %v562
      %v1659 = vpack.c.b16 %v1024, %v1019
      %v1660 = vpack.c.b16 %v1025, %v1020
      %v1661 = vpack.c.b16 %v1026, %v1021
      %v1662 = vpack.c.b16 %v1027, %v1022
      %v1663 = vpack.c.b16 %v1028, %v1023
      %v1664 = vpack.c.b16 %v1034, %v1029
      %v1665 = vpack.c.b16 %v1035, %v1030
      %v1666 = vpack.c.b16 %v1036, %v1031
      %v1667 = vpack.c.b16 %v1037, %v1032
      %v1668 = vpack.c.b16 %v1038, %v1033
      %v1669 = vpack.c.b16 %v1044, %v1039
      %v1670 = vpack.c.b16 %v1045, %v1040
      %v1671 = vpack.c.b16 %v1046, %v1041
      %v1672 = vpack.c.b16 %v1047, %v1042
      %v1673 = vpack.c.b16 %v1048, %v1043
      %v1674 = vpack.c.b16 %v1054, %v1049
      %v1675 = vpack.c.b16 %v1055, %v1050
      %v1676 = vpack.c.b16 %v1056, %v1051
      %v1677 = vpack.c.b16 %v1057, %v1052
      %v1678 = vpack.c.b16 %v1058, %v1053
      %v1679 = vpack.c.b16 %v1064, %v1059
      %v1680 = vpack.c.b16 %v1065, %v1060
      %v1681 = vpack.c.b16 %v1066, %v1061
      %v1682 = vpack.c.b16 %v1067, %v1062
      %v1683 = vpack.c.b16 %v1068, %v1063
      %v1684 = vpack.c.b16 %v1074, %v1069
      %v1685 = vpack.c.b16 %v1075, %v1070
      %v1686 = vpack.c.b16 %v1076, %v1071
      %v1687 = vpack.c.b16 %v1077, %v1072
      %v1688 = vpack.c.b16 %v1078, %v1073
      %v1689 = vpack.c.b16 %v1084, %v1079
      %v1690 = vpack.c.b16 %v1085, %v1080
      %v1691 = vpack.c.b16 %v1086, %v1081
      %v1692 = vpack.c.b16 %v1087, %v1082
      %v1693 = vpack.c.b16 %v1088, %v1083
      %v1694 = vpack.c.b16 %v1094, %v1089
      %v1695 = vpack.c.b16 %v1095, %v1090
      %v1696 = vpack.c.b16 %v1096, %v1091
      %v1697 = vpack.c.b16 %v1097, %v1092
      %v1698 = vpack.c.b16 %v1098, %v1093
      %v1699 = vpack.c.b16 %v1104, %v1099
      %v1700 = vpack.c.b16 %v1105, %v1100
      %v1701 = vpack.c.b16 %v1106, %v1101
      %v1702 = vpack.c.b16 %v1107, %v1102
      %v1703 = vpack.c.b16 %v1108, %v1103
      %v1704 = vpack.c.b16 %v1114, %v1109
      %v1705 = vpack.c.b16 %v1115, %v1110
      %v1706 = vpack.c.b16 %v1116, %v1111
      %v1707 = vpack.c.b16 %v1117, %v1112
      %v1708 = vpack.c.b16 %v1118, %v1113
      %v1709 = vpack.c.b16 %v1124, %v1119
      %v1710 = vpack.c.b16 %v1125, %v1120
      %v1711 = vpack.c.b16 %v1126, %v1121
      %v1712 = vpack.c.b16 %v1127, %v1122
      %v1713 = vpack.c.b16 %v1128, %v1123
      %v1714 = vpack.c.b16 %v1134, %v1129
      %v1715 = vpack.c.b16 %v1135, %v1130
      %v1716 = vpack.c.b16 %v1136, %v1131
      %v1717 = vpack.c.b16 %v1137, %v1132
      %v1718 = vpack.c.b16 %v1138, %v1133
      %v1719 = vpack.c.b16 %v1144, %v1139
      %v1720 = vpack.c.b16 %v1145, %v1140
      %v1721 = vpack.c.b16 %v1146, %v1141
      %v1722 = vpack.c.b16 %v1147, %v1142
      %v1723 = vpack.c.b16 %v1148, %v1143
      %v1724 = vpack.c.b16 %v1154, %v1149
      %v1725 = vpack.c.b16 %v1155, %v1150
      %v1726 = vpack.c.b16 %v1156, %v1151
      %v1727 = vpack.c.b16 %v1157, %v1152
      %v1728 = vpack.c.b16 %v1158, %v1153
      %v1729 = vpack.c.b16 %v1164, %v1159
      %v1730 = vpack.c.b16 %v1165, %v1160
      %v1731 = vpack.c.b16 %v1166, %v1161
      %v1732 = vpack.c.b16 %v1167, %v1162
      %v1733 = vpack.c.b16 %v1168, %v1163
      %v1734 = vpack.c.b16 %v1174, %v1169
      %v1735 = vpack.c.b16 %v1175, %v1170
      %v1736 = vpack.c.b16 %v1176, %v1171
      %v1737 = vpack.c.b16 %v1177, %v1172
      %v1738 = vpack.c.b16 %v1178, %v1173
      %v1739 = vpack.c.b16 %v1184, %v1179
      %v1740 = vpack.c.b16 %v1185, %v1180
      %v1741 = vpack.c.b16 %v1186, %v1181
      %v1742 = vpack.c.b16 %v1187, %v1182
      %v1743 = vpack.c.b16 %v1188, %v1183
      %v1744 = vpack.c.b16 %v1194, %v1189
      %v1745 = vpack.c.b16 %v1195, %v1190
      %v1746 = vpack.c.b16 %v1196, %v1191
      %v1747 = vpack.c.b16 %v1197, %v1192
      %v1748 = vpack.c.b16 %v1198, %v1193
      %v1749 = vpack.c.b16 %v1204, %v1199
      %v1750 = vpack.c.b16 %v1205, %v1200
      %v1751 = vpack.c.b16 %v1206, %v1201
      %v1752 = vpack.c.b16 %v1207, %v1202
      %v1753 = vpack.c.b16 %v1208, %v1203
      %v1754 = vpack.c.b16 %v1214, %v1209
      %v1755 = vpack.c.b16 %v1215, %v1210
      %v1756 = vpack.c.b16 %v1216, %v1211
      %v1757 = vpack.c.b16 %v1217, %v1212
      %v1758 = vpack.c.b16 %v1218, %v1213
      %v1759 = vpack.c.b16 %v1224, %v1219
      %v1760 = vpack.c.b16 %v1225, %v1220
      %v1761 = vpack.c.b16 %v1226, %v1221
      %v1762 = vpack.c.b16 %v1227, %v1222
      %v1763 = vpack.c.b16 %v1228, %v1223
      %v1764 = vpack.c.b16 %v1234, %v1229
      %v1765 = vpack.c.b16 %v1235, %v1230
      %v1766 = vpack.c.b16 %v1236, %v1231
      %v1767 = vpack.c.b16 %v1237, %v1232
      %v1768 = vpack.c.b16 %v1238, %v1233
      %v1769 = vpack.c.b16 %v1244, %v1239
      %v1770 = vpack.c.b16 %v1245, %v1240
      %v1771 = vpack.c.b16 %v1246, %v1241
      %v1772 = vpack.c.b16 %v1247, %v1242
      %v1773 = vpack.c.b16 %v1248, %v1243
      %v1774 = vpack.c.b16 %v1254, %v1249
      %v1775 = vpack.c.b16 %v1255, %v1250
      %v1776 = vpack.c.b16 %v1256, %v1251
      %v1777 = vpack.c.b16 %v1257, %v1252
      %v1778 = vpack.c.b16 %v1258, %v1253
      %v1779 = vpack.c.b16 %v1264, %v1259
      %v1780 = vpack.c.b16 %v1265, %v1260
      %v1781 = vpack.c.b16 %v1266, %v1261
      %v1782 = vpack.c.b16 %v1267, %v1262
      %v1783 = vpack.c.b16 %v1268, %v1263
      %v1784 = vpack.c.b16 %v1274, %v1269
      %v1785 = vpack.c.b16 %v1275, %v1270
      %v1786 = vpack.c.b16 %v1276, %v1271
      %v1787 = vpack.c.b16 %v1277, %v1272
      %v1788 = vpack.c.b16 %v1278, %v1273
      %v1789 = vpack.c.b16 %v1284, %v1279
      %v1790 = vpack.c.b16 %v1285, %v1280
      %v1791 = vpack.c.b16 %v1286, %v1281
      %v1792 = vpack.c.b16 %v1287, %v1282
      %v1793 = vpack.c.b16 %v1288, %v1283
      %v1794 = vpack.c.b16 %v1294, %v1289
      %v1795 = vpack.c.b16 %v1295, %v1290
      %v1796 = vpack.c.b16 %v1296, %v1291
      %v1797 = vpack.c.b16 %v1297, %v1292
      %v1798 = vpack.c.b16 %v1298, %v1293
      %v1799 = vpack.c.b16 %v1304, %v1299
      %v1800 = vpack.c.b16 %v1305, %v1300
      %v1801 = vpack.c.b16 %v1306, %v1301
      %v1802 = vpack.c.b16 %v1307, %v1302
      %v1803 = vpack.c.b16 %v1308, %v1303
      %v1804 = vpack.c.b16 %v1314, %v1309
      %v1805 = vpack.c.b16 %v1315, %v1310
      %v1806 = vpack.c.b16 %v1316, %v1311
      %v1807 = vpack.c.b16 %v1317, %v1312
      %v1808 = vpack.c.b16 %v1318, %v1313
      %v1809 = vpack.c.b16 %v1324, %v1319
      %v1810 = vpack.c.b16 %v1325, %v1320
      %v1811 = vpack.c.b16 %v1326, %v1321
      %v1812 = vpack.c.b16 %v1327, %v1322
      %v1813 = vpack.c.b16 %v1328, %v1323
      %v1814 = vpack.c.b16 %v1334, %v1329
      %v1815 = vpack.c.b16 %v1335, %v1330
      %v1816 = vpack.c.b16 %v1336, %v1331
      %v1817 = vpack.c.b16 %v1337, %v1332
      %v1818 = vpack.c.b16 %v1338, %v1333
      %v1819 = vpack.c.b16 %v1344, %v1339
      %v1820 = vpack.c.b16 %v1345, %v1340
      %v1821 = vpack.c.b16 %v1346, %v1341
      %v1822 = vpack.c.b16 %v1347, %v1342
      %v1823 = vpack.c.b16 %v1348, %v1343
      %v1824 = vpack.c.b16 %v1354, %v1349
      %v1825 = vpack.c.b16 %v1355, %v1350
      %v1826 = vpack.c.b16 %v1356, %v1351
      %v1827 = vpack.c.b16 %v1357, %v1352
      %v1828 = vpack.c.b16 %v1358, %v1353
      %v1829 = vpack.c.b16 %v1364, %v1359
      %v1830 = vpack.c.b16 %v1365, %v1360
      %v1831 = vpack.c.b16 %v1366, %v1361
      %v1832 = vpack.c.b16 %v1367, %v1362
      %v1833 = vpack.c.b16 %v1368, %v1363
      %v1834 = vpack.c.b16 %v1374, %v1369
      %v1835 = vpack.c.b16 %v1375, %v1370
      %v1836 = vpack.c.b16 %v1376, %v1371
      %v1837 = vpack.c.b16 %v1377, %v1372
      %v1838 = vpack.c.b16 %v1378, %v1373
      %v1839 = vpack.c.b16 %v1384, %v1379
      %v1840 = vpack.c.b16 %v1385, %v1380
      %v1841 = vpack.c.b16 %v1386, %v1381
      %v1842 = vpack.c.b16 %v1387, %v1382
      %v1843 = vpack.c.b16 %v1388, %v1383
      %v1844 = vpack.c.b16 %v1394, %v1389
      %v1845 = vpack.c.b16 %v1395, %v1390
      %v1846 = vpack.c.b16 %v1396, %v1391
      %v1847 = vpack.c.b16 %v1397, %v1392
      %v1848 = vpack.c.b16 %v1398, %v1393
      %v1849 = vpack.c.b16 %v1404, %v1399
      %v1850 = vpack.c.b16 %v1405, %v1400
      %v1851 = vpack.c.b16 %v1406, %v1401
      %v1852 = vpack.c.b16 %v1407, %v1402
      %v1853 = vpack.c.b16 %v1408, %v1403
      %v1854 = vpack.c.b16 %v1414, %v1409
      %v1855 = vpack.c.b16 %v1415, %v1410
      %v1856 = vpack.c.b16 %v1416, %v1411
      %v1857 = vpack.c.b16 %v1417, %v1412
      %v1858 = vpack.c.b16 %v1418, %v1413
      %v1859 = vpack.c.b16 %v1424, %v1419
      %v1860 = vpack.c.b16 %v1425, %v1420
      %v1861 = vpack.c.b16 %v1426, %v1421
      %v1862 = vpack.c.b16 %v1427, %v1422
      %v1863 = vpack.c.b16 %v1428, %v1423
      %v1864 = vpack.c.b16 %v1434, %v1429
      %v1865 = vpack.c.b16 %v1435, %v1430
      %v1866 = vpack.c.b16 %v1436, %v1431
      %v1867 = vpack.c.b16 %v1437, %v1432
      %v1868 = vpack.c.b16 %v1438, %v1433
      %v1869 = vpack.c.b16 %v1444, %v1439
      %v1870 = vpack.c.b16 %v1445, %v1440
      %v1871 = vpack.c.b16 %v1446, %v1441
      %v1872 = vpack.c.b16 %v1447, %v1442
      %v1873 = vpack.c.b16 %v1448, %v1443
      %v1874 = vpack.c.b16 %v1454, %v1449
      %v1875 = vpack.c.b16 %v1455, %v1450
      %v1876 = vpack.c.b16 %v1456, %v1451
      %v1877 = vpack.c.b16 %v1457, %v1452
      %v1878 = vpack.c.b16 %v1458, %v1453
      %v1879 = vpack.c.b16 %v1464, %v1459
      %v1880 = vpack.c.b16 %v1465, %v1460
      %v1881 = vpack.c.b16 %v1466, %v1461
      %v1882 = vpack.c.b16 %v1467, %v1462
      %v1883 = vpack.c.b16 %v1468, %v1463
      %v1884 = vpack.c.b16 %v1474, %v1469
      %v1885 = vpack.c.b16 %v1475, %v1470
      %v1886 = vpack.c.b16 %v1476, %v1471
      %v1887 = vpack.c.b16 %v1477, %v1472
      %v1888 = vpack.c.b16 %v1478, %v1473
      %v1889 = vpack.c.b16 %v1484, %v1479
      %v1890 = vpack.c.b16 %v1485, %v1480
      %v1891 = vpack.c.b16 %v1486, %v1481
      %v1892 = vpack.c.b16 %v1487, %v1482
      %v1893 = vpack.c.b16 %v1488, %v1483
      %v1894 = vpack.c.b16 %v1494, %v1489
      %v1895 = vpack.c.b16 %v1495, %v1490
      %v1896 = vpack.c.b16 %v1496, %v1491
      %v1897 = vpack.c.b16 %v1497, %v1492
      %v1898 = vpack.c.b16 %v1498, %v1493
      %v1899 = vpack.c.b16 %v1504, %v1499
      %v1900 = vpack.c.b16 %v1505, %v1500
      %v1901 = vpack.c.b16 %v1506, %v1501
      %v1902 = vpack.c.b16 %v1507, %v1502
      %v1903 = vpack.c.b16 %v1508, %v1503
      %v1904 = vpack.c.b16 %v1514, %v1509
      %v1905 = vpack.c.b16 %v1515, %v1510
      %v1906 = vpack.c.b16 %v1516, %v1511
      %v1907 = vpack.c.b16 %v1517, %v1512
      %v1908 = vpack.c.b16 %v1518, %v1513
      %v1909 = vpack.c.b16 %v1524, %v1519
      %v1910 = vpack.c.b16 %v1525, %v1520
      %v1911 = vpack.c.b16 %v1526, %v1521
      %v1912 = vpack.c.b16 %v1527, %v1522
      %v1913 = vpack.c.b16 %v1528, %v1523
      %v1914 = vpack.c.b16 %v1534, %v1529
      %v1915 = vpack.c.b16 %v1535, %v1530
      %v1916 = vpack.c.b16 %v1536, %v1531
      %v1917 = vpack.c.b16 %v1537, %v1532
      %v1918 = vpack.c.b16 %v1538, %v1533
      %v1919 = vpack.c.b16 %v1544, %v1539
      %v1920 = vpack.c.b16 %v1545, %v1540
      %v1921 = vpack.c.b16 %v1546, %v1541
      %v1922 = vpack.c.b16 %v1547, %v1542
      %v1923 = vpack.c.b16 %v1548, %v1543
      %v1924 = vpack.c.b16 %v1554, %v1549
      %v1925 = vpack.c.b16 %v1555, %v1550
      %v1926 = vpack.c.b16 %v1556, %v1551
      %v1927 = vpack.c.b16 %v1557, %v1552
      %v1928 = vpack.c.b16 %v1558, %v1553
      %v1929 = vpack.c.b16 %v1564, %v1559
      %v1930 = vpack.c.b16 %v1565, %v1560
      %v1931 = vpack.c.b16 %v1566, %v1561
      %v1932 = vpack.c.b16 %v1567, %v1562
      %v1933 = vpack.c.b16 %v1568, %v1563
      %v1934 = vpack.c.b16 %v1574, %v1569
      %v1935 = vpack.c.b16 %v1575, %v1570
      %v1936 = vpack.c.b16 %v1576, %v1571
      %v1937 = vpack.c.b16 %v1577, %v1572
      %v1938 = vpack.c.b16 %v1578, %v1573
      %v1939 = vpack.c.b16 %v1584, %v1579
      %v1940 = vpack.c.b16 %v1585, %v1580
      %v1941 = vpack.c.b16 %v1586, %v1581
      %v1942 = vpack.c.b16 %v1587, %v1582
      %v1943 = vpack.c.b16 %v1588, %v1583
      %v1944 = vpack.c.b16 %v1594, %v1589
      %v1945 = vpack.c.b16 %v1595, %v1590
      %v1946 = vpack.c.b16 %v1596, %v1591
      %v1947 = vpack.c.b16 %v1597, %v1592
      %v1948 = vpack.c.b16 %v1598, %v1593
      %v1949 = vpack.c.b16 %v1604, %v1599
      %v1950 = vpack.c.b16 %v1605, %v1600
      %v1951 = vpack.c.b16 %v1606, %v1601
      %v1952 = vpack.c.b16 %v1607, %v1602
      %v1953 = vpack.c.b16 %v1608, %v1603
      %v1954 = vpack.c.b16 %v1614, %v1609
      %v1955 = vpack.c.b16 %v1615, %v1610
      %v1956 = vpack.c.b16 %v1616, %v1611
      %v1957 = vpack.c.b16 %v1617, %v1612
      %v1958 = vpack.c.b16 %v1618, %v1613
      %v1959 = vpack.c.b16 %v1624, %v1619
      %v1960 = vpack.c.b16 %v1625, %v1620
      %v1961 = vpack.c.b16 %v1626, %v1621
      %v1962 = vpack.c.b16 %v1627, %v1622
      %v1963 = vpack.c.b16 %v1628, %v1623
      %v1964 = vpack.c.b16 %v1634, %v1629
      %v1965 = vpack.c.b16 %v1635, %v1630
      %v1966 = vpack.c.b16 %v1636, %v1631
      %v1967 = vpack.c.b16 %v1637, %v1632
      %v1968 = vpack.c.b16 %v1638, %v1633
      %v1969 = vpack.c.b16 %v1644, %v1639
      %v1970 = vpack.c.b16 %v1645, %v1640
      %v1971 = vpack.c.b16 %v1646, %v1641
      %v1972 = vpack.c.b16 %v1647, %v1642
      %v1973 = vpack.c.b16 %v1648, %v1643
      %v1974 = vpack.c.b16 %v1654, %v1649
      %v1975 = vpack.c.b16 %v1655, %v1650
      %v1976 = vpack.c.b16 %v1656, %v1651
      %v1977 = vpack.c.b16 %v1657, %v1652
      %v1978 = vpack.c.b16 %v1658, %v1653
      %v2307 = vunpack.c.l.b16 %v563
      %v2308 = vunpack.c.l.b16 %v564
      %v2309 = vunpack.c.l.b16 %v565
      %v2310 = vunpack.c.l.b16 %v566
      %v2311 = vunpack.c.l.b16 %v567
      %v2312 = vunpack.c.l.b16 %v568
      %v2313 = vunpack.c.l.b16 %v569
      %v2314 = vunpack.c.l.b16 %v570
      %v2315 = vunpack.c.l.b16 %v571
      %v2316 = vunpack.c.l.b16 %v572
      %v2317 = vunpack.c.l.b16 %v573
      %v2318 = vunpack.c.l.b16 %v574
      %v2319 = vunpack.c.l.b16 %v575
      %v2320 = vunpack.c.l.b16 %v576
      %v2321 = vunpack.c.l.b16 %v577
      %v2322 = vunpack.c.l.b16 %v578
      %v2323 = vunpack.c.l.b16 %v579
      %v2324 = vunpack.c.l.b16 %v580
      %v2325 = vunpack.c.l.b16 %v581
      %v2326 = vunpack.c.l.b16 %v582
      %v2327 = vunpack.c.l.b16 %v583
      %v2328 = vunpack.c.l.b16 %v584
      %v2329 = vunpack.c.l.b16 %v585
      %v2330 = vunpack.c.l.b16 %v586
      %v2331 = vunpack.c.l.b16 %v587
      %v2332 = vunpack.c.l.b16 %v588
      %v2333 = vunpack.c.l.b16 %v589
      %v2334 = vunpack.c.l.b16 %v590
      %v2335 = vunpack.c.l.b16 %v591
      %v2336 = vunpack.c.l.b16 %v592
      %v2337 = vunpack.c.l.b16 %v593
      %v2338 = vunpack.c.l.b16 %v594
      %v2339 = vunpack.c.l.b16 %v595
      %v2340 = vunpack.c.l.b16 %v596
      %v2341 = vunpack.c.l.b16 %v597
      %v2342 = vunpack.c.l.b16 %v598
      %v2343 = vunpack.c.l.b16 %v599
      %v2344 = vunpack.c.l.b16 %v600
      %v2345 = vunpack.c.l.b16 %v601
      %v2346 = vunpack.c.l.b16 %v602
      %v2347 = vunpack.c.l.b16 %v603
      %v2348 = vunpack.c.l.b16 %v604
      %v2349 = vunpack.c.l.b16 %v605
      %v2350 = vunpack.c.l.b16 %v606
      %v2351 = vunpack.c.l.b16 %v607
      %v2352 = vunpack.c.l.b16 %v608
      %v2353 = vunpack.c.l.b16 %v609
      %v2354 = vunpack.c.l.b16 %v610
      %v2355 = vunpack.c.l.b16 %v611
      %v2356 = vunpack.c.l.b16 %v612
      %v2357 = vunpack.c.l.b16 %v613
      %v2358 = vunpack.c.l.b16 %v614
      %v2359 = vunpack.c.l.b16 %v615
      %v2360 = vunpack.c.l.b16 %v616
      %v2361 = vunpack.c.l.b16 %v617
      %v2362 = vunpack.c.l.b16 %v618
      %v2363 = vunpack.c.l.b16 %v619
      %v2364 = vunpack.c.l.b16 %v620
      %v2365 = vunpack.c.l.b16 %v621
      %v2366 = vunpack.c.l.b16 %v622
      %v2367 = vunpack.c.l.b16 %v623
      %v2368 = vunpack.c.l.b16 %v624
      %v2369 = vunpack.c.l.b16 %v625
      %v2370 = vunpack.c.l.b16 %v626
      %v2371 = vunpack.c.l.b16 %v627
      %v2372 = vunpack.c.l.b16 %v628
      %v2373 = vunpack.c.l.b16 %v629
      %v2374 = vunpack.c.l.b16 %v630
      %v2375 = vunpack.c.l.b16 %v631
      %v2376 = vunpack.c.l.b16 %v632
      %v2377 = vunpack.c.l.b16 %v633
      %v2378 = vunpack.c.l.b16 %v634
      %v2379 = vpack.c.b16 %v2308, %v2307
      %v2380 = vpack.c.b16 %v2310, %v2309
      %v2381 = vpack.c.b16 %v2312, %v2311
      %v2382 = vpack.c.b16 %v2314, %v2313
      %v2383 = vpack.c.b16 %v2316, %v2315
      %v2384 = vpack.c.b16 %v2318, %v2317
      %v2385 = vpack.c.b16 %v2320, %v2319
      %v2386 = vpack.c.b16 %v2322, %v2321
      %v2387 = vpack.c.b16 %v2324, %v2323
      %v2388 = vpack.c.b16 %v2326, %v2325
      %v2389 = vpack.c.b16 %v2328, %v2327
      %v2390 = vpack.c.b16 %v2330, %v2329
      %v2391 = vpack.c.b16 %v2332, %v2331
      %v2392 = vpack.c.b16 %v2334, %v2333
      %v2393 = vpack.c.b16 %v2336, %v2335
      %v2394 = vpack.c.b16 %v2338, %v2337
      %v2395 = vpack.c.b16 %v2340, %v2339
      %v2396 = vpack.c.b16 %v2342, %v2341
      %v2397 = vpack.c.b16 %v2344, %v2343
      %v2398 = vpack.c.b16 %v2346, %v2345
      %v2399 = vpack.c.b16 %v2348, %v2347
      %v2400 = vpack.c.b16 %v2350, %v2349
      %v2401 = vpack.c.b16 %v2352, %v2351
      %v2402 = vpack.c.b16 %v2354, %v2353
      %v2403 = vpack.c.b16 %v2356, %v2355
      %v2404 = vpack.c.b16 %v2358, %v2357
      %v2405 = vpack.c.b16 %v2360, %v2359
      %v2406 = vpack.c.b16 %v2362, %v2361
      %v2407 = vpack.c.b16 %v2364, %v2363
      %v2408 = vpack.c.b16 %v2366, %v2365
      %v2409 = vpack.c.b16 %v2368, %v2367
      %v2410 = vpack.c.b16 %v2370, %v2369
      %v2411 = vpack.c.b16 %v2372, %v2371
      %v2412 = vpack.c.b16 %v2374, %v2373
      %v2413 = vpack.c.b16 %v2376, %v2375
      %v2414 = vpack.c.b16 %v2378, %v2377
      %vm2451 = vcmask 523264
      %v2453 = vsel %vm2451, %v1663, 0
      %v2456 = vsel %vm2451, %v1668, 0
      %v2459 = vsel %vm2451, %v1673, 0
      %v2462 = vsel %vm2451, %v1678, 0
      %v2465 = vsel %vm2451, %v1683, 0
      %v2468 = vsel %vm2451, %v1688, 0
      %v2471 = vsel %vm2451, %v1693, 0
      %v2474 = vsel %vm2451, %v1698, 0
      %v2477 = vsel %vm2451, %v1703, 0
      %v2480 = vsel %vm2451, %v1708, 0
      %v2483 = vsel %vm2451, %v1713, 0
      %v2486 = vsel %vm2451, %v1718, 0
      %v2489 = vsel %vm2451, %v1723, 0
      %v2492 = vsel %vm2451, %v1728, 0
      %v2495 = vsel %vm2451, %v1733, 0
      %v2498 = vsel %vm2451, %v1738, 0
      %v2501 = vsel %vm2451, %v1743, 0
      %v2504 = vsel %vm2451, %v1748, 0
      %v2507 = vsel %vm2451, %v1753, 0
      %v2510 = vsel %vm2451, %v1758, 0
      %v2513 = vsel %vm2451, %v1763, 0
      %v2516 = vsel %vm2451, %v1768, 0
      %v2519 = vsel %vm2451, %v1773, 0
      %v2522 = vsel %vm2451, %v1778, 0
      %v2525 = vsel %vm2451, %v1783, 0
      %v2528 = vsel %vm2451, %v1788, 0
      %v2531 = vsel %vm2451, %v1793, 0
      %v2534 = vsel %vm2451, %v1798, 0
      %v2537 = vsel %vm2451, %v1803, 0
      %v2540 = vsel %vm2451, %v1808, 0
      %v2543 = vsel %vm2451, %v1813, 0
      %v2546 = vsel %vm2451, %v1818, 0
      %v2549 = vsel %vm2451, %v1823, 0
      %v2552 = vsel %vm2451, %v1828, 0
      %v2555 = vsel %vm2451, %v1833, 0
      %v2558 = vsel %vm2451, %v1838, 0
      %v2561 = vsel %vm2451, %v1843, 0
      %v2564 = vsel %vm2451, %v1848, 0
      %v2567 = vsel %vm2451, %v1853, 0
      %v2570 = vsel %vm2451, %v1858, 0
      %v2573 = vsel %vm2451, %v1863, 0
      %v2576 = vsel %vm2451, %v1868, 0
      %v2579 = vsel %vm2451, %v1873, 0
      %v2582 = vsel %vm2451, %v1878, 0
      %v2585 = vsel %vm2451, %v1883, 0
      %v2588 = vsel %vm2451, %v1888, 0
      %v2591 = vsel %vm2451, %v1893, 0
      %v2594 = vsel %vm2451, %v1898, 0
      %v2597 = vsel %vm2451, %v1903, 0
      %v2600 = vsel %vm2451, %v1908, 0
      %v2603 = vsel %vm2451, %v1913, 0
      %v2606 = vsel %vm2451, %v1918, 0
      %v2609 = vsel %vm2451, %v1923, 0
      %v2612 = vsel %vm2451, %v1928, 0
      %v2615 = vsel %vm2451, %v1933, 0
      %v2618 = vsel %vm2451, %v1938, 0
      %v2621 = vsel %vm2451, %v1943, 0
      %v2624 = vsel %vm2451, %v1948, 0
      %v2627 = vsel %vm2451, %v1953, 0
      %v2630 = vsel %vm2451, %v1958, 0
      %v2633 = vsel %vm2451, %v1963, 0
      %v2636 = vsel %vm2451, %v1968, 0
      %v2639 = vsel %vm2451, %v1973, 0
      %v2642 = vsel %vm2451, %v1978, 0
      %2644 = vmatprep.subr.bf16.mxu0 0
      %2645 = vmatpush1.bf16.msra.mxu0 %v2386
      %2646 = vmatprep.subr.bf16.mxu0 0
      %2647 = vmatpush1.bf16.msra.mxu0 %v2385
      %2648 = vmatprep.subr.bf16.mxu0 0
      %2649 = vmatpush1.bf16.msra.mxu0 %v2384
      %2650 = vmatprep.subr.bf16.mxu0 0
      %2651 = vmatpush1.bf16.msra.mxu0 %v2383
      %2652 = vmatprep.subr.bf16.mxu0 0
      %2653 = vmatpush1.bf16.msra.mxu0 %v2382
      %2654 = vmatprep.subr.bf16.mxu0 0
      %2655 = vmatpush1.bf16.msra.mxu0 %v2381
      %2656 = vmatprep.subr.bf16.mxu0 0
      %2657 = vmatpush1.bf16.msra.mxu0 %v2380
      %2658 = vmatprep.subr.bf16.mxu0 0
      %2659 = vmatpush1.bf16.msra.mxu0 %v2379
      %2660 = vmatprep.subr.bf16.mxu0 0
      %2661 = vmatpush2.bf16.msra.mxu0 %v2394
      %2662 = vmatprep.subr.bf16.mxu0 0
      %2663 = vmatpush2.bf16.msra.mxu0 %v2393
      %2664 = vmatprep.subr.bf16.mxu0 0
      %2665 = vmatpush2.bf16.msra.mxu0 %v2392
      %2666 = vmatprep.subr.bf16.mxu0 0
      %2667 = vmatpush2.bf16.msra.mxu0 %v2391
      %2668 = vmatprep.subr.bf16.mxu0 0
      %2669 = vmatpush2.bf16.msra.mxu0 %v2390
      %2670 = vmatprep.subr.bf16.mxu0 0
      %2671 = vmatpush2.bf16.msra.mxu0 %v2389
      %2672 = vmatprep.subr.bf16.mxu0 0
      %2673 = vmatpush2.bf16.msra.mxu0 %v2388
      %2674 = vmatprep.subr.bf16.mxu0 0
      %2675 = vmatpush2.bf16.msra.mxu0 %v2387
      %2676 = vmatprep.mubr.bf16.mxu0 %v1660
      %2677 = vmatmul.mubr.bf16.gmra.mxu0 %v1659
      %v2678 = vpop.f32.mrf.mxu0
      %v2679 = vadd.f32 0.0, %v2678
      %v2680 = vpop.f32.mrf.mxu0
      %v2681 = vpop.f32.mrf.mxu0
      %v2682 = vadd.f32 0.0, %v2681
      %v2683 = vpop.f32.mrf.mxu0
      %2684 = vmatprep.mubr.bf16.mxu0 %v1665
      %2685 = vmatmul.mubr.bf16.gmra.mxu0 %v1664
      %v2686 = vpop.f32.mrf.mxu0
      %v2687 = vadd.f32 0.0, %v2686
      %v2688 = vpop.f32.mrf.mxu0
      %v2689 = vpop.f32.mrf.mxu0
      %v2690 = vadd.f32 0.0, %v2689
      %v2691 = vpop.f32.mrf.mxu0
      %2692 = vmatprep.mubr.bf16.mxu0 %v1670
      %2693 = vmatmul.mubr.bf16.gmra.mxu0 %v1669
      %v2694 = vpop.f32.mrf.mxu0
      %v2695 = vadd.f32 0.0, %v2694
      %v2696 = vpop.f32.mrf.mxu0
      %v2697 = vpop.f32.mrf.mxu0
      %v2698 = vadd.f32 0.0, %v2697
      %v2699 = vpop.f32.mrf.mxu0
      %2700 = vmatprep.mubr.bf16.mxu0 %v1675
      %2701 = vmatmul.mubr.bf16.gmra.mxu0 %v1674
      %v2702 = vpop.f32.mrf.mxu0
      %v2703 = vadd.f32 0.0, %v2702
      %v2704 = vpop.f32.mrf.mxu0
      %v2705 = vpop.f32.mrf.mxu0
      %v2706 = vadd.f32 0.0, %v2705
      %v2707 = vpop.f32.mrf.mxu0
      %2708 = vmatprep.mubr.bf16.mxu0 %v1680
      %2709 = vmatmul.mubr.bf16.gmra.mxu0 %v1679
      %v2710 = vpop.f32.mrf.mxu0
      %v2711 = vadd.f32 0.0, %v2710
      %v2712 = vpop.f32.mrf.mxu0
      %v2713 = vpop.f32.mrf.mxu0
      %v2714 = vadd.f32 0.0, %v2713
      %v2715 = vpop.f32.mrf.mxu0
      %2716 = vmatprep.mubr.bf16.mxu0 %v1685
      %2717 = vmatmul.mubr.bf16.gmra.mxu0 %v1684
      %v2718 = vpop.f32.mrf.mxu0
      %v2719 = vadd.f32 0.0, %v2718
      %v2720 = vpop.f32.mrf.mxu0
      %v2721 = vpop.f32.mrf.mxu0
      %v2722 = vadd.f32 0.0, %v2721
      %v2723 = vpop.f32.mrf.mxu0
      %2724 = vmatprep.mubr.bf16.mxu0 %v1690
      %2725 = vmatmul.mubr.bf16.gmra.mxu0 %v1689
      %v2726 = vpop.f32.mrf.mxu0
      %v2727 = vadd.f32 0.0, %v2726
      %v2728 = vpop.f32.mrf.mxu0
      %v2729 = vpop.f32.mrf.mxu0
      %v2730 = vadd.f32 0.0, %v2729
      %v2731 = vpop.f32.mrf.mxu0
      %2732 = vmatprep.mubr.bf16.mxu0 %v1695
      %2733 = vmatmul.mubr.bf16.gmra.mxu0 %v1694
      %v2734 = vpop.f32.mrf.mxu0
      %v2735 = vadd.f32 0.0, %v2734
      %v2736 = vpop.f32.mrf.mxu0
      %v2737 = vpop.f32.mrf.mxu0
      %v2738 = vadd.f32 0.0, %v2737
      %v2739 = vpop.f32.mrf.mxu0
      %2740 = vmatprep.mubr.bf16.mxu0 %v1700
      %2741 = vmatmul.mubr.bf16.gmra.mxu0 %v1699
      %v2742 = vpop.f32.mrf.mxu0
      %v2743 = vadd.f32 0.0, %v2742
      %v2744 = vpop.f32.mrf.mxu0
      %v2745 = vpop.f32.mrf.mxu0
      %v2746 = vadd.f32 0.0, %v2745
      %v2747 = vpop.f32.mrf.mxu0
      %2748 = vmatprep.mubr.bf16.mxu0 %v1705
      %2749 = vmatmul.mubr.bf16.gmra.mxu0 %v1704
      %v2750 = vpop.f32.mrf.mxu0
      %v2751 = vadd.f32 0.0, %v2750
      %v2752 = vpop.f32.mrf.mxu0
      %v2753 = vpop.f32.mrf.mxu0
      %v2754 = vadd.f32 0.0, %v2753
      %v2755 = vpop.f32.mrf.mxu0
      %2756 = vmatprep.mubr.bf16.mxu0 %v1710
      %2757 = vmatmul.mubr.bf16.gmra.mxu0 %v1709
      %v2758 = vpop.f32.mrf.mxu0
      %v2759 = vadd.f32 0.0, %v2758
      %v2760 = vpop.f32.mrf.mxu0
      %v2761 = vpop.f32.mrf.mxu0
      %v2762 = vadd.f32 0.0, %v2761
      %v2763 = vpop.f32.mrf.mxu0
      %2764 = vmatprep.mubr.bf16.mxu0 %v1715
      %2765 = vmatmul.mubr.bf16.gmra.mxu0 %v1714
      %v2766 = vpop.f32.mrf.mxu0
      %v2767 = vadd.f32 0.0, %v2766
      %v2768 = vpop.f32.mrf.mxu0
      %v2769 = vpop.f32.mrf.mxu0
      %v2770 = vadd.f32 0.0, %v2769
      %v2771 = vpop.f32.mrf.mxu0
      %2772 = vmatprep.mubr.bf16.mxu0 %v1720
      %2773 = vmatmul.mubr.bf16.gmra.mxu0 %v1719
      %v2774 = vpop.f32.mrf.mxu0
      %v2775 = vadd.f32 0.0, %v2774
      %v2776 = vpop.f32.mrf.mxu0
      %v2777 = vpop.f32.mrf.mxu0
      %v2778 = vadd.f32 0.0, %v2777
      %v2779 = vpop.f32.mrf.mxu0
      %2780 = vmatprep.mubr.bf16.mxu0 %v1725
      %2781 = vmatmul.mubr.bf16.gmra.mxu0 %v1724
      %v2782 = vpop.f32.mrf.mxu0
      %v2783 = vadd.f32 0.0, %v2782
      %v2784 = vpop.f32.mrf.mxu0
      %v2785 = vpop.f32.mrf.mxu0
      %v2786 = vadd.f32 0.0, %v2785
      %v2787 = vpop.f32.mrf.mxu0
      %2788 = vmatprep.mubr.bf16.mxu0 %v1730
      %2789 = vmatmul.mubr.bf16.gmra.mxu0 %v1729
      %v2790 = vpop.f32.mrf.mxu0
      %v2791 = vadd.f32 0.0, %v2790
      %v2792 = vpop.f32.mrf.mxu0
      %v2793 = vpop.f32.mrf.mxu0
      %v2794 = vadd.f32 0.0, %v2793
      %v2795 = vpop.f32.mrf.mxu0
      %2796 = vmatprep.mubr.bf16.mxu0 %v1735
      %2797 = vmatmul.mubr.bf16.gmra.mxu0 %v1734
      %v2798 = vpop.f32.mrf.mxu0
      %v2799 = vadd.f32 0.0, %v2798
      %v2800 = vpop.f32.mrf.mxu0
      %v2801 = vpop.f32.mrf.mxu0
      %v2802 = vadd.f32 0.0, %v2801
      %v2803 = vpop.f32.mrf.mxu0
      %2804 = vmatprep.mubr.bf16.mxu0 %v1740
      %2805 = vmatmul.mubr.bf16.gmra.mxu0 %v1739
      %v2806 = vpop.f32.mrf.mxu0
      %v2807 = vadd.f32 0.0, %v2806
      %v2808 = vpop.f32.mrf.mxu0
      %v2809 = vpop.f32.mrf.mxu0
      %v2810 = vadd.f32 0.0, %v2809
      %v2811 = vpop.f32.mrf.mxu0
      %2812 = vmatprep.mubr.bf16.mxu0 %v1745
      %2813 = vmatmul.mubr.bf16.gmra.mxu0 %v1744
      %v2814 = vpop.f32.mrf.mxu0
      %v2815 = vadd.f32 0.0, %v2814
      %v2816 = vpop.f32.mrf.mxu0
      %v2817 = vpop.f32.mrf.mxu0
      %v2818 = vadd.f32 0.0, %v2817
      %v2819 = vpop.f32.mrf.mxu0
      %2820 = vmatprep.mubr.bf16.mxu0 %v1750
      %2821 = vmatmul.mubr.bf16.gmra.mxu0 %v1749
      %v2822 = vpop.f32.mrf.mxu0
      %v2823 = vadd.f32 0.0, %v2822
      %v2824 = vpop.f32.mrf.mxu0
      %v2825 = vpop.f32.mrf.mxu0
      %v2826 = vadd.f32 0.0, %v2825
      %v2827 = vpop.f32.mrf.mxu0
      %2828 = vmatprep.mubr.bf16.mxu0 %v1755
      %2829 = vmatmul.mubr.bf16.gmra.mxu0 %v1754
      %v2830 = vpop.f32.mrf.mxu0
      %v2831 = vadd.f32 0.0, %v2830
      %v2832 = vpop.f32.mrf.mxu0
      %v2833 = vpop.f32.mrf.mxu0
      %v2834 = vadd.f32 0.0, %v2833
      %v2835 = vpop.f32.mrf.mxu0
      %2836 = vmatprep.mubr.bf16.mxu0 %v1760
      %2837 = vmatmul.mubr.bf16.gmra.mxu0 %v1759
      %v2838 = vpop.f32.mrf.mxu0
      %v2839 = vadd.f32 0.0, %v2838
      %v2840 = vpop.f32.mrf.mxu0
      %v2841 = vpop.f32.mrf.mxu0
      %v2842 = vadd.f32 0.0, %v2841
      %v2843 = vpop.f32.mrf.mxu0
      %2844 = vmatprep.mubr.bf16.mxu0 %v1765
      %2845 = vmatmul.mubr.bf16.gmra.mxu0 %v1764
      %v2846 = vpop.f32.mrf.mxu0
      %v2847 = vadd.f32 0.0, %v2846
      %v2848 = vpop.f32.mrf.mxu0
      %v2849 = vpop.f32.mrf.mxu0
      %v2850 = vadd.f32 0.0, %v2849
      %v2851 = vpop.f32.mrf.mxu0
      %2852 = vmatprep.mubr.bf16.mxu0 %v1770
      %2853 = vmatmul.mubr.bf16.gmra.mxu0 %v1769
      %v2854 = vpop.f32.mrf.mxu0
      %v2855 = vadd.f32 0.0, %v2854
      %v2856 = vpop.f32.mrf.mxu0
      %v2857 = vpop.f32.mrf.mxu0
      %v2858 = vadd.f32 0.0, %v2857
      %v2859 = vpop.f32.mrf.mxu0
      %2860 = vmatprep.mubr.bf16.mxu0 %v1775
      %2861 = vmatmul.mubr.bf16.gmra.mxu0 %v1774
      %v2862 = vpop.f32.mrf.mxu0
      %v2863 = vadd.f32 0.0, %v2862
      %v2864 = vpop.f32.mrf.mxu0
      %v2865 = vpop.f32.mrf.mxu0
      %v2866 = vadd.f32 0.0, %v2865
      %v2867 = vpop.f32.mrf.mxu0
      %2868 = vmatprep.mubr.bf16.mxu0 %v1780
      %2869 = vmatmul.mubr.bf16.gmra.mxu0 %v1779
      %v2870 = vpop.f32.mrf.mxu0
      %v2871 = vadd.f32 0.0, %v2870
      %v2872 = vpop.f32.mrf.mxu0
      %v2873 = vpop.f32.mrf.mxu0
      %v2874 = vadd.f32 0.0, %v2873
      %v2875 = vpop.f32.mrf.mxu0
      %2876 = vmatprep.mubr.bf16.mxu0 %v1785
      %2877 = vmatmul.mubr.bf16.gmra.mxu0 %v1784
      %v2878 = vpop.f32.mrf.mxu0
      %v2879 = vadd.f32 0.0, %v2878
      %v2880 = vpop.f32.mrf.mxu0
      %v2881 = vpop.f32.mrf.mxu0
      %v2882 = vadd.f32 0.0, %v2881
      %v2883 = vpop.f32.mrf.mxu0
      %2884 = vmatprep.mubr.bf16.mxu0 %v1790
      %2885 = vmatmul.mubr.bf16.gmra.mxu0 %v1789
      %v2886 = vpop.f32.mrf.mxu0
      %v2887 = vadd.f32 0.0, %v2886
      %v2888 = vpop.f32.mrf.mxu0
      %v2889 = vpop.f32.mrf.mxu0
      %v2890 = vadd.f32 0.0, %v2889
      %v2891 = vpop.f32.mrf.mxu0
      %2892 = vmatprep.mubr.bf16.mxu0 %v1795
      %2893 = vmatmul.mubr.bf16.gmra.mxu0 %v1794
      %v2894 = vpop.f32.mrf.mxu0
      %v2895 = vadd.f32 0.0, %v2894
      %v2896 = vpop.f32.mrf.mxu0
      %v2897 = vpop.f32.mrf.mxu0
      %v2898 = vadd.f32 0.0, %v2897
      %v2899 = vpop.f32.mrf.mxu0
      %2900 = vmatprep.mubr.bf16.mxu0 %v1800
      %2901 = vmatmul.mubr.bf16.gmra.mxu0 %v1799
      %v2902 = vpop.f32.mrf.mxu0
      %v2903 = vadd.f32 0.0, %v2902
      %v2904 = vpop.f32.mrf.mxu0
      %v2905 = vpop.f32.mrf.mxu0
      %v2906 = vadd.f32 0.0, %v2905
      %v2907 = vpop.f32.mrf.mxu0
      %2908 = vmatprep.mubr.bf16.mxu0 %v1805
      %2909 = vmatmul.mubr.bf16.gmra.mxu0 %v1804
      %v2910 = vpop.f32.mrf.mxu0
      %v2911 = vadd.f32 0.0, %v2910
      %v2912 = vpop.f32.mrf.mxu0
      %v2913 = vpop.f32.mrf.mxu0
      %v2914 = vadd.f32 0.0, %v2913
      %v2915 = vpop.f32.mrf.mxu0
      %2916 = vmatprep.mubr.bf16.mxu0 %v1810
      %2917 = vmatmul.mubr.bf16.gmra.mxu0 %v1809
      %v2918 = vpop.f32.mrf.mxu0
      %v2919 = vadd.f32 0.0, %v2918
      %v2920 = vpop.f32.mrf.mxu0
      %v2921 = vpop.f32.mrf.mxu0
      %v2922 = vadd.f32 0.0, %v2921
      %v2923 = vpop.f32.mrf.mxu0
      %2924 = vmatprep.mubr.bf16.mxu0 %v1815
      %2925 = vmatmul.mubr.bf16.gmra.mxu0 %v1814
      %v2926 = vpop.f32.mrf.mxu0
      %v2927 = vadd.f32 0.0, %v2926
      %v2928 = vpop.f32.mrf.mxu0
      %v2929 = vpop.f32.mrf.mxu0
      %v2930 = vadd.f32 0.0, %v2929
      %v2931 = vpop.f32.mrf.mxu0
      %2932 = vmatprep.mubr.bf16.mxu0 %v1820
      %2933 = vmatmul.mubr.bf16.gmra.mxu0 %v1819
      %v2934 = vpop.f32.mrf.mxu0
      %v2935 = vadd.f32 0.0, %v2934
      %v2936 = vpop.f32.mrf.mxu0
      %v2937 = vpop.f32.mrf.mxu0
      %v2938 = vadd.f32 0.0, %v2937
      %v2939 = vpop.f32.mrf.mxu0
      %2940 = vmatprep.mubr.bf16.mxu0 %v1825
      %2941 = vmatmul.mubr.bf16.gmra.mxu0 %v1824
      %v2942 = vpop.f32.mrf.mxu0
      %v2943 = vadd.f32 0.0, %v2942
      %v2944 = vpop.f32.mrf.mxu0
      %v2945 = vpop.f32.mrf.mxu0
      %v2946 = vadd.f32 0.0, %v2945
      %v2947 = vpop.f32.mrf.mxu0
      %2948 = vmatprep.mubr.bf16.mxu0 %v1830
      %2949 = vmatmul.mubr.bf16.gmra.mxu0 %v1829
      %v2950 = vpop.f32.mrf.mxu0
      %v2951 = vadd.f32 0.0, %v2950
      %v2952 = vpop.f32.mrf.mxu0
      %v2953 = vpop.f32.mrf.mxu0
      %v2954 = vadd.f32 0.0, %v2953
      %v2955 = vpop.f32.mrf.mxu0
      %2956 = vmatprep.mubr.bf16.mxu0 %v1835
      %2957 = vmatmul.mubr.bf16.gmra.mxu0 %v1834
      %v2958 = vpop.f32.mrf.mxu0
      %v2959 = vadd.f32 0.0, %v2958
      %v2960 = vpop.f32.mrf.mxu0
      %v2961 = vpop.f32.mrf.mxu0
      %v2962 = vadd.f32 0.0, %v2961
      %v2963 = vpop.f32.mrf.mxu0
      %2964 = vmatprep.mubr.bf16.mxu0 %v1840
      %2965 = vmatmul.mubr.bf16.gmra.mxu0 %v1839
      %v2966 = vpop.f32.mrf.mxu0
      %v2967 = vadd.f32 0.0, %v2966
      %v2968 = vpop.f32.mrf.mxu0
      %v2969 = vpop.f32.mrf.mxu0
      %v2970 = vadd.f32 0.0, %v2969
      %v2971 = vpop.f32.mrf.mxu0
      %2972 = vmatprep.mubr.bf16.mxu0 %v1845
      %2973 = vmatmul.mubr.bf16.gmra.mxu0 %v1844
      %v2974 = vpop.f32.mrf.mxu0
      %v2975 = vadd.f32 0.0, %v2974
      %v2976 = vpop.f32.mrf.mxu0
      %v2977 = vpop.f32.mrf.mxu0
      %v2978 = vadd.f32 0.0, %v2977
      %v2979 = vpop.f32.mrf.mxu0
      %2980 = vmatprep.mubr.bf16.mxu0 %v1850
      %2981 = vmatmul.mubr.bf16.gmra.mxu0 %v1849
      %v2982 = vpop.f32.mrf.mxu0
      %v2983 = vadd.f32 0.0, %v2982
      %v2984 = vpop.f32.mrf.mxu0
      %v2985 = vpop.f32.mrf.mxu0
      %v2986 = vadd.f32 0.0, %v2985
      %v2987 = vpop.f32.mrf.mxu0
      %2988 = vmatprep.mubr.bf16.mxu0 %v1855
      %2989 = vmatmul.mubr.bf16.gmra.mxu0 %v1854
      %v2990 = vpop.f32.mrf.mxu0
      %v2991 = vadd.f32 0.0, %v2990
      %v2992 = vpop.f32.mrf.mxu0
      %v2993 = vpop.f32.mrf.mxu0
      %v2994 = vadd.f32 0.0, %v2993
      %v2995 = vpop.f32.mrf.mxu0
      %2996 = vmatprep.mubr.bf16.mxu0 %v1860
      %2997 = vmatmul.mubr.bf16.gmra.mxu0 %v1859
      %v2998 = vpop.f32.mrf.mxu0
      %v2999 = vadd.f32 0.0, %v2998
      %v3000 = vpop.f32.mrf.mxu0
      %v3001 = vpop.f32.mrf.mxu0
      %v3002 = vadd.f32 0.0, %v3001
      %v3003 = vpop.f32.mrf.mxu0
      %3004 = vmatprep.mubr.bf16.mxu0 %v1865
      %3005 = vmatmul.mubr.bf16.gmra.mxu0 %v1864
      %v3006 = vpop.f32.mrf.mxu0
      %v3007 = vadd.f32 0.0, %v3006
      %v3008 = vpop.f32.mrf.mxu0
      %v3009 = vpop.f32.mrf.mxu0
      %v3010 = vadd.f32 0.0, %v3009
      %v3011 = vpop.f32.mrf.mxu0
      %3012 = vmatprep.mubr.bf16.mxu0 %v1870
      %3013 = vmatmul.mubr.bf16.gmra.mxu0 %v1869
      %v3014 = vpop.f32.mrf.mxu0
      %v3015 = vadd.f32 0.0, %v3014
      %v3016 = vpop.f32.mrf.mxu0
      %v3017 = vpop.f32.mrf.mxu0
      %v3018 = vadd.f32 0.0, %v3017
      %v3019 = vpop.f32.mrf.mxu0
      %3020 = vmatprep.mubr.bf16.mxu0 %v1875
      %3021 = vmatmul.mubr.bf16.gmra.mxu0 %v1874
      %v3022 = vpop.f32.mrf.mxu0
      %v3023 = vadd.f32 0.0, %v3022
      %v3024 = vpop.f32.mrf.mxu0
      %v3025 = vpop.f32.mrf.mxu0
      %v3026 = vadd.f32 0.0, %v3025
      %v3027 = vpop.f32.mrf.mxu0
      %3028 = vmatprep.mubr.bf16.mxu0 %v1880
      %3029 = vmatmul.mubr.bf16.gmra.mxu0 %v1879
      %v3030 = vpop.f32.mrf.mxu0
      %v3031 = vadd.f32 0.0, %v3030
      %v3032 = vpop.f32.mrf.mxu0
      %v3033 = vpop.f32.mrf.mxu0
      %v3034 = vadd.f32 0.0, %v3033
      %v3035 = vpop.f32.mrf.mxu0
      %3036 = vmatprep.mubr.bf16.mxu0 %v1885
      %3037 = vmatmul.mubr.bf16.gmra.mxu0 %v1884
      %v3038 = vpop.f32.mrf.mxu0
      %v3039 = vadd.f32 0.0, %v3038
      %v3040 = vpop.f32.mrf.mxu0
      %v3041 = vpop.f32.mrf.mxu0
      %v3042 = vadd.f32 0.0, %v3041
      %v3043 = vpop.f32.mrf.mxu0
      %3044 = vmatprep.mubr.bf16.mxu0 %v1890
      %3045 = vmatmul.mubr.bf16.gmra.mxu0 %v1889
      %v3046 = vpop.f32.mrf.mxu0
      %v3047 = vadd.f32 0.0, %v3046
      %v3048 = vpop.f32.mrf.mxu0
      %v3049 = vpop.f32.mrf.mxu0
      %v3050 = vadd.f32 0.0, %v3049
      %v3051 = vpop.f32.mrf.mxu0
      %3052 = vmatprep.mubr.bf16.mxu0 %v1895
      %3053 = vmatmul.mubr.bf16.gmra.mxu0 %v1894
      %v3054 = vpop.f32.mrf.mxu0
      %v3055 = vadd.f32 0.0, %v3054
      %v3056 = vpop.f32.mrf.mxu0
      %v3057 = vpop.f32.mrf.mxu0
      %v3058 = vadd.f32 0.0, %v3057
      %v3059 = vpop.f32.mrf.mxu0
      %3060 = vmatprep.mubr.bf16.mxu0 %v1900
      %3061 = vmatmul.mubr.bf16.gmra.mxu0 %v1899
      %v3062 = vpop.f32.mrf.mxu0
      %v3063 = vadd.f32 0.0, %v3062
      %v3064 = vpop.f32.mrf.mxu0
      %v3065 = vpop.f32.mrf.mxu0
      %v3066 = vadd.f32 0.0, %v3065
      %v3067 = vpop.f32.mrf.mxu0
      %3068 = vmatprep.mubr.bf16.mxu0 %v1905
      %3069 = vmatmul.mubr.bf16.gmra.mxu0 %v1904
      %v3070 = vpop.f32.mrf.mxu0
      %v3071 = vadd.f32 0.0, %v3070
      %v3072 = vpop.f32.mrf.mxu0
      %v3073 = vpop.f32.mrf.mxu0
      %v3074 = vadd.f32 0.0, %v3073
      %v3075 = vpop.f32.mrf.mxu0
      %3076 = vmatprep.mubr.bf16.mxu0 %v1910
      %3077 = vmatmul.mubr.bf16.gmra.mxu0 %v1909
      %v3078 = vpop.f32.mrf.mxu0
      %v3079 = vadd.f32 0.0, %v3078
      %v3080 = vpop.f32.mrf.mxu0
      %v3081 = vpop.f32.mrf.mxu0
      %v3082 = vadd.f32 0.0, %v3081
      %v3083 = vpop.f32.mrf.mxu0
      %3084 = vmatprep.mubr.bf16.mxu0 %v1915
      %3085 = vmatmul.mubr.bf16.gmra.mxu0 %v1914
      %v3086 = vpop.f32.mrf.mxu0
      %v3087 = vadd.f32 0.0, %v3086
      %v3088 = vpop.f32.mrf.mxu0
      %v3089 = vpop.f32.mrf.mxu0
      %v3090 = vadd.f32 0.0, %v3089
      %v3091 = vpop.f32.mrf.mxu0
      %3092 = vmatprep.mubr.bf16.mxu0 %v1920
      %3093 = vmatmul.mubr.bf16.gmra.mxu0 %v1919
      %v3094 = vpop.f32.mrf.mxu0
      %v3095 = vadd.f32 0.0, %v3094
      %v3096 = vpop.f32.mrf.mxu0
      %v3097 = vpop.f32.mrf.mxu0
      %v3098 = vadd.f32 0.0, %v3097
      %v3099 = vpop.f32.mrf.mxu0
      %3100 = vmatprep.mubr.bf16.mxu0 %v1925
      %3101 = vmatmul.mubr.bf16.gmra.mxu0 %v1924
      %v3102 = vpop.f32.mrf.mxu0
      %v3103 = vadd.f32 0.0, %v3102
      %v3104 = vpop.f32.mrf.mxu0
      %v3105 = vpop.f32.mrf.mxu0
      %v3106 = vadd.f32 0.0, %v3105
      %v3107 = vpop.f32.mrf.mxu0
      %3108 = vmatprep.mubr.bf16.mxu0 %v1930
      %3109 = vmatmul.mubr.bf16.gmra.mxu0 %v1929
      %v3110 = vpop.f32.mrf.mxu0
      %v3111 = vadd.f32 0.0, %v3110
      %v3112 = vpop.f32.mrf.mxu0
      %v3113 = vpop.f32.mrf.mxu0
      %v3114 = vadd.f32 0.0, %v3113
      %v3115 = vpop.f32.mrf.mxu0
      %3116 = vmatprep.mubr.bf16.mxu0 %v1935
      %3117 = vmatmul.mubr.bf16.gmra.mxu0 %v1934
      %v3118 = vpop.f32.mrf.mxu0
      %v3119 = vadd.f32 0.0, %v3118
      %v3120 = vpop.f32.mrf.mxu0
      %v3121 = vpop.f32.mrf.mxu0
      %v3122 = vadd.f32 0.0, %v3121
      %v3123 = vpop.f32.mrf.mxu0
      %3124 = vmatprep.mubr.bf16.mxu0 %v1940
      %3125 = vmatmul.mubr.bf16.gmra.mxu0 %v1939
      %v3126 = vpop.f32.mrf.mxu0
      %v3127 = vadd.f32 0.0, %v3126
      %v3128 = vpop.f32.mrf.mxu0
      %v3129 = vpop.f32.mrf.mxu0
      %v3130 = vadd.f32 0.0, %v3129
      %v3131 = vpop.f32.mrf.mxu0
      %3132 = vmatprep.mubr.bf16.mxu0 %v1945
      %3133 = vmatmul.mubr.bf16.gmra.mxu0 %v1944
      %v3134 = vpop.f32.mrf.mxu0
      %v3135 = vadd.f32 0.0, %v3134
      %v3136 = vpop.f32.mrf.mxu0
      %v3137 = vpop.f32.mrf.mxu0
      %v3138 = vadd.f32 0.0, %v3137
      %v3139 = vpop.f32.mrf.mxu0
      %3140 = vmatprep.mubr.bf16.mxu0 %v1950
      %3141 = vmatmul.mubr.bf16.gmra.mxu0 %v1949
      %v3142 = vpop.f32.mrf.mxu0
      %v3143 = vadd.f32 0.0, %v3142
      %v3144 = vpop.f32.mrf.mxu0
      %v3145 = vpop.f32.mrf.mxu0
      %v3146 = vadd.f32 0.0, %v3145
      %v3147 = vpop.f32.mrf.mxu0
      %3148 = vmatprep.mubr.bf16.mxu0 %v1955
      %3149 = vmatmul.mubr.bf16.gmra.mxu0 %v1954
      %v3150 = vpop.f32.mrf.mxu0
      %v3151 = vadd.f32 0.0, %v3150
      %v3152 = vpop.f32.mrf.mxu0
      %v3153 = vpop.f32.mrf.mxu0
      %v3154 = vadd.f32 0.0, %v3153
      %v3155 = vpop.f32.mrf.mxu0
      %3156 = vmatprep.mubr.bf16.mxu0 %v1960
      %3157 = vmatmul.mubr.bf16.gmra.mxu0 %v1959
      %v3158 = vpop.f32.mrf.mxu0
      %v3159 = vadd.f32 0.0, %v3158
      %v3160 = vpop.f32.mrf.mxu0
      %v3161 = vpop.f32.mrf.mxu0
      %v3162 = vadd.f32 0.0, %v3161
      %v3163 = vpop.f32.mrf.mxu0
      %3164 = vmatprep.mubr.bf16.mxu0 %v1965
      %3165 = vmatmul.mubr.bf16.gmra.mxu0 %v1964
      %v3166 = vpop.f32.mrf.mxu0
      %v3167 = vadd.f32 0.0, %v3166
      %v3168 = vpop.f32.mrf.mxu0
      %v3169 = vpop.f32.mrf.mxu0
      %v3170 = vadd.f32 0.0, %v3169
      %v3171 = vpop.f32.mrf.mxu0
      %3172 = vmatprep.mubr.bf16.mxu0 %v1970
      %3173 = vmatmul.mubr.bf16.gmra.mxu0 %v1969
      %v3174 = vpop.f32.mrf.mxu0
      %v3175 = vadd.f32 0.0, %v3174
      %v3176 = vpop.f32.mrf.mxu0
      %v3177 = vpop.f32.mrf.mxu0
      %v3178 = vadd.f32 0.0, %v3177
      %v3179 = vpop.f32.mrf.mxu0
      %3180 = vmatprep.mubr.bf16.mxu0 %v1975
      %3181 = vmatmul.mubr.bf16.gmra.mxu0 %v1974
      %v3182 = vpop.f32.mrf.mxu0
      %v3183 = vadd.f32 0.0, %v3182
      %v3184 = vpop.f32.mrf.mxu0
      %v3185 = vpop.f32.mrf.mxu0
      %v3186 = vadd.f32 0.0, %v3185
      %v3187 = vpop.f32.mrf.mxu0
      %3188 = vdwg.mxu0
      %3189 = vmatprep.subr.bf16.mxu0 0
      %3190 = vmatpush1.bf16.msra.mxu0 %v2402
      %3191 = vmatprep.subr.bf16.mxu0 0
      %3192 = vmatpush1.bf16.msra.mxu0 %v2401
      %3193 = vmatprep.subr.bf16.mxu0 0
      %3194 = vmatpush1.bf16.msra.mxu0 %v2400
      %3195 = vmatprep.subr.bf16.mxu0 0
      %3196 = vmatpush1.bf16.msra.mxu0 %v2399
      %3197 = vmatprep.subr.bf16.mxu0 0
      %3198 = vmatpush1.bf16.msra.mxu0 %v2398
      %3199 = vmatprep.subr.bf16.mxu0 0
      %3200 = vmatpush1.bf16.msra.mxu0 %v2397
      %3201 = vmatprep.subr.bf16.mxu0 0
      %3202 = vmatpush1.bf16.msra.mxu0 %v2396
      %3203 = vmatprep.subr.bf16.mxu0 0
      %3204 = vmatpush1.bf16.msra.mxu0 %v2395
      %3205 = vmatprep.subr.bf16.mxu0 0
      %3206 = vmatpush2.bf16.msra.mxu0 %v2410
      %3207 = vmatprep.subr.bf16.mxu0 0
      %3208 = vmatpush2.bf16.msra.mxu0 %v2409
      %3209 = vmatprep.subr.bf16.mxu0 0
      %3210 = vmatpush2.bf16.msra.mxu0 %v2408
      %3211 = vmatprep.subr.bf16.mxu0 0
      %3212 = vmatpush2.bf16.msra.mxu0 %v2407
      %3213 = vmatprep.subr.bf16.mxu0 0
      %3214 = vmatpush2.bf16.msra.mxu0 %v2406
      %3215 = vmatprep.subr.bf16.mxu0 0
      %3216 = vmatpush2.bf16.msra.mxu0 %v2405
      %3217 = vmatprep.subr.bf16.mxu0 0
      %3218 = vmatpush2.bf16.msra.mxu0 %v2404
      %3219 = vmatprep.subr.bf16.mxu0 0
      %3220 = vmatpush2.bf16.msra.mxu0 %v2403
      %3221 = vmatprep.mubr.bf16.mxu0 %v1662
      %3222 = vmatmul.mubr.bf16.gmra.mxu0 %v1661
      %v3223 = vpop.f32.mrf.mxu0
      %v3224 = vadd.f32 %v2679, %v3223
      %v3225 = vpop.f32.mrf.mxu0
      %v3226 = vpop.f32.mrf.mxu0
      %v3227 = vadd.f32 %v2682, %v3226
      %v3228 = vpop.f32.mrf.mxu0
      %3229 = vmatprep.mubr.bf16.mxu0 %v1667
      %3230 = vmatmul.mubr.bf16.gmra.mxu0 %v1666
      %v3231 = vpop.f32.mrf.mxu0
      %v3232 = vadd.f32 %v2687, %v3231
      %v3233 = vpop.f32.mrf.mxu0
      %v3234 = vpop.f32.mrf.mxu0
      %v3235 = vadd.f32 %v2690, %v3234
      %v3236 = vpop.f32.mrf.mxu0
      %3237 = vmatprep.mubr.bf16.mxu0 %v1672
      %3238 = vmatmul.mubr.bf16.gmra.mxu0 %v1671
      %v3239 = vpop.f32.mrf.mxu0
      %v3240 = vadd.f32 %v2695, %v3239
      %v3241 = vpop.f32.mrf.mxu0
      %v3242 = vpop.f32.mrf.mxu0
      %v3243 = vadd.f32 %v2698, %v3242
      %v3244 = vpop.f32.mrf.mxu0
      %3245 = vmatprep.mubr.bf16.mxu0 %v1677
      %3246 = vmatmul.mubr.bf16.gmra.mxu0 %v1676
      %v3247 = vpop.f32.mrf.mxu0
      %v3248 = vadd.f32 %v2703, %v3247
      %v3249 = vpop.f32.mrf.mxu0
      %v3250 = vpop.f32.mrf.mxu0
      %v3251 = vadd.f32 %v2706, %v3250
      %v3252 = vpop.f32.mrf.mxu0
      %3253 = vmatprep.mubr.bf16.mxu0 %v1682
      %3254 = vmatmul.mubr.bf16.gmra.mxu0 %v1681
      %v3255 = vpop.f32.mrf.mxu0
      %v3256 = vadd.f32 %v2711, %v3255
      %v3257 = vpop.f32.mrf.mxu0
      %v3258 = vpop.f32.mrf.mxu0
      %v3259 = vadd.f32 %v2714, %v3258
      %v3260 = vpop.f32.mrf.mxu0
      %3261 = vmatprep.mubr.bf16.mxu0 %v1687
      %3262 = vmatmul.mubr.bf16.gmra.mxu0 %v1686
      %v3263 = vpop.f32.mrf.mxu0
      %v3264 = vadd.f32 %v2719, %v3263
      %v3265 = vpop.f32.mrf.mxu0
      %v3266 = vpop.f32.mrf.mxu0
      %v3267 = vadd.f32 %v2722, %v3266
      %v3268 = vpop.f32.mrf.mxu0
      %3269 = vmatprep.mubr.bf16.mxu0 %v1692
      %3270 = vmatmul.mubr.bf16.gmra.mxu0 %v1691
      %v3271 = vpop.f32.mrf.mxu0
      %v3272 = vadd.f32 %v2727, %v3271
      %v3273 = vpop.f32.mrf.mxu0
      %v3274 = vpop.f32.mrf.mxu0
      %v3275 = vadd.f32 %v2730, %v3274
      %v3276 = vpop.f32.mrf.mxu0
      %3277 = vmatprep.mubr.bf16.mxu0 %v1697
      %3278 = vmatmul.mubr.bf16.gmra.mxu0 %v1696
      %v3279 = vpop.f32.mrf.mxu0
      %v3280 = vadd.f32 %v2735, %v3279
      %v3281 = vpop.f32.mrf.mxu0
      %v3282 = vpop.f32.mrf.mxu0
      %v3283 = vadd.f32 %v2738, %v3282
      %v3284 = vpop.f32.mrf.mxu0
      %3285 = vmatprep.mubr.bf16.mxu0 %v1702
      %3286 = vmatmul.mubr.bf16.gmra.mxu0 %v1701
      %v3287 = vpop.f32.mrf.mxu0
      %v3288 = vadd.f32 %v2743, %v3287
      %v3289 = vpop.f32.mrf.mxu0
      %v3290 = vpop.f32.mrf.mxu0
      %v3291 = vadd.f32 %v2746, %v3290
      %v3292 = vpop.f32.mrf.mxu0
      %3293 = vmatprep.mubr.bf16.mxu0 %v1707
      %3294 = vmatmul.mubr.bf16.gmra.mxu0 %v1706
      %v3295 = vpop.f32.mrf.mxu0
      %v3296 = vadd.f32 %v2751, %v3295
      %v3297 = vpop.f32.mrf.mxu0
      %v3298 = vpop.f32.mrf.mxu0
      %v3299 = vadd.f32 %v2754, %v3298
      %v3300 = vpop.f32.mrf.mxu0
      %3301 = vmatprep.mubr.bf16.mxu0 %v1712
      %3302 = vmatmul.mubr.bf16.gmra.mxu0 %v1711
      %v3303 = vpop.f32.mrf.mxu0
      %v3304 = vadd.f32 %v2759, %v3303
      %v3305 = vpop.f32.mrf.mxu0
      %v3306 = vpop.f32.mrf.mxu0
      %v3307 = vadd.f32 %v2762, %v3306
      %v3308 = vpop.f32.mrf.mxu0
      %3309 = vmatprep.mubr.bf16.mxu0 %v1717
      %3310 = vmatmul.mubr.bf16.gmra.mxu0 %v1716
      %v3311 = vpop.f32.mrf.mxu0
      %v3312 = vadd.f32 %v2767, %v3311
      %v3313 = vpop.f32.mrf.mxu0
      %v3314 = vpop.f32.mrf.mxu0
      %v3315 = vadd.f32 %v2770, %v3314
      %v3316 = vpop.f32.mrf.mxu0
      %3317 = vmatprep.mubr.bf16.mxu0 %v1722
      %3318 = vmatmul.mubr.bf16.gmra.mxu0 %v1721
      %v3319 = vpop.f32.mrf.mxu0
      %v3320 = vadd.f32 %v2775, %v3319
      %v3321 = vpop.f32.mrf.mxu0
      %v3322 = vpop.f32.mrf.mxu0
      %v3323 = vadd.f32 %v2778, %v3322
      %v3324 = vpop.f32.mrf.mxu0
      %3325 = vmatprep.mubr.bf16.mxu0 %v1727
      %3326 = vmatmul.mubr.bf16.gmra.mxu0 %v1726
      %v3327 = vpop.f32.mrf.mxu0
      %v3328 = vadd.f32 %v2783, %v3327
      %v3329 = vpop.f32.mrf.mxu0
      %v3330 = vpop.f32.mrf.mxu0
      %v3331 = vadd.f32 %v2786, %v3330
      %v3332 = vpop.f32.mrf.mxu0
      %3333 = vmatprep.mubr.bf16.mxu0 %v1732
      %3334 = vmatmul.mubr.bf16.gmra.mxu0 %v1731
      %v3335 = vpop.f32.mrf.mxu0
      %v3336 = vadd.f32 %v2791, %v3335
      %v3337 = vpop.f32.mrf.mxu0
      %v3338 = vpop.f32.mrf.mxu0
      %v3339 = vadd.f32 %v2794, %v3338
      %v3340 = vpop.f32.mrf.mxu0
      %3341 = vmatprep.mubr.bf16.mxu0 %v1737
      %3342 = vmatmul.mubr.bf16.gmra.mxu0 %v1736
      %v3343 = vpop.f32.mrf.mxu0
      %v3344 = vadd.f32 %v2799, %v3343
      %v3345 = vpop.f32.mrf.mxu0
      %v3346 = vpop.f32.mrf.mxu0
      %v3347 = vadd.f32 %v2802, %v3346
      %v3348 = vpop.f32.mrf.mxu0
      %3349 = vmatprep.mubr.bf16.mxu0 %v1742
      %3350 = vmatmul.mubr.bf16.gmra.mxu0 %v1741
      %v3351 = vpop.f32.mrf.mxu0
      %v3352 = vadd.f32 %v2807, %v3351
      %v3353 = vpop.f32.mrf.mxu0
      %v3354 = vpop.f32.mrf.mxu0
      %v3355 = vadd.f32 %v2810, %v3354
      %v3356 = vpop.f32.mrf.mxu0
      %3357 = vmatprep.mubr.bf16.mxu0 %v1747
      %3358 = vmatmul.mubr.bf16.gmra.mxu0 %v1746
      %v3359 = vpop.f32.mrf.mxu0
      %v3360 = vadd.f32 %v2815, %v3359
      %v3361 = vpop.f32.mrf.mxu0
      %v3362 = vpop.f32.mrf.mxu0
      %v3363 = vadd.f32 %v2818, %v3362
      %v3364 = vpop.f32.mrf.mxu0
      %3365 = vmatprep.mubr.bf16.mxu0 %v1752
      %3366 = vmatmul.mubr.bf16.gmra.mxu0 %v1751
      %v3367 = vpop.f32.mrf.mxu0
      %v3368 = vadd.f32 %v2823, %v3367
      %v3369 = vpop.f32.mrf.mxu0
      %v3370 = vpop.f32.mrf.mxu0
      %v3371 = vadd.f32 %v2826, %v3370
      %v3372 = vpop.f32.mrf.mxu0
      %3373 = vmatprep.mubr.bf16.mxu0 %v1757
      %3374 = vmatmul.mubr.bf16.gmra.mxu0 %v1756
      %v3375 = vpop.f32.mrf.mxu0
      %v3376 = vadd.f32 %v2831, %v3375
      %v3377 = vpop.f32.mrf.mxu0
      %v3378 = vpop.f32.mrf.mxu0
      %v3379 = vadd.f32 %v2834, %v3378
      %v3380 = vpop.f32.mrf.mxu0
      %3381 = vmatprep.mubr.bf16.mxu0 %v1762
      %3382 = vmatmul.mubr.bf16.gmra.mxu0 %v1761
      %v3383 = vpop.f32.mrf.mxu0
      %v3384 = vadd.f32 %v2839, %v3383
      %v3385 = vpop.f32.mrf.mxu0
      %v3386 = vpop.f32.mrf.mxu0
      %v3387 = vadd.f32 %v2842, %v3386
      %v3388 = vpop.f32.mrf.mxu0
      %3389 = vmatprep.mubr.bf16.mxu0 %v1767
      %3390 = vmatmul.mubr.bf16.gmra.mxu0 %v1766
      %v3391 = vpop.f32.mrf.mxu0
      %v3392 = vadd.f32 %v2847, %v3391
      %v3393 = vpop.f32.mrf.mxu0
      %v3394 = vpop.f32.mrf.mxu0
      %v3395 = vadd.f32 %v2850, %v3394
      %v3396 = vpop.f32.mrf.mxu0
      %3397 = vmatprep.mubr.bf16.mxu0 %v1772
      %3398 = vmatmul.mubr.bf16.gmra.mxu0 %v1771
      %v3399 = vpop.f32.mrf.mxu0
      %v3400 = vadd.f32 %v2855, %v3399
      %v3401 = vpop.f32.mrf.mxu0
      %v3402 = vpop.f32.mrf.mxu0
      %v3403 = vadd.f32 %v2858, %v3402
      %v3404 = vpop.f32.mrf.mxu0
      %3405 = vmatprep.mubr.bf16.mxu0 %v1777
      %3406 = vmatmul.mubr.bf16.gmra.mxu0 %v1776
      %v3407 = vpop.f32.mrf.mxu0
      %v3408 = vadd.f32 %v2863, %v3407
      %v3409 = vpop.f32.mrf.mxu0
      %v3410 = vpop.f32.mrf.mxu0
      %v3411 = vadd.f32 %v2866, %v3410
      %v3412 = vpop.f32.mrf.mxu0
      %3413 = vmatprep.mubr.bf16.mxu0 %v1782
      %3414 = vmatmul.mubr.bf16.gmra.mxu0 %v1781
      %v3415 = vpop.f32.mrf.mxu0
      %v3416 = vadd.f32 %v2871, %v3415
      %v3417 = vpop.f32.mrf.mxu0
      %v3418 = vpop.f32.mrf.mxu0
      %v3419 = vadd.f32 %v2874, %v3418
      %v3420 = vpop.f32.mrf.mxu0
      %3421 = vmatprep.mubr.bf16.mxu0 %v1787
      %3422 = vmatmul.mubr.bf16.gmra.mxu0 %v1786
      %v3423 = vpop.f32.mrf.mxu0
      %v3424 = vadd.f32 %v2879, %v3423
      %v3425 = vpop.f32.mrf.mxu0
      %v3426 = vpop.f32.mrf.mxu0
      %v3427 = vadd.f32 %v2882, %v3426
      %v3428 = vpop.f32.mrf.mxu0
      %3429 = vmatprep.mubr.bf16.mxu0 %v1792
      %3430 = vmatmul.mubr.bf16.gmra.mxu0 %v1791
      %v3431 = vpop.f32.mrf.mxu0
      %v3432 = vadd.f32 %v2887, %v3431
      %v3433 = vpop.f32.mrf.mxu0
      %v3434 = vpop.f32.mrf.mxu0
      %v3435 = vadd.f32 %v2890, %v3434
      %v3436 = vpop.f32.mrf.mxu0
      %3437 = vmatprep.mubr.bf16.mxu0 %v1797
      %3438 = vmatmul.mubr.bf16.gmra.mxu0 %v1796
      %v3439 = vpop.f32.mrf.mxu0
      %v3440 = vadd.f32 %v2895, %v3439
      %v3441 = vpop.f32.mrf.mxu0
      %v3442 = vpop.f32.mrf.mxu0
      %v3443 = vadd.f32 %v2898, %v3442
      %v3444 = vpop.f32.mrf.mxu0
      %3445 = vmatprep.mubr.bf16.mxu0 %v1802
      %3446 = vmatmul.mubr.bf16.gmra.mxu0 %v1801
      %v3447 = vpop.f32.mrf.mxu0
      %v3448 = vadd.f32 %v2903, %v3447
      %v3449 = vpop.f32.mrf.mxu0
      %v3450 = vpop.f32.mrf.mxu0
      %v3451 = vadd.f32 %v2906, %v3450
      %v3452 = vpop.f32.mrf.mxu0
      %3453 = vmatprep.mubr.bf16.mxu0 %v1807
      %3454 = vmatmul.mubr.bf16.gmra.mxu0 %v1806
      %v3455 = vpop.f32.mrf.mxu0
      %v3456 = vadd.f32 %v2911, %v3455
      %v3457 = vpop.f32.mrf.mxu0
      %v3458 = vpop.f32.mrf.mxu0
      %v3459 = vadd.f32 %v2914, %v3458
      %v3460 = vpop.f32.mrf.mxu0
      %3461 = vmatprep.mubr.bf16.mxu0 %v1812
      %3462 = vmatmul.mubr.bf16.gmra.mxu0 %v1811
      %v3463 = vpop.f32.mrf.mxu0
      %v3464 = vadd.f32 %v2919, %v3463
      %v3465 = vpop.f32.mrf.mxu0
      %v3466 = vpop.f32.mrf.mxu0
      %v3467 = vadd.f32 %v2922, %v3466
      %v3468 = vpop.f32.mrf.mxu0
      %3469 = vmatprep.mubr.bf16.mxu0 %v1817
      %3470 = vmatmul.mubr.bf16.gmra.mxu0 %v1816
      %v3471 = vpop.f32.mrf.mxu0
      %v3472 = vadd.f32 %v2927, %v3471
      %v3473 = vpop.f32.mrf.mxu0
      %v3474 = vpop.f32.mrf.mxu0
      %v3475 = vadd.f32 %v2930, %v3474
      %v3476 = vpop.f32.mrf.mxu0
      %3477 = vmatprep.mubr.bf16.mxu0 %v1822
      %3478 = vmatmul.mubr.bf16.gmra.mxu0 %v1821
      %v3479 = vpop.f32.mrf.mxu0
      %v3480 = vadd.f32 %v2935, %v3479
      %v3481 = vpop.f32.mrf.mxu0
      %v3482 = vpop.f32.mrf.mxu0
      %v3483 = vadd.f32 %v2938, %v3482
      %v3484 = vpop.f32.mrf.mxu0
      %3485 = vmatprep.mubr.bf16.mxu0 %v1827
      %3486 = vmatmul.mubr.bf16.gmra.mxu0 %v1826
      %v3487 = vpop.f32.mrf.mxu0
      %v3488 = vadd.f32 %v2943, %v3487
      %v3489 = vpop.f32.mrf.mxu0
      %v3490 = vpop.f32.mrf.mxu0
      %v3491 = vadd.f32 %v2946, %v3490
      %v3492 = vpop.f32.mrf.mxu0
      %3493 = vmatprep.mubr.bf16.mxu0 %v1832
      %3494 = vmatmul.mubr.bf16.gmra.mxu0 %v1831
      %v3495 = vpop.f32.mrf.mxu0
      %v3496 = vadd.f32 %v2951, %v3495
      %v3497 = vpop.f32.mrf.mxu0
      %v3498 = vpop.f32.mrf.mxu0
      %v3499 = vadd.f32 %v2954, %v3498
      %v3500 = vpop.f32.mrf.mxu0
      %3501 = vmatprep.mubr.bf16.mxu0 %v1837
      %3502 = vmatmul.mubr.bf16.gmra.mxu0 %v1836
      %v3503 = vpop.f32.mrf.mxu0
      %v3504 = vadd.f32 %v2959, %v3503
      %v3505 = vpop.f32.mrf.mxu0
      %v3506 = vpop.f32.mrf.mxu0
      %v3507 = vadd.f32 %v2962, %v3506
      %v3508 = vpop.f32.mrf.mxu0
      %3509 = vmatprep.mubr.bf16.mxu0 %v1842
      %3510 = vmatmul.mubr.bf16.gmra.mxu0 %v1841
      %v3511 = vpop.f32.mrf.mxu0
      %v3512 = vadd.f32 %v2967, %v3511
      %v3513 = vpop.f32.mrf.mxu0
      %v3514 = vpop.f32.mrf.mxu0
      %v3515 = vadd.f32 %v2970, %v3514
      %v3516 = vpop.f32.mrf.mxu0
      %3517 = vmatprep.mubr.bf16.mxu0 %v1847
      %3518 = vmatmul.mubr.bf16.gmra.mxu0 %v1846
      %v3519 = vpop.f32.mrf.mxu0
      %v3520 = vadd.f32 %v2975, %v3519
      %v3521 = vpop.f32.mrf.mxu0
      %v3522 = vpop.f32.mrf.mxu0
      %v3523 = vadd.f32 %v2978, %v3522
      %v3524 = vpop.f32.mrf.mxu0
      %3525 = vmatprep.mubr.bf16.mxu0 %v1852
      %3526 = vmatmul.mubr.bf16.gmra.mxu0 %v1851
      %v3527 = vpop.f32.mrf.mxu0
      %v3528 = vadd.f32 %v2983, %v3527
      %v3529 = vpop.f32.mrf.mxu0
      %v3530 = vpop.f32.mrf.mxu0
      %v3531 = vadd.f32 %v2986, %v3530
      %v3532 = vpop.f32.mrf.mxu0
      %3533 = vmatprep.mubr.bf16.mxu0 %v1857
      %3534 = vmatmul.mubr.bf16.gmra.mxu0 %v1856
      %v3535 = vpop.f32.mrf.mxu0
      %v3536 = vadd.f32 %v2991, %v3535
      %v3537 = vpop.f32.mrf.mxu0
      %v3538 = vpop.f32.mrf.mxu0
      %v3539 = vadd.f32 %v2994, %v3538
      %v3540 = vpop.f32.mrf.mxu0
      %3541 = vmatprep.mubr.bf16.mxu0 %v1862
      %3542 = vmatmul.mubr.bf16.gmra.mxu0 %v1861
      %v3543 = vpop.f32.mrf.mxu0
      %v3544 = vadd.f32 %v2999, %v3543
      %v3545 = vpop.f32.mrf.mxu0
      %v3546 = vpop.f32.mrf.mxu0
      %v3547 = vadd.f32 %v3002, %v3546
      %v3548 = vpop.f32.mrf.mxu0
      %3549 = vmatprep.mubr.bf16.mxu0 %v1867
      %3550 = vmatmul.mubr.bf16.gmra.mxu0 %v1866
      %v3551 = vpop.f32.mrf.mxu0
      %v3552 = vadd.f32 %v3007, %v3551
      %v3553 = vpop.f32.mrf.mxu0
      %v3554 = vpop.f32.mrf.mxu0
      %v3555 = vadd.f32 %v3010, %v3554
      %v3556 = vpop.f32.mrf.mxu0
      %3557 = vmatprep.mubr.bf16.mxu0 %v1872
      %3558 = vmatmul.mubr.bf16.gmra.mxu0 %v1871
      %v3559 = vpop.f32.mrf.mxu0
      %v3560 = vadd.f32 %v3015, %v3559
      %v3561 = vpop.f32.mrf.mxu0
      %v3562 = vpop.f32.mrf.mxu0
      %v3563 = vadd.f32 %v3018, %v3562
      %v3564 = vpop.f32.mrf.mxu0
      %3565 = vmatprep.mubr.bf16.mxu0 %v1877
      %3566 = vmatmul.mubr.bf16.gmra.mxu0 %v1876
      %v3567 = vpop.f32.mrf.mxu0
      %v3568 = vadd.f32 %v3023, %v3567
      %v3569 = vpop.f32.mrf.mxu0
      %v3570 = vpop.f32.mrf.mxu0
      %v3571 = vadd.f32 %v3026, %v3570
      %v3572 = vpop.f32.mrf.mxu0
      %3573 = vmatprep.mubr.bf16.mxu0 %v1882
      %3574 = vmatmul.mubr.bf16.gmra.mxu0 %v1881
      %v3575 = vpop.f32.mrf.mxu0
      %v3576 = vadd.f32 %v3031, %v3575
      %v3577 = vpop.f32.mrf.mxu0
      %v3578 = vpop.f32.mrf.mxu0
      %v3579 = vadd.f32 %v3034, %v3578
      %v3580 = vpop.f32.mrf.mxu0
      %3581 = vmatprep.mubr.bf16.mxu0 %v1887
      %3582 = vmatmul.mubr.bf16.gmra.mxu0 %v1886
      %v3583 = vpop.f32.mrf.mxu0
      %v3584 = vadd.f32 %v3039, %v3583
      %v3585 = vpop.f32.mrf.mxu0
      %v3586 = vpop.f32.mrf.mxu0
      %v3587 = vadd.f32 %v3042, %v3586
      %v3588 = vpop.f32.mrf.mxu0
      %3589 = vmatprep.mubr.bf16.mxu0 %v1892
      %3590 = vmatmul.mubr.bf16.gmra.mxu0 %v1891
      %v3591 = vpop.f32.mrf.mxu0
      %v3592 = vadd.f32 %v3047, %v3591
      %v3593 = vpop.f32.mrf.mxu0
      %v3594 = vpop.f32.mrf.mxu0
      %v3595 = vadd.f32 %v3050, %v3594
      %v3596 = vpop.f32.mrf.mxu0
      %3597 = vmatprep.mubr.bf16.mxu0 %v1897
      %3598 = vmatmul.mubr.bf16.gmra.mxu0 %v1896
      %v3599 = vpop.f32.mrf.mxu0
      %v3600 = vadd.f32 %v3055, %v3599
      %v3601 = vpop.f32.mrf.mxu0
      %v3602 = vpop.f32.mrf.mxu0
      %v3603 = vadd.f32 %v3058, %v3602
      %v3604 = vpop.f32.mrf.mxu0
      %3605 = vmatprep.mubr.bf16.mxu0 %v1902
      %3606 = vmatmul.mubr.bf16.gmra.mxu0 %v1901
      %v3607 = vpop.f32.mrf.mxu0
      %v3608 = vadd.f32 %v3063, %v3607
      %v3609 = vpop.f32.mrf.mxu0
      %v3610 = vpop.f32.mrf.mxu0
      %v3611 = vadd.f32 %v3066, %v3610
      %v3612 = vpop.f32.mrf.mxu0
      %3613 = vmatprep.mubr.bf16.mxu0 %v1907
      %3614 = vmatmul.mubr.bf16.gmra.mxu0 %v1906
      %v3615 = vpop.f32.mrf.mxu0
      %v3616 = vadd.f32 %v3071, %v3615
      %v3617 = vpop.f32.mrf.mxu0
      %v3618 = vpop.f32.mrf.mxu0
      %v3619 = vadd.f32 %v3074, %v3618
      %v3620 = vpop.f32.mrf.mxu0
      %3621 = vmatprep.mubr.bf16.mxu0 %v1912
      %3622 = vmatmul.mubr.bf16.gmra.mxu0 %v1911
      %v3623 = vpop.f32.mrf.mxu0
      %v3624 = vadd.f32 %v3079, %v3623
      %v3625 = vpop.f32.mrf.mxu0
      %v3626 = vpop.f32.mrf.mxu0
      %v3627 = vadd.f32 %v3082, %v3626
      %v3628 = vpop.f32.mrf.mxu0
      %3629 = vmatprep.mubr.bf16.mxu0 %v1917
      %3630 = vmatmul.mubr.bf16.gmra.mxu0 %v1916
      %v3631 = vpop.f32.mrf.mxu0
      %v3632 = vadd.f32 %v3087, %v3631
      %v3633 = vpop.f32.mrf.mxu0
      %v3634 = vpop.f32.mrf.mxu0
      %v3635 = vadd.f32 %v3090, %v3634
      %v3636 = vpop.f32.mrf.mxu0
      %3637 = vmatprep.mubr.bf16.mxu0 %v1922
      %3638 = vmatmul.mubr.bf16.gmra.mxu0 %v1921
      %v3639 = vpop.f32.mrf.mxu0
      %v3640 = vadd.f32 %v3095, %v3639
      %v3641 = vpop.f32.mrf.mxu0
      %v3642 = vpop.f32.mrf.mxu0
      %v3643 = vadd.f32 %v3098, %v3642
      %v3644 = vpop.f32.mrf.mxu0
      %3645 = vmatprep.mubr.bf16.mxu0 %v1927
      %3646 = vmatmul.mubr.bf16.gmra.mxu0 %v1926
      %v3647 = vpop.f32.mrf.mxu0
      %v3648 = vadd.f32 %v3103, %v3647
      %v3649 = vpop.f32.mrf.mxu0
      %v3650 = vpop.f32.mrf.mxu0
      %v3651 = vadd.f32 %v3106, %v3650
      %v3652 = vpop.f32.mrf.mxu0
      %3653 = vmatprep.mubr.bf16.mxu0 %v1932
      %3654 = vmatmul.mubr.bf16.gmra.mxu0 %v1931
      %v3655 = vpop.f32.mrf.mxu0
      %v3656 = vadd.f32 %v3111, %v3655
      %v3657 = vpop.f32.mrf.mxu0
      %v3658 = vpop.f32.mrf.mxu0
      %v3659 = vadd.f32 %v3114, %v3658
      %v3660 = vpop.f32.mrf.mxu0
      %3661 = vmatprep.mubr.bf16.mxu0 %v1937
      %3662 = vmatmul.mubr.bf16.gmra.mxu0 %v1936
      %v3663 = vpop.f32.mrf.mxu0
      %v3664 = vadd.f32 %v3119, %v3663
      %v3665 = vpop.f32.mrf.mxu0
      %v3666 = vpop.f32.mrf.mxu0
      %v3667 = vadd.f32 %v3122, %v3666
      %v3668 = vpop.f32.mrf.mxu0
      %3669 = vmatprep.mubr.bf16.mxu0 %v1942
      %3670 = vmatmul.mubr.bf16.gmra.mxu0 %v1941
      %v3671 = vpop.f32.mrf.mxu0
      %v3672 = vadd.f32 %v3127, %v3671
      %v3673 = vpop.f32.mrf.mxu0
      %v3674 = vpop.f32.mrf.mxu0
      %v3675 = vadd.f32 %v3130, %v3674
      %v3676 = vpop.f32.mrf.mxu0
      %3677 = vmatprep.mubr.bf16.mxu0 %v1947
      %3678 = vmatmul.mubr.bf16.gmra.mxu0 %v1946
      %v3679 = vpop.f32.mrf.mxu0
      %v3680 = vadd.f32 %v3135, %v3679
      %v3681 = vpop.f32.mrf.mxu0
      %v3682 = vpop.f32.mrf.mxu0
      %v3683 = vadd.f32 %v3138, %v3682
      %v3684 = vpop.f32.mrf.mxu0
      %3685 = vmatprep.mubr.bf16.mxu0 %v1952
      %3686 = vmatmul.mubr.bf16.gmra.mxu0 %v1951
      %v3687 = vpop.f32.mrf.mxu0
      %v3688 = vadd.f32 %v3143, %v3687
      %v3689 = vpop.f32.mrf.mxu0
      %v3690 = vpop.f32.mrf.mxu0
      %v3691 = vadd.f32 %v3146, %v3690
      %v3692 = vpop.f32.mrf.mxu0
      %3693 = vmatprep.mubr.bf16.mxu0 %v1957
      %3694 = vmatmul.mubr.bf16.gmra.mxu0 %v1956
      %v3695 = vpop.f32.mrf.mxu0
      %v3696 = vadd.f32 %v3151, %v3695
      %v3697 = vpop.f32.mrf.mxu0
      %v3698 = vpop.f32.mrf.mxu0
      %v3699 = vadd.f32 %v3154, %v3698
      %v3700 = vpop.f32.mrf.mxu0
      %3701 = vmatprep.mubr.bf16.mxu0 %v1962
      %3702 = vmatmul.mubr.bf16.gmra.mxu0 %v1961
      %v3703 = vpop.f32.mrf.mxu0
      %v3704 = vadd.f32 %v3159, %v3703
      %v3705 = vpop.f32.mrf.mxu0
      %v3706 = vpop.f32.mrf.mxu0
      %v3707 = vadd.f32 %v3162, %v3706
      %v3708 = vpop.f32.mrf.mxu0
      %3709 = vmatprep.mubr.bf16.mxu0 %v1967
      %3710 = vmatmul.mubr.bf16.gmra.mxu0 %v1966
      %v3711 = vpop.f32.mrf.mxu0
      %v3712 = vadd.f32 %v3167, %v3711
      %v3713 = vpop.f32.mrf.mxu0
      %v3714 = vpop.f32.mrf.mxu0
      %v3715 = vadd.f32 %v3170, %v3714
      %v3716 = vpop.f32.mrf.mxu0
      %3717 = vmatprep.mubr.bf16.mxu0 %v1972
      %3718 = vmatmul.mubr.bf16.gmra.mxu0 %v1971
      %v3719 = vpop.f32.mrf.mxu0
      %v3720 = vadd.f32 %v3175, %v3719
      %v3721 = vpop.f32.mrf.mxu0
      %v3722 = vpop.f32.mrf.mxu0
      %v3723 = vadd.f32 %v3178, %v3722
      %v3724 = vpop.f32.mrf.mxu0
      %3725 = vmatprep.mubr.bf16.mxu0 %v1977
      %3726 = vmatmul.mubr.bf16.gmra.mxu0 %v1976
      %v3727 = vpop.f32.mrf.mxu0
      %v3728 = vadd.f32 %v3183, %v3727
      %v3729 = vpop.f32.mrf.mxu0
      %v3730 = vpop.f32.mrf.mxu0
      %v3731 = vadd.f32 %v3186, %v3730
      %v3732 = vpop.f32.mrf.mxu0
      %3733 = vdwg.mxu0
      %3734 = vmatprep.subr.bf16.mxu0 0
      %3735 = vmatpush1.bf16.msra.mxu0 0
      %3736 = vmatprep.subr.bf16.mxu0 0
      %3737 = vmatpush1.bf16.msra.mxu0 0
      %3738 = vmatprep.subr.bf16.mxu0 0
      %3739 = vmatpush1.bf16.msra.mxu0 0
      %3740 = vmatprep.subr.bf16.mxu0 0
      %3741 = vmatpush1.bf16.msra.mxu0 0
      %3742 = vmatprep.subr.bf16.mxu0 0
      %3743 = vmatpush1.bf16.msra.mxu0 %v2414
      %3744 = vmatprep.subr.bf16.mxu0 0
      %3745 = vmatpush1.bf16.msra.mxu0 %v2413
      %3746 = vmatprep.subr.bf16.mxu0 0
      %3747 = vmatpush1.bf16.msra.mxu0 %v2412
      %3748 = vmatprep.subr.bf16.mxu0 0
      %3749 = vmatpush1.bf16.msra.mxu0 %v2411
      %3750 = vmatprep.subr.bf16.mxu0 0
      %3751 = vmatpush2.bf16.msra.mxu0 0
      %3752 = vmatprep.subr.bf16.mxu0 0
      %3753 = vmatpush2.bf16.msra.mxu0 0
      %3754 = vmatprep.subr.bf16.mxu0 0
      %3755 = vmatpush2.bf16.msra.mxu0 0
      %3756 = vmatprep.subr.bf16.mxu0 0
      %3757 = vmatpush2.bf16.msra.mxu0 0
      %3758 = vmatprep.subr.bf16.mxu0 0
      %3759 = vmatpush2.bf16.msra.mxu0 0
      %3760 = vmatprep.subr.bf16.mxu0 0
      %3761 = vmatpush2.bf16.msra.mxu0 0
      %3762 = vmatprep.subr.bf16.mxu0 0
      %3763 = vmatpush2.bf16.msra.mxu0 0
      %3764 = vmatprep.subr.bf16.mxu0 0
      %3765 = vmatpush2.bf16.msra.mxu0 0
      %3766 = vmatprep.mubr.bf16.mxu0 0
      %3767 = vmatmul.mubr.bf16.gmra.mxu0 %v2453
      %v3768 = vpop.f32.mrf.mxu0
      %v3769 = vadd.f32 %v3224, %v3768
      %v3770 = vpop.f32.mrf.mxu0
      %v3771 = vpop.f32.mrf.mxu0
      %v3772 = vadd.f32 %v3227, %v3771
      %v3773 = vpop.f32.mrf.mxu0
      %3774 = vmatprep.mubr.bf16.mxu0 0
      %3775 = vmatmul.mubr.bf16.gmra.mxu0 %v2456
      %v3776 = vpop.f32.mrf.mxu0
      %v3777 = vadd.f32 %v3232, %v3776
      %v3778 = vpop.f32.mrf.mxu0
      %v3779 = vpop.f32.mrf.mxu0
      %v3780 = vadd.f32 %v3235, %v3779
      %v3781 = vpop.f32.mrf.mxu0
      %3782 = vmatprep.mubr.bf16.mxu0 0
      %3783 = vmatmul.mubr.bf16.gmra.mxu0 %v2459
      %v3784 = vpop.f32.mrf.mxu0
      %v3785 = vadd.f32 %v3240, %v3784
      %v3786 = vpop.f32.mrf.mxu0
      %v3787 = vpop.f32.mrf.mxu0
      %v3788 = vadd.f32 %v3243, %v3787
      %v3789 = vpop.f32.mrf.mxu0
      %3790 = vmatprep.mubr.bf16.mxu0 0
      %3791 = vmatmul.mubr.bf16.gmra.mxu0 %v2462
      %v3792 = vpop.f32.mrf.mxu0
      %v3793 = vadd.f32 %v3248, %v3792
      %v3794 = vpop.f32.mrf.mxu0
      %v3795 = vpop.f32.mrf.mxu0
      %v3796 = vadd.f32 %v3251, %v3795
      %v3797 = vpop.f32.mrf.mxu0
      %3798 = vmatprep.mubr.bf16.mxu0 0
      %3799 = vmatmul.mubr.bf16.gmra.mxu0 %v2465
      %v3800 = vpop.f32.mrf.mxu0
      %v3801 = vadd.f32 %v3256, %v3800
      %v3802 = vpop.f32.mrf.mxu0
      %v3803 = vpop.f32.mrf.mxu0
      %v3804 = vadd.f32 %v3259, %v3803
      %v3805 = vpop.f32.mrf.mxu0
      %3806 = vmatprep.mubr.bf16.mxu0 0
      %3807 = vmatmul.mubr.bf16.gmra.mxu0 %v2468
      %v3808 = vpop.f32.mrf.mxu0
      %v3809 = vadd.f32 %v3264, %v3808
      %v3810 = vpop.f32.mrf.mxu0
      %v3811 = vpop.f32.mrf.mxu0
      %v3812 = vadd.f32 %v3267, %v3811
      %v3813 = vpop.f32.mrf.mxu0
      %3814 = vmatprep.mubr.bf16.mxu0 0
      %3815 = vmatmul.mubr.bf16.gmra.mxu0 %v2471
      %v3816 = vpop.f32.mrf.mxu0
      %v3817 = vadd.f32 %v3272, %v3816
      %v3818 = vpop.f32.mrf.mxu0
      %v3819 = vpop.f32.mrf.mxu0
      %v3820 = vadd.f32 %v3275, %v3819
      %v3821 = vpop.f32.mrf.mxu0
      %3822 = vmatprep.mubr.bf16.mxu0 0
      %3823 = vmatmul.mubr.bf16.gmra.mxu0 %v2474
      %v3824 = vpop.f32.mrf.mxu0
      %v3825 = vadd.f32 %v3280, %v3824
      %v3826 = vpop.f32.mrf.mxu0
      %v3827 = vpop.f32.mrf.mxu0
      %v3828 = vadd.f32 %v3283, %v3827
      %v3829 = vpop.f32.mrf.mxu0
      %3830 = vmatprep.mubr.bf16.mxu0 0
      %3831 = vmatmul.mubr.bf16.gmra.mxu0 %v2477
      %v3832 = vpop.f32.mrf.mxu0
      %v3833 = vadd.f32 %v3288, %v3832
      %v3834 = vpop.f32.mrf.mxu0
      %v3835 = vpop.f32.mrf.mxu0
      %v3836 = vadd.f32 %v3291, %v3835
      %v3837 = vpop.f32.mrf.mxu0
      %3838 = vmatprep.mubr.bf16.mxu0 0
      %3839 = vmatmul.mubr.bf16.gmra.mxu0 %v2480
      %v3840 = vpop.f32.mrf.mxu0
      %v3841 = vadd.f32 %v3296, %v3840
      %v3842 = vpop.f32.mrf.mxu0
      %v3843 = vpop.f32.mrf.mxu0
      %v3844 = vadd.f32 %v3299, %v3843
      %v3845 = vpop.f32.mrf.mxu0
      %3846 = vmatprep.mubr.bf16.mxu0 0
      %3847 = vmatmul.mubr.bf16.gmra.mxu0 %v2483
      %v3848 = vpop.f32.mrf.mxu0
      %v3849 = vadd.f32 %v3304, %v3848
      %v3850 = vpop.f32.mrf.mxu0
      %v3851 = vpop.f32.mrf.mxu0
      %v3852 = vadd.f32 %v3307, %v3851
      %v3853 = vpop.f32.mrf.mxu0
      %3854 = vmatprep.mubr.bf16.mxu0 0
      %3855 = vmatmul.mubr.bf16.gmra.mxu0 %v2486
      %v3856 = vpop.f32.mrf.mxu0
      %v3857 = vadd.f32 %v3312, %v3856
      %v3858 = vpop.f32.mrf.mxu0
      %v3859 = vpop.f32.mrf.mxu0
      %v3860 = vadd.f32 %v3315, %v3859
      %v3861 = vpop.f32.mrf.mxu0
      %3862 = vmatprep.mubr.bf16.mxu0 0
      %3863 = vmatmul.mubr.bf16.gmra.mxu0 %v2489
      %v3864 = vpop.f32.mrf.mxu0
      %v3865 = vadd.f32 %v3320, %v3864
      %v3866 = vpop.f32.mrf.mxu0
      %v3867 = vpop.f32.mrf.mxu0
      %v3868 = vadd.f32 %v3323, %v3867
      %v3869 = vpop.f32.mrf.mxu0
      %3870 = vmatprep.mubr.bf16.mxu0 0
      %3871 = vmatmul.mubr.bf16.gmra.mxu0 %v2492
      %v3872 = vpop.f32.mrf.mxu0
      %v3873 = vadd.f32 %v3328, %v3872
      %v3874 = vpop.f32.mrf.mxu0
      %v3875 = vpop.f32.mrf.mxu0
      %v3876 = vadd.f32 %v3331, %v3875
      %v3877 = vpop.f32.mrf.mxu0
      %3878 = vmatprep.mubr.bf16.mxu0 0
      %3879 = vmatmul.mubr.bf16.gmra.mxu0 %v2495
      %v3880 = vpop.f32.mrf.mxu0
      %v3881 = vadd.f32 %v3336, %v3880
      %v3882 = vpop.f32.mrf.mxu0
      %v3883 = vpop.f32.mrf.mxu0
      %v3884 = vadd.f32 %v3339, %v3883
      %v3885 = vpop.f32.mrf.mxu0
      %3886 = vmatprep.mubr.bf16.mxu0 0
      %3887 = vmatmul.mubr.bf16.gmra.mxu0 %v2498
      %v3888 = vpop.f32.mrf.mxu0
      %v3889 = vadd.f32 %v3344, %v3888
      %v3890 = vpop.f32.mrf.mxu0
      %v3891 = vpop.f32.mrf.mxu0
      %v3892 = vadd.f32 %v3347, %v3891
      %v3893 = vpop.f32.mrf.mxu0
      %3894 = vmatprep.mubr.bf16.mxu0 0
      %3895 = vmatmul.mubr.bf16.gmra.mxu0 %v2501
      %v3896 = vpop.f32.mrf.mxu0
      %v3897 = vadd.f32 %v3352, %v3896
      %v3898 = vpop.f32.mrf.mxu0
      %v3899 = vpop.f32.mrf.mxu0
      %v3900 = vadd.f32 %v3355, %v3899
      %v3901 = vpop.f32.mrf.mxu0
      %3902 = vmatprep.mubr.bf16.mxu0 0
      %3903 = vmatmul.mubr.bf16.gmra.mxu0 %v2504
      %v3904 = vpop.f32.mrf.mxu0
      %v3905 = vadd.f32 %v3360, %v3904
      %v3906 = vpop.f32.mrf.mxu0
      %v3907 = vpop.f32.mrf.mxu0
      %v3908 = vadd.f32 %v3363, %v3907
      %v3909 = vpop.f32.mrf.mxu0
      %3910 = vmatprep.mubr.bf16.mxu0 0
      %3911 = vmatmul.mubr.bf16.gmra.mxu0 %v2507
      %v3912 = vpop.f32.mrf.mxu0
      %v3913 = vadd.f32 %v3368, %v3912
      %v3914 = vpop.f32.mrf.mxu0
      %v3915 = vpop.f32.mrf.mxu0
      %v3916 = vadd.f32 %v3371, %v3915
      %v3917 = vpop.f32.mrf.mxu0
      %3918 = vmatprep.mubr.bf16.mxu0 0
      %3919 = vmatmul.mubr.bf16.gmra.mxu0 %v2510
      %v3920 = vpop.f32.mrf.mxu0
      %v3921 = vadd.f32 %v3376, %v3920
      %v3922 = vpop.f32.mrf.mxu0
      %v3923 = vpop.f32.mrf.mxu0
      %v3924 = vadd.f32 %v3379, %v3923
      %v3925 = vpop.f32.mrf.mxu0
      %3926 = vmatprep.mubr.bf16.mxu0 0
      %3927 = vmatmul.mubr.bf16.gmra.mxu0 %v2513
      %v3928 = vpop.f32.mrf.mxu0
      %v3929 = vadd.f32 %v3384, %v3928
      %v3930 = vpop.f32.mrf.mxu0
      %v3931 = vpop.f32.mrf.mxu0
      %v3932 = vadd.f32 %v3387, %v3931
      %v3933 = vpop.f32.mrf.mxu0
      %3934 = vmatprep.mubr.bf16.mxu0 0
      %3935 = vmatmul.mubr.bf16.gmra.mxu0 %v2516
      %v3936 = vpop.f32.mrf.mxu0
      %v3937 = vadd.f32 %v3392, %v3936
      %v3938 = vpop.f32.mrf.mxu0
      %v3939 = vpop.f32.mrf.mxu0
      %v3940 = vadd.f32 %v3395, %v3939
      %v3941 = vpop.f32.mrf.mxu0
      %3942 = vmatprep.mubr.bf16.mxu0 0
      %3943 = vmatmul.mubr.bf16.gmra.mxu0 %v2519
      %v3944 = vpop.f32.mrf.mxu0
      %v3945 = vadd.f32 %v3400, %v3944
      %v3946 = vpop.f32.mrf.mxu0
      %v3947 = vpop.f32.mrf.mxu0
      %v3948 = vadd.f32 %v3403, %v3947
      %v3949 = vpop.f32.mrf.mxu0
      %3950 = vmatprep.mubr.bf16.mxu0 0
      %3951 = vmatmul.mubr.bf16.gmra.mxu0 %v2522
      %v3952 = vpop.f32.mrf.mxu0
      %v3953 = vadd.f32 %v3408, %v3952
      %v3954 = vpop.f32.mrf.mxu0
      %v3955 = vpop.f32.mrf.mxu0
      %v3956 = vadd.f32 %v3411, %v3955
      %v3957 = vpop.f32.mrf.mxu0
      %3958 = vmatprep.mubr.bf16.mxu0 0
      %3959 = vmatmul.mubr.bf16.gmra.mxu0 %v2525
      %v3960 = vpop.f32.mrf.mxu0
      %v3961 = vadd.f32 %v3416, %v3960
      %v3962 = vpop.f32.mrf.mxu0
      %v3963 = vpop.f32.mrf.mxu0
      %v3964 = vadd.f32 %v3419, %v3963
      %v3965 = vpop.f32.mrf.mxu0
      %3966 = vmatprep.mubr.bf16.mxu0 0
      %3967 = vmatmul.mubr.bf16.gmra.mxu0 %v2528
      %v3968 = vpop.f32.mrf.mxu0
      %v3969 = vadd.f32 %v3424, %v3968
      %v3970 = vpop.f32.mrf.mxu0
      %v3971 = vpop.f32.mrf.mxu0
      %v3972 = vadd.f32 %v3427, %v3971
      %v3973 = vpop.f32.mrf.mxu0
      %3974 = vmatprep.mubr.bf16.mxu0 0
      %3975 = vmatmul.mubr.bf16.gmra.mxu0 %v2531
      %v3976 = vpop.f32.mrf.mxu0
      %v3977 = vadd.f32 %v3432, %v3976
      %v3978 = vpop.f32.mrf.mxu0
      %v3979 = vpop.f32.mrf.mxu0
      %v3980 = vadd.f32 %v3435, %v3979
      %v3981 = vpop.f32.mrf.mxu0
      %3982 = vmatprep.mubr.bf16.mxu0 0
      %3983 = vmatmul.mubr.bf16.gmra.mxu0 %v2534
      %v3984 = vpop.f32.mrf.mxu0
      %v3985 = vadd.f32 %v3440, %v3984
      %v3986 = vpop.f32.mrf.mxu0
      %v3987 = vpop.f32.mrf.mxu0
      %v3988 = vadd.f32 %v3443, %v3987
      %v3989 = vpop.f32.mrf.mxu0
      %3990 = vmatprep.mubr.bf16.mxu0 0
      %3991 = vmatmul.mubr.bf16.gmra.mxu0 %v2537
      %v3992 = vpop.f32.mrf.mxu0
      %v3993 = vadd.f32 %v3448, %v3992
      %v3994 = vpop.f32.mrf.mxu0
      %v3995 = vpop.f32.mrf.mxu0
      %v3996 = vadd.f32 %v3451, %v3995
      %v3997 = vpop.f32.mrf.mxu0
      %3998 = vmatprep.mubr.bf16.mxu0 0
      %3999 = vmatmul.mubr.bf16.gmra.mxu0 %v2540
      %v4000 = vpop.f32.mrf.mxu0
      %v4001 = vadd.f32 %v3456, %v4000
      %v4002 = vpop.f32.mrf.mxu0
      %v4003 = vpop.f32.mrf.mxu0
      %v4004 = vadd.f32 %v3459, %v4003
      %v4005 = vpop.f32.mrf.mxu0
      %4006 = vmatprep.mubr.bf16.mxu0 0
      %4007 = vmatmul.mubr.bf16.gmra.mxu0 %v2543
      %v4008 = vpop.f32.mrf.mxu0
      %v4009 = vadd.f32 %v3464, %v4008
      %v4010 = vpop.f32.mrf.mxu0
      %v4011 = vpop.f32.mrf.mxu0
      %v4012 = vadd.f32 %v3467, %v4011
      %v4013 = vpop.f32.mrf.mxu0
      %4014 = vmatprep.mubr.bf16.mxu0 0
      %4015 = vmatmul.mubr.bf16.gmra.mxu0 %v2546
      %v4016 = vpop.f32.mrf.mxu0
      %v4017 = vadd.f32 %v3472, %v4016
      %v4018 = vpop.f32.mrf.mxu0
      %v4019 = vpop.f32.mrf.mxu0
      %v4020 = vadd.f32 %v3475, %v4019
      %v4021 = vpop.f32.mrf.mxu0
      %4022 = vmatprep.mubr.bf16.mxu0 0
      %4023 = vmatmul.mubr.bf16.gmra.mxu0 %v2549
      %v4024 = vpop.f32.mrf.mxu0
      %v4025 = vadd.f32 %v3480, %v4024
      %v4026 = vpop.f32.mrf.mxu0
      %v4027 = vpop.f32.mrf.mxu0
      %v4028 = vadd.f32 %v3483, %v4027
      %v4029 = vpop.f32.mrf.mxu0
      %4030 = vmatprep.mubr.bf16.mxu0 0
      %4031 = vmatmul.mubr.bf16.gmra.mxu0 %v2552
      %v4032 = vpop.f32.mrf.mxu0
      %v4033 = vadd.f32 %v3488, %v4032
      %v4034 = vpop.f32.mrf.mxu0
      %v4035 = vpop.f32.mrf.mxu0
      %v4036 = vadd.f32 %v3491, %v4035
      %v4037 = vpop.f32.mrf.mxu0
      %4038 = vmatprep.mubr.bf16.mxu0 0
      %4039 = vmatmul.mubr.bf16.gmra.mxu0 %v2555
      %v4040 = vpop.f32.mrf.mxu0
      %v4041 = vadd.f32 %v3496, %v4040
      %v4042 = vpop.f32.mrf.mxu0
      %v4043 = vpop.f32.mrf.mxu0
      %v4044 = vadd.f32 %v3499, %v4043
      %v4045 = vpop.f32.mrf.mxu0
      %4046 = vmatprep.mubr.bf16.mxu0 0
      %4047 = vmatmul.mubr.bf16.gmra.mxu0 %v2558
      %v4048 = vpop.f32.mrf.mxu0
      %v4049 = vadd.f32 %v3504, %v4048
      %v4050 = vpop.f32.mrf.mxu0
      %v4051 = vpop.f32.mrf.mxu0
      %v4052 = vadd.f32 %v3507, %v4051
      %v4053 = vpop.f32.mrf.mxu0
      %4054 = vmatprep.mubr.bf16.mxu0 0
      %4055 = vmatmul.mubr.bf16.gmra.mxu0 %v2561
      %v4056 = vpop.f32.mrf.mxu0
      %v4057 = vadd.f32 %v3512, %v4056
      %v4058 = vpop.f32.mrf.mxu0
      %v4059 = vpop.f32.mrf.mxu0
      %v4060 = vadd.f32 %v3515, %v4059
      %v4061 = vpop.f32.mrf.mxu0
      %4062 = vmatprep.mubr.bf16.mxu0 0
      %4063 = vmatmul.mubr.bf16.gmra.mxu0 %v2564
      %v4064 = vpop.f32.mrf.mxu0
      %v4065 = vadd.f32 %v3520, %v4064
      %v4066 = vpop.f32.mrf.mxu0
      %v4067 = vpop.f32.mrf.mxu0
      %v4068 = vadd.f32 %v3523, %v4067
      %v4069 = vpop.f32.mrf.mxu0
      %4070 = vmatprep.mubr.bf16.mxu0 0
      %4071 = vmatmul.mubr.bf16.gmra.mxu0 %v2567
      %v4072 = vpop.f32.mrf.mxu0
      %v4073 = vadd.f32 %v3528, %v4072
      %v4074 = vpop.f32.mrf.mxu0
      %v4075 = vpop.f32.mrf.mxu0
      %v4076 = vadd.f32 %v3531, %v4075
      %v4077 = vpop.f32.mrf.mxu0
      %4078 = vmatprep.mubr.bf16.mxu0 0
      %4079 = vmatmul.mubr.bf16.gmra.mxu0 %v2570
      %v4080 = vpop.f32.mrf.mxu0
      %v4081 = vadd.f32 %v3536, %v4080
      %v4082 = vpop.f32.mrf.mxu0
      %v4083 = vpop.f32.mrf.mxu0
      %v4084 = vadd.f32 %v3539, %v4083
      %v4085 = vpop.f32.mrf.mxu0
      %4086 = vmatprep.mubr.bf16.mxu0 0
      %4087 = vmatmul.mubr.bf16.gmra.mxu0 %v2573
      %v4088 = vpop.f32.mrf.mxu0
      %v4089 = vadd.f32 %v3544, %v4088
      %v4090 = vpop.f32.mrf.mxu0
      %v4091 = vpop.f32.mrf.mxu0
      %v4092 = vadd.f32 %v3547, %v4091
      %v4093 = vpop.f32.mrf.mxu0
      %4094 = vmatprep.mubr.bf16.mxu0 0
      %4095 = vmatmul.mubr.bf16.gmra.mxu0 %v2576
      %v4096 = vpop.f32.mrf.mxu0
      %v4097 = vadd.f32 %v3552, %v4096
      %v4098 = vpop.f32.mrf.mxu0
      %v4099 = vpop.f32.mrf.mxu0
      %v4100 = vadd.f32 %v3555, %v4099
      %v4101 = vpop.f32.mrf.mxu0
      %4102 = vmatprep.mubr.bf16.mxu0 0
      %4103 = vmatmul.mubr.bf16.gmra.mxu0 %v2579
      %v4104 = vpop.f32.mrf.mxu0
      %v4105 = vadd.f32 %v3560, %v4104
      %v4106 = vpop.f32.mrf.mxu0
      %v4107 = vpop.f32.mrf.mxu0
      %v4108 = vadd.f32 %v3563, %v4107
      %v4109 = vpop.f32.mrf.mxu0
      %4110 = vmatprep.mubr.bf16.mxu0 0
      %4111 = vmatmul.mubr.bf16.gmra.mxu0 %v2582
      %v4112 = vpop.f32.mrf.mxu0
      %v4113 = vadd.f32 %v3568, %v4112
      %v4114 = vpop.f32.mrf.mxu0
      %v4115 = vpop.f32.mrf.mxu0
      %v4116 = vadd.f32 %v3571, %v4115
      %v4117 = vpop.f32.mrf.mxu0
      %4118 = vmatprep.mubr.bf16.mxu0 0
      %4119 = vmatmul.mubr.bf16.gmra.mxu0 %v2585
      %v4120 = vpop.f32.mrf.mxu0
      %v4121 = vadd.f32 %v3576, %v4120
      %v4122 = vpop.f32.mrf.mxu0
      %v4123 = vpop.f32.mrf.mxu0
      %v4124 = vadd.f32 %v3579, %v4123
      %v4125 = vpop.f32.mrf.mxu0
      %4126 = vmatprep.mubr.bf16.mxu0 0
      %4127 = vmatmul.mubr.bf16.gmra.mxu0 %v2588
      %v4128 = vpop.f32.mrf.mxu0
      %v4129 = vadd.f32 %v3584, %v4128
      %v4130 = vpop.f32.mrf.mxu0
      %v4131 = vpop.f32.mrf.mxu0
      %v4132 = vadd.f32 %v3587, %v4131
      %v4133 = vpop.f32.mrf.mxu0
      %4134 = vmatprep.mubr.bf16.mxu0 0
      %4135 = vmatmul.mubr.bf16.gmra.mxu0 %v2591
      %v4136 = vpop.f32.mrf.mxu0
      %v4137 = vadd.f32 %v3592, %v4136
      %v4138 = vpop.f32.mrf.mxu0
      %v4139 = vpop.f32.mrf.mxu0
      %v4140 = vadd.f32 %v3595, %v4139
      %v4141 = vpop.f32.mrf.mxu0
      %4142 = vmatprep.mubr.bf16.mxu0 0
      %4143 = vmatmul.mubr.bf16.gmra.mxu0 %v2594
      %v4144 = vpop.f32.mrf.mxu0
      %v4145 = vadd.f32 %v3600, %v4144
      %v4146 = vpop.f32.mrf.mxu0
      %v4147 = vpop.f32.mrf.mxu0
      %v4148 = vadd.f32 %v3603, %v4147
      %v4149 = vpop.f32.mrf.mxu0
      %4150 = vmatprep.mubr.bf16.mxu0 0
      %4151 = vmatmul.mubr.bf16.gmra.mxu0 %v2597
      %v4152 = vpop.f32.mrf.mxu0
      %v4153 = vadd.f32 %v3608, %v4152
      %v4154 = vpop.f32.mrf.mxu0
      %v4155 = vpop.f32.mrf.mxu0
      %v4156 = vadd.f32 %v3611, %v4155
      %v4157 = vpop.f32.mrf.mxu0
      %4158 = vmatprep.mubr.bf16.mxu0 0
      %4159 = vmatmul.mubr.bf16.gmra.mxu0 %v2600
      %v4160 = vpop.f32.mrf.mxu0
      %v4161 = vadd.f32 %v3616, %v4160
      %v4162 = vpop.f32.mrf.mxu0
      %v4163 = vpop.f32.mrf.mxu0
      %v4164 = vadd.f32 %v3619, %v4163
      %v4165 = vpop.f32.mrf.mxu0
      %4166 = vmatprep.mubr.bf16.mxu0 0
      %4167 = vmatmul.mubr.bf16.gmra.mxu0 %v2603
      %v4168 = vpop.f32.mrf.mxu0
      %v4169 = vadd.f32 %v3624, %v4168
      %v4170 = vpop.f32.mrf.mxu0
      %v4171 = vpop.f32.mrf.mxu0
      %v4172 = vadd.f32 %v3627, %v4171
      %v4173 = vpop.f32.mrf.mxu0
      %4174 = vmatprep.mubr.bf16.mxu0 0
      %4175 = vmatmul.mubr.bf16.gmra.mxu0 %v2606
      %v4176 = vpop.f32.mrf.mxu0
      %v4177 = vadd.f32 %v3632, %v4176
      %v4178 = vpop.f32.mrf.mxu0
      %v4179 = vpop.f32.mrf.mxu0
      %v4180 = vadd.f32 %v3635, %v4179
      %v4181 = vpop.f32.mrf.mxu0
      %4182 = vmatprep.mubr.bf16.mxu0 0
      %4183 = vmatmul.mubr.bf16.gmra.mxu0 %v2609
      %v4184 = vpop.f32.mrf.mxu0
      %v4185 = vadd.f32 %v3640, %v4184
      %v4186 = vpop.f32.mrf.mxu0
      %v4187 = vpop.f32.mrf.mxu0
      %v4188 = vadd.f32 %v3643, %v4187
      %v4189 = vpop.f32.mrf.mxu0
      %4190 = vmatprep.mubr.bf16.mxu0 0
      %4191 = vmatmul.mubr.bf16.gmra.mxu0 %v2612
      %v4192 = vpop.f32.mrf.mxu0
      %v4193 = vadd.f32 %v3648, %v4192
      %v4194 = vpop.f32.mrf.mxu0
      %v4195 = vpop.f32.mrf.mxu0
      %v4196 = vadd.f32 %v3651, %v4195
      %v4197 = vpop.f32.mrf.mxu0
      %4198 = vmatprep.mubr.bf16.mxu0 0
      %4199 = vmatmul.mubr.bf16.gmra.mxu0 %v2615
      %v4200 = vpop.f32.mrf.mxu0
      %v4201 = vadd.f32 %v3656, %v4200
      %v4202 = vpop.f32.mrf.mxu0
      %v4203 = vpop.f32.mrf.mxu0
      %v4204 = vadd.f32 %v3659, %v4203
      %v4205 = vpop.f32.mrf.mxu0
      %4206 = vmatprep.mubr.bf16.mxu0 0
      %4207 = vmatmul.mubr.bf16.gmra.mxu0 %v2618
      %v4208 = vpop.f32.mrf.mxu0
      %v4209 = vadd.f32 %v3664, %v4208
      %v4210 = vpop.f32.mrf.mxu0
      %v4211 = vpop.f32.mrf.mxu0
      %v4212 = vadd.f32 %v3667, %v4211
      %v4213 = vpop.f32.mrf.mxu0
      %4214 = vmatprep.mubr.bf16.mxu0 0
      %4215 = vmatmul.mubr.bf16.gmra.mxu0 %v2621
      %v4216 = vpop.f32.mrf.mxu0
      %v4217 = vadd.f32 %v3672, %v4216
      %v4218 = vpop.f32.mrf.mxu0
      %v4219 = vpop.f32.mrf.mxu0
      %v4220 = vadd.f32 %v3675, %v4219
      %v4221 = vpop.f32.mrf.mxu0
      %4222 = vmatprep.mubr.bf16.mxu0 0
      %4223 = vmatmul.mubr.bf16.gmra.mxu0 %v2624
      %v4224 = vpop.f32.mrf.mxu0
      %v4225 = vadd.f32 %v3680, %v4224
      %v4226 = vpop.f32.mrf.mxu0
      %v4227 = vpop.f32.mrf.mxu0
      %v4228 = vadd.f32 %v3683, %v4227
      %v4229 = vpop.f32.mrf.mxu0
      %4230 = vmatprep.mubr.bf16.mxu0 0
      %4231 = vmatmul.mubr.bf16.gmra.mxu0 %v2627
      %v4232 = vpop.f32.mrf.mxu0
      %v4233 = vadd.f32 %v3688, %v4232
      %v4234 = vpop.f32.mrf.mxu0
      %v4235 = vpop.f32.mrf.mxu0
      %v4236 = vadd.f32 %v3691, %v4235
      %v4237 = vpop.f32.mrf.mxu0
      %4238 = vmatprep.mubr.bf16.mxu0 0
      %4239 = vmatmul.mubr.bf16.gmra.mxu0 %v2630
      %v4240 = vpop.f32.mrf.mxu0
      %v4241 = vadd.f32 %v3696, %v4240
      %v4242 = vpop.f32.mrf.mxu0
      %v4243 = vpop.f32.mrf.mxu0
      %v4244 = vadd.f32 %v3699, %v4243
      %v4245 = vpop.f32.mrf.mxu0
      %4246 = vmatprep.mubr.bf16.mxu0 0
      %4247 = vmatmul.mubr.bf16.gmra.mxu0 %v2633
      %v4248 = vpop.f32.mrf.mxu0
      %v4249 = vadd.f32 %v3704, %v4248
      %v4250 = vpop.f32.mrf.mxu0
      %v4251 = vpop.f32.mrf.mxu0
      %v4252 = vadd.f32 %v3707, %v4251
      %v4253 = vpop.f32.mrf.mxu0
      %4254 = vmatprep.mubr.bf16.mxu0 0
      %4255 = vmatmul.mubr.bf16.gmra.mxu0 %v2636
      %v4256 = vpop.f32.mrf.mxu0
      %v4257 = vadd.f32 %v3712, %v4256
      %v4258 = vpop.f32.mrf.mxu0
      %v4259 = vpop.f32.mrf.mxu0
      %v4260 = vadd.f32 %v3715, %v4259
      %v4261 = vpop.f32.mrf.mxu0
      %4262 = vmatprep.mubr.bf16.mxu0 0
      %4263 = vmatmul.mubr.bf16.gmra.mxu0 %v2639
      %v4264 = vpop.f32.mrf.mxu0
      %v4265 = vadd.f32 %v3720, %v4264
      %v4266 = vpop.f32.mrf.mxu0
      %v4267 = vpop.f32.mrf.mxu0
      %v4268 = vadd.f32 %v3723, %v4267
      %v4269 = vpop.f32.mrf.mxu0
      %4270 = vmatprep.mubr.bf16.mxu0 0
      %4271 = vmatmul.mubr.bf16.gmra.mxu0 %v2642
      %v4272 = vpop.f32.mrf.mxu0
      %v4273 = vadd.f32 %v3728, %v4272
      %v4274 = vpop.f32.mrf.mxu0
      %v4275 = vpop.f32.mrf.mxu0
      %v4276 = vadd.f32 %v3731, %v4275
      %v4277 = vpop.f32.mrf.mxu0
      %4278 = vdwg.mxu0
      %v4279 = vtanh.pop %v3769
      %v4280 = vtanh.pop %v3772
      %v4281 = vtanh.pop %v3777
      %v4282 = vtanh.pop %v3780
      %v4283 = vtanh.pop %v3785
      %v4284 = vtanh.pop %v3788
      %v4285 = vtanh.pop %v3793
      %v4286 = vtanh.pop %v3796
      %v4287 = vtanh.pop %v3801
      %v4288 = vtanh.pop %v3804
      %v4289 = vtanh.pop %v3809
      %v4290 = vtanh.pop %v3812
      %v4291 = vtanh.pop %v3817
      %v4292 = vtanh.pop %v3820
      %v4293 = vtanh.pop %v3825
      %v4294 = vtanh.pop %v3828
      %v4295 = vtanh.pop %v3833
      %v4296 = vtanh.pop %v3836
      %v4297 = vtanh.pop %v3841
      %v4298 = vtanh.pop %v3844
      %v4299 = vtanh.pop %v3849
      %v4300 = vtanh.pop %v3852
      %v4301 = vtanh.pop %v3857
      %v4302 = vtanh.pop %v3860
      %v4303 = vtanh.pop %v3865
      %v4304 = vtanh.pop %v3868
      %v4305 = vtanh.pop %v3873
      %v4306 = vtanh.pop %v3876
      %v4307 = vtanh.pop %v3881
      %v4308 = vtanh.pop %v3884
      %v4309 = vtanh.pop %v3889
      %v4310 = vtanh.pop %v3892
      %v4311 = vtanh.pop %v3897
      %v4312 = vtanh.pop %v3900
      %v4313 = vtanh.pop %v3905
      %v4314 = vtanh.pop %v3908
      %v4315 = vtanh.pop %v3913
      %v4316 = vtanh.pop %v3916
      %v4317 = vtanh.pop %v3921
      %v4318 = vtanh.pop %v3924
      %v4319 = vtanh.pop %v3929
      %v4320 = vtanh.pop %v3932
      %v4321 = vtanh.pop %v3937
      %v4322 = vtanh.pop %v3940
      %v4323 = vtanh.pop %v3945
      %v4324 = vtanh.pop %v3948
      %v4325 = vtanh.pop %v3953
      %v4326 = vtanh.pop %v3956
      %v4327 = vtanh.pop %v3961
      %v4328 = vtanh.pop %v3964
      %v4329 = vtanh.pop %v3969
      %v4330 = vtanh.pop %v3972
      %v4331 = vtanh.pop %v3977
      %v4332 = vtanh.pop %v3980
      %v4333 = vtanh.pop %v3985
      %v4334 = vtanh.pop %v3988
      %v4335 = vtanh.pop %v3993
      %v4336 = vtanh.pop %v3996
      %v4337 = vtanh.pop %v4001
      %v4338 = vtanh.pop %v4004
      %v4339 = vtanh.pop %v4009
      %v4340 = vtanh.pop %v4012
      %v4341 = vtanh.pop %v4017
      %v4342 = vtanh.pop %v4020
      %v4343 = vtanh.pop %v4025
      %v4344 = vtanh.pop %v4028
      %v4345 = vtanh.pop %v4033
      %v4346 = vtanh.pop %v4036
      %v4347 = vtanh.pop %v4041
      %v4348 = vtanh.pop %v4044
      %v4349 = vtanh.pop %v4049
      %v4350 = vtanh.pop %v4052
      %v4351 = vtanh.pop %v4057
      %v4352 = vtanh.pop %v4060
      %v4353 = vtanh.pop %v4065
      %v4354 = vtanh.pop %v4068
      %v4355 = vtanh.pop %v4073
      %v4356 = vtanh.pop %v4076
      %v4357 = vtanh.pop %v4081
      %v4358 = vtanh.pop %v4084
      %v4359 = vtanh.pop %v4089
      %v4360 = vtanh.pop %v4092
      %v4361 = vtanh.pop %v4097
      %v4362 = vtanh.pop %v4100
      %v4363 = vtanh.pop %v4105
      %v4364 = vtanh.pop %v4108
      %v4365 = vtanh.pop %v4113
      %v4366 = vtanh.pop %v4116
      %v4367 = vtanh.pop %v4121
      %v4368 = vtanh.pop %v4124
      %v4369 = vtanh.pop %v4129
      %v4370 = vtanh.pop %v4132
      %v4371 = vtanh.pop %v4137
      %v4372 = vtanh.pop %v4140
      %v4373 = vtanh.pop %v4145
      %v4374 = vtanh.pop %v4148
      %v4375 = vtanh.pop %v4153
      %v4376 = vtanh.pop %v4156
      %v4377 = vtanh.pop %v4161
      %v4378 = vtanh.pop %v4164
      %v4379 = vtanh.pop %v4169
      %v4380 = vtanh.pop %v4172
      %v4381 = vtanh.pop %v4177
      %v4382 = vtanh.pop %v4180
      %v4383 = vtanh.pop %v4185
      %v4384 = vtanh.pop %v4188
      %v4385 = vtanh.pop %v4193
      %v4386 = vtanh.pop %v4196
      %v4387 = vtanh.pop %v4201
      %v4388 = vtanh.pop %v4204
      %v4389 = vtanh.pop %v4209
      %v4390 = vtanh.pop %v4212
      %v4391 = vtanh.pop %v4217
      %v4392 = vtanh.pop %v4220
      %v4393 = vtanh.pop %v4225
      %v4394 = vtanh.pop %v4228
      %v4395 = vtanh.pop %v4233
      %v4396 = vtanh.pop %v4236
      %v4397 = vtanh.pop %v4241
      %v4398 = vtanh.pop %v4244
      %v4399 = vtanh.pop %v4249
      %v4400 = vtanh.pop %v4252
      %v4401 = vtanh.pop %v4257
      %v4402 = vtanh.pop %v4260
      %v4403 = vtanh.pop %v4265
      %v4404 = vtanh.pop %v4268
      %v4405 = vtanh.pop %v4273
      %v4406 = vtanh.pop %v4276
      %4407 = vst [vmem:[%s176] sm:$0xff] %v4279
      %4408 = vst [vmem:[%s176 + $0x8] sm:$0xff] %v4280
      %4409 = vst [vmem:[%s176 + $0x10] sm:$0xff] %v4281
      %4410 = vst [vmem:[%s176 + $0x18] sm:$0xff] %v4282
      %4411 = vst [vmem:[%s176 + $0x20] sm:$0xff] %v4283
      %4412 = vst [vmem:[%s176 + $0x28] sm:$0xff] %v4284
      %4413 = vst [vmem:[%s176 + $0x30] sm:$0xff] %v4285
      %4414 = vst [vmem:[%s176 + $0x38] sm:$0xff] %v4286
      %4415 = vst [vmem:[%s176 + $0x40] sm:$0xff] %v4287
      %4416 = vst [vmem:[%s176 + $0x48] sm:$0xff] %v4288
      %4417 = vst [vmem:[%s176 + $0x50] sm:$0xff] %v4289
      %4418 = vst [vmem:[%s176 + $0x58] sm:$0xff] %v4290
      %4419 = vst [vmem:[%s176 + $0x60] sm:$0xff] %v4291
      %4420 = vst [vmem:[%s176 + $0x68] sm:$0xff] %v4292
      %4421 = vst [vmem:[%s176 + $0x70] sm:$0xff] %v4293
      %4422 = vst [vmem:[%s176 + $0x78] sm:$0xff] %v4294
      %4423 = vst [vmem:[%s176 + $0x80] sm:$0xff] %v4295
      %4424 = vst [vmem:[%s176 + $0x88] sm:$0xff] %v4296
      %4425 = vst [vmem:[%s176 + $0x90] sm:$0xff] %v4297
      %4426 = vst [vmem:[%s176 + $0x98] sm:$0xff] %v4298
      %4427 = vst [vmem:[%s176 + $0xa0] sm:$0xff] %v4299
      %4428 = vst [vmem:[%s176 + $0xa8] sm:$0xff] %v4300
      %4429 = vst [vmem:[%s176 + $0xb0] sm:$0xff] %v4301
      %4430 = vst [vmem:[%s176 + $0xb8] sm:$0xff] %v4302
      %4431 = vst [vmem:[%s176 + $0xc0] sm:$0xff] %v4303
      %4432 = vst [vmem:[%s176 + $0xc8] sm:$0xff] %v4304
      %4433 = vst [vmem:[%s176 + $0xd0] sm:$0xff] %v4305
      %4434 = vst [vmem:[%s176 + $0xd8] sm:$0xff] %v4306
      %4435 = vst [vmem:[%s176 + $0xe0] sm:$0xff] %v4307
      %4436 = vst [vmem:[%s176 + $0xe8] sm:$0xff] %v4308
      %4437 = vst [vmem:[%s176 + $0xf0] sm:$0xff] %v4309
      %4438 = vst [vmem:[%s176 + $0xf8] sm:$0xff] %v4310
      %4439 = vst [vmem:[%s176 + $0x100] sm:$0xff] %v4311
      %4440 = vst [vmem:[%s176 + $0x108] sm:$0xff] %v4312
      %4441 = vst [vmem:[%s176 + $0x110] sm:$0xff] %v4313
      %4442 = vst [vmem:[%s176 + $0x118] sm:$0xff] %v4314
      %4443 = vst [vmem:[%s176 + $0x120] sm:$0xff] %v4315
      %4444 = vst [vmem:[%s176 + $0x128] sm:$0xff] %v4316
      %4445 = vst [vmem:[%s176 + $0x130] sm:$0xff] %v4317
      %4446 = vst [vmem:[%s176 + $0x138] sm:$0xff] %v4318
      %4447 = vst [vmem:[%s176 + $0x140] sm:$0xff] %v4319
      %4448 = vst [vmem:[%s176 + $0x148] sm:$0xff] %v4320
      %4449 = vst [vmem:[%s176 + $0x150] sm:$0xff] %v4321
      %4450 = vst [vmem:[%s176 + $0x158] sm:$0xff] %v4322
      %4451 = vst [vmem:[%s176 + $0x160] sm:$0xff] %v4323
      %4452 = vst [vmem:[%s176 + $0x168] sm:$0xff] %v4324
      %4453 = vst [vmem:[%s176 + $0x170] sm:$0xff] %v4325
      %4454 = vst [vmem:[%s176 + $0x178] sm:$0xff] %v4326
      %4455 = vst [vmem:[%s176 + $0x180] sm:$0xff] %v4327
      %4456 = vst [vmem:[%s176 + $0x188] sm:$0xff] %v4328
      %4457 = vst [vmem:[%s176 + $0x190] sm:$0xff] %v4329
      %4458 = vst [vmem:[%s176 + $0x198] sm:$0xff] %v4330
      %4459 = vst [vmem:[%s176 + $0x1a0] sm:$0xff] %v4331
      %4460 = vst [vmem:[%s176 + $0x1a8] sm:$0xff] %v4332
      %4461 = vst [vmem:[%s176 + $0x1b0] sm:$0xff] %v4333
      %4462 = vst [vmem:[%s176 + $0x1b8] sm:$0xff] %v4334
      %4463 = vst [vmem:[%s176 + $0x1c0] sm:$0xff] %v4335
      %4464 = vst [vmem:[%s176 + $0x1c8] sm:$0xff] %v4336
      %4465 = vst [vmem:[%s176 + $0x1d0] sm:$0xff] %v4337
      %4466 = vst [vmem:[%s176 + $0x1d8] sm:$0xff] %v4338
      %4467 = vst [vmem:[%s176 + $0x1e0] sm:$0xff] %v4339
      %4468 = vst [vmem:[%s176 + $0x1e8] sm:$0xff] %v4340
      %4469 = vst [vmem:[%s176 + $0x1f0] sm:$0xff] %v4341
      %4470 = vst [vmem:[%s176 + $0x1f8] sm:$0xff] %v4342
      %4471 = vst [vmem:[%s176 + $0x200] sm:$0xff] %v4343
      %4472 = vst [vmem:[%s176 + $0x208] sm:$0xff] %v4344
      %4473 = vst [vmem:[%s176 + $0x210] sm:$0xff] %v4345
      %4474 = vst [vmem:[%s176 + $0x218] sm:$0xff] %v4346
      %4475 = vst [vmem:[%s176 + $0x220] sm:$0xff] %v4347
      %4476 = vst [vmem:[%s176 + $0x228] sm:$0xff] %v4348
      %4477 = vst [vmem:[%s176 + $0x230] sm:$0xff] %v4349
      %4478 = vst [vmem:[%s176 + $0x238] sm:$0xff] %v4350
      %4479 = vst [vmem:[%s176 + $0x240] sm:$0xff] %v4351
      %4480 = vst [vmem:[%s176 + $0x248] sm:$0xff] %v4352
      %4481 = vst [vmem:[%s176 + $0x250] sm:$0xff] %v4353
      %4482 = vst [vmem:[%s176 + $0x258] sm:$0xff] %v4354
      %4483 = vst [vmem:[%s176 + $0x260] sm:$0xff] %v4355
      %4484 = vst [vmem:[%s176 + $0x268] sm:$0xff] %v4356
      %4485 = vst [vmem:[%s176 + $0x270] sm:$0xff] %v4357
      %4486 = vst [vmem:[%s176 + $0x278] sm:$0xff] %v4358
      %4487 = vst [vmem:[%s176 + $0x280] sm:$0xff] %v4359
      %4488 = vst [vmem:[%s176 + $0x288] sm:$0xff] %v4360
      %4489 = vst [vmem:[%s176 + $0x290] sm:$0xff] %v4361
      %4490 = vst [vmem:[%s176 + $0x298] sm:$0xff] %v4362
      %4491 = vst [vmem:[%s176 + $0x2a0] sm:$0xff] %v4363
      %4492 = vst [vmem:[%s176 + $0x2a8] sm:$0xff] %v4364
      %4493 = vst [vmem:[%s176 + $0x2b0] sm:$0xff] %v4365
      %4494 = vst [vmem:[%s176 + $0x2b8] sm:$0xff] %v4366
      %4495 = vst [vmem:[%s176 + $0x2c0] sm:$0xff] %v4367
      %4496 = vst [vmem:[%s176 + $0x2c8] sm:$0xff] %v4368
      %4497 = vst [vmem:[%s176 + $0x2d0] sm:$0xff] %v4369
      %4498 = vst [vmem:[%s176 + $0x2d8] sm:$0xff] %v4370
      %4499 = vst [vmem:[%s176 + $0x2e0] sm:$0xff] %v4371
      %4500 = vst [vmem:[%s176 + $0x2e8] sm:$0xff] %v4372
      %4501 = vst [vmem:[%s176 + $0x2f0] sm:$0xff] %v4373
      %4502 = vst [vmem:[%s176 + $0x2f8] sm:$0xff] %v4374
      %4503 = vst [vmem:[%s176 + $0x300] sm:$0xff] %v4375
      %4504 = vst [vmem:[%s176 + $0x308] sm:$0xff] %v4376
      %4505 = vst [vmem:[%s176 + $0x310] sm:$0xff] %v4377
      %4506 = vst [vmem:[%s176 + $0x318] sm:$0xff] %v4378
      %4507 = vst [vmem:[%s176 + $0x320] sm:$0xff] %v4379
      %4508 = vst [vmem:[%s176 + $0x328] sm:$0xff] %v4380
      %4509 = vst [vmem:[%s176 + $0x330] sm:$0xff] %v4381
      %4510 = vst [vmem:[%s176 + $0x338] sm:$0xff] %v4382
      %4511 = vst [vmem:[%s176 + $0x340] sm:$0xff] %v4383
      %4512 = vst [vmem:[%s176 + $0x348] sm:$0xff] %v4384
      %4513 = vst [vmem:[%s176 + $0x350] sm:$0xff] %v4385
      %4514 = vst [vmem:[%s176 + $0x358] sm:$0xff] %v4386
      %4515 = vst [vmem:[%s176 + $0x360] sm:$0xff] %v4387
      %4516 = vst [vmem:[%s176 + $0x368] sm:$0xff] %v4388
      %4517 = vst [vmem:[%s176 + $0x370] sm:$0xff] %v4389
      %4518 = vst [vmem:[%s176 + $0x378] sm:$0xff] %v4390
      %4519 = vst [vmem:[%s176 + $0x380] sm:$0xff] %v4391
      %4520 = vst [vmem:[%s176 + $0x388] sm:$0xff] %v4392
      %4521 = vst [vmem:[%s176 + $0x390] sm:$0xff] %v4393
      %4522 = vst [vmem:[%s176 + $0x398] sm:$0xff] %v4394
      %4523 = vst [vmem:[%s176 + $0x3a0] sm:$0xff] %v4395
      %4524 = vst [vmem:[%s176 + $0x3a8] sm:$0xff] %v4396
      %4525 = vst [vmem:[%s176 + $0x3b0] sm:$0xff] %v4397
      %4526 = vst [vmem:[%s176 + $0x3b8] sm:$0xff] %v4398
      %4527 = vst [vmem:[%s176 + $0x3c0] sm:$0xff] %v4399
      %4528 = vst [vmem:[%s176 + $0x3c8] sm:$0xff] %v4400
      %4529 = vst [vmem:[%s176 + $0x3d0] sm:$0xff] %v4401
      %4530 = vst [vmem:[%s176 + $0x3d8] sm:$0xff] %v4402
      %4531 = vst [vmem:[%s176 + $0x3e0] sm:$0xff] %v4403
      %4532 = vst [vmem:[%s176 + $0x3e8] sm:$0xff] %v4404
      %4533 = vst [vmem:[%s176 + $0x3f0] sm:$0xff] %v4405
      %4534 = vst [vmem:[%s176 + $0x3f8] sm:$0xff] %v4406
      %s4535 = smul.u32 128, %s15
      %p4536 = scmp.lt.s32.totalorder %s4535, 255
      %s4537 = scalar_select %p4536, %s4535, 255
      %s4538 = smul.addr %s4537, 8
      %s4539 = scalar_lea.vmem %s3, %s4538
      // Predicated region
      $region33: #{netg_forward.21} parent=31 // pred_check
        %p4540 = pneg %p101
      $region34: #{netg_forward.21} parent=31 // pred_check_branch
        %4542 = sbr.rel (%p4540) target = $region36
      $region35: #{netg_forward.21} parent=31 // pred_region
        %s4543 = smul.u32 128, %s15
      $region36: #{netg_forward.21} parent=31 // pred_fallthru
        _
    $region32: #{netg_forward.21} parent=5 // pred_fallthru
      _
    %p4544 = scmp.le.s32.totalorder 2, %s10
    // Predicated region
    $region37: #{netg_forward.21} parent=5 // pred_check
      %p4545 = pneg %p4544
    $region38: #{netg_forward.21} parent=5 // pred_check_branch
      %4547 = sbr.rel (%p4545) target = $region40
    $region39: #{netg_forward.21} parent=5 // pred_region
      %s4548 = ssub.s32 %s10, 2
      // Predicated region
      $region41: #{netg_forward.21} parent=39 // pred_check
        %p4549 = pneg %p107
      $region42: #{netg_forward.21} parent=39 // pred_check_branch
        %4551 = sbr.rel (%p4549) target = $region44
      $region43: #{netg_forward.21} parent=39 // pred_region
        %s4552 = smul.u32 128, %s16
        %p4553 = scmp.lt.s32.totalorder %s4552, 255
        %s4554 = scalar_select %p4553, %s4552, 255
        %s4555 = smul.addr %s4554, 8
        %s4556 = scalar_lea.vmem %s3, %s4555
      $region44: #{netg_forward.21} parent=39 // pred_fallthru
        _
    $region40: #{netg_forward.21} parent=5 // pred_fallthru
      _
  $region6: #{netg_forward.21} parent=0 // loop_footer
    %s14 = sadd.s32 1, %s10
  $region7: #{netg_forward.21} parent=0 // loop_footer_branch
    %9 = sbr.rel target = $region3
  $region8: #{netg_forward.21} parent=0 // loop_exit
    _

</llo_original>
